<compile_context>
chip_gen: v5e
topology: v5e:2x2
jax: 0.10.0
libtpu: 0.0.40
codegen_flags: <defaults>
</compile_context>

<pallas_src>
import numpy as np

import jax
import jax.numpy as jnp
from jax.experimental import pallas as pl
from jax.experimental.pallas import tpu as pltpu

KERNEL_SIZES = (2, 3, 5, 6)   # matches the PyTorch module default


# ----------------------------------------------------------------------------
# Host-side precomputation (static shapes only)
# ----------------------------------------------------------------------------
def _bilinear_matrix(out_size, in_size):
    """PyTorch bilinear (align_corners=True) 1-D interpolation matrix."""
    a = np.zeros((out_size, in_size), np.float64)
    if in_size == 1:
        a[:, 0] = 1.0
        return a
    if out_size == 1:
        a[0, 0] = 1.0
        return a
    scale = (in_size - 1) / (out_size - 1)
    for o in range(out_size):
        src = o * scale
        i0 = min(int(np.floor(src)), in_size - 1)
        i1 = min(i0 + 1, in_size - 1)
        t = src - i0
        a[o, i0] += 1.0 - t
        a[o, i1] += t
    return a


def _rmp_constants(h, w, kernel_sizes):
    """Gather matrix (P, sum k*k*Pk), stacked upsample matrix (sum Pk, P),
    branch mask (nb, sum Pk), plus per-branch Pk / tap counts."""
    p = h * w
    gcols, up_rows, pks, taps = [], [], [], []
    for k in kernel_sizes:
        hk, wk = h // k, w // k
        pk = hk * wk
        pks.append(pk)
        taps.append(k * k)
        gk = np.zeros((p, k * k * pk), np.float32)
        for di in range(k):
            for dj in range(k):
                t = di * k + dj
                for i in range(hk):
                    for j in range(wk):
                        gk[(i * k + di) * w + (j * k + dj),
                           t * pk + i * wk + j] = 1.0
        gcols.append(gk)
        a_h = _bilinear_matrix(h, hk)
        a_w = _bilinear_matrix(w, wk)
        up_rows.append(np.kron(a_h, a_w).T.astype(np.float32))   # (Pk, P)
    gmat = np.concatenate(gcols, axis=1)                          # (P, 850)
    up_all = np.concatenate(up_rows, axis=0)                      # (102, P)
    l_tot = sum(pks)
    mask = np.zeros((len(kernel_sizes), l_tot), np.float32)
    off = 0
    for br, pk in enumerate(pks):
        mask[br, off:off + pk] = 1.0
        off += pk
    return gmat, up_all, mask, tuple(pks), tuple(taps)


def _padded_bytes(shape, itemsize=4):
    """Approximate VMEM/HBM bytes after (8,128) layout padding."""
    if len(shape) == 1:
        return -(-int(shape[0]) * itemsize // 512) * 512
    lead = int(np.prod(shape[:-2])) if len(shape) > 2 else 1
    sub = -(-int(shape[-2]) // 8) * 8
    lane = -(-int(shape[-1]) // 128) * 128
    return lead * sub * lane * itemsize


# ----------------------------------------------------------------------------
# Pallas kernel (factory closes over static branch geometry)
# ----------------------------------------------------------------------------
def _make_rmp_kernel(c, n_blk, pks, tap_counts):
    nb = len(pks)
    gather_off = []
    off = 0
    for pk, t in zip(pks, tap_counts):
        gather_off.append(off)
        off += pk * t

    def kernel(x_ref, g_ref, up_ref, mask_ref, wblk_ref, b_ref, o_ref):
        # x_ref   : (n_blk*C, P)  VMEM (lane-dense, P = H*W)
        # g_ref   : (P, sum k*k*Pk) VMEM one-hot gather matrix (all branches/taps)
        # up_ref  : (sum Pk, P)   VMEM stacked bilinear matrices
        # mask_ref: (nb, sum Pk)  VMEM branch-segment mask
        # wblk_ref: (n_blk, n_blk*C) VMEM block-diagonal conv weights
        # b_ref   : (1,)          SMEM conv bias
        # o_ref   : (n_blk, C+nb, P) VMEM output block
        x_native = x_ref[...]
        x = x_native.astype(jnp.float32)

        # 1) One lane-dense MXU matmul gathers every pooling tap of every branch.
        #    HIGHEST precision + one-hot RHS => exact value transport.
        g = jnp.dot(x, g_ref[...],
                    precision=jax.lax.Precision.HIGHEST,
                    preferred_element_type=jnp.float32)      # (n_blk*C, 850)

        # 2) Per-branch running max over its k*k tap slices (static lane slices,
        #    VPU max; the MXU chain from the old 74-matmul version is gone).
        segs = []
        for br, (pk, taps) in enumerate(zip(pks, tap_counts)):
            base = gather_off[br]
            seg = g[:, base:base + pk]
            for t in range(1, taps):
                seg = jnp.maximum(seg, g[:, base + t * pk:base + (t + 1) * pk])
            segs.append(seg)
        pooled = jnp.concatenate(segs, axis=-1)               # (n_blk*C, 102)

        # 3) Shared 1x1 conv (C -> 1) for every image at once: one matmul against
        #    the block-diagonal kron(I, w) weight matrix.
        conv_all = jnp.dot(wblk_ref[...], pooled,
                           precision=jax.lax.Precision.HIGHEST,
                           preferred_element_type=jnp.float32)  # (n_blk, 102)

        bias = b_ref[0]
        mask = mask_ref[...]                                   # (nb, 102)
        up_mat = up_ref[...]                                   # (102, P)

        # 4) Per image: block-sparse row tile -> ONE fused upsample matmul ->
        #    ONE full-tile (C+nb, P) store (branches + identity passthrough).
        for m in range(n_blk):
            y_blk = conv_all[m:m + 1, :] * mask                # (nb, 102)
            up = jnp.dot(y_blk, up_mat,
                         precision=jax.lax.Precision.HIGHEST,
                         preferred_element_type=jnp.float32)   # (nb, P)
            branches = (up + bias).astype(o_ref.dtype)
            identity = x_native[m * c:(m + 1) * c, :].astype(o_ref.dtype)
            o_ref[m] = jnp.concatenate([branches, identity], axis=0)

    return kernel


# ----------------------------------------------------------------------------
# Wrapper
# ----------------------------------------------------------------------------
def rmp_block(x, w, b, kernel_sizes=KERNEL_SIZES):
    """x: (N, C, H, W) f32; w: (1, C, 1, 1) conv weight; b: (1,) conv bias."""
    n, c, h, wd = x.shape
    p = h * wd
    nb = len(kernel_sizes)

    # Images per grid step: divisor of N that keeps the x block's sublane dim a
    # multiple of 8 (falls back to the whole batch, which is always legal).
    n_blk = n
    for cand in range(min(n, 8), 0, -1):
        if n % cand == 0 and (cand * c) % 8 == 0:
            n_blk = cand
            break

    gmat_np, up_np, mask_np, pks, taps = _rmp_constants(h, wd, kernel_sizes)
    gmat = jnp.asarray(gmat_np)
    up_all = jnp.asarray(up_np)
    mask = jnp.asarray(mask_np)

    x_flat = x.reshape(n * c, p)
    w_row = w.reshape(1, c).astype(jnp.float32)
    w_blk = jnp.kron(jnp.eye(n_blk, dtype=jnp.float32), w_row)  # (n_blk, n_blk*C)
    b_s = b.reshape(1).astype(jnp.float32)

    kernel = _make_rmp_kernel(c, n_blk, pks, taps)

    n_steps = n // n_blk
    tot = gmat_np.shape[1]          # 850
    l_tot = up_np.shape[0]          # 102

    flops_step = (2 * (n_blk * c) * p * tot
                  + 2 * n_blk * (n_blk * c) * l_tot
                  + 2 * n_blk * nb * l_tot * p)
    bytes_step = (4 * (n_blk * c * p + n_blk * (c + nb) * p)
                  + _padded_bytes(gmat_np.shape)
                  + _padded_bytes(up_np.shape)
                  + _padded_bytes(mask_np.shape)
                  + _padded_bytes((n_blk, n_blk * c)))

    out_flat = pl.pallas_call(
        kernel,
        out_shape=jax.ShapeDtypeStruct((n, c + nb, p), x.dtype),
        grid_spec=pltpu.PrefetchScalarGridSpec(
            num_scalar_prefetch=0,
            grid=(n_steps,),
            in_specs=[
                pl.BlockSpec((n_blk * c, p), lambda i: (i, 0)),      # x
                pl.BlockSpec(gmat.shape, lambda i: (0, 0)),          # gather
                pl.BlockSpec(up_all.shape, lambda i: (0, 0)),        # upsample
                pl.BlockSpec(mask.shape, lambda i: (0, 0)),          # branch mask
                pl.BlockSpec(w_blk.shape, lambda i: (0, 0)),         # conv weights
                pl.BlockSpec(memory_space=pltpu.MemorySpace.SMEM),   # bias
            ],
            out_specs=pl.BlockSpec((n_blk, c + nb, p), lambda i: (i, 0, 0)),
        ),
        compiler_params=pltpu.CompilerParams(
            dimension_semantics=("parallel",)),
        cost_estimate=pl.CostEstimate(
            flops=int(flops_step * n_steps),
            transcendentals=0,
            bytes_accessed=int(bytes_step * n_steps)),
    )(x_flat, gmat, up_all, mask, w_blk, b_s)

    return out_flat.reshape(n, c + nb, h, wd)


# ----------------------------------------------------------------------------
# Pure-JAX reference mirroring the PyTorch module
# ----------------------------------------------------------------------------
def _upsample_bilinear_ac_ref(img, out_h, out_w):
    """img: (N, h, w) -> (N, out_h, out_w), bilinear, align_corners=True."""
    _, h, w = img.shape
    if h > 1 and out_h > 1:
        ys = jnp.arange(out_h, dtype=jnp.float32) * ((h - 1) / (out_h - 1))
    else:
        ys = jnp.zeros((out_h,), jnp.float32)
    if w > 1 and out_w > 1:
        xs = jnp.arange(out_w, dtype=jnp.float32) * ((w - 1) / (out_w - 1))
    else:
        xs = jnp.zeros((out_w,), jnp.float32)
    y0 = jnp.clip(jnp.floor(ys).astype(jnp.int32), 0, h - 1)
    x0 = jnp.clip(jnp.floor(xs).astype(jnp.int32), 0, w - 1)
    y1 = jnp.minimum(y0 + 1, h - 1)
    x1 = jnp.minimum(x0 + 1, w - 1)
    ty = (ys - y0.astype(jnp.float32))[None, :, None]
    tx = (xs - x0.astype(jnp.float32))[None, None, :]

    def gather(yy, xx):
        return img[:, yy[:, None], xx[None, :]]

    top = gather(y0, x0) * (1.0 - tx) + gather(y0, x1) * tx
    bot = gather(y1, x0) * (1.0 - tx) + gather(y1, x1) * tx
    return top * (1.0 - ty) + bot * ty


def rmp_block_ref(x, w, b, kernel_sizes=KERNEL_SIZES):
    n, c, h, wd = x.shape
    w_vec = w.reshape(c).astype(jnp.float32)
    outs = []
    for k in kernel_sizes:
        pooled = jax.lax.reduce_window(
            x, -jnp.inf, jax.lax.max,
            window_dimensions=(1, 1, k, k),
            window_strides=(1, 1, k, k),
            padding="VALID")                                    # (N, C, Hk, Wk)
        conv = jnp.sum(pooled * w_vec[None, :, None, None], axis=1) + b[0]
        up = _upsample_bilinear_ac_ref(conv, h, wd)             # (N, H, W)
        outs.append(up[:, None, :, :])
    outs.append(x)
    return jnp.concatenate(outs, axis=1)


# ----------------------------------------------------------------------------
if __name__ == "__main__":
    key = jax.random.PRNGKey(0)
    kx, kw, kb = jax.random.split(key, 3)

    N, C, H, W = 2, 4, 16, 16
    x = jax.random.normal(kx, (N, C, H, W), dtype=jnp.float32)

    # nn.Conv2d(C, 1, kernel_size=1) default init: uniform(-1/sqrt(fan_in), ...)
    fan_in = C * 1 * 1
    bound = 1.0 / (fan_in ** 0.5)
    w = jax.random.uniform(kw, (1, C, 1, 1), jnp.float32, -bound, bound)
    b = jax.random.uniform(kb, (1,), jnp.float32, -bound, bound)

    out = jax.block_until_ready(rmp_block(x, w, b))
    ref = rmp_block_ref(x, w, b)

    assert out.shape == (N, C + len(KERNEL_SIZES), H, W)
    assert jnp.allclose(out, ref, atol=1e-3, rtol=1e-3), "mismatch vs reference"

    print("KERNEL_OK")
</pallas_src>

<mosaic_0001>
module attributes {stable_mosaic.version = 11 : i64} {
  func.func @kernel(%arg0: i32, %arg1: memref<8x256xf32, #tpu.memory_space<vmem>>, %arg2: memref<256x850xf32, #tpu.memory_space<vmem>>, %arg3: memref<102x256xf32, #tpu.memory_space<vmem>>, %arg4: memref<4x102xf32, #tpu.memory_space<vmem>>, %arg5: memref<2x8xf32, #tpu.memory_space<vmem>>, %arg6: memref<1xf32, #tpu.memory_space<smem>>, %arg7: memref<2x8x256xf32, #tpu.memory_space<vmem>>) attributes {dimension_semantics = [#tpu.dimension_semantics<parallel>], iteration_bounds = array<i64: 1>, scalar_prefetch = 0 : i64, scratch_operands = 0 : i64, tpu.core_type = #tpu.core_type<tc>, window_params = [{transform_indices = @transform_0, window_bounds = array<i64: 8, 256>}, {pipeline_mode = #tpu.pipeline_mode<synchronous>, transform_indices = @transform_1, window_bounds = array<i64: 256, 850>}, {pipeline_mode = #tpu.pipeline_mode<synchronous>, transform_indices = @transform_2, window_bounds = array<i64: 102, 256>}, {pipeline_mode = #tpu.pipeline_mode<synchronous>, transform_indices = @transform_3, window_bounds = array<i64: 4, 102>}, {pipeline_mode = #tpu.pipeline_mode<synchronous>, transform_indices = @transform_4, window_bounds = array<i64: 2, 8>}, {transform_indices = @transform_5, window_bounds = array<i64: 1>}, {transform_indices = @transform_6, window_bounds = array<i64: 2, 8, 256>}]} {
    %c0 = arith.constant 0 : index
    %c0_0 = arith.constant 0 : index
    %0 = vector.load %arg1[%c0, %c0_0] : memref<8x256xf32, #tpu.memory_space<vmem>>, vector<8x256xf32>
    %c0_1 = arith.constant 0 : index
    %c0_2 = arith.constant 0 : index
    %1 = vector.load %arg2[%c0_1, %c0_2] : memref<256x850xf32, #tpu.memory_space<vmem>>, vector<256x850xf32>
    %cst = arith.constant dense<0.000000e+00> : vector<8x850xf32>
    %2 = tpu.matmul %0, %1, %cst {dimension_numbers = #tpu.dot_dimension_numbers<[1], [0], [0], [1], [0, 0, 1, 1], [], []>, precision = #tpu.contract_precision<fp32>} : vector<8x256xf32>, vector<256x850xf32>, vector<8x850xf32> -> vector<8x850xf32>
    %3 = vector.extract_strided_slice %2 {offsets = [0, 0], sizes = [8, 64], strides = [1, 1]} : vector<8x850xf32> to vector<8x64xf32>
    %4 = vector.extract_strided_slice %2 {offsets = [0, 64], sizes = [8, 64], strides = [1, 1]} : vector<8x850xf32> to vector<8x64xf32>
    %5 = arith.maximumf %3, %4 : vector<8x64xf32>
    %6 = vector.extract_strided_slice %2 {offsets = [0, 128], sizes = [8, 64], strides = [1, 1]} : vector<8x850xf32> to vector<8x64xf32>
    %7 = arith.maximumf %5, %6 : vector<8x64xf32>
    %8 = vector.extract_strided_slice %2 {offsets = [0, 192], sizes = [8, 64], strides = [1, 1]} : vector<8x850xf32> to vector<8x64xf32>
    %9 = arith.maximumf %7, %8 : vector<8x64xf32>
    %10 = vector.extract_strided_slice %2 {offsets = [0, 256], sizes = [8, 25], strides = [1, 1]} : vector<8x850xf32> to vector<8x25xf32>
    %11 = vector.extract_strided_slice %2 {offsets = [0, 281], sizes = [8, 25], strides = [1, 1]} : vector<8x850xf32> to vector<8x25xf32>
    %12 = arith.maximumf %10, %11 : vector<8x25xf32>
    %13 = vector.extract_strided_slice %2 {offsets = [0, 306], sizes = [8, 25], strides = [1, 1]} : vector<8x850xf32> to vector<8x25xf32>
    %14 = arith.maximumf %12, %13 : vector<8x25xf32>
    %15 = vector.extract_strided_slice %2 {offsets = [0, 331], sizes = [8, 25], strides = [1, 1]} : vector<8x850xf32> to vector<8x25xf32>
    %16 = arith.maximumf %14, %15 : vector<8x25xf32>
    %17 = vector.extract_strided_slice %2 {offsets = [0, 356], sizes = [8, 25], strides = [1, 1]} : vector<8x850xf32> to vector<8x25xf32>
    %18 = arith.maximumf %16, %17 : vector<8x25xf32>
    %19 = vector.extract_strided_slice %2 {offsets = [0, 381], sizes = [8, 25], strides = [1, 1]} : vector<8x850xf32> to vector<8x25xf32>
    %20 = arith.maximumf %18, %19 : vector<8x25xf32>
    %21 = vector.extract_strided_slice %2 {offsets = [0, 406], sizes = [8, 25], strides = [1, 1]} : vector<8x850xf32> to vector<8x25xf32>
    %22 = arith.maximumf %20, %21 : vector<8x25xf32>
    %23 = vector.extract_strided_slice %2 {offsets = [0, 431], sizes = [8, 25], strides = [1, 1]} : vector<8x850xf32> to vector<8x25xf32>
    %24 = arith.maximumf %22, %23 : vector<8x25xf32>
    %25 = vector.extract_strided_slice %2 {offsets = [0, 456], sizes = [8, 25], strides = [1, 1]} : vector<8x850xf32> to vector<8x25xf32>
    %26 = arith.maximumf %24, %25 : vector<8x25xf32>
    %27 = vector.extract_strided_slice %2 {offsets = [0, 481], sizes = [8, 9], strides = [1, 1]} : vector<8x850xf32> to vector<8x9xf32>
    %28 = vector.extract_strided_slice %2 {offsets = [0, 490], sizes = [8, 9], strides = [1, 1]} : vector<8x850xf32> to vector<8x9xf32>
    %29 = arith.maximumf %27, %28 : vector<8x9xf32>
    %30 = vector.extract_strided_slice %2 {offsets = [0, 499], sizes = [8, 9], strides = [1, 1]} : vector<8x850xf32> to vector<8x9xf32>
    %31 = arith.maximumf %29, %30 : vector<8x9xf32>
    %32 = vector.extract_strided_slice %2 {offsets = [0, 508], sizes = [8, 9], strides = [1, 1]} : vector<8x850xf32> to vector<8x9xf32>
    %33 = arith.maximumf %31, %32 : vector<8x9xf32>
    %34 = vector.extract_strided_slice %2 {offsets = [0, 517], sizes = [8, 9], strides = [1, 1]} : vector<8x850xf32> to vector<8x9xf32>
    %35 = arith.maximumf %33, %34 : vector<8x9xf32>
    %36 = vector.extract_strided_slice %2 {offsets = [0, 526], sizes = [8, 9], strides = [1, 1]} : vector<8x850xf32> to vector<8x9xf32>
    %37 = arith.maximumf %35, %36 : vector<8x9xf32>
    %38 = vector.extract_strided_slice %2 {offsets = [0, 535], sizes = [8, 9], strides = [1, 1]} : vector<8x850xf32> to vector<8x9xf32>
    %39 = arith.maximumf %37, %38 : vector<8x9xf32>
    %40 = vector.extract_strided_slice %2 {offsets = [0, 544], sizes = [8, 9], strides = [1, 1]} : vector<8x850xf32> to vector<8x9xf32>
    %41 = arith.maximumf %39, %40 : vector<8x9xf32>
    %42 = vector.extract_strided_slice %2 {offsets = [0, 553], sizes = [8, 9], strides = [1, 1]} : vector<8x850xf32> to vector<8x9xf32>
    %43 = arith.maximumf %41, %42 : vector<8x9xf32>
    %44 = vector.extract_strided_slice %2 {offsets = [0, 562], sizes = [8, 9], strides = [1, 1]} : vector<8x850xf32> to vector<8x9xf32>
    %45 = arith.maximumf %43, %44 : vector<8x9xf32>
    %46 = vector.extract_strided_slice %2 {offsets = [0, 571], sizes = [8, 9], strides = [1, 1]} : vector<8x850xf32> to vector<8x9xf32>
    %47 = arith.maximumf %45, %46 : vector<8x9xf32>
    %48 = vector.extract_strided_slice %2 {offsets = [0, 580], sizes = [8, 9], strides = [1, 1]} : vector<8x850xf32> to vector<8x9xf32>
    %49 = arith.maximumf %47, %48 : vector<8x9xf32>
    %50 = vector.extract_strided_slice %2 {offsets = [0, 589], sizes = [8, 9], strides = [1, 1]} : vector<8x850xf32> to vector<8x9xf32>
    %51 = arith.maximumf %49, %50 : vector<8x9xf32>
    %52 = vector.extract_strided_slice %2 {offsets = [0, 598], sizes = [8, 9], strides = [1, 1]} : vector<8x850xf32> to vector<8x9xf32>
    %53 = arith.maximumf %51, %52 : vector<8x9xf32>
    %54 = vector.extract_strided_slice %2 {offsets = [0, 607], sizes = [8, 9], strides = [1, 1]} : vector<8x850xf32> to vector<8x9xf32>
    %55 = arith.maximumf %53, %54 : vector<8x9xf32>
    %56 = vector.extract_strided_slice %2 {offsets = [0, 616], sizes = [8, 9], strides = [1, 1]} : vector<8x850xf32> to vector<8x9xf32>
    %57 = arith.maximumf %55, %56 : vector<8x9xf32>
    %58 = vector.extract_strided_slice %2 {offsets = [0, 625], sizes = [8, 9], strides = [1, 1]} : vector<8x850xf32> to vector<8x9xf32>
    %59 = arith.maximumf %57, %58 : vector<8x9xf32>
    %60 = vector.extract_strided_slice %2 {offsets = [0, 634], sizes = [8, 9], strides = [1, 1]} : vector<8x850xf32> to vector<8x9xf32>
    %61 = arith.maximumf %59, %60 : vector<8x9xf32>
    %62 = vector.extract_strided_slice %2 {offsets = [0, 643], sizes = [8, 9], strides = [1, 1]} : vector<8x850xf32> to vector<8x9xf32>
    %63 = arith.maximumf %61, %62 : vector<8x9xf32>
    %64 = vector.extract_strided_slice %2 {offsets = [0, 652], sizes = [8, 9], strides = [1, 1]} : vector<8x850xf32> to vector<8x9xf32>
    %65 = arith.maximumf %63, %64 : vector<8x9xf32>
    %66 = vector.extract_strided_slice %2 {offsets = [0, 661], sizes = [8, 9], strides = [1, 1]} : vector<8x850xf32> to vector<8x9xf32>
    %67 = arith.maximumf %65, %66 : vector<8x9xf32>
    %68 = vector.extract_strided_slice %2 {offsets = [0, 670], sizes = [8, 9], strides = [1, 1]} : vector<8x850xf32> to vector<8x9xf32>
    %69 = arith.maximumf %67, %68 : vector<8x9xf32>
    %70 = vector.extract_strided_slice %2 {offsets = [0, 679], sizes = [8, 9], strides = [1, 1]} : vector<8x850xf32> to vector<8x9xf32>
    %71 = arith.maximumf %69, %70 : vector<8x9xf32>
    %72 = vector.extract_strided_slice %2 {offsets = [0, 688], sizes = [8, 9], strides = [1, 1]} : vector<8x850xf32> to vector<8x9xf32>
    %73 = arith.maximumf %71, %72 : vector<8x9xf32>
    %74 = vector.extract_strided_slice %2 {offsets = [0, 697], sizes = [8, 9], strides = [1, 1]} : vector<8x850xf32> to vector<8x9xf32>
    %75 = arith.maximumf %73, %74 : vector<8x9xf32>
    %76 = vector.extract_strided_slice %2 {offsets = [0, 706], sizes = [8, 4], strides = [1, 1]} : vector<8x850xf32> to vector<8x4xf32>
    %77 = vector.extract_strided_slice %2 {offsets = [0, 710], sizes = [8, 4], strides = [1, 1]} : vector<8x850xf32> to vector<8x4xf32>
    %78 = arith.maximumf %76, %77 : vector<8x4xf32>
    %79 = vector.extract_strided_slice %2 {offsets = [0, 714], sizes = [8, 4], strides = [1, 1]} : vector<8x850xf32> to vector<8x4xf32>
    %80 = arith.maximumf %78, %79 : vector<8x4xf32>
    %81 = vector.extract_strided_slice %2 {offsets = [0, 718], sizes = [8, 4], strides = [1, 1]} : vector<8x850xf32> to vector<8x4xf32>
    %82 = arith.maximumf %80, %81 : vector<8x4xf32>
    %83 = vector.extract_strided_slice %2 {offsets = [0, 722], sizes = [8, 4], strides = [1, 1]} : vector<8x850xf32> to vector<8x4xf32>
    %84 = arith.maximumf %82, %83 : vector<8x4xf32>
    %85 = vector.extract_strided_slice %2 {offsets = [0, 726], sizes = [8, 4], strides = [1, 1]} : vector<8x850xf32> to vector<8x4xf32>
    %86 = arith.maximumf %84, %85 : vector<8x4xf32>
    %87 = vector.extract_strided_slice %2 {offsets = [0, 730], sizes = [8, 4], strides = [1, 1]} : vector<8x850xf32> to vector<8x4xf32>
    %88 = arith.maximumf %86, %87 : vector<8x4xf32>
    %89 = vector.extract_strided_slice %2 {offsets = [0, 734], sizes = [8, 4], strides = [1, 1]} : vector<8x850xf32> to vector<8x4xf32>
    %90 = arith.maximumf %88, %89 : vector<8x4xf32>
    %91 = vector.extract_strided_slice %2 {offsets = [0, 738], sizes = [8, 4], strides = [1, 1]} : vector<8x850xf32> to vector<8x4xf32>
    %92 = arith.maximumf %90, %91 : vector<8x4xf32>
    %93 = vector.extract_strided_slice %2 {offsets = [0, 742], sizes = [8, 4], strides = [1, 1]} : vector<8x850xf32> to vector<8x4xf32>
    %94 = arith.maximumf %92, %93 : vector<8x4xf32>
    %95 = vector.extract_strided_slice %2 {offsets = [0, 746], sizes = [8, 4], strides = [1, 1]} : vector<8x850xf32> to vector<8x4xf32>
    %96 = arith.maximumf %94, %95 : vector<8x4xf32>
    %97 = vector.extract_strided_slice %2 {offsets = [0, 750], sizes = [8, 4], strides = [1, 1]} : vector<8x850xf32> to vector<8x4xf32>
    %98 = arith.maximumf %96, %97 : vector<8x4xf32>
    %99 = vector.extract_strided_slice %2 {offsets = [0, 754], sizes = [8, 4], strides = [1, 1]} : vector<8x850xf32> to vector<8x4xf32>
    %100 = arith.maximumf %98, %99 : vector<8x4xf32>
    %101 = vector.extract_strided_slice %2 {offsets = [0, 758], sizes = [8, 4], strides = [1, 1]} : vector<8x850xf32> to vector<8x4xf32>
    %102 = arith.maximumf %100, %101 : vector<8x4xf32>
    %103 = vector.extract_strided_slice %2 {offsets = [0, 762], sizes = [8, 4], strides = [1, 1]} : vector<8x850xf32> to vector<8x4xf32>
    %104 = arith.maximumf %102, %103 : vector<8x4xf32>
    %105 = vector.extract_strided_slice %2 {offsets = [0, 766], sizes = [8, 4], strides = [1, 1]} : vector<8x850xf32> to vector<8x4xf32>
    %106 = arith.maximumf %104, %105 : vector<8x4xf32>
    %107 = vector.extract_strided_slice %2 {offsets = [0, 770], sizes = [8, 4], strides = [1, 1]} : vector<8x850xf32> to vector<8x4xf32>
    %108 = arith.maximumf %106, %107 : vector<8x4xf32>
    %109 = vector.extract_strided_slice %2 {offsets = [0, 774], sizes = [8, 4], strides = [1, 1]} : vector<8x850xf32> to vector<8x4xf32>
    %110 = arith.maximumf %108, %109 : vector<8x4xf32>
    %111 = vector.extract_strided_slice %2 {offsets = [0, 778], sizes = [8, 4], strides = [1, 1]} : vector<8x850xf32> to vector<8x4xf32>
    %112 = arith.maximumf %110, %111 : vector<8x4xf32>
    %113 = vector.extract_strided_slice %2 {offsets = [0, 782], sizes = [8, 4], strides = [1, 1]} : vector<8x850xf32> to vector<8x4xf32>
    %114 = arith.maximumf %112, %113 : vector<8x4xf32>
    %115 = vector.extract_strided_slice %2 {offsets = [0, 786], sizes = [8, 4], strides = [1, 1]} : vector<8x850xf32> to vector<8x4xf32>
    %116 = arith.maximumf %114, %115 : vector<8x4xf32>
    %117 = vector.extract_strided_slice %2 {offsets = [0, 790], sizes = [8, 4], strides = [1, 1]} : vector<8x850xf32> to vector<8x4xf32>
    %118 = arith.maximumf %116, %117 : vector<8x4xf32>
    %119 = vector.extract_strided_slice %2 {offsets = [0, 794], sizes = [8, 4], strides = [1, 1]} : vector<8x850xf32> to vector<8x4xf32>
    %120 = arith.maximumf %118, %119 : vector<8x4xf32>
    %121 = vector.extract_strided_slice %2 {offsets = [0, 798], sizes = [8, 4], strides = [1, 1]} : vector<8x850xf32> to vector<8x4xf32>
    %122 = arith.maximumf %120, %121 : vector<8x4xf32>
    %123 = vector.extract_strided_slice %2 {offsets = [0, 802], sizes = [8, 4], strides = [1, 1]} : vector<8x850xf32> to vector<8x4xf32>
    %124 = arith.maximumf %122, %123 : vector<8x4xf32>
    %125 = vector.extract_strided_slice %2 {offsets = [0, 806], sizes = [8, 4], strides = [1, 1]} : vector<8x850xf32> to vector<8x4xf32>
    %126 = arith.maximumf %124, %125 : vector<8x4xf32>
    %127 = vector.extract_strided_slice %2 {offsets = [0, 810], sizes = [8, 4], strides = [1, 1]} : vector<8x850xf32> to vector<8x4xf32>
    %128 = arith.maximumf %126, %127 : vector<8x4xf32>
    %129 = vector.extract_strided_slice %2 {offsets = [0, 814], sizes = [8, 4], strides = [1, 1]} : vector<8x850xf32> to vector<8x4xf32>
    %130 = arith.maximumf %128, %129 : vector<8x4xf32>
    %131 = vector.extract_strided_slice %2 {offsets = [0, 818], sizes = [8, 4], strides = [1, 1]} : vector<8x850xf32> to vector<8x4xf32>
    %132 = arith.maximumf %130, %131 : vector<8x4xf32>
    %133 = vector.extract_strided_slice %2 {offsets = [0, 822], sizes = [8, 4], strides = [1, 1]} : vector<8x850xf32> to vector<8x4xf32>
    %134 = arith.maximumf %132, %133 : vector<8x4xf32>
    %135 = vector.extract_strided_slice %2 {offsets = [0, 826], sizes = [8, 4], strides = [1, 1]} : vector<8x850xf32> to vector<8x4xf32>
    %136 = arith.maximumf %134, %135 : vector<8x4xf32>
    %137 = vector.extract_strided_slice %2 {offsets = [0, 830], sizes = [8, 4], strides = [1, 1]} : vector<8x850xf32> to vector<8x4xf32>
    %138 = arith.maximumf %136, %137 : vector<8x4xf32>
    %139 = vector.extract_strided_slice %2 {offsets = [0, 834], sizes = [8, 4], strides = [1, 1]} : vector<8x850xf32> to vector<8x4xf32>
    %140 = arith.maximumf %138, %139 : vector<8x4xf32>
    %141 = vector.extract_strided_slice %2 {offsets = [0, 838], sizes = [8, 4], strides = [1, 1]} : vector<8x850xf32> to vector<8x4xf32>
    %142 = arith.maximumf %140, %141 : vector<8x4xf32>
    %143 = vector.extract_strided_slice %2 {offsets = [0, 842], sizes = [8, 4], strides = [1, 1]} : vector<8x850xf32> to vector<8x4xf32>
    %144 = arith.maximumf %142, %143 : vector<8x4xf32>
    %145 = vector.extract_strided_slice %2 {offsets = [0, 846], sizes = [8, 4], strides = [1, 1]} : vector<8x850xf32> to vector<8x4xf32>
    %146 = arith.maximumf %144, %145 : vector<8x4xf32>
    %147 = tpu.concatenate %9, %26, %75, %146 in 1 : vector<8x64xf32>, vector<8x25xf32>, vector<8x9xf32>, vector<8x4xf32> -> vector<8x102xf32>
    %c0_3 = arith.constant 0 : index
    %c0_4 = arith.constant 0 : index
    %148 = vector.load %arg5[%c0_3, %c0_4] : memref<2x8xf32, #tpu.memory_space<vmem>>, vector<2x8xf32>
    %cst_5 = arith.constant dense<0.000000e+00> : vector<2x102xf32>
    %149 = tpu.matmul %148, %147, %cst_5 {dimension_numbers = #tpu.dot_dimension_numbers<[1], [0], [0], [1], [0, 0, 1, 1], [], []>, precision = #tpu.contract_precision<fp32>} : vector<2x8xf32>, vector<8x102xf32>, vector<2x102xf32> -> vector<2x102xf32>
    %c0_6 = arith.constant 0 : index
    %150 = memref.load %arg6[%c0_6] : memref<1xf32, #tpu.memory_space<smem>>
    %c0_7 = arith.constant 0 : index
    %c0_8 = arith.constant 0 : index
    %151 = vector.load %arg4[%c0_7, %c0_8] : memref<4x102xf32, #tpu.memory_space<vmem>>, vector<4x102xf32>
    %c0_9 = arith.constant 0 : index
    %c0_10 = arith.constant 0 : index
    %152 = vector.load %arg3[%c0_9, %c0_10] : memref<102x256xf32, #tpu.memory_space<vmem>>, vector<102x256xf32>
    %153 = vector.extract_strided_slice %149 {offsets = [0, 0], sizes = [1, 102], strides = [1, 1]} : vector<2x102xf32> to vector<1x102xf32>
    %154 = vector.broadcast %153 : vector<1x102xf32> to vector<4x102xf32>
    %155 = arith.mulf %154, %151 : vector<4x102xf32>
    %cst_11 = arith.constant dense<0.000000e+00> : vector<4x256xf32>
    %156 = tpu.matmul %155, %152, %cst_11 {dimension_numbers = #tpu.dot_dimension_numbers<[1], [0], [0], [1], [0, 0, 1, 1], [], []>, precision = #tpu.contract_precision<fp32>} : vector<4x102xf32>, vector<102x256xf32>, vector<4x256xf32> -> vector<4x256xf32>
    %157 = vector.broadcast %150 : f32 to vector<4x256xf32>
    %158 = arith.addf %156, %157 : vector<4x256xf32>
    %159 = vector.extract_strided_slice %0 {offsets = [0, 0], sizes = [4, 256], strides = [1, 1]} : vector<8x256xf32> to vector<4x256xf32>
    %160 = tpu.concatenate %158, %159 in 0 : vector<4x256xf32>, vector<4x256xf32> -> vector<8x256xf32>
    %c0_12 = arith.constant 0 : index
    %c0_13 = arith.constant 0 : index
    %c0_14 = arith.constant 0 : index
    %161 = vector.load %arg7[%c0_12, %c0_13, %c0_14] : memref<2x8x256xf32, #tpu.memory_space<vmem>>, vector<1x8x256xf32>
    %162 = vector.shape_cast %161 : vector<1x8x256xf32> to vector<8x256xf32>
    %163 = vector.shape_cast %160 : vector<8x256xf32> to vector<1x8x256xf32>
    tpu.vector_store %arg7[%c0_12, %c0_13, %c0_14], %163 {strides = array<i32>} : memref<2x8x256xf32, #tpu.memory_space<vmem>>, vector<1x8x256xf32>,
    %164 = vector.extract_strided_slice %149 {offsets = [1, 0], sizes = [1, 102], strides = [1, 1]} : vector<2x102xf32> to vector<1x102xf32>
    %165 = vector.broadcast %164 : vector<1x102xf32> to vector<4x102xf32>
    %166 = arith.mulf %165, %151 : vector<4x102xf32>
    %cst_15 = arith.constant dense<0.000000e+00> : vector<4x256xf32>
    %167 = tpu.matmul %166, %152, %cst_15 {dimension_numbers = #tpu.dot_dimension_numbers<[1], [0], [0], [1], [0, 0, 1, 1], [], []>, precision = #tpu.contract_precision<fp32>} : vector<4x102xf32>, vector<102x256xf32>, vector<4x256xf32> -> vector<4x256xf32>
    %168 = vector.broadcast %150 : f32 to vector<4x256xf32>
    %169 = arith.addf %167, %168 : vector<4x256xf32>
    %170 = vector.extract_strided_slice %0 {offsets = [4, 0], sizes = [4, 256], strides = [1, 1]} : vector<8x256xf32> to vector<4x256xf32>
    %171 = tpu.concatenate %169, %170 in 0 : vector<4x256xf32>, vector<4x256xf32> -> vector<8x256xf32>
    %c1 = arith.constant 1 : index
    %c0_16 = arith.constant 0 : index
    %c0_17 = arith.constant 0 : index
    %172 = vector.load %arg7[%c1, %c0_16, %c0_17] : memref<2x8x256xf32, #tpu.memory_space<vmem>>, vector<1x8x256xf32>
    %173 = vector.shape_cast %172 : vector<1x8x256xf32> to vector<8x256xf32>
    %174 = vector.shape_cast %171 : vector<8x256xf32> to vector<1x8x256xf32>
    tpu.vector_store %arg7[%c1, %c0_16, %c0_17], %174 {strides = array<i32>} : memref<2x8x256xf32, #tpu.memory_space<vmem>>, vector<1x8x256xf32>,
    return
  }
  func.func @transform_0(%arg0: i32) -> (i32, i32) {
    %c0_i32 = arith.constant 0 : i32
    %c0_i32_0 = arith.constant 0 : i32
    return %arg0, %c0_i32 : i32, i32
  }
  func.func @transform_1(%arg0: i32) -> (i32, i32) {
    %c0_i32 = arith.constant 0 : i32
    %c0_i32_0 = arith.constant 0 : i32
    %c0_i32_1 = arith.constant 0 : i32
    return %c0_i32, %c0_i32_0 : i32, i32
  }
  func.func @transform_2(%arg0: i32) -> (i32, i32) {
    %c0_i32 = arith.constant 0 : i32
    %c0_i32_0 = arith.constant 0 : i32
    %c0_i32_1 = arith.constant 0 : i32
    return %c0_i32, %c0_i32_0 : i32, i32
  }
  func.func @transform_3(%arg0: i32) -> (i32, i32) {
    %c0_i32 = arith.constant 0 : i32
    %c0_i32_0 = arith.constant 0 : i32
    %c0_i32_1 = arith.constant 0 : i32
    return %c0_i32, %c0_i32_0 : i32, i32
  }
  func.func @transform_4(%arg0: i32) -> (i32, i32) {
    %c0_i32 = arith.constant 0 : i32
    %c0_i32_0 = arith.constant 0 : i32
    %c0_i32_1 = arith.constant 0 : i32
    return %c0_i32, %c0_i32_0 : i32, i32
  }
  func.func @transform_5(%arg0: i32) -> i32 {
    %c0_i32 = arith.constant 0 : i32
    %c0_i32_0 = arith.constant 0 : i32
    return %c0_i32 : i32
  }
  func.func @transform_6(%arg0: i32) -> (i32, i32, i32) {
    %c0_i32 = arith.constant 0 : i32
    %c0_i32_0 = arith.constant 0 : i32
    %c0_i32_1 = arith.constant 0 : i32
    return %arg0, %c0_i32, %c0_i32_0 : i32, i32, i32
  }
}

</mosaic_0001>

<llo_original>
// kernel: tpu_custom_call.1
$region0: #{tpu_custom_call.1}
  #allocation0 [shape = 'u32[]', space=smem, size = 0x4, offset = 0x4, fixed_abs, tag = 'smem constant byte address 0x4 - core index']
  #allocation1 [shape = 'u32[72,128]{1,0:T(1,128)}', space=vmem, size = 0x9000, scoped, tag = 'internal scratch']
  #allocation2 [shape = 'f32[1]{0:T(128)S(6)}', space=smem, size = 0x200, scoped, tag = 'scoped memory for tpu_custom_call.1']
  %s0 = inlined_call_operand.vmem [shape: f32[8,256], index: 0, kind: input, shape index: {}]
  %s1 = inlined_call_operand.vmem [shape: f32[256,850], index: 1, kind: input, shape index: {}]
  %s2 = inlined_call_operand.vmem [shape: f32[102,256], index: 2, kind: input, shape index: {}]
  %s3 = inlined_call_operand.vmem [shape: f32[4,102], index: 3, kind: input, shape index: {}]
  %s4 = inlined_call_operand.vmem [shape: f32[2,8], index: 4, kind: input, shape index: {}]
  %s5 = inlined_call_operand.<no memory space> [shape: f32[1], index: 5, kind: input, shape index: {}]
  %s6 = inlined_call_operand.hbm [shape: f32[2,8,256], index: 6, kind: output, shape index: {}]
  %s7 = sld [smem:[#allocation0]]
  $region34: #{tpu_custom_call.1} parent=0
    _
  %s9 = ssub.s32 1, %s7
  %s10 = scalar_select 0, %s9, %s7
  %11 = sst [smem:[#allocation2]] %s5
  $region1: #{tpu_custom_call.1} parent=0
    #allocation3 [shape = 'u8[16384]{0}', space=vmem, size = 0x4000, scoped, tag = 'output window, operand 0, single buffered']
    #allocation4 [shape = 's32[1]{0}', space=sflag, size = 0x4, scoped, tag = 'scoped memory for tpu_custom_call.1']
    %12 = vsyncpa [#allocation4], 0
    // Predicated region
    $region2: #{tpu_custom_call.1} parent=1 // pred_check
      _
    $region3: #{tpu_custom_call.1} parent=1 // pred_check_branch
      %14 = sbr.rel (0) target = $region5
    $region4: #{tpu_custom_call.1} parent=1 // pred_region
      _
    $region5: #{tpu_custom_call.1} parent=1 // pred_fallthru
      _
    // Predicated region
    $region6: #{tpu_custom_call.1} parent=1 // pred_check
      _
    $region7: #{tpu_custom_call.1} parent=1 // pred_check_branch
      %16 = sbr.rel (0) target = $region9
    $region8: #{tpu_custom_call.1} parent=1 // pred_region
      _
    $region9: #{tpu_custom_call.1} parent=1 // pred_fallthru
      _
    // Predicated region
    $region10: #{tpu_custom_call.1} parent=1 // pred_check
      _
    $region11: #{tpu_custom_call.1} parent=1 // pred_check_branch
      %18 = sbr.rel (0) target = $region13
    $region12: #{tpu_custom_call.1} parent=1 // pred_region
      _
    $region13: #{tpu_custom_call.1} parent=1 // pred_fallthru
      _
    // Predicated region
    $region14: #{tpu_custom_call.1} parent=1 // pred_check
      _
    $region15: #{tpu_custom_call.1} parent=1 // pred_check_branch
      %20 = sbr.rel (0) target = $region17
    $region16: #{tpu_custom_call.1} parent=1 // pred_region
      _
    $region17: #{tpu_custom_call.1} parent=1 // pred_fallthru
      _
    // Predicated region
    $region18: #{tpu_custom_call.1} parent=1 // pred_check
      _
    $region19: #{tpu_custom_call.1} parent=1 // pred_check_branch
      %22 = sbr.rel (0) target = $region21
    $region20: #{tpu_custom_call.1} parent=1 // pred_region
      _
    $region21: #{tpu_custom_call.1} parent=1 // pred_fallthru
      _
    // Predicated region
    $region22: #{tpu_custom_call.1} parent=1 // pred_check
      _
    $region23: #{tpu_custom_call.1} parent=1 // pred_check_branch
      %24 = sbr.rel (0) target = $region25
    $region24: #{tpu_custom_call.1} parent=1 // pred_region
      _
    $region25: #{tpu_custom_call.1} parent=1 // pred_fallthru
      _
    %v25 = vld [vmem:[%s0] sm:$0xff]
    %v26 = vld [vmem:[%s0 + $0x8] sm:$0xff]
    %v27 = vld [vmem:[%s1] sm:$0xff]
    %v28 = vld [vmem:[%s1 + $0x8] sm:$0xff]
    %v29 = vld [vmem:[%s1 + $0x10] sm:$0xff]
    %v30 = vld [vmem:[%s1 + $0x18] sm:$0xff]
    %v31 = vld [vmem:[%s1 + $0x20] sm:$0xff]
    %v32 = vld [vmem:[%s1 + $0x28] sm:$0xff]
    %v33 = vld [vmem:[%s1 + $0x30] sm:$0xff]
    %v34 = vld [vmem:[%s1 + $0x38] sm:$0xff]
    %v35 = vld [vmem:[%s1 + $0x40] sm:$0xff]
    %v36 = vld [vmem:[%s1 + $0x48] sm:$0xff]
    %v37 = vld [vmem:[%s1 + $0x50] sm:$0xff]
    %v38 = vld [vmem:[%s1 + $0x58] sm:$0xff]
    %v39 = vld [vmem:[%s1 + $0x60] sm:$0xff]
    %v40 = vld [vmem:[%s1 + $0x68] sm:$0xff]
    %v41 = vld [vmem:[%s1 + $0x70] sm:$0xff]
    %v42 = vld [vmem:[%s1 + $0x78] sm:$0xff]
    %v43 = vld [vmem:[%s1 + $0x80] sm:$0xff]
    %v44 = vld [vmem:[%s1 + $0x88] sm:$0xff]
    %v45 = vld [vmem:[%s1 + $0x90] sm:$0xff]
    %v46 = vld [vmem:[%s1 + $0x98] sm:$0xff]
    %v47 = vld [vmem:[%s1 + $0xa0] sm:$0xff]
    %v48 = vld [vmem:[%s1 + $0xa8] sm:$0xff]
    %v49 = vld [vmem:[%s1 + $0xb0] sm:$0xff]
    %v50 = vld [vmem:[%s1 + $0xb8] sm:$0xff]
    %v51 = vld [vmem:[%s1 + $0xc0] sm:$0xff]
    %v52 = vld [vmem:[%s1 + $0xc8] sm:$0xff]
    %v53 = vld [vmem:[%s1 + $0xd0] sm:$0xff]
    %v54 = vld [vmem:[%s1 + $0xd8] sm:$0xff]
    %v55 = vld [vmem:[%s1 + $0xe0] sm:$0xff]
    %v56 = vld [vmem:[%s1 + $0xe8] sm:$0xff]
    %v57 = vld [vmem:[%s1 + $0xf0] sm:$0xff]
    %v58 = vld [vmem:[%s1 + $0xf8] sm:$0xff]
    %v59 = vld [vmem:[%s1 + $0x100] sm:$0xff]
    %v60 = vld [vmem:[%s1 + $0x108] sm:$0xff]
    %v61 = vld [vmem:[%s1 + $0x110] sm:$0xff]
    %v62 = vld [vmem:[%s1 + $0x118] sm:$0xff]
    %v63 = vld [vmem:[%s1 + $0x120] sm:$0xff]
    %v64 = vld [vmem:[%s1 + $0x128] sm:$0xff]
    %v65 = vld [vmem:[%s1 + $0x130] sm:$0xff]
    %v66 = vld [vmem:[%s1 + $0x138] sm:$0xff]
    %v67 = vld [vmem:[%s1 + $0x140] sm:$0xff]
    %v68 = vld [vmem:[%s1 + $0x148] sm:$0xff]
    %v69 = vld [vmem:[%s1 + $0x150] sm:$0xff]
    %v70 = vld [vmem:[%s1 + $0x158] sm:$0xff]
    %v71 = vld [vmem:[%s1 + $0x160] sm:$0xff]
    %v72 = vld [vmem:[%s1 + $0x168] sm:$0xff]
    %v73 = vld [vmem:[%s1 + $0x170] sm:$0xff]
    %v74 = vld [vmem:[%s1 + $0x178] sm:$0xff]
    %v75 = vld [vmem:[%s1 + $0x180] sm:$0xff]
    %v76 = vld [vmem:[%s1 + $0x188] sm:$0xff]
    %v77 = vld [vmem:[%s1 + $0x190] sm:$0xff]
    %v78 = vld [vmem:[%s1 + $0x198] sm:$0xff]
    %v79 = vld [vmem:[%s1 + $0x1a0] sm:$0xff]
    %v80 = vld [vmem:[%s1 + $0x1a8] sm:$0xff]
    %v81 = vld [vmem:[%s1 + $0x1b0] sm:$0xff]
    %v82 = vld [vmem:[%s1 + $0x1b8] sm:$0xff]
    %v83 = vld [vmem:[%s1 + $0x1c0] sm:$0xff]
    %v84 = vld [vmem:[%s1 + $0x1c8] sm:$0xff]
    %v85 = vld [vmem:[%s1 + $0x1d0] sm:$0xff]
    %v86 = vld [vmem:[%s1 + $0x1d8] sm:$0xff]
    %v87 = vld [vmem:[%s1 + $0x1e0] sm:$0xff]
    %v88 = vld [vmem:[%s1 + $0x1e8] sm:$0xff]
    %v89 = vld [vmem:[%s1 + $0x1f0] sm:$0xff]
    %v90 = vld [vmem:[%s1 + $0x1f8] sm:$0xff]
    %v91 = vld [vmem:[%s1 + $0x200] sm:$0xff]
    %v92 = vld [vmem:[%s1 + $0x208] sm:$0xff]
    %v93 = vld [vmem:[%s1 + $0x210] sm:$0xff]
    %v94 = vld [vmem:[%s1 + $0x218] sm:$0xff]
    %v95 = vld [vmem:[%s1 + $0x220] sm:$0xff]
    %v96 = vld [vmem:[%s1 + $0x228] sm:$0xff]
    %v97 = vld [vmem:[%s1 + $0x230] sm:$0xff]
    %v98 = vld [vmem:[%s1 + $0x238] sm:$0xff]
    %v99 = vld [vmem:[%s1 + $0x240] sm:$0xff]
    %v100 = vld [vmem:[%s1 + $0x248] sm:$0xff]
    %v101 = vld [vmem:[%s1 + $0x250] sm:$0xff]
    %v102 = vld [vmem:[%s1 + $0x258] sm:$0xff]
    %v103 = vld [vmem:[%s1 + $0x260] sm:$0xff]
    %v104 = vld [vmem:[%s1 + $0x268] sm:$0xff]
    %v105 = vld [vmem:[%s1 + $0x270] sm:$0xff]
    %v106 = vld [vmem:[%s1 + $0x278] sm:$0xff]
    %v107 = vld [vmem:[%s1 + $0x280] sm:$0xff]
    %v108 = vld [vmem:[%s1 + $0x288] sm:$0xff]
    %v109 = vld [vmem:[%s1 + $0x290] sm:$0xff]
    %v110 = vld [vmem:[%s1 + $0x298] sm:$0xff]
    %v111 = vld [vmem:[%s1 + $0x2a0] sm:$0xff]
    %v112 = vld [vmem:[%s1 + $0x2a8] sm:$0xff]
    %v113 = vld [vmem:[%s1 + $0x2b0] sm:$0xff]
    %v114 = vld [vmem:[%s1 + $0x2b8] sm:$0xff]
    %v115 = vld [vmem:[%s1 + $0x2c0] sm:$0xff]
    %v116 = vld [vmem:[%s1 + $0x2c8] sm:$0xff]
    %v117 = vld [vmem:[%s1 + $0x2d0] sm:$0xff]
    %v118 = vld [vmem:[%s1 + $0x2d8] sm:$0xff]
    %v119 = vld [vmem:[%s1 + $0x2e0] sm:$0xff]
    %v120 = vld [vmem:[%s1 + $0x2e8] sm:$0xff]
    %v121 = vld [vmem:[%s1 + $0x2f0] sm:$0xff]
    %v122 = vld [vmem:[%s1 + $0x2f8] sm:$0xff]
    %v123 = vld [vmem:[%s1 + $0x300] sm:$0xff]
    %v124 = vld [vmem:[%s1 + $0x308] sm:$0xff]
    %v125 = vld [vmem:[%s1 + $0x310] sm:$0xff]
    %v126 = vld [vmem:[%s1 + $0x318] sm:$0xff]
    %v127 = vld [vmem:[%s1 + $0x320] sm:$0xff]
    %v128 = vld [vmem:[%s1 + $0x328] sm:$0xff]
    %v129 = vld [vmem:[%s1 + $0x330] sm:$0xff]
    %v130 = vld [vmem:[%s1 + $0x338] sm:$0xff]
    %v131 = vld [vmem:[%s1 + $0x340] sm:$0xff]
    %v132 = vld [vmem:[%s1 + $0x348] sm:$0xff]
    %v133 = vld [vmem:[%s1 + $0x350] sm:$0xff]
    %v134 = vld [vmem:[%s1 + $0x358] sm:$0xff]
    %v135 = vld [vmem:[%s1 + $0x360] sm:$0xff]
    %v136 = vld [vmem:[%s1 + $0x368] sm:$0xff]
    %v137 = vld [vmem:[%s1 + $0x370] sm:$0xff]
    %v138 = vld [vmem:[%s1 + $0x378] sm:$0xff]
    %v139 = vld [vmem:[%s1 + $0x380] sm:$0xff]
    %v140 = vld [vmem:[%s1 + $0x388] sm:$0xff]
    %v141 = vld [vmem:[%s1 + $0x390] sm:$0xff]
    %v142 = vld [vmem:[%s1 + $0x398] sm:$0xff]
    %v143 = vld [vmem:[%s1 + $0x3a0] sm:$0xff]
    %v144 = vld [vmem:[%s1 + $0x3a8] sm:$0xff]
    %v145 = vld [vmem:[%s1 + $0x3b0] sm:$0xff]
    %v146 = vld [vmem:[%s1 + $0x3b8] sm:$0xff]
    %v147 = vld [vmem:[%s1 + $0x3c0] sm:$0xff]
    %v148 = vld [vmem:[%s1 + $0x3c8] sm:$0xff]
    %v149 = vld [vmem:[%s1 + $0x3d0] sm:$0xff]
    %v150 = vld [vmem:[%s1 + $0x3d8] sm:$0xff]
    %v151 = vld [vmem:[%s1 + $0x3e0] sm:$0xff]
    %v152 = vld [vmem:[%s1 + $0x3e8] sm:$0xff]
    %v153 = vld [vmem:[%s1 + $0x3f0] sm:$0xff]
    %v154 = vld [vmem:[%s1 + $0x3f8] sm:$0xff]
    %v155 = vld [vmem:[%s1 + $0x400] sm:$0xff]
    %v156 = vld [vmem:[%s1 + $0x408] sm:$0xff]
    %v157 = vld [vmem:[%s1 + $0x410] sm:$0xff]
    %v158 = vld [vmem:[%s1 + $0x418] sm:$0xff]
    %v159 = vld [vmem:[%s1 + $0x420] sm:$0xff]
    %v160 = vld [vmem:[%s1 + $0x428] sm:$0xff]
    %v161 = vld [vmem:[%s1 + $0x430] sm:$0xff]
    %v162 = vld [vmem:[%s1 + $0x438] sm:$0xff]
    %v163 = vld [vmem:[%s1 + $0x440] sm:$0xff]
    %v164 = vld [vmem:[%s1 + $0x448] sm:$0xff]
    %v165 = vld [vmem:[%s1 + $0x450] sm:$0xff]
    %v166 = vld [vmem:[%s1 + $0x458] sm:$0xff]
    %v167 = vld [vmem:[%s1 + $0x460] sm:$0xff]
    %v168 = vld [vmem:[%s1 + $0x468] sm:$0xff]
    %v169 = vld [vmem:[%s1 + $0x470] sm:$0xff]
    %v170 = vld [vmem:[%s1 + $0x478] sm:$0xff]
    %v171 = vld [vmem:[%s1 + $0x480] sm:$0xff]
    %v172 = vld [vmem:[%s1 + $0x488] sm:$0xff]
    %v173 = vld [vmem:[%s1 + $0x490] sm:$0xff]
    %v174 = vld [vmem:[%s1 + $0x498] sm:$0xff]
    %v175 = vld [vmem:[%s1 + $0x4a0] sm:$0xff]
    %v176 = vld [vmem:[%s1 + $0x4a8] sm:$0xff]
    %v177 = vld [vmem:[%s1 + $0x4b0] sm:$0xff]
    %v178 = vld [vmem:[%s1 + $0x4b8] sm:$0xff]
    %v179 = vld [vmem:[%s1 + $0x4c0] sm:$0xff]
    %v180 = vld [vmem:[%s1 + $0x4c8] sm:$0xff]
    %v181 = vld [vmem:[%s1 + $0x4d0] sm:$0xff]
    %v182 = vld [vmem:[%s1 + $0x4d8] sm:$0xff]
    %v183 = vld [vmem:[%s1 + $0x4e0] sm:$0xff]
    %v184 = vld [vmem:[%s1 + $0x4e8] sm:$0xff]
    %v185 = vld [vmem:[%s1 + $0x4f0] sm:$0xff]
    %v186 = vld [vmem:[%s1 + $0x4f8] sm:$0xff]
    %v187 = vld [vmem:[%s1 + $0x500] sm:$0xff]
    %v188 = vld [vmem:[%s1 + $0x508] sm:$0xff]
    %v189 = vld [vmem:[%s1 + $0x510] sm:$0xff]
    %v190 = vld [vmem:[%s1 + $0x518] sm:$0xff]
    %v191 = vld [vmem:[%s1 + $0x520] sm:$0xff]
    %v192 = vld [vmem:[%s1 + $0x528] sm:$0xff]
    %v193 = vld [vmem:[%s1 + $0x530] sm:$0xff]
    %v194 = vld [vmem:[%s1 + $0x538] sm:$0xff]
    %v195 = vld [vmem:[%s1 + $0x540] sm:$0xff]
    %v196 = vld [vmem:[%s1 + $0x548] sm:$0xff]
    %v197 = vld [vmem:[%s1 + $0x550] sm:$0xff]
    %v198 = vld [vmem:[%s1 + $0x558] sm:$0xff]
    %v199 = vld [vmem:[%s1 + $0x560] sm:$0xff]
    %v200 = vld [vmem:[%s1 + $0x568] sm:$0xff]
    %v201 = vld [vmem:[%s1 + $0x570] sm:$0xff]
    %v202 = vld [vmem:[%s1 + $0x578] sm:$0xff]
    %v203 = vld [vmem:[%s1 + $0x580] sm:$0xff]
    %v204 = vld [vmem:[%s1 + $0x588] sm:$0xff]
    %v205 = vld [vmem:[%s1 + $0x590] sm:$0xff]
    %v206 = vld [vmem:[%s1 + $0x598] sm:$0xff]
    %v207 = vld [vmem:[%s1 + $0x5a0] sm:$0xff]
    %v208 = vld [vmem:[%s1 + $0x5a8] sm:$0xff]
    %v209 = vld [vmem:[%s1 + $0x5b0] sm:$0xff]
    %v210 = vld [vmem:[%s1 + $0x5b8] sm:$0xff]
    %v211 = vld [vmem:[%s1 + $0x5c0] sm:$0xff]
    %v212 = vld [vmem:[%s1 + $0x5c8] sm:$0xff]
    %v213 = vld [vmem:[%s1 + $0x5d0] sm:$0xff]
    %v214 = vld [vmem:[%s1 + $0x5d8] sm:$0xff]
    %v215 = vld [vmem:[%s1 + $0x5e0] sm:$0xff]
    %v216 = vld [vmem:[%s1 + $0x5e8] sm:$0xff]
    %v217 = vld [vmem:[%s1 + $0x5f0] sm:$0xff]
    %v218 = vld [vmem:[%s1 + $0x5f8] sm:$0xff]
    %v219 = vld [vmem:[%s1 + $0x600] sm:$0xff]
    %v220 = vld [vmem:[%s1 + $0x608] sm:$0xff]
    %v221 = vld [vmem:[%s1 + $0x610] sm:$0xff]
    %v222 = vld [vmem:[%s1 + $0x618] sm:$0xff]
    %v223 = vld [vmem:[%s1 + $0x620] sm:$0xff]
    %v224 = vld [vmem:[%s1 + $0x628] sm:$0xff]
    %v225 = vld [vmem:[%s1 + $0x630] sm:$0xff]
    %v226 = vld [vmem:[%s1 + $0x638] sm:$0xff]
    %v227 = vld [vmem:[%s1 + $0x640] sm:$0xff]
    %v228 = vld [vmem:[%s1 + $0x648] sm:$0xff]
    %v229 = vld [vmem:[%s1 + $0x650] sm:$0xff]
    %v230 = vld [vmem:[%s1 + $0x658] sm:$0xff]
    %v231 = vld [vmem:[%s1 + $0x660] sm:$0xff]
    %v232 = vld [vmem:[%s1 + $0x668] sm:$0xff]
    %v233 = vld [vmem:[%s1 + $0x670] sm:$0xff]
    %v234 = vld [vmem:[%s1 + $0x678] sm:$0xff]
    %v235 = vld [vmem:[%s1 + $0x680] sm:$0xff]
    %v236 = vld [vmem:[%s1 + $0x688] sm:$0xff]
    %v237 = vld [vmem:[%s1 + $0x690] sm:$0xff]
    %v238 = vld [vmem:[%s1 + $0x698] sm:$0xff]
    %v239 = vld [vmem:[%s1 + $0x6a0] sm:$0xff]
    %v240 = vld [vmem:[%s1 + $0x6a8] sm:$0xff]
    %v241 = vld [vmem:[%s1 + $0x6b0] sm:$0xff]
    %v242 = vld [vmem:[%s1 + $0x6b8] sm:$0xff]
    %v243 = vld [vmem:[%s1 + $0x6c0] sm:$0xff]
    %v244 = vld [vmem:[%s1 + $0x6c8] sm:$0xff]
    %v245 = vld [vmem:[%s1 + $0x6d0] sm:$0xff]
    %v246 = vld [vmem:[%s1 + $0x6d8] sm:$0xff]
    %v247 = vld [vmem:[%s1 + $0x6e0] sm:$0xff]
    %v248 = vld [vmem:[%s1 + $0x6e8] sm:$0xff]
    %v249 = vld [vmem:[%s1 + $0x6f0] sm:$0xff]
    %v250 = vld [vmem:[%s1 + $0x6f8] sm:$0xff]
    %v251 = vand.u32 %v132, 4294901760
    %252 = vmatpush.msra.mxu0 %v251
    %v253 = vand.u32 %v125, 4294901760
    %254 = vmatpush.msra.mxu0 %v253
    %v255 = vand.u32 %v118, 4294901760
    %256 = vmatpush.msra.mxu0 %v255
    %v257 = vand.u32 %v111, 4294901760
    %258 = vmatpush.msra.mxu0 %v257
    %v259 = vand.u32 %v104, 4294901760
    %260 = vmatpush.msra.mxu0 %v259
    %v261 = vand.u32 %v97, 4294901760
    %262 = vmatpush.msra.mxu0 %v261
    %v263 = vand.u32 %v90, 4294901760
    %264 = vmatpush.msra.mxu0 %v263
    %v265 = vand.u32 %v83, 4294901760
    %266 = vmatpush.msra.mxu0 %v265
    %v267 = vand.u32 %v76, 4294901760
    %268 = vmatpush.msra.mxu0 %v267
    %v269 = vand.u32 %v69, 4294901760
    %270 = vmatpush.msra.mxu0 %v269
    %v271 = vand.u32 %v62, 4294901760
    %272 = vmatpush.msra.mxu0 %v271
    %v273 = vand.u32 %v55, 4294901760
    %274 = vmatpush.msra.mxu0 %v273
    %v275 = vand.u32 %v48, 4294901760
    %276 = vmatpush.msra.mxu0 %v275
    %v277 = vand.u32 %v41, 4294901760
    %278 = vmatpush.msra.mxu0 %v277
    %v279 = vand.u32 %v34, 4294901760
    %280 = vmatpush.msra.mxu0 %v279
    %v281 = vand.u32 %v27, 4294901760
    %282 = vmatpush.msra.mxu0 %v281
    %v283 = vand.u32 %v25, 4294901760
    %v284 = vsub.f32 %v25, %v283
    %v285 = vand.u32 %v284, 4294901760
    %v286 = vsub.f32 %v284, %v285
    %v287 = vand.u32 %v286, 4294901760
    %288 = vmatmul.f32.gmra.mxu0 %v287
    %v289 = vpop.f32.mrf.mxu0
    %v290 = vadd.f32 0.0, %v289
    %291 = vdwg.mxu0
    %v292 = vand.u32 %v132, 4294901760
    %v293 = vsub.f32 %v132, %v292
    %v294 = vand.u32 %v293, 4294901760
    %v295 = vsub.f32 %v293, %v294
    %v296 = vand.u32 %v295, 4294901760
    %297 = vmatpush.msra.mxu0 %v296
    %v298 = vand.u32 %v125, 4294901760
    %v299 = vsub.f32 %v125, %v298
    %v300 = vand.u32 %v299, 4294901760
    %v301 = vsub.f32 %v299, %v300
    %v302 = vand.u32 %v301, 4294901760
    %303 = vmatpush.msra.mxu0 %v302
    %v304 = vand.u32 %v118, 4294901760
    %v305 = vsub.f32 %v118, %v304
    %v306 = vand.u32 %v305, 4294901760
    %v307 = vsub.f32 %v305, %v306
    %v308 = vand.u32 %v307, 4294901760
    %309 = vmatpush.msra.mxu0 %v308
    %v310 = vand.u32 %v111, 4294901760
    %v311 = vsub.f32 %v111, %v310
    %v312 = vand.u32 %v311, 4294901760
    %v313 = vsub.f32 %v311, %v312
    %v314 = vand.u32 %v313, 4294901760
    %315 = vmatpush.msra.mxu0 %v314
    %v316 = vand.u32 %v104, 4294901760
    %v317 = vsub.f32 %v104, %v316
    %v318 = vand.u32 %v317, 4294901760
    %v319 = vsub.f32 %v317, %v318
    %v320 = vand.u32 %v319, 4294901760
    %321 = vmatpush.msra.mxu0 %v320
    %v322 = vand.u32 %v97, 4294901760
    %v323 = vsub.f32 %v97, %v322
    %v324 = vand.u32 %v323, 4294901760
    %v325 = vsub.f32 %v323, %v324
    %v326 = vand.u32 %v325, 4294901760
    %327 = vmatpush.msra.mxu0 %v326
    %v328 = vand.u32 %v90, 4294901760
    %v329 = vsub.f32 %v90, %v328
    %v330 = vand.u32 %v329, 4294901760
    %v331 = vsub.f32 %v329, %v330
    %v332 = vand.u32 %v331, 4294901760
    %333 = vmatpush.msra.mxu0 %v332
    %v334 = vand.u32 %v83, 4294901760
    %v335 = vsub.f32 %v83, %v334
    %v336 = vand.u32 %v335, 4294901760
    %v337 = vsub.f32 %v335, %v336
    %v338 = vand.u32 %v337, 4294901760
    %339 = vmatpush.msra.mxu0 %v338
    %v340 = vand.u32 %v76, 4294901760
    %v341 = vsub.f32 %v76, %v340
    %v342 = vand.u32 %v341, 4294901760
    %v343 = vsub.f32 %v341, %v342
    %v344 = vand.u32 %v343, 4294901760
    %345 = vmatpush.msra.mxu0 %v344
    %v346 = vand.u32 %v69, 4294901760
    %v347 = vsub.f32 %v69, %v346
    %v348 = vand.u32 %v347, 4294901760
    %v349 = vsub.f32 %v347, %v348
    %v350 = vand.u32 %v349, 4294901760
    %351 = vmatpush.msra.mxu0 %v350
    %v352 = vand.u32 %v62, 4294901760
    %v353 = vsub.f32 %v62, %v352
    %v354 = vand.u32 %v353, 4294901760
    %v355 = vsub.f32 %v353, %v354
    %v356 = vand.u32 %v355, 4294901760
    %357 = vmatpush.msra.mxu0 %v356
    %v358 = vand.u32 %v55, 4294901760
    %v359 = vsub.f32 %v55, %v358
    %v360 = vand.u32 %v359, 4294901760
    %v361 = vsub.f32 %v359, %v360
    %v362 = vand.u32 %v361, 4294901760
    %363 = vmatpush.msra.mxu0 %v362
    %v364 = vand.u32 %v48, 4294901760
    %v365 = vsub.f32 %v48, %v364
    %v366 = vand.u32 %v365, 4294901760
    %v367 = vsub.f32 %v365, %v366
    %v368 = vand.u32 %v367, 4294901760
    %369 = vmatpush.msra.mxu0 %v368
    %v370 = vand.u32 %v41, 4294901760
    %v371 = vsub.f32 %v41, %v370
    %v372 = vand.u32 %v371, 4294901760
    %v373 = vsub.f32 %v371, %v372
    %v374 = vand.u32 %v373, 4294901760
    %375 = vmatpush.msra.mxu0 %v374
    %v376 = vand.u32 %v34, 4294901760
    %v377 = vsub.f32 %v34, %v376
    %v378 = vand.u32 %v377, 4294901760
    %v379 = vsub.f32 %v377, %v378
    %v380 = vand.u32 %v379, 4294901760
    %381 = vmatpush.msra.mxu0 %v380
    %v382 = vand.u32 %v27, 4294901760
    %v383 = vsub.f32 %v27, %v382
    %v384 = vand.u32 %v383, 4294901760
    %v385 = vsub.f32 %v383, %v384
    %v386 = vand.u32 %v385, 4294901760
    %387 = vmatpush.msra.mxu0 %v386
    %v388 = vand.u32 %v25, 4294901760
    %389 = vmatmul.f32.gmra.mxu0 %v388
    %v390 = vpop.f32.mrf.mxu0
    %v391 = vadd.f32 %v290, %v390
    %392 = vdwg.mxu0
    %v393 = vand.u32 %v132, 4294901760
    %v394 = vsub.f32 %v132, %v393
    %395 = vmatpush.msra.mxu0 %v394
    %v396 = vand.u32 %v125, 4294901760
    %v397 = vsub.f32 %v125, %v396
    %398 = vmatpush.msra.mxu0 %v397
    %v399 = vand.u32 %v118, 4294901760
    %v400 = vsub.f32 %v118, %v399
    %401 = vmatpush.msra.mxu0 %v400
    %v402 = vand.u32 %v111, 4294901760
    %v403 = vsub.f32 %v111, %v402
    %404 = vmatpush.msra.mxu0 %v403
    %v405 = vand.u32 %v104, 4294901760
    %v406 = vsub.f32 %v104, %v405
    %407 = vmatpush.msra.mxu0 %v406
    %v408 = vand.u32 %v97, 4294901760
    %v409 = vsub.f32 %v97, %v408
    %410 = vmatpush.msra.mxu0 %v409
    %v411 = vand.u32 %v90, 4294901760
    %v412 = vsub.f32 %v90, %v411
    %413 = vmatpush.msra.mxu0 %v412
    %v414 = vand.u32 %v83, 4294901760
    %v415 = vsub.f32 %v83, %v414
    %416 = vmatpush.msra.mxu0 %v415
    %v417 = vand.u32 %v76, 4294901760
    %v418 = vsub.f32 %v76, %v417
    %419 = vmatpush.msra.mxu0 %v418
    %v420 = vand.u32 %v69, 4294901760
    %v421 = vsub.f32 %v69, %v420
    %422 = vmatpush.msra.mxu0 %v421
    %v423 = vand.u32 %v62, 4294901760
    %v424 = vsub.f32 %v62, %v423
    %425 = vmatpush.msra.mxu0 %v424
    %v426 = vand.u32 %v55, 4294901760
    %v427 = vsub.f32 %v55, %v426
    %428 = vmatpush.msra.mxu0 %v427
    %v429 = vand.u32 %v48, 4294901760
    %v430 = vsub.f32 %v48, %v429
    %431 = vmatpush.msra.mxu0 %v430
    %v432 = vand.u32 %v41, 4294901760
    %v433 = vsub.f32 %v41, %v432
    %434 = vmatpush.msra.mxu0 %v433
    %v435 = vand.u32 %v34, 4294901760
    %v436 = vsub.f32 %v34, %v435
    %437 = vmatpush.msra.mxu0 %v436
    %v438 = vand.u32 %v27, 4294901760
    %v439 = vsub.f32 %v27, %v438
    %440 = vmatpush.msra.mxu0 %v439
    %v441 = vand.u32 %v25, 4294901760
    %v442 = vsub.f32 %v25, %v441
    %443 = vmatmul.f32.gmra.mxu0 %v442
    %v444 = vpop.f32.mrf.mxu0
    %v445 = vadd.f32 %v391, %v444
    %446 = vdwg.mxu0
    %v447 = vand.u32 %v132, 4294901760
    %448 = vmatpush.msra.mxu0 %v447
    %v449 = vand.u32 %v125, 4294901760
    %450 = vmatpush.msra.mxu0 %v449
    %v451 = vand.u32 %v118, 4294901760
    %452 = vmatpush.msra.mxu0 %v451
    %v453 = vand.u32 %v111, 4294901760
    %454 = vmatpush.msra.mxu0 %v453
    %v455 = vand.u32 %v104, 4294901760
    %456 = vmatpush.msra.mxu0 %v455
    %v457 = vand.u32 %v97, 4294901760
    %458 = vmatpush.msra.mxu0 %v457
    %v459 = vand.u32 %v90, 4294901760
    %460 = vmatpush.msra.mxu0 %v459
    %v461 = vand.u32 %v83, 4294901760
    %462 = vmatpush.msra.mxu0 %v461
    %v463 = vand.u32 %v76, 4294901760
    %464 = vmatpush.msra.mxu0 %v463
    %v465 = vand.u32 %v69, 4294901760
    %466 = vmatpush.msra.mxu0 %v465
    %v467 = vand.u32 %v62, 4294901760
    %468 = vmatpush.msra.mxu0 %v467
    %v469 = vand.u32 %v55, 4294901760
    %470 = vmatpush.msra.mxu0 %v469
    %v471 = vand.u32 %v48, 4294901760
    %472 = vmatpush.msra.mxu0 %v471
    %v473 = vand.u32 %v41, 4294901760
    %474 = vmatpush.msra.mxu0 %v473
    %v475 = vand.u32 %v34, 4294901760
    %476 = vmatpush.msra.mxu0 %v475
    %v477 = vand.u32 %v27, 4294901760
    %478 = vmatpush.msra.mxu0 %v477
    %v479 = vand.u32 %v25, 4294901760
    %v480 = vsub.f32 %v25, %v479
    %v481 = vand.u32 %v480, 4294901760
    %482 = vmatmul.f32.gmra.mxu0 %v481
    %v483 = vpop.f32.mrf.mxu0
    %v484 = vadd.f32 %v445, %v483
    %485 = vdwg.mxu0
    %v486 = vand.u32 %v132, 4294901760
    %v487 = vsub.f32 %v132, %v486
    %v488 = vand.u32 %v487, 4294901760
    %489 = vmatpush.msra.mxu0 %v488
    %v490 = vand.u32 %v125, 4294901760
    %v491 = vsub.f32 %v125, %v490
    %v492 = vand.u32 %v491, 4294901760
    %493 = vmatpush.msra.mxu0 %v492
    %v494 = vand.u32 %v118, 4294901760
    %v495 = vsub.f32 %v118, %v494
    %v496 = vand.u32 %v495, 4294901760
    %497 = vmatpush.msra.mxu0 %v496
    %v498 = vand.u32 %v111, 4294901760
    %v499 = vsub.f32 %v111, %v498
    %v500 = vand.u32 %v499, 4294901760
    %501 = vmatpush.msra.mxu0 %v500
    %v502 = vand.u32 %v104, 4294901760
    %v503 = vsub.f32 %v104, %v502
    %v504 = vand.u32 %v503, 4294901760
    %505 = vmatpush.msra.mxu0 %v504
    %v506 = vand.u32 %v97, 4294901760
    %v507 = vsub.f32 %v97, %v506
    %v508 = vand.u32 %v507, 4294901760
    %509 = vmatpush.msra.mxu0 %v508
    %v510 = vand.u32 %v90, 4294901760
    %v511 = vsub.f32 %v90, %v510
    %v512 = vand.u32 %v511, 4294901760
    %513 = vmatpush.msra.mxu0 %v512
    %v514 = vand.u32 %v83, 4294901760
    %v515 = vsub.f32 %v83, %v514
    %v516 = vand.u32 %v515, 4294901760
    %517 = vmatpush.msra.mxu0 %v516
    %v518 = vand.u32 %v76, 4294901760
    %v519 = vsub.f32 %v76, %v518
    %v520 = vand.u32 %v519, 4294901760
    %521 = vmatpush.msra.mxu0 %v520
    %v522 = vand.u32 %v69, 4294901760
    %v523 = vsub.f32 %v69, %v522
    %v524 = vand.u32 %v523, 4294901760
    %525 = vmatpush.msra.mxu0 %v524
    %v526 = vand.u32 %v62, 4294901760
    %v527 = vsub.f32 %v62, %v526
    %v528 = vand.u32 %v527, 4294901760
    %529 = vmatpush.msra.mxu0 %v528
    %v530 = vand.u32 %v55, 4294901760
    %v531 = vsub.f32 %v55, %v530
    %v532 = vand.u32 %v531, 4294901760
    %533 = vmatpush.msra.mxu0 %v532
    %v534 = vand.u32 %v48, 4294901760
    %v535 = vsub.f32 %v48, %v534
    %v536 = vand.u32 %v535, 4294901760
    %537 = vmatpush.msra.mxu0 %v536
    %v538 = vand.u32 %v41, 4294901760
    %v539 = vsub.f32 %v41, %v538
    %v540 = vand.u32 %v539, 4294901760
    %541 = vmatpush.msra.mxu0 %v540
    %v542 = vand.u32 %v34, 4294901760
    %v543 = vsub.f32 %v34, %v542
    %v544 = vand.u32 %v543, 4294901760
    %545 = vmatpush.msra.mxu0 %v544
    %v546 = vand.u32 %v27, 4294901760
    %v547 = vsub.f32 %v27, %v546
    %v548 = vand.u32 %v547, 4294901760
    %549 = vmatpush.msra.mxu0 %v548
    %v550 = vand.u32 %v25, 4294901760
    %551 = vmatmul.f32.gmra.mxu0 %v550
    %v552 = vpop.f32.mrf.mxu0
    %v553 = vadd.f32 %v484, %v552
    %554 = vdwg.mxu0
    %v555 = vand.u32 %v132, 4294901760
    %556 = vmatpush.msra.mxu0 %v555
    %v557 = vand.u32 %v125, 4294901760
    %558 = vmatpush.msra.mxu0 %v557
    %v559 = vand.u32 %v118, 4294901760
    %560 = vmatpush.msra.mxu0 %v559
    %v561 = vand.u32 %v111, 4294901760
    %562 = vmatpush.msra.mxu0 %v561
    %v563 = vand.u32 %v104, 4294901760
    %564 = vmatpush.msra.mxu0 %v563
    %v565 = vand.u32 %v97, 4294901760
    %566 = vmatpush.msra.mxu0 %v565
    %v567 = vand.u32 %v90, 4294901760
    %568 = vmatpush.msra.mxu0 %v567
    %v569 = vand.u32 %v83, 4294901760
    %570 = vmatpush.msra.mxu0 %v569
    %v571 = vand.u32 %v76, 4294901760
    %572 = vmatpush.msra.mxu0 %v571
    %v573 = vand.u32 %v69, 4294901760
    %574 = vmatpush.msra.mxu0 %v573
    %v575 = vand.u32 %v62, 4294901760
    %576 = vmatpush.msra.mxu0 %v575
    %v577 = vand.u32 %v55, 4294901760
    %578 = vmatpush.msra.mxu0 %v577
    %v579 = vand.u32 %v48, 4294901760
    %580 = vmatpush.msra.mxu0 %v579
    %v581 = vand.u32 %v41, 4294901760
    %582 = vmatpush.msra.mxu0 %v581
    %v583 = vand.u32 %v34, 4294901760
    %584 = vmatpush.msra.mxu0 %v583
    %v585 = vand.u32 %v27, 4294901760
    %586 = vmatpush.msra.mxu0 %v585
    %v587 = vand.u32 %v25, 4294901760
    %588 = vmatmul.f32.gmra.mxu0 %v587
    %v589 = vpop.f32.mrf.mxu0
    %v590 = vadd.f32 %v553, %v589
    %591 = vdwg.mxu0
    %v592 = vand.u32 %v244, 4294901760
    %593 = vmatpush.msra.mxu0 %v592
    %v594 = vand.u32 %v237, 4294901760
    %595 = vmatpush.msra.mxu0 %v594
    %v596 = vand.u32 %v230, 4294901760
    %597 = vmatpush.msra.mxu0 %v596
    %v598 = vand.u32 %v223, 4294901760
    %599 = vmatpush.msra.mxu0 %v598
    %v600 = vand.u32 %v216, 4294901760
    %601 = vmatpush.msra.mxu0 %v600
    %v602 = vand.u32 %v209, 4294901760
    %603 = vmatpush.msra.mxu0 %v602
    %v604 = vand.u32 %v202, 4294901760
    %605 = vmatpush.msra.mxu0 %v604
    %v606 = vand.u32 %v195, 4294901760
    %607 = vmatpush.msra.mxu0 %v606
    %v608 = vand.u32 %v188, 4294901760
    %609 = vmatpush.msra.mxu0 %v608
    %v610 = vand.u32 %v181, 4294901760
    %611 = vmatpush.msra.mxu0 %v610
    %v612 = vand.u32 %v174, 4294901760
    %613 = vmatpush.msra.mxu0 %v612
    %v614 = vand.u32 %v167, 4294901760
    %615 = vmatpush.msra.mxu0 %v614
    %v616 = vand.u32 %v160, 4294901760
    %617 = vmatpush.msra.mxu0 %v616
    %v618 = vand.u32 %v153, 4294901760
    %619 = vmatpush.msra.mxu0 %v618
    %v620 = vand.u32 %v146, 4294901760
    %621 = vmatpush.msra.mxu0 %v620
    %v622 = vand.u32 %v139, 4294901760
    %623 = vmatpush.msra.mxu0 %v622
    %v624 = vand.u32 %v26, 4294901760
    %v625 = vsub.f32 %v26, %v624
    %v626 = vand.u32 %v625, 4294901760
    %v627 = vsub.f32 %v625, %v626
    %v628 = vand.u32 %v627, 4294901760
    %629 = vmatmul.f32.gmra.mxu0 %v628
    %v630 = vpop.f32.mrf.mxu0
    %v631 = vadd.f32 %v590, %v630
    %632 = vdwg.mxu0
    %v633 = vand.u32 %v244, 4294901760
    %v634 = vsub.f32 %v244, %v633
    %v635 = vand.u32 %v634, 4294901760
    %v636 = vsub.f32 %v634, %v635
    %v637 = vand.u32 %v636, 4294901760
    %638 = vmatpush.msra.mxu0 %v637
    %v639 = vand.u32 %v237, 4294901760
    %v640 = vsub.f32 %v237, %v639
    %v641 = vand.u32 %v640, 4294901760
    %v642 = vsub.f32 %v640, %v641
    %v643 = vand.u32 %v642, 4294901760
    %644 = vmatpush.msra.mxu0 %v643
    %v645 = vand.u32 %v230, 4294901760
    %v646 = vsub.f32 %v230, %v645
    %v647 = vand.u32 %v646, 4294901760
    %v648 = vsub.f32 %v646, %v647
    %v649 = vand.u32 %v648, 4294901760
    %650 = vmatpush.msra.mxu0 %v649
    %v651 = vand.u32 %v223, 4294901760
    %v652 = vsub.f32 %v223, %v651
    %v653 = vand.u32 %v652, 4294901760
    %v654 = vsub.f32 %v652, %v653
    %v655 = vand.u32 %v654, 4294901760
    %656 = vmatpush.msra.mxu0 %v655
    %v657 = vand.u32 %v216, 4294901760
    %v658 = vsub.f32 %v216, %v657
    %v659 = vand.u32 %v658, 4294901760
    %v660 = vsub.f32 %v658, %v659
    %v661 = vand.u32 %v660, 4294901760
    %662 = vmatpush.msra.mxu0 %v661
    %v663 = vand.u32 %v209, 4294901760
    %v664 = vsub.f32 %v209, %v663
    %v665 = vand.u32 %v664, 4294901760
    %v666 = vsub.f32 %v664, %v665
    %v667 = vand.u32 %v666, 4294901760
    %668 = vmatpush.msra.mxu0 %v667
    %v669 = vand.u32 %v202, 4294901760
    %v670 = vsub.f32 %v202, %v669
    %v671 = vand.u32 %v670, 4294901760
    %v672 = vsub.f32 %v670, %v671
    %v673 = vand.u32 %v672, 4294901760
    %674 = vmatpush.msra.mxu0 %v673
    %v675 = vand.u32 %v195, 4294901760
    %v676 = vsub.f32 %v195, %v675
    %v677 = vand.u32 %v676, 4294901760
    %v678 = vsub.f32 %v676, %v677
    %v679 = vand.u32 %v678, 4294901760
    %680 = vmatpush.msra.mxu0 %v679
    %v681 = vand.u32 %v188, 4294901760
    %v682 = vsub.f32 %v188, %v681
    %v683 = vand.u32 %v682, 4294901760
    %v684 = vsub.f32 %v682, %v683
    %v685 = vand.u32 %v684, 4294901760
    %686 = vmatpush.msra.mxu0 %v685
    %v687 = vand.u32 %v181, 4294901760
    %v688 = vsub.f32 %v181, %v687
    %v689 = vand.u32 %v688, 4294901760
    %v690 = vsub.f32 %v688, %v689
    %v691 = vand.u32 %v690, 4294901760
    %692 = vmatpush.msra.mxu0 %v691
    %v693 = vand.u32 %v174, 4294901760
    %v694 = vsub.f32 %v174, %v693
    %v695 = vand.u32 %v694, 4294901760
    %v696 = vsub.f32 %v694, %v695
    %v697 = vand.u32 %v696, 4294901760
    %698 = vmatpush.msra.mxu0 %v697
    %v699 = vand.u32 %v167, 4294901760
    %v700 = vsub.f32 %v167, %v699
    %v701 = vand.u32 %v700, 4294901760
    %v702 = vsub.f32 %v700, %v701
    %v703 = vand.u32 %v702, 4294901760
    %704 = vmatpush.msra.mxu0 %v703
    %v705 = vand.u32 %v160, 4294901760
    %v706 = vsub.f32 %v160, %v705
    %v707 = vand.u32 %v706, 4294901760
    %v708 = vsub.f32 %v706, %v707
    %v709 = vand.u32 %v708, 4294901760
    %710 = vmatpush.msra.mxu0 %v709
    %v711 = vand.u32 %v153, 4294901760
    %v712 = vsub.f32 %v153, %v711
    %v713 = vand.u32 %v712, 4294901760
    %v714 = vsub.f32 %v712, %v713
    %v715 = vand.u32 %v714, 4294901760
    %716 = vmatpush.msra.mxu0 %v715
    %v717 = vand.u32 %v146, 4294901760
    %v718 = vsub.f32 %v146, %v717
    %v719 = vand.u32 %v718, 4294901760
    %v720 = vsub.f32 %v718, %v719
    %v721 = vand.u32 %v720, 4294901760
    %722 = vmatpush.msra.mxu0 %v721
    %v723 = vand.u32 %v139, 4294901760
    %v724 = vsub.f32 %v139, %v723
    %v725 = vand.u32 %v724, 4294901760
    %v726 = vsub.f32 %v724, %v725
    %v727 = vand.u32 %v726, 4294901760
    %728 = vmatpush.msra.mxu0 %v727
    %v729 = vand.u32 %v26, 4294901760
    %730 = vmatmul.f32.gmra.mxu0 %v729
    %v731 = vpop.f32.mrf.mxu0
    %v732 = vadd.f32 %v631, %v731
    %733 = vdwg.mxu0
    %v734 = vand.u32 %v244, 4294901760
    %v735 = vsub.f32 %v244, %v734
    %736 = vmatpush.msra.mxu0 %v735
    %v737 = vand.u32 %v237, 4294901760
    %v738 = vsub.f32 %v237, %v737
    %739 = vmatpush.msra.mxu0 %v738
    %v740 = vand.u32 %v230, 4294901760
    %v741 = vsub.f32 %v230, %v740
    %742 = vmatpush.msra.mxu0 %v741
    %v743 = vand.u32 %v223, 4294901760
    %v744 = vsub.f32 %v223, %v743
    %745 = vmatpush.msra.mxu0 %v744
    %v746 = vand.u32 %v216, 4294901760
    %v747 = vsub.f32 %v216, %v746
    %748 = vmatpush.msra.mxu0 %v747
    %v749 = vand.u32 %v209, 4294901760
    %v750 = vsub.f32 %v209, %v749
    %751 = vmatpush.msra.mxu0 %v750
    %v752 = vand.u32 %v202, 4294901760
    %v753 = vsub.f32 %v202, %v752
    %754 = vmatpush.msra.mxu0 %v753
    %v755 = vand.u32 %v195, 4294901760
    %v756 = vsub.f32 %v195, %v755
    %757 = vmatpush.msra.mxu0 %v756
    %v758 = vand.u32 %v188, 4294901760
    %v759 = vsub.f32 %v188, %v758
    %760 = vmatpush.msra.mxu0 %v759
    %v761 = vand.u32 %v181, 4294901760
    %v762 = vsub.f32 %v181, %v761
    %763 = vmatpush.msra.mxu0 %v762
    %v764 = vand.u32 %v174, 4294901760
    %v765 = vsub.f32 %v174, %v764
    %766 = vmatpush.msra.mxu0 %v765
    %v767 = vand.u32 %v167, 4294901760
    %v768 = vsub.f32 %v167, %v767
    %769 = vmatpush.msra.mxu0 %v768
    %v770 = vand.u32 %v160, 4294901760
    %v771 = vsub.f32 %v160, %v770
    %772 = vmatpush.msra.mxu0 %v771
    %v773 = vand.u32 %v153, 4294901760
    %v774 = vsub.f32 %v153, %v773
    %775 = vmatpush.msra.mxu0 %v774
    %v776 = vand.u32 %v146, 4294901760
    %v777 = vsub.f32 %v146, %v776
    %778 = vmatpush.msra.mxu0 %v777
    %v779 = vand.u32 %v139, 4294901760
    %v780 = vsub.f32 %v139, %v779
    %781 = vmatpush.msra.mxu0 %v780
    %v782 = vand.u32 %v26, 4294901760
    %v783 = vsub.f32 %v26, %v782
    %784 = vmatmul.f32.gmra.mxu0 %v783
    %v785 = vpop.f32.mrf.mxu0
    %v786 = vadd.f32 %v732, %v785
    %787 = vdwg.mxu0
    %v788 = vand.u32 %v244, 4294901760
    %789 = vmatpush.msra.mxu0 %v788
    %v790 = vand.u32 %v237, 4294901760
    %791 = vmatpush.msra.mxu0 %v790
    %v792 = vand.u32 %v230, 4294901760
    %793 = vmatpush.msra.mxu0 %v792
    %v794 = vand.u32 %v223, 4294901760
    %795 = vmatpush.msra.mxu0 %v794
    %v796 = vand.u32 %v216, 4294901760
    %797 = vmatpush.msra.mxu0 %v796
    %v798 = vand.u32 %v209, 4294901760
    %799 = vmatpush.msra.mxu0 %v798
    %v800 = vand.u32 %v202, 4294901760
    %801 = vmatpush.msra.mxu0 %v800
    %v802 = vand.u32 %v195, 4294901760
    %803 = vmatpush.msra.mxu0 %v802
    %v804 = vand.u32 %v188, 4294901760
    %805 = vmatpush.msra.mxu0 %v804
    %v806 = vand.u32 %v181, 4294901760
    %807 = vmatpush.msra.mxu0 %v806
    %v808 = vand.u32 %v174, 4294901760
    %809 = vmatpush.msra.mxu0 %v808
    %v810 = vand.u32 %v167, 4294901760
    %811 = vmatpush.msra.mxu0 %v810
    %v812 = vand.u32 %v160, 4294901760
    %813 = vmatpush.msra.mxu0 %v812
    %v814 = vand.u32 %v153, 4294901760
    %815 = vmatpush.msra.mxu0 %v814
    %v816 = vand.u32 %v146, 4294901760
    %817 = vmatpush.msra.mxu0 %v816
    %v818 = vand.u32 %v139, 4294901760
    %819 = vmatpush.msra.mxu0 %v818
    %v820 = vand.u32 %v26, 4294901760
    %v821 = vsub.f32 %v26, %v820
    %v822 = vand.u32 %v821, 4294901760
    %823 = vmatmul.f32.gmra.mxu0 %v822
    %v824 = vpop.f32.mrf.mxu0
    %v825 = vadd.f32 %v786, %v824
    %826 = vdwg.mxu0
    %v827 = vand.u32 %v244, 4294901760
    %v828 = vsub.f32 %v244, %v827
    %v829 = vand.u32 %v828, 4294901760
    %830 = vmatpush.msra.mxu0 %v829
    %v831 = vand.u32 %v237, 4294901760
    %v832 = vsub.f32 %v237, %v831
    %v833 = vand.u32 %v832, 4294901760
    %834 = vmatpush.msra.mxu0 %v833
    %v835 = vand.u32 %v230, 4294901760
    %v836 = vsub.f32 %v230, %v835
    %v837 = vand.u32 %v836, 4294901760
    %838 = vmatpush.msra.mxu0 %v837
    %v839 = vand.u32 %v223, 4294901760
    %v840 = vsub.f32 %v223, %v839
    %v841 = vand.u32 %v840, 4294901760
    %842 = vmatpush.msra.mxu0 %v841
    %v843 = vand.u32 %v216, 4294901760
    %v844 = vsub.f32 %v216, %v843
    %v845 = vand.u32 %v844, 4294901760
    %846 = vmatpush.msra.mxu0 %v845
    %v847 = vand.u32 %v209, 4294901760
    %v848 = vsub.f32 %v209, %v847
    %v849 = vand.u32 %v848, 4294901760
    %850 = vmatpush.msra.mxu0 %v849
    %v851 = vand.u32 %v202, 4294901760
    %v852 = vsub.f32 %v202, %v851
    %v853 = vand.u32 %v852, 4294901760
    %854 = vmatpush.msra.mxu0 %v853
    %v855 = vand.u32 %v195, 4294901760
    %v856 = vsub.f32 %v195, %v855
    %v857 = vand.u32 %v856, 4294901760
    %858 = vmatpush.msra.mxu0 %v857
    %v859 = vand.u32 %v188, 4294901760
    %v860 = vsub.f32 %v188, %v859
    %v861 = vand.u32 %v860, 4294901760
    %862 = vmatpush.msra.mxu0 %v861
    %v863 = vand.u32 %v181, 4294901760
    %v864 = vsub.f32 %v181, %v863
    %v865 = vand.u32 %v864, 4294901760
    %866 = vmatpush.msra.mxu0 %v865
    %v867 = vand.u32 %v174, 4294901760
    %v868 = vsub.f32 %v174, %v867
    %v869 = vand.u32 %v868, 4294901760
    %870 = vmatpush.msra.mxu0 %v869
    %v871 = vand.u32 %v167, 4294901760
    %v872 = vsub.f32 %v167, %v871
    %v873 = vand.u32 %v872, 4294901760
    %874 = vmatpush.msra.mxu0 %v873
    %v875 = vand.u32 %v160, 4294901760
    %v876 = vsub.f32 %v160, %v875
    %v877 = vand.u32 %v876, 4294901760
    %878 = vmatpush.msra.mxu0 %v877
    %v879 = vand.u32 %v153, 4294901760
    %v880 = vsub.f32 %v153, %v879
    %v881 = vand.u32 %v880, 4294901760
    %882 = vmatpush.msra.mxu0 %v881
    %v883 = vand.u32 %v146, 4294901760
    %v884 = vsub.f32 %v146, %v883
    %v885 = vand.u32 %v884, 4294901760
    %886 = vmatpush.msra.mxu0 %v885
    %v887 = vand.u32 %v139, 4294901760
    %v888 = vsub.f32 %v139, %v887
    %v889 = vand.u32 %v888, 4294901760
    %890 = vmatpush.msra.mxu0 %v889
    %v891 = vand.u32 %v26, 4294901760
    %892 = vmatmul.f32.gmra.mxu0 %v891
    %v893 = vpop.f32.mrf.mxu0
    %v894 = vadd.f32 %v825, %v893
    %895 = vdwg.mxu0
    %v896 = vand.u32 %v244, 4294901760
    %897 = vmatpush.msra.mxu0 %v896
    %v898 = vand.u32 %v237, 4294901760
    %899 = vmatpush.msra.mxu0 %v898
    %v900 = vand.u32 %v230, 4294901760
    %901 = vmatpush.msra.mxu0 %v900
    %v902 = vand.u32 %v223, 4294901760
    %903 = vmatpush.msra.mxu0 %v902
    %v904 = vand.u32 %v216, 4294901760
    %905 = vmatpush.msra.mxu0 %v904
    %v906 = vand.u32 %v209, 4294901760
    %907 = vmatpush.msra.mxu0 %v906
    %v908 = vand.u32 %v202, 4294901760
    %909 = vmatpush.msra.mxu0 %v908
    %v910 = vand.u32 %v195, 4294901760
    %911 = vmatpush.msra.mxu0 %v910
    %v912 = vand.u32 %v188, 4294901760
    %913 = vmatpush.msra.mxu0 %v912
    %v914 = vand.u32 %v181, 4294901760
    %915 = vmatpush.msra.mxu0 %v914
    %v916 = vand.u32 %v174, 4294901760
    %917 = vmatpush.msra.mxu0 %v916
    %v918 = vand.u32 %v167, 4294901760
    %919 = vmatpush.msra.mxu0 %v918
    %v920 = vand.u32 %v160, 4294901760
    %921 = vmatpush.msra.mxu0 %v920
    %v922 = vand.u32 %v153, 4294901760
    %923 = vmatpush.msra.mxu0 %v922
    %v924 = vand.u32 %v146, 4294901760
    %925 = vmatpush.msra.mxu0 %v924
    %v926 = vand.u32 %v139, 4294901760
    %927 = vmatpush.msra.mxu0 %v926
    %v928 = vand.u32 %v26, 4294901760
    %929 = vmatmul.f32.gmra.mxu0 %v928
    %v930 = vpop.f32.mrf.mxu0
    %v931 = vadd.f32 %v894, %v930
    %932 = vdwg.mxu0
    %v933 = vand.u32 %v133, 4294901760
    %934 = vmatpush.msra.mxu0 %v933
    %v935 = vand.u32 %v126, 4294901760
    %936 = vmatpush.msra.mxu0 %v935
    %v937 = vand.u32 %v119, 4294901760
    %938 = vmatpush.msra.mxu0 %v937
    %v939 = vand.u32 %v112, 4294901760
    %940 = vmatpush.msra.mxu0 %v939
    %v941 = vand.u32 %v105, 4294901760
    %942 = vmatpush.msra.mxu0 %v941
    %v943 = vand.u32 %v98, 4294901760
    %944 = vmatpush.msra.mxu0 %v943
    %v945 = vand.u32 %v91, 4294901760
    %946 = vmatpush.msra.mxu0 %v945
    %v947 = vand.u32 %v84, 4294901760
    %948 = vmatpush.msra.mxu0 %v947
    %v949 = vand.u32 %v77, 4294901760
    %950 = vmatpush.msra.mxu0 %v949
    %v951 = vand.u32 %v70, 4294901760
    %952 = vmatpush.msra.mxu0 %v951
    %v953 = vand.u32 %v63, 4294901760
    %954 = vmatpush.msra.mxu0 %v953
    %v955 = vand.u32 %v56, 4294901760
    %956 = vmatpush.msra.mxu0 %v955
    %v957 = vand.u32 %v49, 4294901760
    %958 = vmatpush.msra.mxu0 %v957
    %v959 = vand.u32 %v42, 4294901760
    %960 = vmatpush.msra.mxu0 %v959
    %v961 = vand.u32 %v35, 4294901760
    %962 = vmatpush.msra.mxu0 %v961
    %v963 = vand.u32 %v28, 4294901760
    %964 = vmatpush.msra.mxu0 %v963
    %v965 = vand.u32 %v25, 4294901760
    %v966 = vsub.f32 %v25, %v965
    %v967 = vand.u32 %v966, 4294901760
    %v968 = vsub.f32 %v966, %v967
    %v969 = vand.u32 %v968, 4294901760
    %970 = vmatmul.f32.gmra.mxu0 %v969
    %v971 = vpop.f32.mrf.mxu0
    %v972 = vadd.f32 0.0, %v971
    %973 = vdwg.mxu0
    %v974 = vand.u32 %v133, 4294901760
    %v975 = vsub.f32 %v133, %v974
    %v976 = vand.u32 %v975, 4294901760
    %v977 = vsub.f32 %v975, %v976
    %v978 = vand.u32 %v977, 4294901760
    %979 = vmatpush.msra.mxu0 %v978
    %v980 = vand.u32 %v126, 4294901760
    %v981 = vsub.f32 %v126, %v980
    %v982 = vand.u32 %v981, 4294901760
    %v983 = vsub.f32 %v981, %v982
    %v984 = vand.u32 %v983, 4294901760
    %985 = vmatpush.msra.mxu0 %v984
    %v986 = vand.u32 %v119, 4294901760
    %v987 = vsub.f32 %v119, %v986
    %v988 = vand.u32 %v987, 4294901760
    %v989 = vsub.f32 %v987, %v988
    %v990 = vand.u32 %v989, 4294901760
    %991 = vmatpush.msra.mxu0 %v990
    %v992 = vand.u32 %v112, 4294901760
    %v993 = vsub.f32 %v112, %v992
    %v994 = vand.u32 %v993, 4294901760
    %v995 = vsub.f32 %v993, %v994
    %v996 = vand.u32 %v995, 4294901760
    %997 = vmatpush.msra.mxu0 %v996
    %v998 = vand.u32 %v105, 4294901760
    %v999 = vsub.f32 %v105, %v998
    %v1000 = vand.u32 %v999, 4294901760
    %v1001 = vsub.f32 %v999, %v1000
    %v1002 = vand.u32 %v1001, 4294901760
    %1003 = vmatpush.msra.mxu0 %v1002
    %v1004 = vand.u32 %v98, 4294901760
    %v1005 = vsub.f32 %v98, %v1004
    %v1006 = vand.u32 %v1005, 4294901760
    %v1007 = vsub.f32 %v1005, %v1006
    %v1008 = vand.u32 %v1007, 4294901760
    %1009 = vmatpush.msra.mxu0 %v1008
    %v1010 = vand.u32 %v91, 4294901760
    %v1011 = vsub.f32 %v91, %v1010
    %v1012 = vand.u32 %v1011, 4294901760
    %v1013 = vsub.f32 %v1011, %v1012
    %v1014 = vand.u32 %v1013, 4294901760
    %1015 = vmatpush.msra.mxu0 %v1014
    %v1016 = vand.u32 %v84, 4294901760
    %v1017 = vsub.f32 %v84, %v1016
    %v1018 = vand.u32 %v1017, 4294901760
    %v1019 = vsub.f32 %v1017, %v1018
    %v1020 = vand.u32 %v1019, 4294901760
    %1021 = vmatpush.msra.mxu0 %v1020
    %v1022 = vand.u32 %v77, 4294901760
    %v1023 = vsub.f32 %v77, %v1022
    %v1024 = vand.u32 %v1023, 4294901760
    %v1025 = vsub.f32 %v1023, %v1024
    %v1026 = vand.u32 %v1025, 4294901760
    %1027 = vmatpush.msra.mxu0 %v1026
    %v1028 = vand.u32 %v70, 4294901760
    %v1029 = vsub.f32 %v70, %v1028
    %v1030 = vand.u32 %v1029, 4294901760
    %v1031 = vsub.f32 %v1029, %v1030
    %v1032 = vand.u32 %v1031, 4294901760
    %1033 = vmatpush.msra.mxu0 %v1032
    %v1034 = vand.u32 %v63, 4294901760
    %v1035 = vsub.f32 %v63, %v1034
    %v1036 = vand.u32 %v1035, 4294901760
    %v1037 = vsub.f32 %v1035, %v1036
    %v1038 = vand.u32 %v1037, 4294901760
    %1039 = vmatpush.msra.mxu0 %v1038
    %v1040 = vand.u32 %v56, 4294901760
    %v1041 = vsub.f32 %v56, %v1040
    %v1042 = vand.u32 %v1041, 4294901760
    %v1043 = vsub.f32 %v1041, %v1042
    %v1044 = vand.u32 %v1043, 4294901760
    %1045 = vmatpush.msra.mxu0 %v1044
    %v1046 = vand.u32 %v49, 4294901760
    %v1047 = vsub.f32 %v49, %v1046
    %v1048 = vand.u32 %v1047, 4294901760
    %v1049 = vsub.f32 %v1047, %v1048
    %v1050 = vand.u32 %v1049, 4294901760
    %1051 = vmatpush.msra.mxu0 %v1050
    %v1052 = vand.u32 %v42, 4294901760
    %v1053 = vsub.f32 %v42, %v1052
    %v1054 = vand.u32 %v1053, 4294901760
    %v1055 = vsub.f32 %v1053, %v1054
    %v1056 = vand.u32 %v1055, 4294901760
    %1057 = vmatpush.msra.mxu0 %v1056
    %v1058 = vand.u32 %v35, 4294901760
    %v1059 = vsub.f32 %v35, %v1058
    %v1060 = vand.u32 %v1059, 4294901760
    %v1061 = vsub.f32 %v1059, %v1060
    %v1062 = vand.u32 %v1061, 4294901760
    %1063 = vmatpush.msra.mxu0 %v1062
    %v1064 = vand.u32 %v28, 4294901760
    %v1065 = vsub.f32 %v28, %v1064
    %v1066 = vand.u32 %v1065, 4294901760
    %v1067 = vsub.f32 %v1065, %v1066
    %v1068 = vand.u32 %v1067, 4294901760
    %1069 = vmatpush.msra.mxu0 %v1068
    %v1070 = vand.u32 %v25, 4294901760
    %1071 = vmatmul.f32.gmra.mxu0 %v1070
    %v1072 = vpop.f32.mrf.mxu0
    %v1073 = vadd.f32 %v972, %v1072
    %1074 = vdwg.mxu0
    %v1075 = vand.u32 %v133, 4294901760
    %v1076 = vsub.f32 %v133, %v1075
    %1077 = vmatpush.msra.mxu0 %v1076
    %v1078 = vand.u32 %v126, 4294901760
    %v1079 = vsub.f32 %v126, %v1078
    %1080 = vmatpush.msra.mxu0 %v1079
    %v1081 = vand.u32 %v119, 4294901760
    %v1082 = vsub.f32 %v119, %v1081
    %1083 = vmatpush.msra.mxu0 %v1082
    %v1084 = vand.u32 %v112, 4294901760
    %v1085 = vsub.f32 %v112, %v1084
    %1086 = vmatpush.msra.mxu0 %v1085
    %v1087 = vand.u32 %v105, 4294901760
    %v1088 = vsub.f32 %v105, %v1087
    %1089 = vmatpush.msra.mxu0 %v1088
    %v1090 = vand.u32 %v98, 4294901760
    %v1091 = vsub.f32 %v98, %v1090
    %1092 = vmatpush.msra.mxu0 %v1091
    %v1093 = vand.u32 %v91, 4294901760
    %v1094 = vsub.f32 %v91, %v1093
    %1095 = vmatpush.msra.mxu0 %v1094
    %v1096 = vand.u32 %v84, 4294901760
    %v1097 = vsub.f32 %v84, %v1096
    %1098 = vmatpush.msra.mxu0 %v1097
    %v1099 = vand.u32 %v77, 4294901760
    %v1100 = vsub.f32 %v77, %v1099
    %1101 = vmatpush.msra.mxu0 %v1100
    %v1102 = vand.u32 %v70, 4294901760
    %v1103 = vsub.f32 %v70, %v1102
    %1104 = vmatpush.msra.mxu0 %v1103
    %v1105 = vand.u32 %v63, 4294901760
    %v1106 = vsub.f32 %v63, %v1105
    %1107 = vmatpush.msra.mxu0 %v1106
    %v1108 = vand.u32 %v56, 4294901760
    %v1109 = vsub.f32 %v56, %v1108
    %1110 = vmatpush.msra.mxu0 %v1109
    %v1111 = vand.u32 %v49, 4294901760
    %v1112 = vsub.f32 %v49, %v1111
    %1113 = vmatpush.msra.mxu0 %v1112
    %v1114 = vand.u32 %v42, 4294901760
    %v1115 = vsub.f32 %v42, %v1114
    %1116 = vmatpush.msra.mxu0 %v1115
    %v1117 = vand.u32 %v35, 4294901760
    %v1118 = vsub.f32 %v35, %v1117
    %1119 = vmatpush.msra.mxu0 %v1118
    %v1120 = vand.u32 %v28, 4294901760
    %v1121 = vsub.f32 %v28, %v1120
    %1122 = vmatpush.msra.mxu0 %v1121
    %v1123 = vand.u32 %v25, 4294901760
    %v1124 = vsub.f32 %v25, %v1123
    %1125 = vmatmul.f32.gmra.mxu0 %v1124
    %v1126 = vpop.f32.mrf.mxu0
    %v1127 = vadd.f32 %v1073, %v1126
    %1128 = vdwg.mxu0
    %v1129 = vand.u32 %v133, 4294901760
    %1130 = vmatpush.msra.mxu0 %v1129
    %v1131 = vand.u32 %v126, 4294901760
    %1132 = vmatpush.msra.mxu0 %v1131
    %v1133 = vand.u32 %v119, 4294901760
    %1134 = vmatpush.msra.mxu0 %v1133
    %v1135 = vand.u32 %v112, 4294901760
    %1136 = vmatpush.msra.mxu0 %v1135
    %v1137 = vand.u32 %v105, 4294901760
    %1138 = vmatpush.msra.mxu0 %v1137
    %v1139 = vand.u32 %v98, 4294901760
    %1140 = vmatpush.msra.mxu0 %v1139
    %v1141 = vand.u32 %v91, 4294901760
    %1142 = vmatpush.msra.mxu0 %v1141
    %v1143 = vand.u32 %v84, 4294901760
    %1144 = vmatpush.msra.mxu0 %v1143
    %v1145 = vand.u32 %v77, 4294901760
    %1146 = vmatpush.msra.mxu0 %v1145
    %v1147 = vand.u32 %v70, 4294901760
    %1148 = vmatpush.msra.mxu0 %v1147
    %v1149 = vand.u32 %v63, 4294901760
    %1150 = vmatpush.msra.mxu0 %v1149
    %v1151 = vand.u32 %v56, 4294901760
    %1152 = vmatpush.msra.mxu0 %v1151
    %v1153 = vand.u32 %v49, 4294901760
    %1154 = vmatpush.msra.mxu0 %v1153
    %v1155 = vand.u32 %v42, 4294901760
    %1156 = vmatpush.msra.mxu0 %v1155
    %v1157 = vand.u32 %v35, 4294901760
    %1158 = vmatpush.msra.mxu0 %v1157
    %v1159 = vand.u32 %v28, 4294901760
    %1160 = vmatpush.msra.mxu0 %v1159
    %v1161 = vand.u32 %v25, 4294901760
    %v1162 = vsub.f32 %v25, %v1161
    %v1163 = vand.u32 %v1162, 4294901760
    %1164 = vmatmul.f32.gmra.mxu0 %v1163
    %v1165 = vpop.f32.mrf.mxu0
    %v1166 = vadd.f32 %v1127, %v1165
    %1167 = vdwg.mxu0
    %v1168 = vand.u32 %v133, 4294901760
    %v1169 = vsub.f32 %v133, %v1168
    %v1170 = vand.u32 %v1169, 4294901760
    %1171 = vmatpush.msra.mxu0 %v1170
    %v1172 = vand.u32 %v126, 4294901760
    %v1173 = vsub.f32 %v126, %v1172
    %v1174 = vand.u32 %v1173, 4294901760
    %1175 = vmatpush.msra.mxu0 %v1174
    %v1176 = vand.u32 %v119, 4294901760
    %v1177 = vsub.f32 %v119, %v1176
    %v1178 = vand.u32 %v1177, 4294901760
    %1179 = vmatpush.msra.mxu0 %v1178
    %v1180 = vand.u32 %v112, 4294901760
    %v1181 = vsub.f32 %v112, %v1180
    %v1182 = vand.u32 %v1181, 4294901760
    %1183 = vmatpush.msra.mxu0 %v1182
    %v1184 = vand.u32 %v105, 4294901760
    %v1185 = vsub.f32 %v105, %v1184
    %v1186 = vand.u32 %v1185, 4294901760
    %1187 = vmatpush.msra.mxu0 %v1186
    %v1188 = vand.u32 %v98, 4294901760
    %v1189 = vsub.f32 %v98, %v1188
    %v1190 = vand.u32 %v1189, 4294901760
    %1191 = vmatpush.msra.mxu0 %v1190
    %v1192 = vand.u32 %v91, 4294901760
    %v1193 = vsub.f32 %v91, %v1192
    %v1194 = vand.u32 %v1193, 4294901760
    %1195 = vmatpush.msra.mxu0 %v1194
    %v1196 = vand.u32 %v84, 4294901760
    %v1197 = vsub.f32 %v84, %v1196
    %v1198 = vand.u32 %v1197, 4294901760
    %1199 = vmatpush.msra.mxu0 %v1198
    %v1200 = vand.u32 %v77, 4294901760
    %v1201 = vsub.f32 %v77, %v1200
    %v1202 = vand.u32 %v1201, 4294901760
    %1203 = vmatpush.msra.mxu0 %v1202
    %v1204 = vand.u32 %v70, 4294901760
    %v1205 = vsub.f32 %v70, %v1204
    %v1206 = vand.u32 %v1205, 4294901760
    %1207 = vmatpush.msra.mxu0 %v1206
    %v1208 = vand.u32 %v63, 4294901760
    %v1209 = vsub.f32 %v63, %v1208
    %v1210 = vand.u32 %v1209, 4294901760
    %1211 = vmatpush.msra.mxu0 %v1210
    %v1212 = vand.u32 %v56, 4294901760
    %v1213 = vsub.f32 %v56, %v1212
    %v1214 = vand.u32 %v1213, 4294901760
    %1215 = vmatpush.msra.mxu0 %v1214
    %v1216 = vand.u32 %v49, 4294901760
    %v1217 = vsub.f32 %v49, %v1216
    %v1218 = vand.u32 %v1217, 4294901760
    %1219 = vmatpush.msra.mxu0 %v1218
    %v1220 = vand.u32 %v42, 4294901760
    %v1221 = vsub.f32 %v42, %v1220
    %v1222 = vand.u32 %v1221, 4294901760
    %1223 = vmatpush.msra.mxu0 %v1222
    %v1224 = vand.u32 %v35, 4294901760
    %v1225 = vsub.f32 %v35, %v1224
    %v1226 = vand.u32 %v1225, 4294901760
    %1227 = vmatpush.msra.mxu0 %v1226
    %v1228 = vand.u32 %v28, 4294901760
    %v1229 = vsub.f32 %v28, %v1228
    %v1230 = vand.u32 %v1229, 4294901760
    %1231 = vmatpush.msra.mxu0 %v1230
    %v1232 = vand.u32 %v25, 4294901760
    %1233 = vmatmul.f32.gmra.mxu0 %v1232
    %v1234 = vpop.f32.mrf.mxu0
    %v1235 = vadd.f32 %v1166, %v1234
    %1236 = vdwg.mxu0
    %v1237 = vand.u32 %v133, 4294901760
    %1238 = vmatpush.msra.mxu0 %v1237
    %v1239 = vand.u32 %v126, 4294901760
    %1240 = vmatpush.msra.mxu0 %v1239
    %v1241 = vand.u32 %v119, 4294901760
    %1242 = vmatpush.msra.mxu0 %v1241
    %v1243 = vand.u32 %v112, 4294901760
    %1244 = vmatpush.msra.mxu0 %v1243
    %v1245 = vand.u32 %v105, 4294901760
    %1246 = vmatpush.msra.mxu0 %v1245
    %v1247 = vand.u32 %v98, 4294901760
    %1248 = vmatpush.msra.mxu0 %v1247
    %v1249 = vand.u32 %v91, 4294901760
    %1250 = vmatpush.msra.mxu0 %v1249
    %v1251 = vand.u32 %v84, 4294901760
    %1252 = vmatpush.msra.mxu0 %v1251
    %v1253 = vand.u32 %v77, 4294901760
    %1254 = vmatpush.msra.mxu0 %v1253
    %v1255 = vand.u32 %v70, 4294901760
    %1256 = vmatpush.msra.mxu0 %v1255
    %v1257 = vand.u32 %v63, 4294901760
    %1258 = vmatpush.msra.mxu0 %v1257
    %v1259 = vand.u32 %v56, 4294901760
    %1260 = vmatpush.msra.mxu0 %v1259
    %v1261 = vand.u32 %v49, 4294901760
    %1262 = vmatpush.msra.mxu0 %v1261
    %v1263 = vand.u32 %v42, 4294901760
    %1264 = vmatpush.msra.mxu0 %v1263
    %v1265 = vand.u32 %v35, 4294901760
    %1266 = vmatpush.msra.mxu0 %v1265
    %v1267 = vand.u32 %v28, 4294901760
    %1268 = vmatpush.msra.mxu0 %v1267
    %v1269 = vand.u32 %v25, 4294901760
    %1270 = vmatmul.f32.gmra.mxu0 %v1269
    %v1271 = vpop.f32.mrf.mxu0
    %v1272 = vadd.f32 %v1235, %v1271
    %1273 = vdwg.mxu0
    %v1274 = vand.u32 %v245, 4294901760
    %1275 = vmatpush.msra.mxu0 %v1274
    %v1276 = vand.u32 %v238, 4294901760
    %1277 = vmatpush.msra.mxu0 %v1276
    %v1278 = vand.u32 %v231, 4294901760
    %1279 = vmatpush.msra.mxu0 %v1278
    %v1280 = vand.u32 %v224, 4294901760
    %1281 = vmatpush.msra.mxu0 %v1280
    %v1282 = vand.u32 %v217, 4294901760
    %1283 = vmatpush.msra.mxu0 %v1282
    %v1284 = vand.u32 %v210, 4294901760
    %1285 = vmatpush.msra.mxu0 %v1284
    %v1286 = vand.u32 %v203, 4294901760
    %1287 = vmatpush.msra.mxu0 %v1286
    %v1288 = vand.u32 %v196, 4294901760
    %1289 = vmatpush.msra.mxu0 %v1288
    %v1290 = vand.u32 %v189, 4294901760
    %1291 = vmatpush.msra.mxu0 %v1290
    %v1292 = vand.u32 %v182, 4294901760
    %1293 = vmatpush.msra.mxu0 %v1292
    %v1294 = vand.u32 %v175, 4294901760
    %1295 = vmatpush.msra.mxu0 %v1294
    %v1296 = vand.u32 %v168, 4294901760
    %1297 = vmatpush.msra.mxu0 %v1296
    %v1298 = vand.u32 %v161, 4294901760
    %1299 = vmatpush.msra.mxu0 %v1298
    %v1300 = vand.u32 %v154, 4294901760
    %1301 = vmatpush.msra.mxu0 %v1300
    %v1302 = vand.u32 %v147, 4294901760
    %1303 = vmatpush.msra.mxu0 %v1302
    %v1304 = vand.u32 %v140, 4294901760
    %1305 = vmatpush.msra.mxu0 %v1304
    %v1306 = vand.u32 %v26, 4294901760
    %v1307 = vsub.f32 %v26, %v1306
    %v1308 = vand.u32 %v1307, 4294901760
    %v1309 = vsub.f32 %v1307, %v1308
    %v1310 = vand.u32 %v1309, 4294901760
    %1311 = vmatmul.f32.gmra.mxu0 %v1310
    %v1312 = vpop.f32.mrf.mxu0
    %v1313 = vadd.f32 %v1272, %v1312
    %1314 = vdwg.mxu0
    %v1315 = vand.u32 %v245, 4294901760
    %v1316 = vsub.f32 %v245, %v1315
    %v1317 = vand.u32 %v1316, 4294901760
    %v1318 = vsub.f32 %v1316, %v1317
    %v1319 = vand.u32 %v1318, 4294901760
    %1320 = vmatpush.msra.mxu0 %v1319
    %v1321 = vand.u32 %v238, 4294901760
    %v1322 = vsub.f32 %v238, %v1321
    %v1323 = vand.u32 %v1322, 4294901760
    %v1324 = vsub.f32 %v1322, %v1323
    %v1325 = vand.u32 %v1324, 4294901760
    %1326 = vmatpush.msra.mxu0 %v1325
    %v1327 = vand.u32 %v231, 4294901760
    %v1328 = vsub.f32 %v231, %v1327
    %v1329 = vand.u32 %v1328, 4294901760
    %v1330 = vsub.f32 %v1328, %v1329
    %v1331 = vand.u32 %v1330, 4294901760
    %1332 = vmatpush.msra.mxu0 %v1331
    %v1333 = vand.u32 %v224, 4294901760
    %v1334 = vsub.f32 %v224, %v1333
    %v1335 = vand.u32 %v1334, 4294901760
    %v1336 = vsub.f32 %v1334, %v1335
    %v1337 = vand.u32 %v1336, 4294901760
    %1338 = vmatpush.msra.mxu0 %v1337
    %v1339 = vand.u32 %v217, 4294901760
    %v1340 = vsub.f32 %v217, %v1339
    %v1341 = vand.u32 %v1340, 4294901760
    %v1342 = vsub.f32 %v1340, %v1341
    %v1343 = vand.u32 %v1342, 4294901760
    %1344 = vmatpush.msra.mxu0 %v1343
    %v1345 = vand.u32 %v210, 4294901760
    %v1346 = vsub.f32 %v210, %v1345
    %v1347 = vand.u32 %v1346, 4294901760
    %v1348 = vsub.f32 %v1346, %v1347
    %v1349 = vand.u32 %v1348, 4294901760
    %1350 = vmatpush.msra.mxu0 %v1349
    %v1351 = vand.u32 %v203, 4294901760
    %v1352 = vsub.f32 %v203, %v1351
    %v1353 = vand.u32 %v1352, 4294901760
    %v1354 = vsub.f32 %v1352, %v1353
    %v1355 = vand.u32 %v1354, 4294901760
    %1356 = vmatpush.msra.mxu0 %v1355
    %v1357 = vand.u32 %v196, 4294901760
    %v1358 = vsub.f32 %v196, %v1357
    %v1359 = vand.u32 %v1358, 4294901760
    %v1360 = vsub.f32 %v1358, %v1359
    %v1361 = vand.u32 %v1360, 4294901760
    %1362 = vmatpush.msra.mxu0 %v1361
    %v1363 = vand.u32 %v189, 4294901760
    %v1364 = vsub.f32 %v189, %v1363
    %v1365 = vand.u32 %v1364, 4294901760
    %v1366 = vsub.f32 %v1364, %v1365
    %v1367 = vand.u32 %v1366, 4294901760
    %1368 = vmatpush.msra.mxu0 %v1367
    %v1369 = vand.u32 %v182, 4294901760
    %v1370 = vsub.f32 %v182, %v1369
    %v1371 = vand.u32 %v1370, 4294901760
    %v1372 = vsub.f32 %v1370, %v1371
    %v1373 = vand.u32 %v1372, 4294901760
    %1374 = vmatpush.msra.mxu0 %v1373
    %v1375 = vand.u32 %v175, 4294901760
    %v1376 = vsub.f32 %v175, %v1375
    %v1377 = vand.u32 %v1376, 4294901760
    %v1378 = vsub.f32 %v1376, %v1377
    %v1379 = vand.u32 %v1378, 4294901760
    %1380 = vmatpush.msra.mxu0 %v1379
    %v1381 = vand.u32 %v168, 4294901760
    %v1382 = vsub.f32 %v168, %v1381
    %v1383 = vand.u32 %v1382, 4294901760
    %v1384 = vsub.f32 %v1382, %v1383
    %v1385 = vand.u32 %v1384, 4294901760
    %1386 = vmatpush.msra.mxu0 %v1385
    %v1387 = vand.u32 %v161, 4294901760
    %v1388 = vsub.f32 %v161, %v1387
    %v1389 = vand.u32 %v1388, 4294901760
    %v1390 = vsub.f32 %v1388, %v1389
    %v1391 = vand.u32 %v1390, 4294901760
    %1392 = vmatpush.msra.mxu0 %v1391
    %v1393 = vand.u32 %v154, 4294901760
    %v1394 = vsub.f32 %v154, %v1393
    %v1395 = vand.u32 %v1394, 4294901760
    %v1396 = vsub.f32 %v1394, %v1395
    %v1397 = vand.u32 %v1396, 4294901760
    %1398 = vmatpush.msra.mxu0 %v1397
    %v1399 = vand.u32 %v147, 4294901760
    %v1400 = vsub.f32 %v147, %v1399
    %v1401 = vand.u32 %v1400, 4294901760
    %v1402 = vsub.f32 %v1400, %v1401
    %v1403 = vand.u32 %v1402, 4294901760
    %1404 = vmatpush.msra.mxu0 %v1403
    %v1405 = vand.u32 %v140, 4294901760
    %v1406 = vsub.f32 %v140, %v1405
    %v1407 = vand.u32 %v1406, 4294901760
    %v1408 = vsub.f32 %v1406, %v1407
    %v1409 = vand.u32 %v1408, 4294901760
    %1410 = vmatpush.msra.mxu0 %v1409
    %v1411 = vand.u32 %v26, 4294901760
    %1412 = vmatmul.f32.gmra.mxu0 %v1411
    %v1413 = vpop.f32.mrf.mxu0
    %v1414 = vadd.f32 %v1313, %v1413
    %1415 = vdwg.mxu0
    %v1416 = vand.u32 %v245, 4294901760
    %v1417 = vsub.f32 %v245, %v1416
    %1418 = vmatpush.msra.mxu0 %v1417
    %v1419 = vand.u32 %v238, 4294901760
    %v1420 = vsub.f32 %v238, %v1419
    %1421 = vmatpush.msra.mxu0 %v1420
    %v1422 = vand.u32 %v231, 4294901760
    %v1423 = vsub.f32 %v231, %v1422
    %1424 = vmatpush.msra.mxu0 %v1423
    %v1425 = vand.u32 %v224, 4294901760
    %v1426 = vsub.f32 %v224, %v1425
    %1427 = vmatpush.msra.mxu0 %v1426
    %v1428 = vand.u32 %v217, 4294901760
    %v1429 = vsub.f32 %v217, %v1428
    %1430 = vmatpush.msra.mxu0 %v1429
    %v1431 = vand.u32 %v210, 4294901760
    %v1432 = vsub.f32 %v210, %v1431
    %1433 = vmatpush.msra.mxu0 %v1432
    %v1434 = vand.u32 %v203, 4294901760
    %v1435 = vsub.f32 %v203, %v1434
    %1436 = vmatpush.msra.mxu0 %v1435
    %v1437 = vand.u32 %v196, 4294901760
    %v1438 = vsub.f32 %v196, %v1437
    %1439 = vmatpush.msra.mxu0 %v1438
    %v1440 = vand.u32 %v189, 4294901760
    %v1441 = vsub.f32 %v189, %v1440
    %1442 = vmatpush.msra.mxu0 %v1441
    %v1443 = vand.u32 %v182, 4294901760
    %v1444 = vsub.f32 %v182, %v1443
    %1445 = vmatpush.msra.mxu0 %v1444
    %v1446 = vand.u32 %v175, 4294901760
    %v1447 = vsub.f32 %v175, %v1446
    %1448 = vmatpush.msra.mxu0 %v1447
    %v1449 = vand.u32 %v168, 4294901760
    %v1450 = vsub.f32 %v168, %v1449
    %1451 = vmatpush.msra.mxu0 %v1450
    %v1452 = vand.u32 %v161, 4294901760
    %v1453 = vsub.f32 %v161, %v1452
    %1454 = vmatpush.msra.mxu0 %v1453
    %v1455 = vand.u32 %v154, 4294901760
    %v1456 = vsub.f32 %v154, %v1455
    %1457 = vmatpush.msra.mxu0 %v1456
    %v1458 = vand.u32 %v147, 4294901760
    %v1459 = vsub.f32 %v147, %v1458
    %1460 = vmatpush.msra.mxu0 %v1459
    %v1461 = vand.u32 %v140, 4294901760
    %v1462 = vsub.f32 %v140, %v1461
    %1463 = vmatpush.msra.mxu0 %v1462
    %v1464 = vand.u32 %v26, 4294901760
    %v1465 = vsub.f32 %v26, %v1464
    %1466 = vmatmul.f32.gmra.mxu0 %v1465
    %v1467 = vpop.f32.mrf.mxu0
    %v1468 = vadd.f32 %v1414, %v1467
    %1469 = vdwg.mxu0
    %v1470 = vand.u32 %v245, 4294901760
    %1471 = vmatpush.msra.mxu0 %v1470
    %v1472 = vand.u32 %v238, 4294901760
    %1473 = vmatpush.msra.mxu0 %v1472
    %v1474 = vand.u32 %v231, 4294901760
    %1475 = vmatpush.msra.mxu0 %v1474
    %v1476 = vand.u32 %v224, 4294901760
    %1477 = vmatpush.msra.mxu0 %v1476
    %v1478 = vand.u32 %v217, 4294901760
    %1479 = vmatpush.msra.mxu0 %v1478
    %v1480 = vand.u32 %v210, 4294901760
    %1481 = vmatpush.msra.mxu0 %v1480
    %v1482 = vand.u32 %v203, 4294901760
    %1483 = vmatpush.msra.mxu0 %v1482
    %v1484 = vand.u32 %v196, 4294901760
    %1485 = vmatpush.msra.mxu0 %v1484
    %v1486 = vand.u32 %v189, 4294901760
    %1487 = vmatpush.msra.mxu0 %v1486
    %v1488 = vand.u32 %v182, 4294901760
    %1489 = vmatpush.msra.mxu0 %v1488
    %v1490 = vand.u32 %v175, 4294901760
    %1491 = vmatpush.msra.mxu0 %v1490
    %v1492 = vand.u32 %v168, 4294901760
    %1493 = vmatpush.msra.mxu0 %v1492
    %v1494 = vand.u32 %v161, 4294901760
    %1495 = vmatpush.msra.mxu0 %v1494
    %v1496 = vand.u32 %v154, 4294901760
    %1497 = vmatpush.msra.mxu0 %v1496
    %v1498 = vand.u32 %v147, 4294901760
    %1499 = vmatpush.msra.mxu0 %v1498
    %v1500 = vand.u32 %v140, 4294901760
    %1501 = vmatpush.msra.mxu0 %v1500
    %v1502 = vand.u32 %v26, 4294901760
    %v1503 = vsub.f32 %v26, %v1502
    %v1504 = vand.u32 %v1503, 4294901760
    %1505 = vmatmul.f32.gmra.mxu0 %v1504
    %v1506 = vpop.f32.mrf.mxu0
    %v1507 = vadd.f32 %v1468, %v1506
    %1508 = vdwg.mxu0
    %v1509 = vand.u32 %v245, 4294901760
    %v1510 = vsub.f32 %v245, %v1509
    %v1511 = vand.u32 %v1510, 4294901760
    %1512 = vmatpush.msra.mxu0 %v1511
    %v1513 = vand.u32 %v238, 4294901760
    %v1514 = vsub.f32 %v238, %v1513
    %v1515 = vand.u32 %v1514, 4294901760
    %1516 = vmatpush.msra.mxu0 %v1515
    %v1517 = vand.u32 %v231, 4294901760
    %v1518 = vsub.f32 %v231, %v1517
    %v1519 = vand.u32 %v1518, 4294901760
    %1520 = vmatpush.msra.mxu0 %v1519
    %v1521 = vand.u32 %v224, 4294901760
    %v1522 = vsub.f32 %v224, %v1521
    %v1523 = vand.u32 %v1522, 4294901760
    %1524 = vmatpush.msra.mxu0 %v1523
    %v1525 = vand.u32 %v217, 4294901760
    %v1526 = vsub.f32 %v217, %v1525
    %v1527 = vand.u32 %v1526, 4294901760
    %1528 = vmatpush.msra.mxu0 %v1527
    %v1529 = vand.u32 %v210, 4294901760
    %v1530 = vsub.f32 %v210, %v1529
    %v1531 = vand.u32 %v1530, 4294901760
    %1532 = vmatpush.msra.mxu0 %v1531
    %v1533 = vand.u32 %v203, 4294901760
    %v1534 = vsub.f32 %v203, %v1533
    %v1535 = vand.u32 %v1534, 4294901760
    %1536 = vmatpush.msra.mxu0 %v1535
    %v1537 = vand.u32 %v196, 4294901760
    %v1538 = vsub.f32 %v196, %v1537
    %v1539 = vand.u32 %v1538, 4294901760
    %1540 = vmatpush.msra.mxu0 %v1539
    %v1541 = vand.u32 %v189, 4294901760
    %v1542 = vsub.f32 %v189, %v1541
    %v1543 = vand.u32 %v1542, 4294901760
    %1544 = vmatpush.msra.mxu0 %v1543
    %v1545 = vand.u32 %v182, 4294901760
    %v1546 = vsub.f32 %v182, %v1545
    %v1547 = vand.u32 %v1546, 4294901760
    %1548 = vmatpush.msra.mxu0 %v1547
    %v1549 = vand.u32 %v175, 4294901760
    %v1550 = vsub.f32 %v175, %v1549
    %v1551 = vand.u32 %v1550, 4294901760
    %1552 = vmatpush.msra.mxu0 %v1551
    %v1553 = vand.u32 %v168, 4294901760
    %v1554 = vsub.f32 %v168, %v1553
    %v1555 = vand.u32 %v1554, 4294901760
    %1556 = vmatpush.msra.mxu0 %v1555
    %v1557 = vand.u32 %v161, 4294901760
    %v1558 = vsub.f32 %v161, %v1557
    %v1559 = vand.u32 %v1558, 4294901760
    %1560 = vmatpush.msra.mxu0 %v1559
    %v1561 = vand.u32 %v154, 4294901760
    %v1562 = vsub.f32 %v154, %v1561
    %v1563 = vand.u32 %v1562, 4294901760
    %1564 = vmatpush.msra.mxu0 %v1563
    %v1565 = vand.u32 %v147, 4294901760
    %v1566 = vsub.f32 %v147, %v1565
    %v1567 = vand.u32 %v1566, 4294901760
    %1568 = vmatpush.msra.mxu0 %v1567
    %v1569 = vand.u32 %v140, 4294901760
    %v1570 = vsub.f32 %v140, %v1569
    %v1571 = vand.u32 %v1570, 4294901760
    %1572 = vmatpush.msra.mxu0 %v1571
    %v1573 = vand.u32 %v26, 4294901760
    %1574 = vmatmul.f32.gmra.mxu0 %v1573
    %v1575 = vpop.f32.mrf.mxu0
    %v1576 = vadd.f32 %v1507, %v1575
    %1577 = vdwg.mxu0
    %v1578 = vand.u32 %v245, 4294901760
    %1579 = vmatpush.msra.mxu0 %v1578
    %v1580 = vand.u32 %v238, 4294901760
    %1581 = vmatpush.msra.mxu0 %v1580
    %v1582 = vand.u32 %v231, 4294901760
    %1583 = vmatpush.msra.mxu0 %v1582
    %v1584 = vand.u32 %v224, 4294901760
    %1585 = vmatpush.msra.mxu0 %v1584
    %v1586 = vand.u32 %v217, 4294901760
    %1587 = vmatpush.msra.mxu0 %v1586
    %v1588 = vand.u32 %v210, 4294901760
    %1589 = vmatpush.msra.mxu0 %v1588
    %v1590 = vand.u32 %v203, 4294901760
    %1591 = vmatpush.msra.mxu0 %v1590
    %v1592 = vand.u32 %v196, 4294901760
    %1593 = vmatpush.msra.mxu0 %v1592
    %v1594 = vand.u32 %v189, 4294901760
    %1595 = vmatpush.msra.mxu0 %v1594
    %v1596 = vand.u32 %v182, 4294901760
    %1597 = vmatpush.msra.mxu0 %v1596
    %v1598 = vand.u32 %v175, 4294901760
    %1599 = vmatpush.msra.mxu0 %v1598
    %v1600 = vand.u32 %v168, 4294901760
    %1601 = vmatpush.msra.mxu0 %v1600
    %v1602 = vand.u32 %v161, 4294901760
    %1603 = vmatpush.msra.mxu0 %v1602
    %v1604 = vand.u32 %v154, 4294901760
    %1605 = vmatpush.msra.mxu0 %v1604
    %v1606 = vand.u32 %v147, 4294901760
    %1607 = vmatpush.msra.mxu0 %v1606
    %v1608 = vand.u32 %v140, 4294901760
    %1609 = vmatpush.msra.mxu0 %v1608
    %v1610 = vand.u32 %v26, 4294901760
    %1611 = vmatmul.f32.gmra.mxu0 %v1610
    %v1612 = vpop.f32.mrf.mxu0
    %v1613 = vadd.f32 %v1576, %v1612
    %1614 = vdwg.mxu0
    %v1615 = vand.u32 %v134, 4294901760
    %1616 = vmatpush.msra.mxu0 %v1615
    %v1617 = vand.u32 %v127, 4294901760
    %1618 = vmatpush.msra.mxu0 %v1617
    %v1619 = vand.u32 %v120, 4294901760
    %1620 = vmatpush.msra.mxu0 %v1619
    %v1621 = vand.u32 %v113, 4294901760
    %1622 = vmatpush.msra.mxu0 %v1621
    %v1623 = vand.u32 %v106, 4294901760
    %1624 = vmatpush.msra.mxu0 %v1623
    %v1625 = vand.u32 %v99, 4294901760
    %1626 = vmatpush.msra.mxu0 %v1625
    %v1627 = vand.u32 %v92, 4294901760
    %1628 = vmatpush.msra.mxu0 %v1627
    %v1629 = vand.u32 %v85, 4294901760
    %1630 = vmatpush.msra.mxu0 %v1629
    %v1631 = vand.u32 %v78, 4294901760
    %1632 = vmatpush.msra.mxu0 %v1631
    %v1633 = vand.u32 %v71, 4294901760
    %1634 = vmatpush.msra.mxu0 %v1633
    %v1635 = vand.u32 %v64, 4294901760
    %1636 = vmatpush.msra.mxu0 %v1635
    %v1637 = vand.u32 %v57, 4294901760
    %1638 = vmatpush.msra.mxu0 %v1637
    %v1639 = vand.u32 %v50, 4294901760
    %1640 = vmatpush.msra.mxu0 %v1639
    %v1641 = vand.u32 %v43, 4294901760
    %1642 = vmatpush.msra.mxu0 %v1641
    %v1643 = vand.u32 %v36, 4294901760
    %1644 = vmatpush.msra.mxu0 %v1643
    %v1645 = vand.u32 %v29, 4294901760
    %1646 = vmatpush.msra.mxu0 %v1645
    %v1647 = vand.u32 %v25, 4294901760
    %v1648 = vsub.f32 %v25, %v1647
    %v1649 = vand.u32 %v1648, 4294901760
    %v1650 = vsub.f32 %v1648, %v1649
    %v1651 = vand.u32 %v1650, 4294901760
    %1652 = vmatmul.f32.gmra.mxu0 %v1651
    %v1653 = vpop.f32.mrf.mxu0
    %v1654 = vadd.f32 0.0, %v1653
    %1655 = vdwg.mxu0
    %v1656 = vand.u32 %v134, 4294901760
    %v1657 = vsub.f32 %v134, %v1656
    %v1658 = vand.u32 %v1657, 4294901760
    %v1659 = vsub.f32 %v1657, %v1658
    %v1660 = vand.u32 %v1659, 4294901760
    %1661 = vmatpush.msra.mxu0 %v1660
    %v1662 = vand.u32 %v127, 4294901760
    %v1663 = vsub.f32 %v127, %v1662
    %v1664 = vand.u32 %v1663, 4294901760
    %v1665 = vsub.f32 %v1663, %v1664
    %v1666 = vand.u32 %v1665, 4294901760
    %1667 = vmatpush.msra.mxu0 %v1666
    %v1668 = vand.u32 %v120, 4294901760
    %v1669 = vsub.f32 %v120, %v1668
    %v1670 = vand.u32 %v1669, 4294901760
    %v1671 = vsub.f32 %v1669, %v1670
    %v1672 = vand.u32 %v1671, 4294901760
    %1673 = vmatpush.msra.mxu0 %v1672
    %v1674 = vand.u32 %v113, 4294901760
    %v1675 = vsub.f32 %v113, %v1674
    %v1676 = vand.u32 %v1675, 4294901760
    %v1677 = vsub.f32 %v1675, %v1676
    %v1678 = vand.u32 %v1677, 4294901760
    %1679 = vmatpush.msra.mxu0 %v1678
    %v1680 = vand.u32 %v106, 4294901760
    %v1681 = vsub.f32 %v106, %v1680
    %v1682 = vand.u32 %v1681, 4294901760
    %v1683 = vsub.f32 %v1681, %v1682
    %v1684 = vand.u32 %v1683, 4294901760
    %1685 = vmatpush.msra.mxu0 %v1684
    %v1686 = vand.u32 %v99, 4294901760
    %v1687 = vsub.f32 %v99, %v1686
    %v1688 = vand.u32 %v1687, 4294901760
    %v1689 = vsub.f32 %v1687, %v1688
    %v1690 = vand.u32 %v1689, 4294901760
    %1691 = vmatpush.msra.mxu0 %v1690
    %v1692 = vand.u32 %v92, 4294901760
    %v1693 = vsub.f32 %v92, %v1692
    %v1694 = vand.u32 %v1693, 4294901760
    %v1695 = vsub.f32 %v1693, %v1694
    %v1696 = vand.u32 %v1695, 4294901760
    %1697 = vmatpush.msra.mxu0 %v1696
    %v1698 = vand.u32 %v85, 4294901760
    %v1699 = vsub.f32 %v85, %v1698
    %v1700 = vand.u32 %v1699, 4294901760
    %v1701 = vsub.f32 %v1699, %v1700
    %v1702 = vand.u32 %v1701, 4294901760
    %1703 = vmatpush.msra.mxu0 %v1702
    %v1704 = vand.u32 %v78, 4294901760
    %v1705 = vsub.f32 %v78, %v1704
    %v1706 = vand.u32 %v1705, 4294901760
    %v1707 = vsub.f32 %v1705, %v1706
    %v1708 = vand.u32 %v1707, 4294901760
    %1709 = vmatpush.msra.mxu0 %v1708
    %v1710 = vand.u32 %v71, 4294901760
    %v1711 = vsub.f32 %v71, %v1710
    %v1712 = vand.u32 %v1711, 4294901760
    %v1713 = vsub.f32 %v1711, %v1712
    %v1714 = vand.u32 %v1713, 4294901760
    %1715 = vmatpush.msra.mxu0 %v1714
    %v1716 = vand.u32 %v64, 4294901760
    %v1717 = vsub.f32 %v64, %v1716
    %v1718 = vand.u32 %v1717, 4294901760
    %v1719 = vsub.f32 %v1717, %v1718
    %v1720 = vand.u32 %v1719, 4294901760
    %1721 = vmatpush.msra.mxu0 %v1720
    %v1722 = vand.u32 %v57, 4294901760
    %v1723 = vsub.f32 %v57, %v1722
    %v1724 = vand.u32 %v1723, 4294901760
    %v1725 = vsub.f32 %v1723, %v1724
    %v1726 = vand.u32 %v1725, 4294901760
    %1727 = vmatpush.msra.mxu0 %v1726
    %v1728 = vand.u32 %v50, 4294901760
    %v1729 = vsub.f32 %v50, %v1728
    %v1730 = vand.u32 %v1729, 4294901760
    %v1731 = vsub.f32 %v1729, %v1730
    %v1732 = vand.u32 %v1731, 4294901760
    %1733 = vmatpush.msra.mxu0 %v1732
    %v1734 = vand.u32 %v43, 4294901760
    %v1735 = vsub.f32 %v43, %v1734
    %v1736 = vand.u32 %v1735, 4294901760
    %v1737 = vsub.f32 %v1735, %v1736
    %v1738 = vand.u32 %v1737, 4294901760
    %1739 = vmatpush.msra.mxu0 %v1738
    %v1740 = vand.u32 %v36, 4294901760
    %v1741 = vsub.f32 %v36, %v1740
    %v1742 = vand.u32 %v1741, 4294901760
    %v1743 = vsub.f32 %v1741, %v1742
    %v1744 = vand.u32 %v1743, 4294901760
    %1745 = vmatpush.msra.mxu0 %v1744
    %v1746 = vand.u32 %v29, 4294901760
    %v1747 = vsub.f32 %v29, %v1746
    %v1748 = vand.u32 %v1747, 4294901760
    %v1749 = vsub.f32 %v1747, %v1748
    %v1750 = vand.u32 %v1749, 4294901760
    %1751 = vmatpush.msra.mxu0 %v1750
    %v1752 = vand.u32 %v25, 4294901760
    %1753 = vmatmul.f32.gmra.mxu0 %v1752
    %v1754 = vpop.f32.mrf.mxu0
    %v1755 = vadd.f32 %v1654, %v1754
    %1756 = vdwg.mxu0
    %v1757 = vand.u32 %v134, 4294901760
    %v1758 = vsub.f32 %v134, %v1757
    %1759 = vmatpush.msra.mxu0 %v1758
    %v1760 = vand.u32 %v127, 4294901760
    %v1761 = vsub.f32 %v127, %v1760
    %1762 = vmatpush.msra.mxu0 %v1761
    %v1763 = vand.u32 %v120, 4294901760
    %v1764 = vsub.f32 %v120, %v1763
    %1765 = vmatpush.msra.mxu0 %v1764
    %v1766 = vand.u32 %v113, 4294901760
    %v1767 = vsub.f32 %v113, %v1766
    %1768 = vmatpush.msra.mxu0 %v1767
    %v1769 = vand.u32 %v106, 4294901760
    %v1770 = vsub.f32 %v106, %v1769
    %1771 = vmatpush.msra.mxu0 %v1770
    %v1772 = vand.u32 %v99, 4294901760
    %v1773 = vsub.f32 %v99, %v1772
    %1774 = vmatpush.msra.mxu0 %v1773
    %v1775 = vand.u32 %v92, 4294901760
    %v1776 = vsub.f32 %v92, %v1775
    %1777 = vmatpush.msra.mxu0 %v1776
    %v1778 = vand.u32 %v85, 4294901760
    %v1779 = vsub.f32 %v85, %v1778
    %1780 = vmatpush.msra.mxu0 %v1779
    %v1781 = vand.u32 %v78, 4294901760
    %v1782 = vsub.f32 %v78, %v1781
    %1783 = vmatpush.msra.mxu0 %v1782
    %v1784 = vand.u32 %v71, 4294901760
    %v1785 = vsub.f32 %v71, %v1784
    %1786 = vmatpush.msra.mxu0 %v1785
    %v1787 = vand.u32 %v64, 4294901760
    %v1788 = vsub.f32 %v64, %v1787
    %1789 = vmatpush.msra.mxu0 %v1788
    %v1790 = vand.u32 %v57, 4294901760
    %v1791 = vsub.f32 %v57, %v1790
    %1792 = vmatpush.msra.mxu0 %v1791
    %v1793 = vand.u32 %v50, 4294901760
    %v1794 = vsub.f32 %v50, %v1793
    %1795 = vmatpush.msra.mxu0 %v1794
    %v1796 = vand.u32 %v43, 4294901760
    %v1797 = vsub.f32 %v43, %v1796
    %1798 = vmatpush.msra.mxu0 %v1797
    %v1799 = vand.u32 %v36, 4294901760
    %v1800 = vsub.f32 %v36, %v1799
    %1801 = vmatpush.msra.mxu0 %v1800
    %v1802 = vand.u32 %v29, 4294901760
    %v1803 = vsub.f32 %v29, %v1802
    %1804 = vmatpush.msra.mxu0 %v1803
    %v1805 = vand.u32 %v25, 4294901760
    %v1806 = vsub.f32 %v25, %v1805
    %1807 = vmatmul.f32.gmra.mxu0 %v1806
    %v1808 = vpop.f32.mrf.mxu0
    %v1809 = vadd.f32 %v1755, %v1808
    %1810 = vdwg.mxu0
    %v1811 = vand.u32 %v134, 4294901760
    %1812 = vmatpush.msra.mxu0 %v1811
    %v1813 = vand.u32 %v127, 4294901760
    %1814 = vmatpush.msra.mxu0 %v1813
    %v1815 = vand.u32 %v120, 4294901760
    %1816 = vmatpush.msra.mxu0 %v1815
    %v1817 = vand.u32 %v113, 4294901760
    %1818 = vmatpush.msra.mxu0 %v1817
    %v1819 = vand.u32 %v106, 4294901760
    %1820 = vmatpush.msra.mxu0 %v1819
    %v1821 = vand.u32 %v99, 4294901760
    %1822 = vmatpush.msra.mxu0 %v1821
    %v1823 = vand.u32 %v92, 4294901760
    %1824 = vmatpush.msra.mxu0 %v1823
    %v1825 = vand.u32 %v85, 4294901760
    %1826 = vmatpush.msra.mxu0 %v1825
    %v1827 = vand.u32 %v78, 4294901760
    %1828 = vmatpush.msra.mxu0 %v1827
    %v1829 = vand.u32 %v71, 4294901760
    %1830 = vmatpush.msra.mxu0 %v1829
    %v1831 = vand.u32 %v64, 4294901760
    %1832 = vmatpush.msra.mxu0 %v1831
    %v1833 = vand.u32 %v57, 4294901760
    %1834 = vmatpush.msra.mxu0 %v1833
    %v1835 = vand.u32 %v50, 4294901760
    %1836 = vmatpush.msra.mxu0 %v1835
    %v1837 = vand.u32 %v43, 4294901760
    %1838 = vmatpush.msra.mxu0 %v1837
    %v1839 = vand.u32 %v36, 4294901760
    %1840 = vmatpush.msra.mxu0 %v1839
    %v1841 = vand.u32 %v29, 4294901760
    %1842 = vmatpush.msra.mxu0 %v1841
    %v1843 = vand.u32 %v25, 4294901760
    %v1844 = vsub.f32 %v25, %v1843
    %v1845 = vand.u32 %v1844, 4294901760
    %1846 = vmatmul.f32.gmra.mxu0 %v1845
    %v1847 = vpop.f32.mrf.mxu0
    %v1848 = vadd.f32 %v1809, %v1847
    %1849 = vdwg.mxu0
    %v1850 = vand.u32 %v134, 4294901760
    %v1851 = vsub.f32 %v134, %v1850
    %v1852 = vand.u32 %v1851, 4294901760
    %1853 = vmatpush.msra.mxu0 %v1852
    %v1854 = vand.u32 %v127, 4294901760
    %v1855 = vsub.f32 %v127, %v1854
    %v1856 = vand.u32 %v1855, 4294901760
    %1857 = vmatpush.msra.mxu0 %v1856
    %v1858 = vand.u32 %v120, 4294901760
    %v1859 = vsub.f32 %v120, %v1858
    %v1860 = vand.u32 %v1859, 4294901760
    %1861 = vmatpush.msra.mxu0 %v1860
    %v1862 = vand.u32 %v113, 4294901760
    %v1863 = vsub.f32 %v113, %v1862
    %v1864 = vand.u32 %v1863, 4294901760
    %1865 = vmatpush.msra.mxu0 %v1864
    %v1866 = vand.u32 %v106, 4294901760
    %v1867 = vsub.f32 %v106, %v1866
    %v1868 = vand.u32 %v1867, 4294901760
    %1869 = vmatpush.msra.mxu0 %v1868
    %v1870 = vand.u32 %v99, 4294901760
    %v1871 = vsub.f32 %v99, %v1870
    %v1872 = vand.u32 %v1871, 4294901760
    %1873 = vmatpush.msra.mxu0 %v1872
    %v1874 = vand.u32 %v92, 4294901760
    %v1875 = vsub.f32 %v92, %v1874
    %v1876 = vand.u32 %v1875, 4294901760
    %1877 = vmatpush.msra.mxu0 %v1876
    %v1878 = vand.u32 %v85, 4294901760
    %v1879 = vsub.f32 %v85, %v1878
    %v1880 = vand.u32 %v1879, 4294901760
    %1881 = vmatpush.msra.mxu0 %v1880
    %v1882 = vand.u32 %v78, 4294901760
    %v1883 = vsub.f32 %v78, %v1882
    %v1884 = vand.u32 %v1883, 4294901760
    %1885 = vmatpush.msra.mxu0 %v1884
    %v1886 = vand.u32 %v71, 4294901760
    %v1887 = vsub.f32 %v71, %v1886
    %v1888 = vand.u32 %v1887, 4294901760
    %1889 = vmatpush.msra.mxu0 %v1888
    %v1890 = vand.u32 %v64, 4294901760
    %v1891 = vsub.f32 %v64, %v1890
    %v1892 = vand.u32 %v1891, 4294901760
    %1893 = vmatpush.msra.mxu0 %v1892
    %v1894 = vand.u32 %v57, 4294901760
    %v1895 = vsub.f32 %v57, %v1894
    %v1896 = vand.u32 %v1895, 4294901760
    %1897 = vmatpush.msra.mxu0 %v1896
    %v1898 = vand.u32 %v50, 4294901760
    %v1899 = vsub.f32 %v50, %v1898
    %v1900 = vand.u32 %v1899, 4294901760
    %1901 = vmatpush.msra.mxu0 %v1900
    %v1902 = vand.u32 %v43, 4294901760
    %v1903 = vsub.f32 %v43, %v1902
    %v1904 = vand.u32 %v1903, 4294901760
    %1905 = vmatpush.msra.mxu0 %v1904
    %v1906 = vand.u32 %v36, 4294901760
    %v1907 = vsub.f32 %v36, %v1906
    %v1908 = vand.u32 %v1907, 4294901760
    %1909 = vmatpush.msra.mxu0 %v1908
    %v1910 = vand.u32 %v29, 4294901760
    %v1911 = vsub.f32 %v29, %v1910
    %v1912 = vand.u32 %v1911, 4294901760
    %1913 = vmatpush.msra.mxu0 %v1912
    %v1914 = vand.u32 %v25, 4294901760
    %1915 = vmatmul.f32.gmra.mxu0 %v1914
    %v1916 = vpop.f32.mrf.mxu0
    %v1917 = vadd.f32 %v1848, %v1916
    %1918 = vdwg.mxu0
    %v1919 = vand.u32 %v134, 4294901760
    %1920 = vmatpush.msra.mxu0 %v1919
    %v1921 = vand.u32 %v127, 4294901760
    %1922 = vmatpush.msra.mxu0 %v1921
    %v1923 = vand.u32 %v120, 4294901760
    %1924 = vmatpush.msra.mxu0 %v1923
    %v1925 = vand.u32 %v113, 4294901760
    %1926 = vmatpush.msra.mxu0 %v1925
    %v1927 = vand.u32 %v106, 4294901760
    %1928 = vmatpush.msra.mxu0 %v1927
    %v1929 = vand.u32 %v99, 4294901760
    %1930 = vmatpush.msra.mxu0 %v1929
    %v1931 = vand.u32 %v92, 4294901760
    %1932 = vmatpush.msra.mxu0 %v1931
    %v1933 = vand.u32 %v85, 4294901760
    %1934 = vmatpush.msra.mxu0 %v1933
    %v1935 = vand.u32 %v78, 4294901760
    %1936 = vmatpush.msra.mxu0 %v1935
    %v1937 = vand.u32 %v71, 4294901760
    %1938 = vmatpush.msra.mxu0 %v1937
    %v1939 = vand.u32 %v64, 4294901760
    %1940 = vmatpush.msra.mxu0 %v1939
    %v1941 = vand.u32 %v57, 4294901760
    %1942 = vmatpush.msra.mxu0 %v1941
    %v1943 = vand.u32 %v50, 4294901760
    %1944 = vmatpush.msra.mxu0 %v1943
    %v1945 = vand.u32 %v43, 4294901760
    %1946 = vmatpush.msra.mxu0 %v1945
    %v1947 = vand.u32 %v36, 4294901760
    %1948 = vmatpush.msra.mxu0 %v1947
    %v1949 = vand.u32 %v29, 4294901760
    %1950 = vmatpush.msra.mxu0 %v1949
    %v1951 = vand.u32 %v25, 4294901760
    %1952 = vmatmul.f32.gmra.mxu0 %v1951
    %v1953 = vpop.f32.mrf.mxu0
    %v1954 = vadd.f32 %v1917, %v1953
    %1955 = vdwg.mxu0
    %v1956 = vand.u32 %v246, 4294901760
    %1957 = vmatpush.msra.mxu0 %v1956
    %v1958 = vand.u32 %v239, 4294901760
    %1959 = vmatpush.msra.mxu0 %v1958
    %v1960 = vand.u32 %v232, 4294901760
    %1961 = vmatpush.msra.mxu0 %v1960
    %v1962 = vand.u32 %v225, 4294901760
    %1963 = vmatpush.msra.mxu0 %v1962
    %v1964 = vand.u32 %v218, 4294901760
    %1965 = vmatpush.msra.mxu0 %v1964
    %v1966 = vand.u32 %v211, 4294901760
    %1967 = vmatpush.msra.mxu0 %v1966
    %v1968 = vand.u32 %v204, 4294901760
    %1969 = vmatpush.msra.mxu0 %v1968
    %v1970 = vand.u32 %v197, 4294901760
    %1971 = vmatpush.msra.mxu0 %v1970
    %v1972 = vand.u32 %v190, 4294901760
    %1973 = vmatpush.msra.mxu0 %v1972
    %v1974 = vand.u32 %v183, 4294901760
    %1975 = vmatpush.msra.mxu0 %v1974
    %v1976 = vand.u32 %v176, 4294901760
    %1977 = vmatpush.msra.mxu0 %v1976
    %v1978 = vand.u32 %v169, 4294901760
    %1979 = vmatpush.msra.mxu0 %v1978
    %v1980 = vand.u32 %v162, 4294901760
    %1981 = vmatpush.msra.mxu0 %v1980
    %v1982 = vand.u32 %v155, 4294901760
    %1983 = vmatpush.msra.mxu0 %v1982
    %v1984 = vand.u32 %v148, 4294901760
    %1985 = vmatpush.msra.mxu0 %v1984
    %v1986 = vand.u32 %v141, 4294901760
    %1987 = vmatpush.msra.mxu0 %v1986
    %v1988 = vand.u32 %v26, 4294901760
    %v1989 = vsub.f32 %v26, %v1988
    %v1990 = vand.u32 %v1989, 4294901760
    %v1991 = vsub.f32 %v1989, %v1990
    %v1992 = vand.u32 %v1991, 4294901760
    %1993 = vmatmul.f32.gmra.mxu0 %v1992
    %v1994 = vpop.f32.mrf.mxu0
    %v1995 = vadd.f32 %v1954, %v1994
    %1996 = vdwg.mxu0
    %v1997 = vand.u32 %v246, 4294901760
    %v1998 = vsub.f32 %v246, %v1997
    %v1999 = vand.u32 %v1998, 4294901760
    %v2000 = vsub.f32 %v1998, %v1999
    %v2001 = vand.u32 %v2000, 4294901760
    %2002 = vmatpush.msra.mxu0 %v2001
    %v2003 = vand.u32 %v239, 4294901760
    %v2004 = vsub.f32 %v239, %v2003
    %v2005 = vand.u32 %v2004, 4294901760
    %v2006 = vsub.f32 %v2004, %v2005
    %v2007 = vand.u32 %v2006, 4294901760
    %2008 = vmatpush.msra.mxu0 %v2007
    %v2009 = vand.u32 %v232, 4294901760
    %v2010 = vsub.f32 %v232, %v2009
    %v2011 = vand.u32 %v2010, 4294901760
    %v2012 = vsub.f32 %v2010, %v2011
    %v2013 = vand.u32 %v2012, 4294901760
    %2014 = vmatpush.msra.mxu0 %v2013
    %v2015 = vand.u32 %v225, 4294901760
    %v2016 = vsub.f32 %v225, %v2015
    %v2017 = vand.u32 %v2016, 4294901760
    %v2018 = vsub.f32 %v2016, %v2017
    %v2019 = vand.u32 %v2018, 4294901760
    %2020 = vmatpush.msra.mxu0 %v2019
    %v2021 = vand.u32 %v218, 4294901760
    %v2022 = vsub.f32 %v218, %v2021
    %v2023 = vand.u32 %v2022, 4294901760
    %v2024 = vsub.f32 %v2022, %v2023
    %v2025 = vand.u32 %v2024, 4294901760
    %2026 = vmatpush.msra.mxu0 %v2025
    %v2027 = vand.u32 %v211, 4294901760
    %v2028 = vsub.f32 %v211, %v2027
    %v2029 = vand.u32 %v2028, 4294901760
    %v2030 = vsub.f32 %v2028, %v2029
    %v2031 = vand.u32 %v2030, 4294901760
    %2032 = vmatpush.msra.mxu0 %v2031
    %v2033 = vand.u32 %v204, 4294901760
    %v2034 = vsub.f32 %v204, %v2033
    %v2035 = vand.u32 %v2034, 4294901760
    %v2036 = vsub.f32 %v2034, %v2035
    %v2037 = vand.u32 %v2036, 4294901760
    %2038 = vmatpush.msra.mxu0 %v2037
    %v2039 = vand.u32 %v197, 4294901760
    %v2040 = vsub.f32 %v197, %v2039
    %v2041 = vand.u32 %v2040, 4294901760
    %v2042 = vsub.f32 %v2040, %v2041
    %v2043 = vand.u32 %v2042, 4294901760
    %2044 = vmatpush.msra.mxu0 %v2043
    %v2045 = vand.u32 %v190, 4294901760
    %v2046 = vsub.f32 %v190, %v2045
    %v2047 = vand.u32 %v2046, 4294901760
    %v2048 = vsub.f32 %v2046, %v2047
    %v2049 = vand.u32 %v2048, 4294901760
    %2050 = vmatpush.msra.mxu0 %v2049
    %v2051 = vand.u32 %v183, 4294901760
    %v2052 = vsub.f32 %v183, %v2051
    %v2053 = vand.u32 %v2052, 4294901760
    %v2054 = vsub.f32 %v2052, %v2053
    %v2055 = vand.u32 %v2054, 4294901760
    %2056 = vmatpush.msra.mxu0 %v2055
    %v2057 = vand.u32 %v176, 4294901760
    %v2058 = vsub.f32 %v176, %v2057
    %v2059 = vand.u32 %v2058, 4294901760
    %v2060 = vsub.f32 %v2058, %v2059
    %v2061 = vand.u32 %v2060, 4294901760
    %2062 = vmatpush.msra.mxu0 %v2061
    %v2063 = vand.u32 %v169, 4294901760
    %v2064 = vsub.f32 %v169, %v2063
    %v2065 = vand.u32 %v2064, 4294901760
    %v2066 = vsub.f32 %v2064, %v2065
    %v2067 = vand.u32 %v2066, 4294901760
    %2068 = vmatpush.msra.mxu0 %v2067
    %v2069 = vand.u32 %v162, 4294901760
    %v2070 = vsub.f32 %v162, %v2069
    %v2071 = vand.u32 %v2070, 4294901760
    %v2072 = vsub.f32 %v2070, %v2071
    %v2073 = vand.u32 %v2072, 4294901760
    %2074 = vmatpush.msra.mxu0 %v2073
    %v2075 = vand.u32 %v155, 4294901760
    %v2076 = vsub.f32 %v155, %v2075
    %v2077 = vand.u32 %v2076, 4294901760
    %v2078 = vsub.f32 %v2076, %v2077
    %v2079 = vand.u32 %v2078, 4294901760
    %2080 = vmatpush.msra.mxu0 %v2079
    %v2081 = vand.u32 %v148, 4294901760
    %v2082 = vsub.f32 %v148, %v2081
    %v2083 = vand.u32 %v2082, 4294901760
    %v2084 = vsub.f32 %v2082, %v2083
    %v2085 = vand.u32 %v2084, 4294901760
    %2086 = vmatpush.msra.mxu0 %v2085
    %v2087 = vand.u32 %v141, 4294901760
    %v2088 = vsub.f32 %v141, %v2087
    %v2089 = vand.u32 %v2088, 4294901760
    %v2090 = vsub.f32 %v2088, %v2089
    %v2091 = vand.u32 %v2090, 4294901760
    %2092 = vmatpush.msra.mxu0 %v2091
    %v2093 = vand.u32 %v26, 4294901760
    %2094 = vmatmul.f32.gmra.mxu0 %v2093
    %v2095 = vpop.f32.mrf.mxu0
    %v2096 = vadd.f32 %v1995, %v2095
    %2097 = vdwg.mxu0
    %v2098 = vand.u32 %v246, 4294901760
    %v2099 = vsub.f32 %v246, %v2098
    %2100 = vmatpush.msra.mxu0 %v2099
    %v2101 = vand.u32 %v239, 4294901760
    %v2102 = vsub.f32 %v239, %v2101
    %2103 = vmatpush.msra.mxu0 %v2102
    %v2104 = vand.u32 %v232, 4294901760
    %v2105 = vsub.f32 %v232, %v2104
    %2106 = vmatpush.msra.mxu0 %v2105
    %v2107 = vand.u32 %v225, 4294901760
    %v2108 = vsub.f32 %v225, %v2107
    %2109 = vmatpush.msra.mxu0 %v2108
    %v2110 = vand.u32 %v218, 4294901760
    %v2111 = vsub.f32 %v218, %v2110
    %2112 = vmatpush.msra.mxu0 %v2111
    %v2113 = vand.u32 %v211, 4294901760
    %v2114 = vsub.f32 %v211, %v2113
    %2115 = vmatpush.msra.mxu0 %v2114
    %v2116 = vand.u32 %v204, 4294901760
    %v2117 = vsub.f32 %v204, %v2116
    %2118 = vmatpush.msra.mxu0 %v2117
    %v2119 = vand.u32 %v197, 4294901760
    %v2120 = vsub.f32 %v197, %v2119
    %2121 = vmatpush.msra.mxu0 %v2120
    %v2122 = vand.u32 %v190, 4294901760
    %v2123 = vsub.f32 %v190, %v2122
    %2124 = vmatpush.msra.mxu0 %v2123
    %v2125 = vand.u32 %v183, 4294901760
    %v2126 = vsub.f32 %v183, %v2125
    %2127 = vmatpush.msra.mxu0 %v2126
    %v2128 = vand.u32 %v176, 4294901760
    %v2129 = vsub.f32 %v176, %v2128
    %2130 = vmatpush.msra.mxu0 %v2129
    %v2131 = vand.u32 %v169, 4294901760
    %v2132 = vsub.f32 %v169, %v2131
    %2133 = vmatpush.msra.mxu0 %v2132
    %v2134 = vand.u32 %v162, 4294901760
    %v2135 = vsub.f32 %v162, %v2134
    %2136 = vmatpush.msra.mxu0 %v2135
    %v2137 = vand.u32 %v155, 4294901760
    %v2138 = vsub.f32 %v155, %v2137
    %2139 = vmatpush.msra.mxu0 %v2138
    %v2140 = vand.u32 %v148, 4294901760
    %v2141 = vsub.f32 %v148, %v2140
    %2142 = vmatpush.msra.mxu0 %v2141
    %v2143 = vand.u32 %v141, 4294901760
    %v2144 = vsub.f32 %v141, %v2143
    %2145 = vmatpush.msra.mxu0 %v2144
    %v2146 = vand.u32 %v26, 4294901760
    %v2147 = vsub.f32 %v26, %v2146
    %2148 = vmatmul.f32.gmra.mxu0 %v2147
    %v2149 = vpop.f32.mrf.mxu0
    %v2150 = vadd.f32 %v2096, %v2149
    %2151 = vdwg.mxu0
    %v2152 = vand.u32 %v246, 4294901760
    %2153 = vmatpush.msra.mxu0 %v2152
    %v2154 = vand.u32 %v239, 4294901760
    %2155 = vmatpush.msra.mxu0 %v2154
    %v2156 = vand.u32 %v232, 4294901760
    %2157 = vmatpush.msra.mxu0 %v2156
    %v2158 = vand.u32 %v225, 4294901760
    %2159 = vmatpush.msra.mxu0 %v2158
    %v2160 = vand.u32 %v218, 4294901760
    %2161 = vmatpush.msra.mxu0 %v2160
    %v2162 = vand.u32 %v211, 4294901760
    %2163 = vmatpush.msra.mxu0 %v2162
    %v2164 = vand.u32 %v204, 4294901760
    %2165 = vmatpush.msra.mxu0 %v2164
    %v2166 = vand.u32 %v197, 4294901760
    %2167 = vmatpush.msra.mxu0 %v2166
    %v2168 = vand.u32 %v190, 4294901760
    %2169 = vmatpush.msra.mxu0 %v2168
    %v2170 = vand.u32 %v183, 4294901760
    %2171 = vmatpush.msra.mxu0 %v2170
    %v2172 = vand.u32 %v176, 4294901760
    %2173 = vmatpush.msra.mxu0 %v2172
    %v2174 = vand.u32 %v169, 4294901760
    %2175 = vmatpush.msra.mxu0 %v2174
    %v2176 = vand.u32 %v162, 4294901760
    %2177 = vmatpush.msra.mxu0 %v2176
    %v2178 = vand.u32 %v155, 4294901760
    %2179 = vmatpush.msra.mxu0 %v2178
    %v2180 = vand.u32 %v148, 4294901760
    %2181 = vmatpush.msra.mxu0 %v2180
    %v2182 = vand.u32 %v141, 4294901760
    %2183 = vmatpush.msra.mxu0 %v2182
    %v2184 = vand.u32 %v26, 4294901760
    %v2185 = vsub.f32 %v26, %v2184
    %v2186 = vand.u32 %v2185, 4294901760
    %2187 = vmatmul.f32.gmra.mxu0 %v2186
    %v2188 = vpop.f32.mrf.mxu0
    %v2189 = vadd.f32 %v2150, %v2188
    %2190 = vdwg.mxu0
    %v2191 = vand.u32 %v246, 4294901760
    %v2192 = vsub.f32 %v246, %v2191
    %v2193 = vand.u32 %v2192, 4294901760
    %2194 = vmatpush.msra.mxu0 %v2193
    %v2195 = vand.u32 %v239, 4294901760
    %v2196 = vsub.f32 %v239, %v2195
    %v2197 = vand.u32 %v2196, 4294901760
    %2198 = vmatpush.msra.mxu0 %v2197
    %v2199 = vand.u32 %v232, 4294901760
    %v2200 = vsub.f32 %v232, %v2199
    %v2201 = vand.u32 %v2200, 4294901760
    %2202 = vmatpush.msra.mxu0 %v2201
    %v2203 = vand.u32 %v225, 4294901760
    %v2204 = vsub.f32 %v225, %v2203
    %v2205 = vand.u32 %v2204, 4294901760
    %2206 = vmatpush.msra.mxu0 %v2205
    %v2207 = vand.u32 %v218, 4294901760
    %v2208 = vsub.f32 %v218, %v2207
    %v2209 = vand.u32 %v2208, 4294901760
    %2210 = vmatpush.msra.mxu0 %v2209
    %v2211 = vand.u32 %v211, 4294901760
    %v2212 = vsub.f32 %v211, %v2211
    %v2213 = vand.u32 %v2212, 4294901760
    %2214 = vmatpush.msra.mxu0 %v2213
    %v2215 = vand.u32 %v204, 4294901760
    %v2216 = vsub.f32 %v204, %v2215
    %v2217 = vand.u32 %v2216, 4294901760
    %2218 = vmatpush.msra.mxu0 %v2217
    %v2219 = vand.u32 %v197, 4294901760
    %v2220 = vsub.f32 %v197, %v2219
    %v2221 = vand.u32 %v2220, 4294901760
    %2222 = vmatpush.msra.mxu0 %v2221
    %v2223 = vand.u32 %v190, 4294901760
    %v2224 = vsub.f32 %v190, %v2223
    %v2225 = vand.u32 %v2224, 4294901760
    %2226 = vmatpush.msra.mxu0 %v2225
    %v2227 = vand.u32 %v183, 4294901760
    %v2228 = vsub.f32 %v183, %v2227
    %v2229 = vand.u32 %v2228, 4294901760
    %2230 = vmatpush.msra.mxu0 %v2229
    %v2231 = vand.u32 %v176, 4294901760
    %v2232 = vsub.f32 %v176, %v2231
    %v2233 = vand.u32 %v2232, 4294901760
    %2234 = vmatpush.msra.mxu0 %v2233
    %v2235 = vand.u32 %v169, 4294901760
    %v2236 = vsub.f32 %v169, %v2235
    %v2237 = vand.u32 %v2236, 4294901760
    %2238 = vmatpush.msra.mxu0 %v2237
    %v2239 = vand.u32 %v162, 4294901760
    %v2240 = vsub.f32 %v162, %v2239
    %v2241 = vand.u32 %v2240, 4294901760
    %2242 = vmatpush.msra.mxu0 %v2241
    %v2243 = vand.u32 %v155, 4294901760
    %v2244 = vsub.f32 %v155, %v2243
    %v2245 = vand.u32 %v2244, 4294901760
    %2246 = vmatpush.msra.mxu0 %v2245
    %v2247 = vand.u32 %v148, 4294901760
    %v2248 = vsub.f32 %v148, %v2247
    %v2249 = vand.u32 %v2248, 4294901760
    %2250 = vmatpush.msra.mxu0 %v2249
    %v2251 = vand.u32 %v141, 4294901760
    %v2252 = vsub.f32 %v141, %v2251
    %v2253 = vand.u32 %v2252, 4294901760
    %2254 = vmatpush.msra.mxu0 %v2253
    %v2255 = vand.u32 %v26, 4294901760
    %2256 = vmatmul.f32.gmra.mxu0 %v2255
    %v2257 = vpop.f32.mrf.mxu0
    %v2258 = vadd.f32 %v2189, %v2257
    %2259 = vdwg.mxu0
    %v2260 = vand.u32 %v246, 4294901760
    %2261 = vmatpush.msra.mxu0 %v2260
    %v2262 = vand.u32 %v239, 4294901760
    %2263 = vmatpush.msra.mxu0 %v2262
    %v2264 = vand.u32 %v232, 4294901760
    %2265 = vmatpush.msra.mxu0 %v2264
    %v2266 = vand.u32 %v225, 4294901760
    %2267 = vmatpush.msra.mxu0 %v2266
    %v2268 = vand.u32 %v218, 4294901760
    %2269 = vmatpush.msra.mxu0 %v2268
    %v2270 = vand.u32 %v211, 4294901760
    %2271 = vmatpush.msra.mxu0 %v2270
    %v2272 = vand.u32 %v204, 4294901760
    %2273 = vmatpush.msra.mxu0 %v2272
    %v2274 = vand.u32 %v197, 4294901760
    %2275 = vmatpush.msra.mxu0 %v2274
    %v2276 = vand.u32 %v190, 4294901760
    %2277 = vmatpush.msra.mxu0 %v2276
    %v2278 = vand.u32 %v183, 4294901760
    %2279 = vmatpush.msra.mxu0 %v2278
    %v2280 = vand.u32 %v176, 4294901760
    %2281 = vmatpush.msra.mxu0 %v2280
    %v2282 = vand.u32 %v169, 4294901760
    %2283 = vmatpush.msra.mxu0 %v2282
    %v2284 = vand.u32 %v162, 4294901760
    %2285 = vmatpush.msra.mxu0 %v2284
    %v2286 = vand.u32 %v155, 4294901760
    %2287 = vmatpush.msra.mxu0 %v2286
    %v2288 = vand.u32 %v148, 4294901760
    %2289 = vmatpush.msra.mxu0 %v2288
    %v2290 = vand.u32 %v141, 4294901760
    %2291 = vmatpush.msra.mxu0 %v2290
    %v2292 = vand.u32 %v26, 4294901760
    %2293 = vmatmul.f32.gmra.mxu0 %v2292
    %v2294 = vpop.f32.mrf.mxu0
    %v2295 = vadd.f32 %v2258, %v2294
    %2296 = vdwg.mxu0
    %v2297 = vand.u32 %v135, 4294901760
    %2298 = vmatpush.msra.mxu0 %v2297
    %v2299 = vand.u32 %v128, 4294901760
    %2300 = vmatpush.msra.mxu0 %v2299
    %v2301 = vand.u32 %v121, 4294901760
    %2302 = vmatpush.msra.mxu0 %v2301
    %v2303 = vand.u32 %v114, 4294901760
    %2304 = vmatpush.msra.mxu0 %v2303
    %v2305 = vand.u32 %v107, 4294901760
    %2306 = vmatpush.msra.mxu0 %v2305
    %v2307 = vand.u32 %v100, 4294901760
    %2308 = vmatpush.msra.mxu0 %v2307
    %v2309 = vand.u32 %v93, 4294901760
    %2310 = vmatpush.msra.mxu0 %v2309
    %v2311 = vand.u32 %v86, 4294901760
    %2312 = vmatpush.msra.mxu0 %v2311
    %v2313 = vand.u32 %v79, 4294901760
    %2314 = vmatpush.msra.mxu0 %v2313
    %v2315 = vand.u32 %v72, 4294901760
    %2316 = vmatpush.msra.mxu0 %v2315
    %v2317 = vand.u32 %v65, 4294901760
    %2318 = vmatpush.msra.mxu0 %v2317
    %v2319 = vand.u32 %v58, 4294901760
    %2320 = vmatpush.msra.mxu0 %v2319
    %v2321 = vand.u32 %v51, 4294901760
    %2322 = vmatpush.msra.mxu0 %v2321
    %v2323 = vand.u32 %v44, 4294901760
    %2324 = vmatpush.msra.mxu0 %v2323
    %v2325 = vand.u32 %v37, 4294901760
    %2326 = vmatpush.msra.mxu0 %v2325
    %v2327 = vand.u32 %v30, 4294901760
    %2328 = vmatpush.msra.mxu0 %v2327
    %v2329 = vand.u32 %v25, 4294901760
    %v2330 = vsub.f32 %v25, %v2329
    %v2331 = vand.u32 %v2330, 4294901760
    %v2332 = vsub.f32 %v2330, %v2331
    %v2333 = vand.u32 %v2332, 4294901760
    %2334 = vmatmul.f32.gmra.mxu0 %v2333
    %v2335 = vpop.f32.mrf.mxu0
    %v2336 = vadd.f32 0.0, %v2335
    %2337 = vdwg.mxu0
    %v2338 = vand.u32 %v135, 4294901760
    %v2339 = vsub.f32 %v135, %v2338
    %v2340 = vand.u32 %v2339, 4294901760
    %v2341 = vsub.f32 %v2339, %v2340
    %v2342 = vand.u32 %v2341, 4294901760
    %2343 = vmatpush.msra.mxu0 %v2342
    %v2344 = vand.u32 %v128, 4294901760
    %v2345 = vsub.f32 %v128, %v2344
    %v2346 = vand.u32 %v2345, 4294901760
    %v2347 = vsub.f32 %v2345, %v2346
    %v2348 = vand.u32 %v2347, 4294901760
    %2349 = vmatpush.msra.mxu0 %v2348
    %v2350 = vand.u32 %v121, 4294901760
    %v2351 = vsub.f32 %v121, %v2350
    %v2352 = vand.u32 %v2351, 4294901760
    %v2353 = vsub.f32 %v2351, %v2352
    %v2354 = vand.u32 %v2353, 4294901760
    %2355 = vmatpush.msra.mxu0 %v2354
    %v2356 = vand.u32 %v114, 4294901760
    %v2357 = vsub.f32 %v114, %v2356
    %v2358 = vand.u32 %v2357, 4294901760
    %v2359 = vsub.f32 %v2357, %v2358
    %v2360 = vand.u32 %v2359, 4294901760
    %2361 = vmatpush.msra.mxu0 %v2360
    %v2362 = vand.u32 %v107, 4294901760
    %v2363 = vsub.f32 %v107, %v2362
    %v2364 = vand.u32 %v2363, 4294901760
    %v2365 = vsub.f32 %v2363, %v2364
    %v2366 = vand.u32 %v2365, 4294901760
    %2367 = vmatpush.msra.mxu0 %v2366
    %v2368 = vand.u32 %v100, 4294901760
    %v2369 = vsub.f32 %v100, %v2368
    %v2370 = vand.u32 %v2369, 4294901760
    %v2371 = vsub.f32 %v2369, %v2370
    %v2372 = vand.u32 %v2371, 4294901760
    %2373 = vmatpush.msra.mxu0 %v2372
    %v2374 = vand.u32 %v93, 4294901760
    %v2375 = vsub.f32 %v93, %v2374
    %v2376 = vand.u32 %v2375, 4294901760
    %v2377 = vsub.f32 %v2375, %v2376
    %v2378 = vand.u32 %v2377, 4294901760
    %2379 = vmatpush.msra.mxu0 %v2378
    %v2380 = vand.u32 %v86, 4294901760
    %v2381 = vsub.f32 %v86, %v2380
    %v2382 = vand.u32 %v2381, 4294901760
    %v2383 = vsub.f32 %v2381, %v2382
    %v2384 = vand.u32 %v2383, 4294901760
    %2385 = vmatpush.msra.mxu0 %v2384
    %v2386 = vand.u32 %v79, 4294901760
    %v2387 = vsub.f32 %v79, %v2386
    %v2388 = vand.u32 %v2387, 4294901760
    %v2389 = vsub.f32 %v2387, %v2388
    %v2390 = vand.u32 %v2389, 4294901760
    %2391 = vmatpush.msra.mxu0 %v2390
    %v2392 = vand.u32 %v72, 4294901760
    %v2393 = vsub.f32 %v72, %v2392
    %v2394 = vand.u32 %v2393, 4294901760
    %v2395 = vsub.f32 %v2393, %v2394
    %v2396 = vand.u32 %v2395, 4294901760
    %2397 = vmatpush.msra.mxu0 %v2396
    %v2398 = vand.u32 %v65, 4294901760
    %v2399 = vsub.f32 %v65, %v2398
    %v2400 = vand.u32 %v2399, 4294901760
    %v2401 = vsub.f32 %v2399, %v2400
    %v2402 = vand.u32 %v2401, 4294901760
    %2403 = vmatpush.msra.mxu0 %v2402
    %v2404 = vand.u32 %v58, 4294901760
    %v2405 = vsub.f32 %v58, %v2404
    %v2406 = vand.u32 %v2405, 4294901760
    %v2407 = vsub.f32 %v2405, %v2406
    %v2408 = vand.u32 %v2407, 4294901760
    %2409 = vmatpush.msra.mxu0 %v2408
    %v2410 = vand.u32 %v51, 4294901760
    %v2411 = vsub.f32 %v51, %v2410
    %v2412 = vand.u32 %v2411, 4294901760
    %v2413 = vsub.f32 %v2411, %v2412
    %v2414 = vand.u32 %v2413, 4294901760
    %2415 = vmatpush.msra.mxu0 %v2414
    %v2416 = vand.u32 %v44, 4294901760
    %v2417 = vsub.f32 %v44, %v2416
    %v2418 = vand.u32 %v2417, 4294901760
    %v2419 = vsub.f32 %v2417, %v2418
    %v2420 = vand.u32 %v2419, 4294901760
    %2421 = vmatpush.msra.mxu0 %v2420
    %v2422 = vand.u32 %v37, 4294901760
    %v2423 = vsub.f32 %v37, %v2422
    %v2424 = vand.u32 %v2423, 4294901760
    %v2425 = vsub.f32 %v2423, %v2424
    %v2426 = vand.u32 %v2425, 4294901760
    %2427 = vmatpush.msra.mxu0 %v2426
    %v2428 = vand.u32 %v30, 4294901760
    %v2429 = vsub.f32 %v30, %v2428
    %v2430 = vand.u32 %v2429, 4294901760
    %v2431 = vsub.f32 %v2429, %v2430
    %v2432 = vand.u32 %v2431, 4294901760
    %2433 = vmatpush.msra.mxu0 %v2432
    %v2434 = vand.u32 %v25, 4294901760
    %2435 = vmatmul.f32.gmra.mxu0 %v2434
    %v2436 = vpop.f32.mrf.mxu0
    %v2437 = vadd.f32 %v2336, %v2436
    %2438 = vdwg.mxu0
    %v2439 = vand.u32 %v135, 4294901760
    %v2440 = vsub.f32 %v135, %v2439
    %2441 = vmatpush.msra.mxu0 %v2440
    %v2442 = vand.u32 %v128, 4294901760
    %v2443 = vsub.f32 %v128, %v2442
    %2444 = vmatpush.msra.mxu0 %v2443
    %v2445 = vand.u32 %v121, 4294901760
    %v2446 = vsub.f32 %v121, %v2445
    %2447 = vmatpush.msra.mxu0 %v2446
    %v2448 = vand.u32 %v114, 4294901760
    %v2449 = vsub.f32 %v114, %v2448
    %2450 = vmatpush.msra.mxu0 %v2449
    %v2451 = vand.u32 %v107, 4294901760
    %v2452 = vsub.f32 %v107, %v2451
    %2453 = vmatpush.msra.mxu0 %v2452
    %v2454 = vand.u32 %v100, 4294901760
    %v2455 = vsub.f32 %v100, %v2454
    %2456 = vmatpush.msra.mxu0 %v2455
    %v2457 = vand.u32 %v93, 4294901760
    %v2458 = vsub.f32 %v93, %v2457
    %2459 = vmatpush.msra.mxu0 %v2458
    %v2460 = vand.u32 %v86, 4294901760
    %v2461 = vsub.f32 %v86, %v2460
    %2462 = vmatpush.msra.mxu0 %v2461
    %v2463 = vand.u32 %v79, 4294901760
    %v2464 = vsub.f32 %v79, %v2463
    %2465 = vmatpush.msra.mxu0 %v2464
    %v2466 = vand.u32 %v72, 4294901760
    %v2467 = vsub.f32 %v72, %v2466
    %2468 = vmatpush.msra.mxu0 %v2467
    %v2469 = vand.u32 %v65, 4294901760
    %v2470 = vsub.f32 %v65, %v2469
    %2471 = vmatpush.msra.mxu0 %v2470
    %v2472 = vand.u32 %v58, 4294901760
    %v2473 = vsub.f32 %v58, %v2472
    %2474 = vmatpush.msra.mxu0 %v2473
    %v2475 = vand.u32 %v51, 4294901760
    %v2476 = vsub.f32 %v51, %v2475
    %2477 = vmatpush.msra.mxu0 %v2476
    %v2478 = vand.u32 %v44, 4294901760
    %v2479 = vsub.f32 %v44, %v2478
    %2480 = vmatpush.msra.mxu0 %v2479
    %v2481 = vand.u32 %v37, 4294901760
    %v2482 = vsub.f32 %v37, %v2481
    %2483 = vmatpush.msra.mxu0 %v2482
    %v2484 = vand.u32 %v30, 4294901760
    %v2485 = vsub.f32 %v30, %v2484
    %2486 = vmatpush.msra.mxu0 %v2485
    %v2487 = vand.u32 %v25, 4294901760
    %v2488 = vsub.f32 %v25, %v2487
    %2489 = vmatmul.f32.gmra.mxu0 %v2488
    %v2490 = vpop.f32.mrf.mxu0
    %v2491 = vadd.f32 %v2437, %v2490
    %2492 = vdwg.mxu0
    %v2493 = vand.u32 %v135, 4294901760
    %2494 = vmatpush.msra.mxu0 %v2493
    %v2495 = vand.u32 %v128, 4294901760
    %2496 = vmatpush.msra.mxu0 %v2495
    %v2497 = vand.u32 %v121, 4294901760
    %2498 = vmatpush.msra.mxu0 %v2497
    %v2499 = vand.u32 %v114, 4294901760
    %2500 = vmatpush.msra.mxu0 %v2499
    %v2501 = vand.u32 %v107, 4294901760
    %2502 = vmatpush.msra.mxu0 %v2501
    %v2503 = vand.u32 %v100, 4294901760
    %2504 = vmatpush.msra.mxu0 %v2503
    %v2505 = vand.u32 %v93, 4294901760
    %2506 = vmatpush.msra.mxu0 %v2505
    %v2507 = vand.u32 %v86, 4294901760
    %2508 = vmatpush.msra.mxu0 %v2507
    %v2509 = vand.u32 %v79, 4294901760
    %2510 = vmatpush.msra.mxu0 %v2509
    %v2511 = vand.u32 %v72, 4294901760
    %2512 = vmatpush.msra.mxu0 %v2511
    %v2513 = vand.u32 %v65, 4294901760
    %2514 = vmatpush.msra.mxu0 %v2513
    %v2515 = vand.u32 %v58, 4294901760
    %2516 = vmatpush.msra.mxu0 %v2515
    %v2517 = vand.u32 %v51, 4294901760
    %2518 = vmatpush.msra.mxu0 %v2517
    %v2519 = vand.u32 %v44, 4294901760
    %2520 = vmatpush.msra.mxu0 %v2519
    %v2521 = vand.u32 %v37, 4294901760
    %2522 = vmatpush.msra.mxu0 %v2521
    %v2523 = vand.u32 %v30, 4294901760
    %2524 = vmatpush.msra.mxu0 %v2523
    %v2525 = vand.u32 %v25, 4294901760
    %v2526 = vsub.f32 %v25, %v2525
    %v2527 = vand.u32 %v2526, 4294901760
    %2528 = vmatmul.f32.gmra.mxu0 %v2527
    %v2529 = vpop.f32.mrf.mxu0
    %v2530 = vadd.f32 %v2491, %v2529
    %2531 = vdwg.mxu0
    %v2532 = vand.u32 %v135, 4294901760
    %v2533 = vsub.f32 %v135, %v2532
    %v2534 = vand.u32 %v2533, 4294901760
    %2535 = vmatpush.msra.mxu0 %v2534
    %v2536 = vand.u32 %v128, 4294901760
    %v2537 = vsub.f32 %v128, %v2536
    %v2538 = vand.u32 %v2537, 4294901760
    %2539 = vmatpush.msra.mxu0 %v2538
    %v2540 = vand.u32 %v121, 4294901760
    %v2541 = vsub.f32 %v121, %v2540
    %v2542 = vand.u32 %v2541, 4294901760
    %2543 = vmatpush.msra.mxu0 %v2542
    %v2544 = vand.u32 %v114, 4294901760
    %v2545 = vsub.f32 %v114, %v2544
    %v2546 = vand.u32 %v2545, 4294901760
    %2547 = vmatpush.msra.mxu0 %v2546
    %v2548 = vand.u32 %v107, 4294901760
    %v2549 = vsub.f32 %v107, %v2548
    %v2550 = vand.u32 %v2549, 4294901760
    %2551 = vmatpush.msra.mxu0 %v2550
    %v2552 = vand.u32 %v100, 4294901760
    %v2553 = vsub.f32 %v100, %v2552
    %v2554 = vand.u32 %v2553, 4294901760
    %2555 = vmatpush.msra.mxu0 %v2554
    %v2556 = vand.u32 %v93, 4294901760
    %v2557 = vsub.f32 %v93, %v2556
    %v2558 = vand.u32 %v2557, 4294901760
    %2559 = vmatpush.msra.mxu0 %v2558
    %v2560 = vand.u32 %v86, 4294901760
    %v2561 = vsub.f32 %v86, %v2560
    %v2562 = vand.u32 %v2561, 4294901760
    %2563 = vmatpush.msra.mxu0 %v2562
    %v2564 = vand.u32 %v79, 4294901760
    %v2565 = vsub.f32 %v79, %v2564
    %v2566 = vand.u32 %v2565, 4294901760
    %2567 = vmatpush.msra.mxu0 %v2566
    %v2568 = vand.u32 %v72, 4294901760
    %v2569 = vsub.f32 %v72, %v2568
    %v2570 = vand.u32 %v2569, 4294901760
    %2571 = vmatpush.msra.mxu0 %v2570
    %v2572 = vand.u32 %v65, 4294901760
    %v2573 = vsub.f32 %v65, %v2572
    %v2574 = vand.u32 %v2573, 4294901760
    %2575 = vmatpush.msra.mxu0 %v2574
    %v2576 = vand.u32 %v58, 4294901760
    %v2577 = vsub.f32 %v58, %v2576
    %v2578 = vand.u32 %v2577, 4294901760
    %2579 = vmatpush.msra.mxu0 %v2578
    %v2580 = vand.u32 %v51, 4294901760
    %v2581 = vsub.f32 %v51, %v2580
    %v2582 = vand.u32 %v2581, 4294901760
    %2583 = vmatpush.msra.mxu0 %v2582
    %v2584 = vand.u32 %v44, 4294901760
    %v2585 = vsub.f32 %v44, %v2584
    %v2586 = vand.u32 %v2585, 4294901760
    %2587 = vmatpush.msra.mxu0 %v2586
    %v2588 = vand.u32 %v37, 4294901760
    %v2589 = vsub.f32 %v37, %v2588
    %v2590 = vand.u32 %v2589, 4294901760
    %2591 = vmatpush.msra.mxu0 %v2590
    %v2592 = vand.u32 %v30, 4294901760
    %v2593 = vsub.f32 %v30, %v2592
    %v2594 = vand.u32 %v2593, 4294901760
    %2595 = vmatpush.msra.mxu0 %v2594
    %v2596 = vand.u32 %v25, 4294901760
    %2597 = vmatmul.f32.gmra.mxu0 %v2596
    %v2598 = vpop.f32.mrf.mxu0
    %v2599 = vadd.f32 %v2530, %v2598
    %2600 = vdwg.mxu0
    %v2601 = vand.u32 %v135, 4294901760
    %2602 = vmatpush.msra.mxu0 %v2601
    %v2603 = vand.u32 %v128, 4294901760
    %2604 = vmatpush.msra.mxu0 %v2603
    %v2605 = vand.u32 %v121, 4294901760
    %2606 = vmatpush.msra.mxu0 %v2605
    %v2607 = vand.u32 %v114, 4294901760
    %2608 = vmatpush.msra.mxu0 %v2607
    %v2609 = vand.u32 %v107, 4294901760
    %2610 = vmatpush.msra.mxu0 %v2609
    %v2611 = vand.u32 %v100, 4294901760
    %2612 = vmatpush.msra.mxu0 %v2611
    %v2613 = vand.u32 %v93, 4294901760
    %2614 = vmatpush.msra.mxu0 %v2613
    %v2615 = vand.u32 %v86, 4294901760
    %2616 = vmatpush.msra.mxu0 %v2615
    %v2617 = vand.u32 %v79, 4294901760
    %2618 = vmatpush.msra.mxu0 %v2617
    %v2619 = vand.u32 %v72, 4294901760
    %2620 = vmatpush.msra.mxu0 %v2619
    %v2621 = vand.u32 %v65, 4294901760
    %2622 = vmatpush.msra.mxu0 %v2621
    %v2623 = vand.u32 %v58, 4294901760
    %2624 = vmatpush.msra.mxu0 %v2623
    %v2625 = vand.u32 %v51, 4294901760
    %2626 = vmatpush.msra.mxu0 %v2625
    %v2627 = vand.u32 %v44, 4294901760
    %2628 = vmatpush.msra.mxu0 %v2627
    %v2629 = vand.u32 %v37, 4294901760
    %2630 = vmatpush.msra.mxu0 %v2629
    %v2631 = vand.u32 %v30, 4294901760
    %2632 = vmatpush.msra.mxu0 %v2631
    %v2633 = vand.u32 %v25, 4294901760
    %2634 = vmatmul.f32.gmra.mxu0 %v2633
    %v2635 = vpop.f32.mrf.mxu0
    %v2636 = vadd.f32 %v2599, %v2635
    %2637 = vdwg.mxu0
    %v2638 = vand.u32 %v247, 4294901760
    %2639 = vmatpush.msra.mxu0 %v2638
    %v2640 = vand.u32 %v240, 4294901760
    %2641 = vmatpush.msra.mxu0 %v2640
    %v2642 = vand.u32 %v233, 4294901760
    %2643 = vmatpush.msra.mxu0 %v2642
    %v2644 = vand.u32 %v226, 4294901760
    %2645 = vmatpush.msra.mxu0 %v2644
    %v2646 = vand.u32 %v219, 4294901760
    %2647 = vmatpush.msra.mxu0 %v2646
    %v2648 = vand.u32 %v212, 4294901760
    %2649 = vmatpush.msra.mxu0 %v2648
    %v2650 = vand.u32 %v205, 4294901760
    %2651 = vmatpush.msra.mxu0 %v2650
    %v2652 = vand.u32 %v198, 4294901760
    %2653 = vmatpush.msra.mxu0 %v2652
    %v2654 = vand.u32 %v191, 4294901760
    %2655 = vmatpush.msra.mxu0 %v2654
    %v2656 = vand.u32 %v184, 4294901760
    %2657 = vmatpush.msra.mxu0 %v2656
    %v2658 = vand.u32 %v177, 4294901760
    %2659 = vmatpush.msra.mxu0 %v2658
    %v2660 = vand.u32 %v170, 4294901760
    %2661 = vmatpush.msra.mxu0 %v2660
    %v2662 = vand.u32 %v163, 4294901760
    %2663 = vmatpush.msra.mxu0 %v2662
    %v2664 = vand.u32 %v156, 4294901760
    %2665 = vmatpush.msra.mxu0 %v2664
    %v2666 = vand.u32 %v149, 4294901760
    %2667 = vmatpush.msra.mxu0 %v2666
    %v2668 = vand.u32 %v142, 4294901760
    %2669 = vmatpush.msra.mxu0 %v2668
    %v2670 = vand.u32 %v26, 4294901760
    %v2671 = vsub.f32 %v26, %v2670
    %v2672 = vand.u32 %v2671, 4294901760
    %v2673 = vsub.f32 %v2671, %v2672
    %v2674 = vand.u32 %v2673, 4294901760
    %2675 = vmatmul.f32.gmra.mxu0 %v2674
    %v2676 = vpop.f32.mrf.mxu0
    %v2677 = vadd.f32 %v2636, %v2676
    %2678 = vdwg.mxu0
    %v2679 = vand.u32 %v247, 4294901760
    %v2680 = vsub.f32 %v247, %v2679
    %v2681 = vand.u32 %v2680, 4294901760
    %v2682 = vsub.f32 %v2680, %v2681
    %v2683 = vand.u32 %v2682, 4294901760
    %2684 = vmatpush.msra.mxu0 %v2683
    %v2685 = vand.u32 %v240, 4294901760
    %v2686 = vsub.f32 %v240, %v2685
    %v2687 = vand.u32 %v2686, 4294901760
    %v2688 = vsub.f32 %v2686, %v2687
    %v2689 = vand.u32 %v2688, 4294901760
    %2690 = vmatpush.msra.mxu0 %v2689
    %v2691 = vand.u32 %v233, 4294901760
    %v2692 = vsub.f32 %v233, %v2691
    %v2693 = vand.u32 %v2692, 4294901760
    %v2694 = vsub.f32 %v2692, %v2693
    %v2695 = vand.u32 %v2694, 4294901760
    %2696 = vmatpush.msra.mxu0 %v2695
    %v2697 = vand.u32 %v226, 4294901760
    %v2698 = vsub.f32 %v226, %v2697
    %v2699 = vand.u32 %v2698, 4294901760
    %v2700 = vsub.f32 %v2698, %v2699
    %v2701 = vand.u32 %v2700, 4294901760
    %2702 = vmatpush.msra.mxu0 %v2701
    %v2703 = vand.u32 %v219, 4294901760
    %v2704 = vsub.f32 %v219, %v2703
    %v2705 = vand.u32 %v2704, 4294901760
    %v2706 = vsub.f32 %v2704, %v2705
    %v2707 = vand.u32 %v2706, 4294901760
    %2708 = vmatpush.msra.mxu0 %v2707
    %v2709 = vand.u32 %v212, 4294901760
    %v2710 = vsub.f32 %v212, %v2709
    %v2711 = vand.u32 %v2710, 4294901760
    %v2712 = vsub.f32 %v2710, %v2711
    %v2713 = vand.u32 %v2712, 4294901760
    %2714 = vmatpush.msra.mxu0 %v2713
    %v2715 = vand.u32 %v205, 4294901760
    %v2716 = vsub.f32 %v205, %v2715
    %v2717 = vand.u32 %v2716, 4294901760
    %v2718 = vsub.f32 %v2716, %v2717
    %v2719 = vand.u32 %v2718, 4294901760
    %2720 = vmatpush.msra.mxu0 %v2719
    %v2721 = vand.u32 %v198, 4294901760
    %v2722 = vsub.f32 %v198, %v2721
    %v2723 = vand.u32 %v2722, 4294901760
    %v2724 = vsub.f32 %v2722, %v2723
    %v2725 = vand.u32 %v2724, 4294901760
    %2726 = vmatpush.msra.mxu0 %v2725
    %v2727 = vand.u32 %v191, 4294901760
    %v2728 = vsub.f32 %v191, %v2727
    %v2729 = vand.u32 %v2728, 4294901760
    %v2730 = vsub.f32 %v2728, %v2729
    %v2731 = vand.u32 %v2730, 4294901760
    %2732 = vmatpush.msra.mxu0 %v2731
    %v2733 = vand.u32 %v184, 4294901760
    %v2734 = vsub.f32 %v184, %v2733
    %v2735 = vand.u32 %v2734, 4294901760
    %v2736 = vsub.f32 %v2734, %v2735
    %v2737 = vand.u32 %v2736, 4294901760
    %2738 = vmatpush.msra.mxu0 %v2737
    %v2739 = vand.u32 %v177, 4294901760
    %v2740 = vsub.f32 %v177, %v2739
    %v2741 = vand.u32 %v2740, 4294901760
    %v2742 = vsub.f32 %v2740, %v2741
    %v2743 = vand.u32 %v2742, 4294901760
    %2744 = vmatpush.msra.mxu0 %v2743
    %v2745 = vand.u32 %v170, 4294901760
    %v2746 = vsub.f32 %v170, %v2745
    %v2747 = vand.u32 %v2746, 4294901760
    %v2748 = vsub.f32 %v2746, %v2747
    %v2749 = vand.u32 %v2748, 4294901760
    %2750 = vmatpush.msra.mxu0 %v2749
    %v2751 = vand.u32 %v163, 4294901760
    %v2752 = vsub.f32 %v163, %v2751
    %v2753 = vand.u32 %v2752, 4294901760
    %v2754 = vsub.f32 %v2752, %v2753
    %v2755 = vand.u32 %v2754, 4294901760
    %2756 = vmatpush.msra.mxu0 %v2755
    %v2757 = vand.u32 %v156, 4294901760
    %v2758 = vsub.f32 %v156, %v2757
    %v2759 = vand.u32 %v2758, 4294901760
    %v2760 = vsub.f32 %v2758, %v2759
    %v2761 = vand.u32 %v2760, 4294901760
    %2762 = vmatpush.msra.mxu0 %v2761
    %v2763 = vand.u32 %v149, 4294901760
    %v2764 = vsub.f32 %v149, %v2763
    %v2765 = vand.u32 %v2764, 4294901760
    %v2766 = vsub.f32 %v2764, %v2765
    %v2767 = vand.u32 %v2766, 4294901760
    %2768 = vmatpush.msra.mxu0 %v2767
    %v2769 = vand.u32 %v142, 4294901760
    %v2770 = vsub.f32 %v142, %v2769
    %v2771 = vand.u32 %v2770, 4294901760
    %v2772 = vsub.f32 %v2770, %v2771
    %v2773 = vand.u32 %v2772, 4294901760
    %2774 = vmatpush.msra.mxu0 %v2773
    %v2775 = vand.u32 %v26, 4294901760
    %2776 = vmatmul.f32.gmra.mxu0 %v2775
    %v2777 = vpop.f32.mrf.mxu0
    %v2778 = vadd.f32 %v2677, %v2777
    %2779 = vdwg.mxu0
    %v2780 = vand.u32 %v247, 4294901760
    %v2781 = vsub.f32 %v247, %v2780
    %2782 = vmatpush.msra.mxu0 %v2781
    %v2783 = vand.u32 %v240, 4294901760
    %v2784 = vsub.f32 %v240, %v2783
    %2785 = vmatpush.msra.mxu0 %v2784
    %v2786 = vand.u32 %v233, 4294901760
    %v2787 = vsub.f32 %v233, %v2786
    %2788 = vmatpush.msra.mxu0 %v2787
    %v2789 = vand.u32 %v226, 4294901760
    %v2790 = vsub.f32 %v226, %v2789
    %2791 = vmatpush.msra.mxu0 %v2790
    %v2792 = vand.u32 %v219, 4294901760
    %v2793 = vsub.f32 %v219, %v2792
    %2794 = vmatpush.msra.mxu0 %v2793
    %v2795 = vand.u32 %v212, 4294901760
    %v2796 = vsub.f32 %v212, %v2795
    %2797 = vmatpush.msra.mxu0 %v2796
    %v2798 = vand.u32 %v205, 4294901760
    %v2799 = vsub.f32 %v205, %v2798
    %2800 = vmatpush.msra.mxu0 %v2799
    %v2801 = vand.u32 %v198, 4294901760
    %v2802 = vsub.f32 %v198, %v2801
    %2803 = vmatpush.msra.mxu0 %v2802
    %v2804 = vand.u32 %v191, 4294901760
    %v2805 = vsub.f32 %v191, %v2804
    %2806 = vmatpush.msra.mxu0 %v2805
    %v2807 = vand.u32 %v184, 4294901760
    %v2808 = vsub.f32 %v184, %v2807
    %2809 = vmatpush.msra.mxu0 %v2808
    %v2810 = vand.u32 %v177, 4294901760
    %v2811 = vsub.f32 %v177, %v2810
    %2812 = vmatpush.msra.mxu0 %v2811
    %v2813 = vand.u32 %v170, 4294901760
    %v2814 = vsub.f32 %v170, %v2813
    %2815 = vmatpush.msra.mxu0 %v2814
    %v2816 = vand.u32 %v163, 4294901760
    %v2817 = vsub.f32 %v163, %v2816
    %2818 = vmatpush.msra.mxu0 %v2817
    %v2819 = vand.u32 %v156, 4294901760
    %v2820 = vsub.f32 %v156, %v2819
    %2821 = vmatpush.msra.mxu0 %v2820
    %v2822 = vand.u32 %v149, 4294901760
    %v2823 = vsub.f32 %v149, %v2822
    %2824 = vmatpush.msra.mxu0 %v2823
    %v2825 = vand.u32 %v142, 4294901760
    %v2826 = vsub.f32 %v142, %v2825
    %2827 = vmatpush.msra.mxu0 %v2826
    %v2828 = vand.u32 %v26, 4294901760
    %v2829 = vsub.f32 %v26, %v2828
    %2830 = vmatmul.f32.gmra.mxu0 %v2829
    %v2831 = vpop.f32.mrf.mxu0
    %v2832 = vadd.f32 %v2778, %v2831
    %2833 = vdwg.mxu0
    %v2834 = vand.u32 %v247, 4294901760
    %2835 = vmatpush.msra.mxu0 %v2834
    %v2836 = vand.u32 %v240, 4294901760
    %2837 = vmatpush.msra.mxu0 %v2836
    %v2838 = vand.u32 %v233, 4294901760
    %2839 = vmatpush.msra.mxu0 %v2838
    %v2840 = vand.u32 %v226, 4294901760
    %2841 = vmatpush.msra.mxu0 %v2840
    %v2842 = vand.u32 %v219, 4294901760
    %2843 = vmatpush.msra.mxu0 %v2842
    %v2844 = vand.u32 %v212, 4294901760
    %2845 = vmatpush.msra.mxu0 %v2844
    %v2846 = vand.u32 %v205, 4294901760
    %2847 = vmatpush.msra.mxu0 %v2846
    %v2848 = vand.u32 %v198, 4294901760
    %2849 = vmatpush.msra.mxu0 %v2848
    %v2850 = vand.u32 %v191, 4294901760
    %2851 = vmatpush.msra.mxu0 %v2850
    %v2852 = vand.u32 %v184, 4294901760
    %2853 = vmatpush.msra.mxu0 %v2852
    %v2854 = vand.u32 %v177, 4294901760
    %2855 = vmatpush.msra.mxu0 %v2854
    %v2856 = vand.u32 %v170, 4294901760
    %2857 = vmatpush.msra.mxu0 %v2856
    %v2858 = vand.u32 %v163, 4294901760
    %2859 = vmatpush.msra.mxu0 %v2858
    %v2860 = vand.u32 %v156, 4294901760
    %2861 = vmatpush.msra.mxu0 %v2860
    %v2862 = vand.u32 %v149, 4294901760
    %2863 = vmatpush.msra.mxu0 %v2862
    %v2864 = vand.u32 %v142, 4294901760
    %2865 = vmatpush.msra.mxu0 %v2864
    %v2866 = vand.u32 %v26, 4294901760
    %v2867 = vsub.f32 %v26, %v2866
    %v2868 = vand.u32 %v2867, 4294901760
    %2869 = vmatmul.f32.gmra.mxu0 %v2868
    %v2870 = vpop.f32.mrf.mxu0
    %v2871 = vadd.f32 %v2832, %v2870
    %2872 = vdwg.mxu0
    %v2873 = vand.u32 %v247, 4294901760
    %v2874 = vsub.f32 %v247, %v2873
    %v2875 = vand.u32 %v2874, 4294901760
    %2876 = vmatpush.msra.mxu0 %v2875
    %v2877 = vand.u32 %v240, 4294901760
    %v2878 = vsub.f32 %v240, %v2877
    %v2879 = vand.u32 %v2878, 4294901760
    %2880 = vmatpush.msra.mxu0 %v2879
    %v2881 = vand.u32 %v233, 4294901760
    %v2882 = vsub.f32 %v233, %v2881
    %v2883 = vand.u32 %v2882, 4294901760
    %2884 = vmatpush.msra.mxu0 %v2883
    %v2885 = vand.u32 %v226, 4294901760
    %v2886 = vsub.f32 %v226, %v2885
    %v2887 = vand.u32 %v2886, 4294901760
    %2888 = vmatpush.msra.mxu0 %v2887
    %v2889 = vand.u32 %v219, 4294901760
    %v2890 = vsub.f32 %v219, %v2889
    %v2891 = vand.u32 %v2890, 4294901760
    %2892 = vmatpush.msra.mxu0 %v2891
    %v2893 = vand.u32 %v212, 4294901760
    %v2894 = vsub.f32 %v212, %v2893
    %v2895 = vand.u32 %v2894, 4294901760
    %2896 = vmatpush.msra.mxu0 %v2895
    %v2897 = vand.u32 %v205, 4294901760
    %v2898 = vsub.f32 %v205, %v2897
    %v2899 = vand.u32 %v2898, 4294901760
    %2900 = vmatpush.msra.mxu0 %v2899
    %v2901 = vand.u32 %v198, 4294901760
    %v2902 = vsub.f32 %v198, %v2901
    %v2903 = vand.u32 %v2902, 4294901760
    %2904 = vmatpush.msra.mxu0 %v2903
    %v2905 = vand.u32 %v191, 4294901760
    %v2906 = vsub.f32 %v191, %v2905
    %v2907 = vand.u32 %v2906, 4294901760
    %2908 = vmatpush.msra.mxu0 %v2907
    %v2909 = vand.u32 %v184, 4294901760
    %v2910 = vsub.f32 %v184, %v2909
    %v2911 = vand.u32 %v2910, 4294901760
    %2912 = vmatpush.msra.mxu0 %v2911
    %v2913 = vand.u32 %v177, 4294901760
    %v2914 = vsub.f32 %v177, %v2913
    %v2915 = vand.u32 %v2914, 4294901760
    %2916 = vmatpush.msra.mxu0 %v2915
    %v2917 = vand.u32 %v170, 4294901760
    %v2918 = vsub.f32 %v170, %v2917
    %v2919 = vand.u32 %v2918, 4294901760
    %2920 = vmatpush.msra.mxu0 %v2919
    %v2921 = vand.u32 %v163, 4294901760
    %v2922 = vsub.f32 %v163, %v2921
    %v2923 = vand.u32 %v2922, 4294901760
    %2924 = vmatpush.msra.mxu0 %v2923
    %v2925 = vand.u32 %v156, 4294901760
    %v2926 = vsub.f32 %v156, %v2925
    %v2927 = vand.u32 %v2926, 4294901760
    %2928 = vmatpush.msra.mxu0 %v2927
    %v2929 = vand.u32 %v149, 4294901760
    %v2930 = vsub.f32 %v149, %v2929
    %v2931 = vand.u32 %v2930, 4294901760
    %2932 = vmatpush.msra.mxu0 %v2931
    %v2933 = vand.u32 %v142, 4294901760
    %v2934 = vsub.f32 %v142, %v2933
    %v2935 = vand.u32 %v2934, 4294901760
    %2936 = vmatpush.msra.mxu0 %v2935
    %v2937 = vand.u32 %v26, 4294901760
    %2938 = vmatmul.f32.gmra.mxu0 %v2937
    %v2939 = vpop.f32.mrf.mxu0
    %v2940 = vadd.f32 %v2871, %v2939
    %2941 = vdwg.mxu0
    %v2942 = vand.u32 %v247, 4294901760
    %2943 = vmatpush.msra.mxu0 %v2942
    %v2944 = vand.u32 %v240, 4294901760
    %2945 = vmatpush.msra.mxu0 %v2944
    %v2946 = vand.u32 %v233, 4294901760
    %2947 = vmatpush.msra.mxu0 %v2946
    %v2948 = vand.u32 %v226, 4294901760
    %2949 = vmatpush.msra.mxu0 %v2948
    %v2950 = vand.u32 %v219, 4294901760
    %2951 = vmatpush.msra.mxu0 %v2950
    %v2952 = vand.u32 %v212, 4294901760
    %2953 = vmatpush.msra.mxu0 %v2952
    %v2954 = vand.u32 %v205, 4294901760
    %2955 = vmatpush.msra.mxu0 %v2954
    %v2956 = vand.u32 %v198, 4294901760
    %2957 = vmatpush.msra.mxu0 %v2956
    %v2958 = vand.u32 %v191, 4294901760
    %2959 = vmatpush.msra.mxu0 %v2958
    %v2960 = vand.u32 %v184, 4294901760
    %2961 = vmatpush.msra.mxu0 %v2960
    %v2962 = vand.u32 %v177, 4294901760
    %2963 = vmatpush.msra.mxu0 %v2962
    %v2964 = vand.u32 %v170, 4294901760
    %2965 = vmatpush.msra.mxu0 %v2964
    %v2966 = vand.u32 %v163, 4294901760
    %2967 = vmatpush.msra.mxu0 %v2966
    %v2968 = vand.u32 %v156, 4294901760
    %2969 = vmatpush.msra.mxu0 %v2968
    %v2970 = vand.u32 %v149, 4294901760
    %2971 = vmatpush.msra.mxu0 %v2970
    %v2972 = vand.u32 %v142, 4294901760
    %2973 = vmatpush.msra.mxu0 %v2972
    %v2974 = vand.u32 %v26, 4294901760
    %2975 = vmatmul.f32.gmra.mxu0 %v2974
    %v2976 = vpop.f32.mrf.mxu0
    %v2977 = vadd.f32 %v2940, %v2976
    %2978 = vdwg.mxu0
    %v2979 = vand.u32 %v136, 4294901760
    %2980 = vmatpush.msra.mxu0 %v2979
    %v2981 = vand.u32 %v129, 4294901760
    %2982 = vmatpush.msra.mxu0 %v2981
    %v2983 = vand.u32 %v122, 4294901760
    %2984 = vmatpush.msra.mxu0 %v2983
    %v2985 = vand.u32 %v115, 4294901760
    %2986 = vmatpush.msra.mxu0 %v2985
    %v2987 = vand.u32 %v108, 4294901760
    %2988 = vmatpush.msra.mxu0 %v2987
    %v2989 = vand.u32 %v101, 4294901760
    %2990 = vmatpush.msra.mxu0 %v2989
    %v2991 = vand.u32 %v94, 4294901760
    %2992 = vmatpush.msra.mxu0 %v2991
    %v2993 = vand.u32 %v87, 4294901760
    %2994 = vmatpush.msra.mxu0 %v2993
    %v2995 = vand.u32 %v80, 4294901760
    %2996 = vmatpush.msra.mxu0 %v2995
    %v2997 = vand.u32 %v73, 4294901760
    %2998 = vmatpush.msra.mxu0 %v2997
    %v2999 = vand.u32 %v66, 4294901760
    %3000 = vmatpush.msra.mxu0 %v2999
    %v3001 = vand.u32 %v59, 4294901760
    %3002 = vmatpush.msra.mxu0 %v3001
    %v3003 = vand.u32 %v52, 4294901760
    %3004 = vmatpush.msra.mxu0 %v3003
    %v3005 = vand.u32 %v45, 4294901760
    %3006 = vmatpush.msra.mxu0 %v3005
    %v3007 = vand.u32 %v38, 4294901760
    %3008 = vmatpush.msra.mxu0 %v3007
    %v3009 = vand.u32 %v31, 4294901760
    %3010 = vmatpush.msra.mxu0 %v3009
    %v3011 = vand.u32 %v25, 4294901760
    %v3012 = vsub.f32 %v25, %v3011
    %v3013 = vand.u32 %v3012, 4294901760
    %v3014 = vsub.f32 %v3012, %v3013
    %v3015 = vand.u32 %v3014, 4294901760
    %3016 = vmatmul.f32.gmra.mxu0 %v3015
    %v3017 = vpop.f32.mrf.mxu0
    %v3018 = vadd.f32 0.0, %v3017
    %3019 = vdwg.mxu0
    %v3020 = vand.u32 %v136, 4294901760
    %v3021 = vsub.f32 %v136, %v3020
    %v3022 = vand.u32 %v3021, 4294901760
    %v3023 = vsub.f32 %v3021, %v3022
    %v3024 = vand.u32 %v3023, 4294901760
    %3025 = vmatpush.msra.mxu0 %v3024
    %v3026 = vand.u32 %v129, 4294901760
    %v3027 = vsub.f32 %v129, %v3026
    %v3028 = vand.u32 %v3027, 4294901760
    %v3029 = vsub.f32 %v3027, %v3028
    %v3030 = vand.u32 %v3029, 4294901760
    %3031 = vmatpush.msra.mxu0 %v3030
    %v3032 = vand.u32 %v122, 4294901760
    %v3033 = vsub.f32 %v122, %v3032
    %v3034 = vand.u32 %v3033, 4294901760
    %v3035 = vsub.f32 %v3033, %v3034
    %v3036 = vand.u32 %v3035, 4294901760
    %3037 = vmatpush.msra.mxu0 %v3036
    %v3038 = vand.u32 %v115, 4294901760
    %v3039 = vsub.f32 %v115, %v3038
    %v3040 = vand.u32 %v3039, 4294901760
    %v3041 = vsub.f32 %v3039, %v3040
    %v3042 = vand.u32 %v3041, 4294901760
    %3043 = vmatpush.msra.mxu0 %v3042
    %v3044 = vand.u32 %v108, 4294901760
    %v3045 = vsub.f32 %v108, %v3044
    %v3046 = vand.u32 %v3045, 4294901760
    %v3047 = vsub.f32 %v3045, %v3046
    %v3048 = vand.u32 %v3047, 4294901760
    %3049 = vmatpush.msra.mxu0 %v3048
    %v3050 = vand.u32 %v101, 4294901760
    %v3051 = vsub.f32 %v101, %v3050
    %v3052 = vand.u32 %v3051, 4294901760
    %v3053 = vsub.f32 %v3051, %v3052
    %v3054 = vand.u32 %v3053, 4294901760
    %3055 = vmatpush.msra.mxu0 %v3054
    %v3056 = vand.u32 %v94, 4294901760
    %v3057 = vsub.f32 %v94, %v3056
    %v3058 = vand.u32 %v3057, 4294901760
    %v3059 = vsub.f32 %v3057, %v3058
    %v3060 = vand.u32 %v3059, 4294901760
    %3061 = vmatpush.msra.mxu0 %v3060
    %v3062 = vand.u32 %v87, 4294901760
    %v3063 = vsub.f32 %v87, %v3062
    %v3064 = vand.u32 %v3063, 4294901760
    %v3065 = vsub.f32 %v3063, %v3064
    %v3066 = vand.u32 %v3065, 4294901760
    %3067 = vmatpush.msra.mxu0 %v3066
    %v3068 = vand.u32 %v80, 4294901760
    %v3069 = vsub.f32 %v80, %v3068
    %v3070 = vand.u32 %v3069, 4294901760
    %v3071 = vsub.f32 %v3069, %v3070
    %v3072 = vand.u32 %v3071, 4294901760
    %3073 = vmatpush.msra.mxu0 %v3072
    %v3074 = vand.u32 %v73, 4294901760
    %v3075 = vsub.f32 %v73, %v3074
    %v3076 = vand.u32 %v3075, 4294901760
    %v3077 = vsub.f32 %v3075, %v3076
    %v3078 = vand.u32 %v3077, 4294901760
    %3079 = vmatpush.msra.mxu0 %v3078
    %v3080 = vand.u32 %v66, 4294901760
    %v3081 = vsub.f32 %v66, %v3080
    %v3082 = vand.u32 %v3081, 4294901760
    %v3083 = vsub.f32 %v3081, %v3082
    %v3084 = vand.u32 %v3083, 4294901760
    %3085 = vmatpush.msra.mxu0 %v3084
    %v3086 = vand.u32 %v59, 4294901760
    %v3087 = vsub.f32 %v59, %v3086
    %v3088 = vand.u32 %v3087, 4294901760
    %v3089 = vsub.f32 %v3087, %v3088
    %v3090 = vand.u32 %v3089, 4294901760
    %3091 = vmatpush.msra.mxu0 %v3090
    %v3092 = vand.u32 %v52, 4294901760
    %v3093 = vsub.f32 %v52, %v3092
    %v3094 = vand.u32 %v3093, 4294901760
    %v3095 = vsub.f32 %v3093, %v3094
    %v3096 = vand.u32 %v3095, 4294901760
    %3097 = vmatpush.msra.mxu0 %v3096
    %v3098 = vand.u32 %v45, 4294901760
    %v3099 = vsub.f32 %v45, %v3098
    %v3100 = vand.u32 %v3099, 4294901760
    %v3101 = vsub.f32 %v3099, %v3100
    %v3102 = vand.u32 %v3101, 4294901760
    %3103 = vmatpush.msra.mxu0 %v3102
    %v3104 = vand.u32 %v38, 4294901760
    %v3105 = vsub.f32 %v38, %v3104
    %v3106 = vand.u32 %v3105, 4294901760
    %v3107 = vsub.f32 %v3105, %v3106
    %v3108 = vand.u32 %v3107, 4294901760
    %3109 = vmatpush.msra.mxu0 %v3108
    %v3110 = vand.u32 %v31, 4294901760
    %v3111 = vsub.f32 %v31, %v3110
    %v3112 = vand.u32 %v3111, 4294901760
    %v3113 = vsub.f32 %v3111, %v3112
    %v3114 = vand.u32 %v3113, 4294901760
    %3115 = vmatpush.msra.mxu0 %v3114
    %v3116 = vand.u32 %v25, 4294901760
    %3117 = vmatmul.f32.gmra.mxu0 %v3116
    %v3118 = vpop.f32.mrf.mxu0
    %v3119 = vadd.f32 %v3018, %v3118
    %3120 = vdwg.mxu0
    %v3121 = vand.u32 %v136, 4294901760
    %v3122 = vsub.f32 %v136, %v3121
    %3123 = vmatpush.msra.mxu0 %v3122
    %v3124 = vand.u32 %v129, 4294901760
    %v3125 = vsub.f32 %v129, %v3124
    %3126 = vmatpush.msra.mxu0 %v3125
    %v3127 = vand.u32 %v122, 4294901760
    %v3128 = vsub.f32 %v122, %v3127
    %3129 = vmatpush.msra.mxu0 %v3128
    %v3130 = vand.u32 %v115, 4294901760
    %v3131 = vsub.f32 %v115, %v3130
    %3132 = vmatpush.msra.mxu0 %v3131
    %v3133 = vand.u32 %v108, 4294901760
    %v3134 = vsub.f32 %v108, %v3133
    %3135 = vmatpush.msra.mxu0 %v3134
    %v3136 = vand.u32 %v101, 4294901760
    %v3137 = vsub.f32 %v101, %v3136
    %3138 = vmatpush.msra.mxu0 %v3137
    %v3139 = vand.u32 %v94, 4294901760
    %v3140 = vsub.f32 %v94, %v3139
    %3141 = vmatpush.msra.mxu0 %v3140
    %v3142 = vand.u32 %v87, 4294901760
    %v3143 = vsub.f32 %v87, %v3142
    %3144 = vmatpush.msra.mxu0 %v3143
    %v3145 = vand.u32 %v80, 4294901760
    %v3146 = vsub.f32 %v80, %v3145
    %3147 = vmatpush.msra.mxu0 %v3146
    %v3148 = vand.u32 %v73, 4294901760
    %v3149 = vsub.f32 %v73, %v3148
    %3150 = vmatpush.msra.mxu0 %v3149
    %v3151 = vand.u32 %v66, 4294901760
    %v3152 = vsub.f32 %v66, %v3151
    %3153 = vmatpush.msra.mxu0 %v3152
    %v3154 = vand.u32 %v59, 4294901760
    %v3155 = vsub.f32 %v59, %v3154
    %3156 = vmatpush.msra.mxu0 %v3155
    %v3157 = vand.u32 %v52, 4294901760
    %v3158 = vsub.f32 %v52, %v3157
    %3159 = vmatpush.msra.mxu0 %v3158
    %v3160 = vand.u32 %v45, 4294901760
    %v3161 = vsub.f32 %v45, %v3160
    %3162 = vmatpush.msra.mxu0 %v3161
    %v3163 = vand.u32 %v38, 4294901760
    %v3164 = vsub.f32 %v38, %v3163
    %3165 = vmatpush.msra.mxu0 %v3164
    %v3166 = vand.u32 %v31, 4294901760
    %v3167 = vsub.f32 %v31, %v3166
    %3168 = vmatpush.msra.mxu0 %v3167
    %v3169 = vand.u32 %v25, 4294901760
    %v3170 = vsub.f32 %v25, %v3169
    %3171 = vmatmul.f32.gmra.mxu0 %v3170
    %v3172 = vpop.f32.mrf.mxu0
    %v3173 = vadd.f32 %v3119, %v3172
    %3174 = vdwg.mxu0
    %v3175 = vand.u32 %v136, 4294901760
    %3176 = vmatpush.msra.mxu0 %v3175
    %v3177 = vand.u32 %v129, 4294901760
    %3178 = vmatpush.msra.mxu0 %v3177
    %v3179 = vand.u32 %v122, 4294901760
    %3180 = vmatpush.msra.mxu0 %v3179
    %v3181 = vand.u32 %v115, 4294901760
    %3182 = vmatpush.msra.mxu0 %v3181
    %v3183 = vand.u32 %v108, 4294901760
    %3184 = vmatpush.msra.mxu0 %v3183
    %v3185 = vand.u32 %v101, 4294901760
    %3186 = vmatpush.msra.mxu0 %v3185
    %v3187 = vand.u32 %v94, 4294901760
    %3188 = vmatpush.msra.mxu0 %v3187
    %v3189 = vand.u32 %v87, 4294901760
    %3190 = vmatpush.msra.mxu0 %v3189
    %v3191 = vand.u32 %v80, 4294901760
    %3192 = vmatpush.msra.mxu0 %v3191
    %v3193 = vand.u32 %v73, 4294901760
    %3194 = vmatpush.msra.mxu0 %v3193
    %v3195 = vand.u32 %v66, 4294901760
    %3196 = vmatpush.msra.mxu0 %v3195
    %v3197 = vand.u32 %v59, 4294901760
    %3198 = vmatpush.msra.mxu0 %v3197
    %v3199 = vand.u32 %v52, 4294901760
    %3200 = vmatpush.msra.mxu0 %v3199
    %v3201 = vand.u32 %v45, 4294901760
    %3202 = vmatpush.msra.mxu0 %v3201
    %v3203 = vand.u32 %v38, 4294901760
    %3204 = vmatpush.msra.mxu0 %v3203
    %v3205 = vand.u32 %v31, 4294901760
    %3206 = vmatpush.msra.mxu0 %v3205
    %v3207 = vand.u32 %v25, 4294901760
    %v3208 = vsub.f32 %v25, %v3207
    %v3209 = vand.u32 %v3208, 4294901760
    %3210 = vmatmul.f32.gmra.mxu0 %v3209
    %v3211 = vpop.f32.mrf.mxu0
    %v3212 = vadd.f32 %v3173, %v3211
    %3213 = vdwg.mxu0
    %v3214 = vand.u32 %v136, 4294901760
    %v3215 = vsub.f32 %v136, %v3214
    %v3216 = vand.u32 %v3215, 4294901760
    %3217 = vmatpush.msra.mxu0 %v3216
    %v3218 = vand.u32 %v129, 4294901760
    %v3219 = vsub.f32 %v129, %v3218
    %v3220 = vand.u32 %v3219, 4294901760
    %3221 = vmatpush.msra.mxu0 %v3220
    %v3222 = vand.u32 %v122, 4294901760
    %v3223 = vsub.f32 %v122, %v3222
    %v3224 = vand.u32 %v3223, 4294901760
    %3225 = vmatpush.msra.mxu0 %v3224
    %v3226 = vand.u32 %v115, 4294901760
    %v3227 = vsub.f32 %v115, %v3226
    %v3228 = vand.u32 %v3227, 4294901760
    %3229 = vmatpush.msra.mxu0 %v3228
    %v3230 = vand.u32 %v108, 4294901760
    %v3231 = vsub.f32 %v108, %v3230
    %v3232 = vand.u32 %v3231, 4294901760
    %3233 = vmatpush.msra.mxu0 %v3232
    %v3234 = vand.u32 %v101, 4294901760
    %v3235 = vsub.f32 %v101, %v3234
    %v3236 = vand.u32 %v3235, 4294901760
    %3237 = vmatpush.msra.mxu0 %v3236
    %v3238 = vand.u32 %v94, 4294901760
    %v3239 = vsub.f32 %v94, %v3238
    %v3240 = vand.u32 %v3239, 4294901760
    %3241 = vmatpush.msra.mxu0 %v3240
    %v3242 = vand.u32 %v87, 4294901760
    %v3243 = vsub.f32 %v87, %v3242
    %v3244 = vand.u32 %v3243, 4294901760
    %3245 = vmatpush.msra.mxu0 %v3244
    %v3246 = vand.u32 %v80, 4294901760
    %v3247 = vsub.f32 %v80, %v3246
    %v3248 = vand.u32 %v3247, 4294901760
    %3249 = vmatpush.msra.mxu0 %v3248
    %v3250 = vand.u32 %v73, 4294901760
    %v3251 = vsub.f32 %v73, %v3250
    %v3252 = vand.u32 %v3251, 4294901760
    %3253 = vmatpush.msra.mxu0 %v3252
    %v3254 = vand.u32 %v66, 4294901760
    %v3255 = vsub.f32 %v66, %v3254
    %v3256 = vand.u32 %v3255, 4294901760
    %3257 = vmatpush.msra.mxu0 %v3256
    %v3258 = vand.u32 %v59, 4294901760
    %v3259 = vsub.f32 %v59, %v3258
    %v3260 = vand.u32 %v3259, 4294901760
    %3261 = vmatpush.msra.mxu0 %v3260
    %v3262 = vand.u32 %v52, 4294901760
    %v3263 = vsub.f32 %v52, %v3262
    %v3264 = vand.u32 %v3263, 4294901760
    %3265 = vmatpush.msra.mxu0 %v3264
    %v3266 = vand.u32 %v45, 4294901760
    %v3267 = vsub.f32 %v45, %v3266
    %v3268 = vand.u32 %v3267, 4294901760
    %3269 = vmatpush.msra.mxu0 %v3268
    %v3270 = vand.u32 %v38, 4294901760
    %v3271 = vsub.f32 %v38, %v3270
    %v3272 = vand.u32 %v3271, 4294901760
    %3273 = vmatpush.msra.mxu0 %v3272
    %v3274 = vand.u32 %v31, 4294901760
    %v3275 = vsub.f32 %v31, %v3274
    %v3276 = vand.u32 %v3275, 4294901760
    %3277 = vmatpush.msra.mxu0 %v3276
    %v3278 = vand.u32 %v25, 4294901760
    %3279 = vmatmul.f32.gmra.mxu0 %v3278
    %v3280 = vpop.f32.mrf.mxu0
    %v3281 = vadd.f32 %v3212, %v3280
    %3282 = vdwg.mxu0
    %v3283 = vand.u32 %v136, 4294901760
    %3284 = vmatpush.msra.mxu0 %v3283
    %v3285 = vand.u32 %v129, 4294901760
    %3286 = vmatpush.msra.mxu0 %v3285
    %v3287 = vand.u32 %v122, 4294901760
    %3288 = vmatpush.msra.mxu0 %v3287
    %v3289 = vand.u32 %v115, 4294901760
    %3290 = vmatpush.msra.mxu0 %v3289
    %v3291 = vand.u32 %v108, 4294901760
    %3292 = vmatpush.msra.mxu0 %v3291
    %v3293 = vand.u32 %v101, 4294901760
    %3294 = vmatpush.msra.mxu0 %v3293
    %v3295 = vand.u32 %v94, 4294901760
    %3296 = vmatpush.msra.mxu0 %v3295
    %v3297 = vand.u32 %v87, 4294901760
    %3298 = vmatpush.msra.mxu0 %v3297
    %v3299 = vand.u32 %v80, 4294901760
    %3300 = vmatpush.msra.mxu0 %v3299
    %v3301 = vand.u32 %v73, 4294901760
    %3302 = vmatpush.msra.mxu0 %v3301
    %v3303 = vand.u32 %v66, 4294901760
    %3304 = vmatpush.msra.mxu0 %v3303
    %v3305 = vand.u32 %v59, 4294901760
    %3306 = vmatpush.msra.mxu0 %v3305
    %v3307 = vand.u32 %v52, 4294901760
    %3308 = vmatpush.msra.mxu0 %v3307
    %v3309 = vand.u32 %v45, 4294901760
    %3310 = vmatpush.msra.mxu0 %v3309
    %v3311 = vand.u32 %v38, 4294901760
    %3312 = vmatpush.msra.mxu0 %v3311
    %v3313 = vand.u32 %v31, 4294901760
    %3314 = vmatpush.msra.mxu0 %v3313
    %v3315 = vand.u32 %v25, 4294901760
    %3316 = vmatmul.f32.gmra.mxu0 %v3315
    %v3317 = vpop.f32.mrf.mxu0
    %v3318 = vadd.f32 %v3281, %v3317
    %3319 = vdwg.mxu0
    %v3320 = vand.u32 %v248, 4294901760
    %3321 = vmatpush.msra.mxu0 %v3320
    %v3322 = vand.u32 %v241, 4294901760
    %3323 = vmatpush.msra.mxu0 %v3322
    %v3324 = vand.u32 %v234, 4294901760
    %3325 = vmatpush.msra.mxu0 %v3324
    %v3326 = vand.u32 %v227, 4294901760
    %3327 = vmatpush.msra.mxu0 %v3326
    %v3328 = vand.u32 %v220, 4294901760
    %3329 = vmatpush.msra.mxu0 %v3328
    %v3330 = vand.u32 %v213, 4294901760
    %3331 = vmatpush.msra.mxu0 %v3330
    %v3332 = vand.u32 %v206, 4294901760
    %3333 = vmatpush.msra.mxu0 %v3332
    %v3334 = vand.u32 %v199, 4294901760
    %3335 = vmatpush.msra.mxu0 %v3334
    %v3336 = vand.u32 %v192, 4294901760
    %3337 = vmatpush.msra.mxu0 %v3336
    %v3338 = vand.u32 %v185, 4294901760
    %3339 = vmatpush.msra.mxu0 %v3338
    %v3340 = vand.u32 %v178, 4294901760
    %3341 = vmatpush.msra.mxu0 %v3340
    %v3342 = vand.u32 %v171, 4294901760
    %3343 = vmatpush.msra.mxu0 %v3342
    %v3344 = vand.u32 %v164, 4294901760
    %3345 = vmatpush.msra.mxu0 %v3344
    %v3346 = vand.u32 %v157, 4294901760
    %3347 = vmatpush.msra.mxu0 %v3346
    %v3348 = vand.u32 %v150, 4294901760
    %3349 = vmatpush.msra.mxu0 %v3348
    %v3350 = vand.u32 %v143, 4294901760
    %3351 = vmatpush.msra.mxu0 %v3350
    %v3352 = vand.u32 %v26, 4294901760
    %v3353 = vsub.f32 %v26, %v3352
    %v3354 = vand.u32 %v3353, 4294901760
    %v3355 = vsub.f32 %v3353, %v3354
    %v3356 = vand.u32 %v3355, 4294901760
    %3357 = vmatmul.f32.gmra.mxu0 %v3356
    %v3358 = vpop.f32.mrf.mxu0
    %v3359 = vadd.f32 %v3318, %v3358
    %3360 = vdwg.mxu0
    %v3361 = vand.u32 %v248, 4294901760
    %v3362 = vsub.f32 %v248, %v3361
    %v3363 = vand.u32 %v3362, 4294901760
    %v3364 = vsub.f32 %v3362, %v3363
    %v3365 = vand.u32 %v3364, 4294901760
    %3366 = vmatpush.msra.mxu0 %v3365
    %v3367 = vand.u32 %v241, 4294901760
    %v3368 = vsub.f32 %v241, %v3367
    %v3369 = vand.u32 %v3368, 4294901760
    %v3370 = vsub.f32 %v3368, %v3369
    %v3371 = vand.u32 %v3370, 4294901760
    %3372 = vmatpush.msra.mxu0 %v3371
    %v3373 = vand.u32 %v234, 4294901760
    %v3374 = vsub.f32 %v234, %v3373
    %v3375 = vand.u32 %v3374, 4294901760
    %v3376 = vsub.f32 %v3374, %v3375
    %v3377 = vand.u32 %v3376, 4294901760
    %3378 = vmatpush.msra.mxu0 %v3377
    %v3379 = vand.u32 %v227, 4294901760
    %v3380 = vsub.f32 %v227, %v3379
    %v3381 = vand.u32 %v3380, 4294901760
    %v3382 = vsub.f32 %v3380, %v3381
    %v3383 = vand.u32 %v3382, 4294901760
    %3384 = vmatpush.msra.mxu0 %v3383
    %v3385 = vand.u32 %v220, 4294901760
    %v3386 = vsub.f32 %v220, %v3385
    %v3387 = vand.u32 %v3386, 4294901760
    %v3388 = vsub.f32 %v3386, %v3387
    %v3389 = vand.u32 %v3388, 4294901760
    %3390 = vmatpush.msra.mxu0 %v3389
    %v3391 = vand.u32 %v213, 4294901760
    %v3392 = vsub.f32 %v213, %v3391
    %v3393 = vand.u32 %v3392, 4294901760
    %v3394 = vsub.f32 %v3392, %v3393
    %v3395 = vand.u32 %v3394, 4294901760
    %3396 = vmatpush.msra.mxu0 %v3395
    %v3397 = vand.u32 %v206, 4294901760
    %v3398 = vsub.f32 %v206, %v3397
    %v3399 = vand.u32 %v3398, 4294901760
    %v3400 = vsub.f32 %v3398, %v3399
    %v3401 = vand.u32 %v3400, 4294901760
    %3402 = vmatpush.msra.mxu0 %v3401
    %v3403 = vand.u32 %v199, 4294901760
    %v3404 = vsub.f32 %v199, %v3403
    %v3405 = vand.u32 %v3404, 4294901760
    %v3406 = vsub.f32 %v3404, %v3405
    %v3407 = vand.u32 %v3406, 4294901760
    %3408 = vmatpush.msra.mxu0 %v3407
    %v3409 = vand.u32 %v192, 4294901760
    %v3410 = vsub.f32 %v192, %v3409
    %v3411 = vand.u32 %v3410, 4294901760
    %v3412 = vsub.f32 %v3410, %v3411
    %v3413 = vand.u32 %v3412, 4294901760
    %3414 = vmatpush.msra.mxu0 %v3413
    %v3415 = vand.u32 %v185, 4294901760
    %v3416 = vsub.f32 %v185, %v3415
    %v3417 = vand.u32 %v3416, 4294901760
    %v3418 = vsub.f32 %v3416, %v3417
    %v3419 = vand.u32 %v3418, 4294901760
    %3420 = vmatpush.msra.mxu0 %v3419
    %v3421 = vand.u32 %v178, 4294901760
    %v3422 = vsub.f32 %v178, %v3421
    %v3423 = vand.u32 %v3422, 4294901760
    %v3424 = vsub.f32 %v3422, %v3423
    %v3425 = vand.u32 %v3424, 4294901760
    %3426 = vmatpush.msra.mxu0 %v3425
    %v3427 = vand.u32 %v171, 4294901760
    %v3428 = vsub.f32 %v171, %v3427
    %v3429 = vand.u32 %v3428, 4294901760
    %v3430 = vsub.f32 %v3428, %v3429
    %v3431 = vand.u32 %v3430, 4294901760
    %3432 = vmatpush.msra.mxu0 %v3431
    %v3433 = vand.u32 %v164, 4294901760
    %v3434 = vsub.f32 %v164, %v3433
    %v3435 = vand.u32 %v3434, 4294901760
    %v3436 = vsub.f32 %v3434, %v3435
    %v3437 = vand.u32 %v3436, 4294901760
    %3438 = vmatpush.msra.mxu0 %v3437
    %v3439 = vand.u32 %v157, 4294901760
    %v3440 = vsub.f32 %v157, %v3439
    %v3441 = vand.u32 %v3440, 4294901760
    %v3442 = vsub.f32 %v3440, %v3441
    %v3443 = vand.u32 %v3442, 4294901760
    %3444 = vmatpush.msra.mxu0 %v3443
    %v3445 = vand.u32 %v150, 4294901760
    %v3446 = vsub.f32 %v150, %v3445
    %v3447 = vand.u32 %v3446, 4294901760
    %v3448 = vsub.f32 %v3446, %v3447
    %v3449 = vand.u32 %v3448, 4294901760
    %3450 = vmatpush.msra.mxu0 %v3449
    %v3451 = vand.u32 %v143, 4294901760
    %v3452 = vsub.f32 %v143, %v3451
    %v3453 = vand.u32 %v3452, 4294901760
    %v3454 = vsub.f32 %v3452, %v3453
    %v3455 = vand.u32 %v3454, 4294901760
    %3456 = vmatpush.msra.mxu0 %v3455
    %v3457 = vand.u32 %v26, 4294901760
    %3458 = vmatmul.f32.gmra.mxu0 %v3457
    %v3459 = vpop.f32.mrf.mxu0
    %v3460 = vadd.f32 %v3359, %v3459
    %3461 = vdwg.mxu0
    %v3462 = vand.u32 %v248, 4294901760
    %v3463 = vsub.f32 %v248, %v3462
    %3464 = vmatpush.msra.mxu0 %v3463
    %v3465 = vand.u32 %v241, 4294901760
    %v3466 = vsub.f32 %v241, %v3465
    %3467 = vmatpush.msra.mxu0 %v3466
    %v3468 = vand.u32 %v234, 4294901760
    %v3469 = vsub.f32 %v234, %v3468
    %3470 = vmatpush.msra.mxu0 %v3469
    %v3471 = vand.u32 %v227, 4294901760
    %v3472 = vsub.f32 %v227, %v3471
    %3473 = vmatpush.msra.mxu0 %v3472
    %v3474 = vand.u32 %v220, 4294901760
    %v3475 = vsub.f32 %v220, %v3474
    %3476 = vmatpush.msra.mxu0 %v3475
    %v3477 = vand.u32 %v213, 4294901760
    %v3478 = vsub.f32 %v213, %v3477
    %3479 = vmatpush.msra.mxu0 %v3478
    %v3480 = vand.u32 %v206, 4294901760
    %v3481 = vsub.f32 %v206, %v3480
    %3482 = vmatpush.msra.mxu0 %v3481
    %v3483 = vand.u32 %v199, 4294901760
    %v3484 = vsub.f32 %v199, %v3483
    %3485 = vmatpush.msra.mxu0 %v3484
    %v3486 = vand.u32 %v192, 4294901760
    %v3487 = vsub.f32 %v192, %v3486
    %3488 = vmatpush.msra.mxu0 %v3487
    %v3489 = vand.u32 %v185, 4294901760
    %v3490 = vsub.f32 %v185, %v3489
    %3491 = vmatpush.msra.mxu0 %v3490
    %v3492 = vand.u32 %v178, 4294901760
    %v3493 = vsub.f32 %v178, %v3492
    %3494 = vmatpush.msra.mxu0 %v3493
    %v3495 = vand.u32 %v171, 4294901760
    %v3496 = vsub.f32 %v171, %v3495
    %3497 = vmatpush.msra.mxu0 %v3496
    %v3498 = vand.u32 %v164, 4294901760
    %v3499 = vsub.f32 %v164, %v3498
    %3500 = vmatpush.msra.mxu0 %v3499
    %v3501 = vand.u32 %v157, 4294901760
    %v3502 = vsub.f32 %v157, %v3501
    %3503 = vmatpush.msra.mxu0 %v3502
    %v3504 = vand.u32 %v150, 4294901760
    %v3505 = vsub.f32 %v150, %v3504
    %3506 = vmatpush.msra.mxu0 %v3505
    %v3507 = vand.u32 %v143, 4294901760
    %v3508 = vsub.f32 %v143, %v3507
    %3509 = vmatpush.msra.mxu0 %v3508
    %v3510 = vand.u32 %v26, 4294901760
    %v3511 = vsub.f32 %v26, %v3510
    %3512 = vmatmul.f32.gmra.mxu0 %v3511
    %v3513 = vpop.f32.mrf.mxu0
    %v3514 = vadd.f32 %v3460, %v3513
    %3515 = vdwg.mxu0
    %v3516 = vand.u32 %v248, 4294901760
    %3517 = vmatpush.msra.mxu0 %v3516
    %v3518 = vand.u32 %v241, 4294901760
    %3519 = vmatpush.msra.mxu0 %v3518
    %v3520 = vand.u32 %v234, 4294901760
    %3521 = vmatpush.msra.mxu0 %v3520
    %v3522 = vand.u32 %v227, 4294901760
    %3523 = vmatpush.msra.mxu0 %v3522
    %v3524 = vand.u32 %v220, 4294901760
    %3525 = vmatpush.msra.mxu0 %v3524
    %v3526 = vand.u32 %v213, 4294901760
    %3527 = vmatpush.msra.mxu0 %v3526
    %v3528 = vand.u32 %v206, 4294901760
    %3529 = vmatpush.msra.mxu0 %v3528
    %v3530 = vand.u32 %v199, 4294901760
    %3531 = vmatpush.msra.mxu0 %v3530
    %v3532 = vand.u32 %v192, 4294901760
    %3533 = vmatpush.msra.mxu0 %v3532
    %v3534 = vand.u32 %v185, 4294901760
    %3535 = vmatpush.msra.mxu0 %v3534
    %v3536 = vand.u32 %v178, 4294901760
    %3537 = vmatpush.msra.mxu0 %v3536
    %v3538 = vand.u32 %v171, 4294901760
    %3539 = vmatpush.msra.mxu0 %v3538
    %v3540 = vand.u32 %v164, 4294901760
    %3541 = vmatpush.msra.mxu0 %v3540
    %v3542 = vand.u32 %v157, 4294901760
    %3543 = vmatpush.msra.mxu0 %v3542
    %v3544 = vand.u32 %v150, 4294901760
    %3545 = vmatpush.msra.mxu0 %v3544
    %v3546 = vand.u32 %v143, 4294901760
    %3547 = vmatpush.msra.mxu0 %v3546
    %v3548 = vand.u32 %v26, 4294901760
    %v3549 = vsub.f32 %v26, %v3548
    %v3550 = vand.u32 %v3549, 4294901760
    %3551 = vmatmul.f32.gmra.mxu0 %v3550
    %v3552 = vpop.f32.mrf.mxu0
    %v3553 = vadd.f32 %v3514, %v3552
    %3554 = vdwg.mxu0
    %v3555 = vand.u32 %v248, 4294901760
    %v3556 = vsub.f32 %v248, %v3555
    %v3557 = vand.u32 %v3556, 4294901760
    %3558 = vmatpush.msra.mxu0 %v3557
    %v3559 = vand.u32 %v241, 4294901760
    %v3560 = vsub.f32 %v241, %v3559
    %v3561 = vand.u32 %v3560, 4294901760
    %3562 = vmatpush.msra.mxu0 %v3561
    %v3563 = vand.u32 %v234, 4294901760
    %v3564 = vsub.f32 %v234, %v3563
    %v3565 = vand.u32 %v3564, 4294901760
    %3566 = vmatpush.msra.mxu0 %v3565
    %v3567 = vand.u32 %v227, 4294901760
    %v3568 = vsub.f32 %v227, %v3567
    %v3569 = vand.u32 %v3568, 4294901760
    %3570 = vmatpush.msra.mxu0 %v3569
    %v3571 = vand.u32 %v220, 4294901760
    %v3572 = vsub.f32 %v220, %v3571
    %v3573 = vand.u32 %v3572, 4294901760
    %3574 = vmatpush.msra.mxu0 %v3573
    %v3575 = vand.u32 %v213, 4294901760
    %v3576 = vsub.f32 %v213, %v3575
    %v3577 = vand.u32 %v3576, 4294901760
    %3578 = vmatpush.msra.mxu0 %v3577
    %v3579 = vand.u32 %v206, 4294901760
    %v3580 = vsub.f32 %v206, %v3579
    %v3581 = vand.u32 %v3580, 4294901760
    %3582 = vmatpush.msra.mxu0 %v3581
    %v3583 = vand.u32 %v199, 4294901760
    %v3584 = vsub.f32 %v199, %v3583
    %v3585 = vand.u32 %v3584, 4294901760
    %3586 = vmatpush.msra.mxu0 %v3585
    %v3587 = vand.u32 %v192, 4294901760
    %v3588 = vsub.f32 %v192, %v3587
    %v3589 = vand.u32 %v3588, 4294901760
    %3590 = vmatpush.msra.mxu0 %v3589
    %v3591 = vand.u32 %v185, 4294901760
    %v3592 = vsub.f32 %v185, %v3591
    %v3593 = vand.u32 %v3592, 4294901760
    %3594 = vmatpush.msra.mxu0 %v3593
    %v3595 = vand.u32 %v178, 4294901760
    %v3596 = vsub.f32 %v178, %v3595
    %v3597 = vand.u32 %v3596, 4294901760
    %3598 = vmatpush.msra.mxu0 %v3597
    %v3599 = vand.u32 %v171, 4294901760
    %v3600 = vsub.f32 %v171, %v3599
    %v3601 = vand.u32 %v3600, 4294901760
    %3602 = vmatpush.msra.mxu0 %v3601
    %v3603 = vand.u32 %v164, 4294901760
    %v3604 = vsub.f32 %v164, %v3603
    %v3605 = vand.u32 %v3604, 4294901760
    %3606 = vmatpush.msra.mxu0 %v3605
    %v3607 = vand.u32 %v157, 4294901760
    %v3608 = vsub.f32 %v157, %v3607
    %v3609 = vand.u32 %v3608, 4294901760
    %3610 = vmatpush.msra.mxu0 %v3609
    %v3611 = vand.u32 %v150, 4294901760
    %v3612 = vsub.f32 %v150, %v3611
    %v3613 = vand.u32 %v3612, 4294901760
    %3614 = vmatpush.msra.mxu0 %v3613
    %v3615 = vand.u32 %v143, 4294901760
    %v3616 = vsub.f32 %v143, %v3615
    %v3617 = vand.u32 %v3616, 4294901760
    %3618 = vmatpush.msra.mxu0 %v3617
    %v3619 = vand.u32 %v26, 4294901760
    %3620 = vmatmul.f32.gmra.mxu0 %v3619
    %v3621 = vpop.f32.mrf.mxu0
    %v3622 = vadd.f32 %v3553, %v3621
    %3623 = vdwg.mxu0
    %v3624 = vand.u32 %v248, 4294901760
    %3625 = vmatpush.msra.mxu0 %v3624
    %v3626 = vand.u32 %v241, 4294901760
    %3627 = vmatpush.msra.mxu0 %v3626
    %v3628 = vand.u32 %v234, 4294901760
    %3629 = vmatpush.msra.mxu0 %v3628
    %v3630 = vand.u32 %v227, 4294901760
    %3631 = vmatpush.msra.mxu0 %v3630
    %v3632 = vand.u32 %v220, 4294901760
    %3633 = vmatpush.msra.mxu0 %v3632
    %v3634 = vand.u32 %v213, 4294901760
    %3635 = vmatpush.msra.mxu0 %v3634
    %v3636 = vand.u32 %v206, 4294901760
    %3637 = vmatpush.msra.mxu0 %v3636
    %v3638 = vand.u32 %v199, 4294901760
    %3639 = vmatpush.msra.mxu0 %v3638
    %v3640 = vand.u32 %v192, 4294901760
    %3641 = vmatpush.msra.mxu0 %v3640
    %v3642 = vand.u32 %v185, 4294901760
    %3643 = vmatpush.msra.mxu0 %v3642
    %v3644 = vand.u32 %v178, 4294901760
    %3645 = vmatpush.msra.mxu0 %v3644
    %v3646 = vand.u32 %v171, 4294901760
    %3647 = vmatpush.msra.mxu0 %v3646
    %v3648 = vand.u32 %v164, 4294901760
    %3649 = vmatpush.msra.mxu0 %v3648
    %v3650 = vand.u32 %v157, 4294901760
    %3651 = vmatpush.msra.mxu0 %v3650
    %v3652 = vand.u32 %v150, 4294901760
    %3653 = vmatpush.msra.mxu0 %v3652
    %v3654 = vand.u32 %v143, 4294901760
    %3655 = vmatpush.msra.mxu0 %v3654
    %v3656 = vand.u32 %v26, 4294901760
    %3657 = vmatmul.f32.gmra.mxu0 %v3656
    %v3658 = vpop.f32.mrf.mxu0
    %v3659 = vadd.f32 %v3622, %v3658
    %3660 = vdwg.mxu0
    %v3661 = vand.u32 %v137, 4294901760
    %3662 = vmatpush.msra.mxu0 %v3661
    %v3663 = vand.u32 %v130, 4294901760
    %3664 = vmatpush.msra.mxu0 %v3663
    %v3665 = vand.u32 %v123, 4294901760
    %3666 = vmatpush.msra.mxu0 %v3665
    %v3667 = vand.u32 %v116, 4294901760
    %3668 = vmatpush.msra.mxu0 %v3667
    %v3669 = vand.u32 %v109, 4294901760
    %3670 = vmatpush.msra.mxu0 %v3669
    %v3671 = vand.u32 %v102, 4294901760
    %3672 = vmatpush.msra.mxu0 %v3671
    %v3673 = vand.u32 %v95, 4294901760
    %3674 = vmatpush.msra.mxu0 %v3673
    %v3675 = vand.u32 %v88, 4294901760
    %3676 = vmatpush.msra.mxu0 %v3675
    %v3677 = vand.u32 %v81, 4294901760
    %3678 = vmatpush.msra.mxu0 %v3677
    %v3679 = vand.u32 %v74, 4294901760
    %3680 = vmatpush.msra.mxu0 %v3679
    %v3681 = vand.u32 %v67, 4294901760
    %3682 = vmatpush.msra.mxu0 %v3681
    %v3683 = vand.u32 %v60, 4294901760
    %3684 = vmatpush.msra.mxu0 %v3683
    %v3685 = vand.u32 %v53, 4294901760
    %3686 = vmatpush.msra.mxu0 %v3685
    %v3687 = vand.u32 %v46, 4294901760
    %3688 = vmatpush.msra.mxu0 %v3687
    %v3689 = vand.u32 %v39, 4294901760
    %3690 = vmatpush.msra.mxu0 %v3689
    %v3691 = vand.u32 %v32, 4294901760
    %3692 = vmatpush.msra.mxu0 %v3691
    %v3693 = vand.u32 %v25, 4294901760
    %v3694 = vsub.f32 %v25, %v3693
    %v3695 = vand.u32 %v3694, 4294901760
    %v3696 = vsub.f32 %v3694, %v3695
    %v3697 = vand.u32 %v3696, 4294901760
    %3698 = vmatmul.f32.gmra.mxu0 %v3697
    %v3699 = vpop.f32.mrf.mxu0
    %v3700 = vadd.f32 0.0, %v3699
    %3701 = vdwg.mxu0
    %v3702 = vand.u32 %v137, 4294901760
    %v3703 = vsub.f32 %v137, %v3702
    %v3704 = vand.u32 %v3703, 4294901760
    %v3705 = vsub.f32 %v3703, %v3704
    %v3706 = vand.u32 %v3705, 4294901760
    %3707 = vmatpush.msra.mxu0 %v3706
    %v3708 = vand.u32 %v130, 4294901760
    %v3709 = vsub.f32 %v130, %v3708
    %v3710 = vand.u32 %v3709, 4294901760
    %v3711 = vsub.f32 %v3709, %v3710
    %v3712 = vand.u32 %v3711, 4294901760
    %3713 = vmatpush.msra.mxu0 %v3712
    %v3714 = vand.u32 %v123, 4294901760
    %v3715 = vsub.f32 %v123, %v3714
    %v3716 = vand.u32 %v3715, 4294901760
    %v3717 = vsub.f32 %v3715, %v3716
    %v3718 = vand.u32 %v3717, 4294901760
    %3719 = vmatpush.msra.mxu0 %v3718
    %v3720 = vand.u32 %v116, 4294901760
    %v3721 = vsub.f32 %v116, %v3720
    %v3722 = vand.u32 %v3721, 4294901760
    %v3723 = vsub.f32 %v3721, %v3722
    %v3724 = vand.u32 %v3723, 4294901760
    %3725 = vmatpush.msra.mxu0 %v3724
    %v3726 = vand.u32 %v109, 4294901760
    %v3727 = vsub.f32 %v109, %v3726
    %v3728 = vand.u32 %v3727, 4294901760
    %v3729 = vsub.f32 %v3727, %v3728
    %v3730 = vand.u32 %v3729, 4294901760
    %3731 = vmatpush.msra.mxu0 %v3730
    %v3732 = vand.u32 %v102, 4294901760
    %v3733 = vsub.f32 %v102, %v3732
    %v3734 = vand.u32 %v3733, 4294901760
    %v3735 = vsub.f32 %v3733, %v3734
    %v3736 = vand.u32 %v3735, 4294901760
    %3737 = vmatpush.msra.mxu0 %v3736
    %v3738 = vand.u32 %v95, 4294901760
    %v3739 = vsub.f32 %v95, %v3738
    %v3740 = vand.u32 %v3739, 4294901760
    %v3741 = vsub.f32 %v3739, %v3740
    %v3742 = vand.u32 %v3741, 4294901760
    %3743 = vmatpush.msra.mxu0 %v3742
    %v3744 = vand.u32 %v88, 4294901760
    %v3745 = vsub.f32 %v88, %v3744
    %v3746 = vand.u32 %v3745, 4294901760
    %v3747 = vsub.f32 %v3745, %v3746
    %v3748 = vand.u32 %v3747, 4294901760
    %3749 = vmatpush.msra.mxu0 %v3748
    %v3750 = vand.u32 %v81, 4294901760
    %v3751 = vsub.f32 %v81, %v3750
    %v3752 = vand.u32 %v3751, 4294901760
    %v3753 = vsub.f32 %v3751, %v3752
    %v3754 = vand.u32 %v3753, 4294901760
    %3755 = vmatpush.msra.mxu0 %v3754
    %v3756 = vand.u32 %v74, 4294901760
    %v3757 = vsub.f32 %v74, %v3756
    %v3758 = vand.u32 %v3757, 4294901760
    %v3759 = vsub.f32 %v3757, %v3758
    %v3760 = vand.u32 %v3759, 4294901760
    %3761 = vmatpush.msra.mxu0 %v3760
    %v3762 = vand.u32 %v67, 4294901760
    %v3763 = vsub.f32 %v67, %v3762
    %v3764 = vand.u32 %v3763, 4294901760
    %v3765 = vsub.f32 %v3763, %v3764
    %v3766 = vand.u32 %v3765, 4294901760
    %3767 = vmatpush.msra.mxu0 %v3766
    %v3768 = vand.u32 %v60, 4294901760
    %v3769 = vsub.f32 %v60, %v3768
    %v3770 = vand.u32 %v3769, 4294901760
    %v3771 = vsub.f32 %v3769, %v3770
    %v3772 = vand.u32 %v3771, 4294901760
    %3773 = vmatpush.msra.mxu0 %v3772
    %v3774 = vand.u32 %v53, 4294901760
    %v3775 = vsub.f32 %v53, %v3774
    %v3776 = vand.u32 %v3775, 4294901760
    %v3777 = vsub.f32 %v3775, %v3776
    %v3778 = vand.u32 %v3777, 4294901760
    %3779 = vmatpush.msra.mxu0 %v3778
    %v3780 = vand.u32 %v46, 4294901760
    %v3781 = vsub.f32 %v46, %v3780
    %v3782 = vand.u32 %v3781, 4294901760
    %v3783 = vsub.f32 %v3781, %v3782
    %v3784 = vand.u32 %v3783, 4294901760
    %3785 = vmatpush.msra.mxu0 %v3784
    %v3786 = vand.u32 %v39, 4294901760
    %v3787 = vsub.f32 %v39, %v3786
    %v3788 = vand.u32 %v3787, 4294901760
    %v3789 = vsub.f32 %v3787, %v3788
    %v3790 = vand.u32 %v3789, 4294901760
    %3791 = vmatpush.msra.mxu0 %v3790
    %v3792 = vand.u32 %v32, 4294901760
    %v3793 = vsub.f32 %v32, %v3792
    %v3794 = vand.u32 %v3793, 4294901760
    %v3795 = vsub.f32 %v3793, %v3794
    %v3796 = vand.u32 %v3795, 4294901760
    %3797 = vmatpush.msra.mxu0 %v3796
    %v3798 = vand.u32 %v25, 4294901760
    %3799 = vmatmul.f32.gmra.mxu0 %v3798
    %v3800 = vpop.f32.mrf.mxu0
    %v3801 = vadd.f32 %v3700, %v3800
    %3802 = vdwg.mxu0
    %v3803 = vand.u32 %v137, 4294901760
    %v3804 = vsub.f32 %v137, %v3803
    %3805 = vmatpush.msra.mxu0 %v3804
    %v3806 = vand.u32 %v130, 4294901760
    %v3807 = vsub.f32 %v130, %v3806
    %3808 = vmatpush.msra.mxu0 %v3807
    %v3809 = vand.u32 %v123, 4294901760
    %v3810 = vsub.f32 %v123, %v3809
    %3811 = vmatpush.msra.mxu0 %v3810
    %v3812 = vand.u32 %v116, 4294901760
    %v3813 = vsub.f32 %v116, %v3812
    %3814 = vmatpush.msra.mxu0 %v3813
    %v3815 = vand.u32 %v109, 4294901760
    %v3816 = vsub.f32 %v109, %v3815
    %3817 = vmatpush.msra.mxu0 %v3816
    %v3818 = vand.u32 %v102, 4294901760
    %v3819 = vsub.f32 %v102, %v3818
    %3820 = vmatpush.msra.mxu0 %v3819
    %v3821 = vand.u32 %v95, 4294901760
    %v3822 = vsub.f32 %v95, %v3821
    %3823 = vmatpush.msra.mxu0 %v3822
    %v3824 = vand.u32 %v88, 4294901760
    %v3825 = vsub.f32 %v88, %v3824
    %3826 = vmatpush.msra.mxu0 %v3825
    %v3827 = vand.u32 %v81, 4294901760
    %v3828 = vsub.f32 %v81, %v3827
    %3829 = vmatpush.msra.mxu0 %v3828
    %v3830 = vand.u32 %v74, 4294901760
    %v3831 = vsub.f32 %v74, %v3830
    %3832 = vmatpush.msra.mxu0 %v3831
    %v3833 = vand.u32 %v67, 4294901760
    %v3834 = vsub.f32 %v67, %v3833
    %3835 = vmatpush.msra.mxu0 %v3834
    %v3836 = vand.u32 %v60, 4294901760
    %v3837 = vsub.f32 %v60, %v3836
    %3838 = vmatpush.msra.mxu0 %v3837
    %v3839 = vand.u32 %v53, 4294901760
    %v3840 = vsub.f32 %v53, %v3839
    %3841 = vmatpush.msra.mxu0 %v3840
    %v3842 = vand.u32 %v46, 4294901760
    %v3843 = vsub.f32 %v46, %v3842
    %3844 = vmatpush.msra.mxu0 %v3843
    %v3845 = vand.u32 %v39, 4294901760
    %v3846 = vsub.f32 %v39, %v3845
    %3847 = vmatpush.msra.mxu0 %v3846
    %v3848 = vand.u32 %v32, 4294901760
    %v3849 = vsub.f32 %v32, %v3848
    %3850 = vmatpush.msra.mxu0 %v3849
    %v3851 = vand.u32 %v25, 4294901760
    %v3852 = vsub.f32 %v25, %v3851
    %3853 = vmatmul.f32.gmra.mxu0 %v3852
    %v3854 = vpop.f32.mrf.mxu0
    %v3855 = vadd.f32 %v3801, %v3854
    %3856 = vdwg.mxu0
    %v3857 = vand.u32 %v137, 4294901760
    %3858 = vmatpush.msra.mxu0 %v3857
    %v3859 = vand.u32 %v130, 4294901760
    %3860 = vmatpush.msra.mxu0 %v3859
    %v3861 = vand.u32 %v123, 4294901760
    %3862 = vmatpush.msra.mxu0 %v3861
    %v3863 = vand.u32 %v116, 4294901760
    %3864 = vmatpush.msra.mxu0 %v3863
    %v3865 = vand.u32 %v109, 4294901760
    %3866 = vmatpush.msra.mxu0 %v3865
    %v3867 = vand.u32 %v102, 4294901760
    %3868 = vmatpush.msra.mxu0 %v3867
    %v3869 = vand.u32 %v95, 4294901760
    %3870 = vmatpush.msra.mxu0 %v3869
    %v3871 = vand.u32 %v88, 4294901760
    %3872 = vmatpush.msra.mxu0 %v3871
    %v3873 = vand.u32 %v81, 4294901760
    %3874 = vmatpush.msra.mxu0 %v3873
    %v3875 = vand.u32 %v74, 4294901760
    %3876 = vmatpush.msra.mxu0 %v3875
    %v3877 = vand.u32 %v67, 4294901760
    %3878 = vmatpush.msra.mxu0 %v3877
    %v3879 = vand.u32 %v60, 4294901760
    %3880 = vmatpush.msra.mxu0 %v3879
    %v3881 = vand.u32 %v53, 4294901760
    %3882 = vmatpush.msra.mxu0 %v3881
    %v3883 = vand.u32 %v46, 4294901760
    %3884 = vmatpush.msra.mxu0 %v3883
    %v3885 = vand.u32 %v39, 4294901760
    %3886 = vmatpush.msra.mxu0 %v3885
    %v3887 = vand.u32 %v32, 4294901760
    %3888 = vmatpush.msra.mxu0 %v3887
    %v3889 = vand.u32 %v25, 4294901760
    %v3890 = vsub.f32 %v25, %v3889
    %v3891 = vand.u32 %v3890, 4294901760
    %3892 = vmatmul.f32.gmra.mxu0 %v3891
    %v3893 = vpop.f32.mrf.mxu0
    %v3894 = vadd.f32 %v3855, %v3893
    %3895 = vdwg.mxu0
    %v3896 = vand.u32 %v137, 4294901760
    %v3897 = vsub.f32 %v137, %v3896
    %v3898 = vand.u32 %v3897, 4294901760
    %3899 = vmatpush.msra.mxu0 %v3898
    %v3900 = vand.u32 %v130, 4294901760
    %v3901 = vsub.f32 %v130, %v3900
    %v3902 = vand.u32 %v3901, 4294901760
    %3903 = vmatpush.msra.mxu0 %v3902
    %v3904 = vand.u32 %v123, 4294901760
    %v3905 = vsub.f32 %v123, %v3904
    %v3906 = vand.u32 %v3905, 4294901760
    %3907 = vmatpush.msra.mxu0 %v3906
    %v3908 = vand.u32 %v116, 4294901760
    %v3909 = vsub.f32 %v116, %v3908
    %v3910 = vand.u32 %v3909, 4294901760
    %3911 = vmatpush.msra.mxu0 %v3910
    %v3912 = vand.u32 %v109, 4294901760
    %v3913 = vsub.f32 %v109, %v3912
    %v3914 = vand.u32 %v3913, 4294901760
    %3915 = vmatpush.msra.mxu0 %v3914
    %v3916 = vand.u32 %v102, 4294901760
    %v3917 = vsub.f32 %v102, %v3916
    %v3918 = vand.u32 %v3917, 4294901760
    %3919 = vmatpush.msra.mxu0 %v3918
    %v3920 = vand.u32 %v95, 4294901760
    %v3921 = vsub.f32 %v95, %v3920
    %v3922 = vand.u32 %v3921, 4294901760
    %3923 = vmatpush.msra.mxu0 %v3922
    %v3924 = vand.u32 %v88, 4294901760
    %v3925 = vsub.f32 %v88, %v3924
    %v3926 = vand.u32 %v3925, 4294901760
    %3927 = vmatpush.msra.mxu0 %v3926
    %v3928 = vand.u32 %v81, 4294901760
    %v3929 = vsub.f32 %v81, %v3928
    %v3930 = vand.u32 %v3929, 4294901760
    %3931 = vmatpush.msra.mxu0 %v3930
    %v3932 = vand.u32 %v74, 4294901760
    %v3933 = vsub.f32 %v74, %v3932
    %v3934 = vand.u32 %v3933, 4294901760
    %3935 = vmatpush.msra.mxu0 %v3934
    %v3936 = vand.u32 %v67, 4294901760
    %v3937 = vsub.f32 %v67, %v3936
    %v3938 = vand.u32 %v3937, 4294901760
    %3939 = vmatpush.msra.mxu0 %v3938
    %v3940 = vand.u32 %v60, 4294901760
    %v3941 = vsub.f32 %v60, %v3940
    %v3942 = vand.u32 %v3941, 4294901760
    %3943 = vmatpush.msra.mxu0 %v3942
    %v3944 = vand.u32 %v53, 4294901760
    %v3945 = vsub.f32 %v53, %v3944
    %v3946 = vand.u32 %v3945, 4294901760
    %3947 = vmatpush.msra.mxu0 %v3946
    %v3948 = vand.u32 %v46, 4294901760
    %v3949 = vsub.f32 %v46, %v3948
    %v3950 = vand.u32 %v3949, 4294901760
    %3951 = vmatpush.msra.mxu0 %v3950
    %v3952 = vand.u32 %v39, 4294901760
    %v3953 = vsub.f32 %v39, %v3952
    %v3954 = vand.u32 %v3953, 4294901760
    %3955 = vmatpush.msra.mxu0 %v3954
    %v3956 = vand.u32 %v32, 4294901760
    %v3957 = vsub.f32 %v32, %v3956
    %v3958 = vand.u32 %v3957, 4294901760
    %3959 = vmatpush.msra.mxu0 %v3958
    %v3960 = vand.u32 %v25, 4294901760
    %3961 = vmatmul.f32.gmra.mxu0 %v3960
    %v3962 = vpop.f32.mrf.mxu0
    %v3963 = vadd.f32 %v3894, %v3962
    %3964 = vdwg.mxu0
    %v3965 = vand.u32 %v137, 4294901760
    %3966 = vmatpush.msra.mxu0 %v3965
    %v3967 = vand.u32 %v130, 4294901760
    %3968 = vmatpush.msra.mxu0 %v3967
    %v3969 = vand.u32 %v123, 4294901760
    %3970 = vmatpush.msra.mxu0 %v3969
    %v3971 = vand.u32 %v116, 4294901760
    %3972 = vmatpush.msra.mxu0 %v3971
    %v3973 = vand.u32 %v109, 4294901760
    %3974 = vmatpush.msra.mxu0 %v3973
    %v3975 = vand.u32 %v102, 4294901760
    %3976 = vmatpush.msra.mxu0 %v3975
    %v3977 = vand.u32 %v95, 4294901760
    %3978 = vmatpush.msra.mxu0 %v3977
    %v3979 = vand.u32 %v88, 4294901760
    %3980 = vmatpush.msra.mxu0 %v3979
    %v3981 = vand.u32 %v81, 4294901760
    %3982 = vmatpush.msra.mxu0 %v3981
    %v3983 = vand.u32 %v74, 4294901760
    %3984 = vmatpush.msra.mxu0 %v3983
    %v3985 = vand.u32 %v67, 4294901760
    %3986 = vmatpush.msra.mxu0 %v3985
    %v3987 = vand.u32 %v60, 4294901760
    %3988 = vmatpush.msra.mxu0 %v3987
    %v3989 = vand.u32 %v53, 4294901760
    %3990 = vmatpush.msra.mxu0 %v3989
    %v3991 = vand.u32 %v46, 4294901760
    %3992 = vmatpush.msra.mxu0 %v3991
    %v3993 = vand.u32 %v39, 4294901760
    %3994 = vmatpush.msra.mxu0 %v3993
    %v3995 = vand.u32 %v32, 4294901760
    %3996 = vmatpush.msra.mxu0 %v3995
    %v3997 = vand.u32 %v25, 4294901760
    %3998 = vmatmul.f32.gmra.mxu0 %v3997
    %v3999 = vpop.f32.mrf.mxu0
    %v4000 = vadd.f32 %v3963, %v3999
    %4001 = vdwg.mxu0
    %v4002 = vand.u32 %v249, 4294901760
    %4003 = vmatpush.msra.mxu0 %v4002
    %v4004 = vand.u32 %v242, 4294901760
    %4005 = vmatpush.msra.mxu0 %v4004
    %v4006 = vand.u32 %v235, 4294901760
    %4007 = vmatpush.msra.mxu0 %v4006
    %v4008 = vand.u32 %v228, 4294901760
    %4009 = vmatpush.msra.mxu0 %v4008
    %v4010 = vand.u32 %v221, 4294901760
    %4011 = vmatpush.msra.mxu0 %v4010
    %v4012 = vand.u32 %v214, 4294901760
    %4013 = vmatpush.msra.mxu0 %v4012
    %v4014 = vand.u32 %v207, 4294901760
    %4015 = vmatpush.msra.mxu0 %v4014
    %v4016 = vand.u32 %v200, 4294901760
    %4017 = vmatpush.msra.mxu0 %v4016
    %v4018 = vand.u32 %v193, 4294901760
    %4019 = vmatpush.msra.mxu0 %v4018
    %v4020 = vand.u32 %v186, 4294901760
    %4021 = vmatpush.msra.mxu0 %v4020
    %v4022 = vand.u32 %v179, 4294901760
    %4023 = vmatpush.msra.mxu0 %v4022
    %v4024 = vand.u32 %v172, 4294901760
    %4025 = vmatpush.msra.mxu0 %v4024
    %v4026 = vand.u32 %v165, 4294901760
    %4027 = vmatpush.msra.mxu0 %v4026
    %v4028 = vand.u32 %v158, 4294901760
    %4029 = vmatpush.msra.mxu0 %v4028
    %v4030 = vand.u32 %v151, 4294901760
    %4031 = vmatpush.msra.mxu0 %v4030
    %v4032 = vand.u32 %v144, 4294901760
    %4033 = vmatpush.msra.mxu0 %v4032
    %v4034 = vand.u32 %v26, 4294901760
    %v4035 = vsub.f32 %v26, %v4034
    %v4036 = vand.u32 %v4035, 4294901760
    %v4037 = vsub.f32 %v4035, %v4036
    %v4038 = vand.u32 %v4037, 4294901760
    %4039 = vmatmul.f32.gmra.mxu0 %v4038
    %v4040 = vpop.f32.mrf.mxu0
    %v4041 = vadd.f32 %v4000, %v4040
    %4042 = vdwg.mxu0
    %v4043 = vand.u32 %v249, 4294901760
    %v4044 = vsub.f32 %v249, %v4043
    %v4045 = vand.u32 %v4044, 4294901760
    %v4046 = vsub.f32 %v4044, %v4045
    %v4047 = vand.u32 %v4046, 4294901760
    %4048 = vmatpush.msra.mxu0 %v4047
    %v4049 = vand.u32 %v242, 4294901760
    %v4050 = vsub.f32 %v242, %v4049
    %v4051 = vand.u32 %v4050, 4294901760
    %v4052 = vsub.f32 %v4050, %v4051
    %v4053 = vand.u32 %v4052, 4294901760
    %4054 = vmatpush.msra.mxu0 %v4053
    %v4055 = vand.u32 %v235, 4294901760
    %v4056 = vsub.f32 %v235, %v4055
    %v4057 = vand.u32 %v4056, 4294901760
    %v4058 = vsub.f32 %v4056, %v4057
    %v4059 = vand.u32 %v4058, 4294901760
    %4060 = vmatpush.msra.mxu0 %v4059
    %v4061 = vand.u32 %v228, 4294901760
    %v4062 = vsub.f32 %v228, %v4061
    %v4063 = vand.u32 %v4062, 4294901760
    %v4064 = vsub.f32 %v4062, %v4063
    %v4065 = vand.u32 %v4064, 4294901760
    %4066 = vmatpush.msra.mxu0 %v4065
    %v4067 = vand.u32 %v221, 4294901760
    %v4068 = vsub.f32 %v221, %v4067
    %v4069 = vand.u32 %v4068, 4294901760
    %v4070 = vsub.f32 %v4068, %v4069
    %v4071 = vand.u32 %v4070, 4294901760
    %4072 = vmatpush.msra.mxu0 %v4071
    %v4073 = vand.u32 %v214, 4294901760
    %v4074 = vsub.f32 %v214, %v4073
    %v4075 = vand.u32 %v4074, 4294901760
    %v4076 = vsub.f32 %v4074, %v4075
    %v4077 = vand.u32 %v4076, 4294901760
    %4078 = vmatpush.msra.mxu0 %v4077
    %v4079 = vand.u32 %v207, 4294901760
    %v4080 = vsub.f32 %v207, %v4079
    %v4081 = vand.u32 %v4080, 4294901760
    %v4082 = vsub.f32 %v4080, %v4081
    %v4083 = vand.u32 %v4082, 4294901760
    %4084 = vmatpush.msra.mxu0 %v4083
    %v4085 = vand.u32 %v200, 4294901760
    %v4086 = vsub.f32 %v200, %v4085
    %v4087 = vand.u32 %v4086, 4294901760
    %v4088 = vsub.f32 %v4086, %v4087
    %v4089 = vand.u32 %v4088, 4294901760
    %4090 = vmatpush.msra.mxu0 %v4089
    %v4091 = vand.u32 %v193, 4294901760
    %v4092 = vsub.f32 %v193, %v4091
    %v4093 = vand.u32 %v4092, 4294901760
    %v4094 = vsub.f32 %v4092, %v4093
    %v4095 = vand.u32 %v4094, 4294901760
    %4096 = vmatpush.msra.mxu0 %v4095
    %v4097 = vand.u32 %v186, 4294901760
    %v4098 = vsub.f32 %v186, %v4097
    %v4099 = vand.u32 %v4098, 4294901760
    %v4100 = vsub.f32 %v4098, %v4099
    %v4101 = vand.u32 %v4100, 4294901760
    %4102 = vmatpush.msra.mxu0 %v4101
    %v4103 = vand.u32 %v179, 4294901760
    %v4104 = vsub.f32 %v179, %v4103
    %v4105 = vand.u32 %v4104, 4294901760
    %v4106 = vsub.f32 %v4104, %v4105
    %v4107 = vand.u32 %v4106, 4294901760
    %4108 = vmatpush.msra.mxu0 %v4107
    %v4109 = vand.u32 %v172, 4294901760
    %v4110 = vsub.f32 %v172, %v4109
    %v4111 = vand.u32 %v4110, 4294901760
    %v4112 = vsub.f32 %v4110, %v4111
    %v4113 = vand.u32 %v4112, 4294901760
    %4114 = vmatpush.msra.mxu0 %v4113
    %v4115 = vand.u32 %v165, 4294901760
    %v4116 = vsub.f32 %v165, %v4115
    %v4117 = vand.u32 %v4116, 4294901760
    %v4118 = vsub.f32 %v4116, %v4117
    %v4119 = vand.u32 %v4118, 4294901760
    %4120 = vmatpush.msra.mxu0 %v4119
    %v4121 = vand.u32 %v158, 4294901760
    %v4122 = vsub.f32 %v158, %v4121
    %v4123 = vand.u32 %v4122, 4294901760
    %v4124 = vsub.f32 %v4122, %v4123
    %v4125 = vand.u32 %v4124, 4294901760
    %4126 = vmatpush.msra.mxu0 %v4125
    %v4127 = vand.u32 %v151, 4294901760
    %v4128 = vsub.f32 %v151, %v4127
    %v4129 = vand.u32 %v4128, 4294901760
    %v4130 = vsub.f32 %v4128, %v4129
    %v4131 = vand.u32 %v4130, 4294901760
    %4132 = vmatpush.msra.mxu0 %v4131
    %v4133 = vand.u32 %v144, 4294901760
    %v4134 = vsub.f32 %v144, %v4133
    %v4135 = vand.u32 %v4134, 4294901760
    %v4136 = vsub.f32 %v4134, %v4135
    %v4137 = vand.u32 %v4136, 4294901760
    %4138 = vmatpush.msra.mxu0 %v4137
    %v4139 = vand.u32 %v26, 4294901760
    %4140 = vmatmul.f32.gmra.mxu0 %v4139
    %v4141 = vpop.f32.mrf.mxu0
    %v4142 = vadd.f32 %v4041, %v4141
    %4143 = vdwg.mxu0
    %v4144 = vand.u32 %v249, 4294901760
    %v4145 = vsub.f32 %v249, %v4144
    %4146 = vmatpush.msra.mxu0 %v4145
    %v4147 = vand.u32 %v242, 4294901760
    %v4148 = vsub.f32 %v242, %v4147
    %4149 = vmatpush.msra.mxu0 %v4148
    %v4150 = vand.u32 %v235, 4294901760
    %v4151 = vsub.f32 %v235, %v4150
    %4152 = vmatpush.msra.mxu0 %v4151
    %v4153 = vand.u32 %v228, 4294901760
    %v4154 = vsub.f32 %v228, %v4153
    %4155 = vmatpush.msra.mxu0 %v4154
    %v4156 = vand.u32 %v221, 4294901760
    %v4157 = vsub.f32 %v221, %v4156
    %4158 = vmatpush.msra.mxu0 %v4157
    %v4159 = vand.u32 %v214, 4294901760
    %v4160 = vsub.f32 %v214, %v4159
    %4161 = vmatpush.msra.mxu0 %v4160
    %v4162 = vand.u32 %v207, 4294901760
    %v4163 = vsub.f32 %v207, %v4162
    %4164 = vmatpush.msra.mxu0 %v4163
    %v4165 = vand.u32 %v200, 4294901760
    %v4166 = vsub.f32 %v200, %v4165
    %4167 = vmatpush.msra.mxu0 %v4166
    %v4168 = vand.u32 %v193, 4294901760
    %v4169 = vsub.f32 %v193, %v4168
    %4170 = vmatpush.msra.mxu0 %v4169
    %v4171 = vand.u32 %v186, 4294901760
    %v4172 = vsub.f32 %v186, %v4171
    %4173 = vmatpush.msra.mxu0 %v4172
    %v4174 = vand.u32 %v179, 4294901760
    %v4175 = vsub.f32 %v179, %v4174
    %4176 = vmatpush.msra.mxu0 %v4175
    %v4177 = vand.u32 %v172, 4294901760
    %v4178 = vsub.f32 %v172, %v4177
    %4179 = vmatpush.msra.mxu0 %v4178
    %v4180 = vand.u32 %v165, 4294901760
    %v4181 = vsub.f32 %v165, %v4180
    %4182 = vmatpush.msra.mxu0 %v4181
    %v4183 = vand.u32 %v158, 4294901760
    %v4184 = vsub.f32 %v158, %v4183
    %4185 = vmatpush.msra.mxu0 %v4184
    %v4186 = vand.u32 %v151, 4294901760
    %v4187 = vsub.f32 %v151, %v4186
    %4188 = vmatpush.msra.mxu0 %v4187
    %v4189 = vand.u32 %v144, 4294901760
    %v4190 = vsub.f32 %v144, %v4189
    %4191 = vmatpush.msra.mxu0 %v4190
    %v4192 = vand.u32 %v26, 4294901760
    %v4193 = vsub.f32 %v26, %v4192
    %4194 = vmatmul.f32.gmra.mxu0 %v4193
    %v4195 = vpop.f32.mrf.mxu0
    %v4196 = vadd.f32 %v4142, %v4195
    %4197 = vdwg.mxu0
    %v4198 = vand.u32 %v249, 4294901760
    %4199 = vmatpush.msra.mxu0 %v4198
    %v4200 = vand.u32 %v242, 4294901760
    %4201 = vmatpush.msra.mxu0 %v4200
    %v4202 = vand.u32 %v235, 4294901760
    %4203 = vmatpush.msra.mxu0 %v4202
    %v4204 = vand.u32 %v228, 4294901760
    %4205 = vmatpush.msra.mxu0 %v4204
    %v4206 = vand.u32 %v221, 4294901760
    %4207 = vmatpush.msra.mxu0 %v4206
    %v4208 = vand.u32 %v214, 4294901760
    %4209 = vmatpush.msra.mxu0 %v4208
    %v4210 = vand.u32 %v207, 4294901760
    %4211 = vmatpush.msra.mxu0 %v4210
    %v4212 = vand.u32 %v200, 4294901760
    %4213 = vmatpush.msra.mxu0 %v4212
    %v4214 = vand.u32 %v193, 4294901760
    %4215 = vmatpush.msra.mxu0 %v4214
    %v4216 = vand.u32 %v186, 4294901760
    %4217 = vmatpush.msra.mxu0 %v4216
    %v4218 = vand.u32 %v179, 4294901760
    %4219 = vmatpush.msra.mxu0 %v4218
    %v4220 = vand.u32 %v172, 4294901760
    %4221 = vmatpush.msra.mxu0 %v4220
    %v4222 = vand.u32 %v165, 4294901760
    %4223 = vmatpush.msra.mxu0 %v4222
    %v4224 = vand.u32 %v158, 4294901760
    %4225 = vmatpush.msra.mxu0 %v4224
    %v4226 = vand.u32 %v151, 4294901760
    %4227 = vmatpush.msra.mxu0 %v4226
    %v4228 = vand.u32 %v144, 4294901760
    %4229 = vmatpush.msra.mxu0 %v4228
    %v4230 = vand.u32 %v26, 4294901760
    %v4231 = vsub.f32 %v26, %v4230
    %v4232 = vand.u32 %v4231, 4294901760
    %4233 = vmatmul.f32.gmra.mxu0 %v4232
    %v4234 = vpop.f32.mrf.mxu0
    %v4235 = vadd.f32 %v4196, %v4234
    %4236 = vdwg.mxu0
    %v4237 = vand.u32 %v249, 4294901760
    %v4238 = vsub.f32 %v249, %v4237
    %v4239 = vand.u32 %v4238, 4294901760
    %4240 = vmatpush.msra.mxu0 %v4239
    %v4241 = vand.u32 %v242, 4294901760
    %v4242 = vsub.f32 %v242, %v4241
    %v4243 = vand.u32 %v4242, 4294901760
    %4244 = vmatpush.msra.mxu0 %v4243
    %v4245 = vand.u32 %v235, 4294901760
    %v4246 = vsub.f32 %v235, %v4245
    %v4247 = vand.u32 %v4246, 4294901760
    %4248 = vmatpush.msra.mxu0 %v4247
    %v4249 = vand.u32 %v228, 4294901760
    %v4250 = vsub.f32 %v228, %v4249
    %v4251 = vand.u32 %v4250, 4294901760
    %4252 = vmatpush.msra.mxu0 %v4251
    %v4253 = vand.u32 %v221, 4294901760
    %v4254 = vsub.f32 %v221, %v4253
    %v4255 = vand.u32 %v4254, 4294901760
    %4256 = vmatpush.msra.mxu0 %v4255
    %v4257 = vand.u32 %v214, 4294901760
    %v4258 = vsub.f32 %v214, %v4257
    %v4259 = vand.u32 %v4258, 4294901760
    %4260 = vmatpush.msra.mxu0 %v4259
    %v4261 = vand.u32 %v207, 4294901760
    %v4262 = vsub.f32 %v207, %v4261
    %v4263 = vand.u32 %v4262, 4294901760
    %4264 = vmatpush.msra.mxu0 %v4263
    %v4265 = vand.u32 %v200, 4294901760
    %v4266 = vsub.f32 %v200, %v4265
    %v4267 = vand.u32 %v4266, 4294901760
    %4268 = vmatpush.msra.mxu0 %v4267
    %v4269 = vand.u32 %v193, 4294901760
    %v4270 = vsub.f32 %v193, %v4269
    %v4271 = vand.u32 %v4270, 4294901760
    %4272 = vmatpush.msra.mxu0 %v4271
    %v4273 = vand.u32 %v186, 4294901760
    %v4274 = vsub.f32 %v186, %v4273
    %v4275 = vand.u32 %v4274, 4294901760
    %4276 = vmatpush.msra.mxu0 %v4275
    %v4277 = vand.u32 %v179, 4294901760
    %v4278 = vsub.f32 %v179, %v4277
    %v4279 = vand.u32 %v4278, 4294901760
    %4280 = vmatpush.msra.mxu0 %v4279
    %v4281 = vand.u32 %v172, 4294901760
    %v4282 = vsub.f32 %v172, %v4281
    %v4283 = vand.u32 %v4282, 4294901760
    %4284 = vmatpush.msra.mxu0 %v4283
    %v4285 = vand.u32 %v165, 4294901760
    %v4286 = vsub.f32 %v165, %v4285
    %v4287 = vand.u32 %v4286, 4294901760
    %4288 = vmatpush.msra.mxu0 %v4287
    %v4289 = vand.u32 %v158, 4294901760
    %v4290 = vsub.f32 %v158, %v4289
    %v4291 = vand.u32 %v4290, 4294901760
    %4292 = vmatpush.msra.mxu0 %v4291
    %v4293 = vand.u32 %v151, 4294901760
    %v4294 = vsub.f32 %v151, %v4293
    %v4295 = vand.u32 %v4294, 4294901760
    %4296 = vmatpush.msra.mxu0 %v4295
    %v4297 = vand.u32 %v144, 4294901760
    %v4298 = vsub.f32 %v144, %v4297
    %v4299 = vand.u32 %v4298, 4294901760
    %4300 = vmatpush.msra.mxu0 %v4299
    %v4301 = vand.u32 %v26, 4294901760
    %4302 = vmatmul.f32.gmra.mxu0 %v4301
    %v4303 = vpop.f32.mrf.mxu0
    %v4304 = vadd.f32 %v4235, %v4303
    %4305 = vdwg.mxu0
    %v4306 = vand.u32 %v249, 4294901760
    %4307 = vmatpush.msra.mxu0 %v4306
    %v4308 = vand.u32 %v242, 4294901760
    %4309 = vmatpush.msra.mxu0 %v4308
    %v4310 = vand.u32 %v235, 4294901760
    %4311 = vmatpush.msra.mxu0 %v4310
    %v4312 = vand.u32 %v228, 4294901760
    %4313 = vmatpush.msra.mxu0 %v4312
    %v4314 = vand.u32 %v221, 4294901760
    %4315 = vmatpush.msra.mxu0 %v4314
    %v4316 = vand.u32 %v214, 4294901760
    %4317 = vmatpush.msra.mxu0 %v4316
    %v4318 = vand.u32 %v207, 4294901760
    %4319 = vmatpush.msra.mxu0 %v4318
    %v4320 = vand.u32 %v200, 4294901760
    %4321 = vmatpush.msra.mxu0 %v4320
    %v4322 = vand.u32 %v193, 4294901760
    %4323 = vmatpush.msra.mxu0 %v4322
    %v4324 = vand.u32 %v186, 4294901760
    %4325 = vmatpush.msra.mxu0 %v4324
    %v4326 = vand.u32 %v179, 4294901760
    %4327 = vmatpush.msra.mxu0 %v4326
    %v4328 = vand.u32 %v172, 4294901760
    %4329 = vmatpush.msra.mxu0 %v4328
    %v4330 = vand.u32 %v165, 4294901760
    %4331 = vmatpush.msra.mxu0 %v4330
    %v4332 = vand.u32 %v158, 4294901760
    %4333 = vmatpush.msra.mxu0 %v4332
    %v4334 = vand.u32 %v151, 4294901760
    %4335 = vmatpush.msra.mxu0 %v4334
    %v4336 = vand.u32 %v144, 4294901760
    %4337 = vmatpush.msra.mxu0 %v4336
    %v4338 = vand.u32 %v26, 4294901760
    %4339 = vmatmul.f32.gmra.mxu0 %v4338
    %v4340 = vpop.f32.mrf.mxu0
    %v4341 = vadd.f32 %v4304, %v4340
    %4342 = vdwg.mxu0
    %v4343 = vand.u32 %v138, 4294901760
    %4344 = vmatpush.msra.mxu0 %v4343
    %v4345 = vand.u32 %v131, 4294901760
    %4346 = vmatpush.msra.mxu0 %v4345
    %v4347 = vand.u32 %v124, 4294901760
    %4348 = vmatpush.msra.mxu0 %v4347
    %v4349 = vand.u32 %v117, 4294901760
    %4350 = vmatpush.msra.mxu0 %v4349
    %v4351 = vand.u32 %v110, 4294901760
    %4352 = vmatpush.msra.mxu0 %v4351
    %v4353 = vand.u32 %v103, 4294901760
    %4354 = vmatpush.msra.mxu0 %v4353
    %v4355 = vand.u32 %v96, 4294901760
    %4356 = vmatpush.msra.mxu0 %v4355
    %v4357 = vand.u32 %v89, 4294901760
    %4358 = vmatpush.msra.mxu0 %v4357
    %v4359 = vand.u32 %v82, 4294901760
    %4360 = vmatpush.msra.mxu0 %v4359
    %v4361 = vand.u32 %v75, 4294901760
    %4362 = vmatpush.msra.mxu0 %v4361
    %v4363 = vand.u32 %v68, 4294901760
    %4364 = vmatpush.msra.mxu0 %v4363
    %v4365 = vand.u32 %v61, 4294901760
    %4366 = vmatpush.msra.mxu0 %v4365
    %v4367 = vand.u32 %v54, 4294901760
    %4368 = vmatpush.msra.mxu0 %v4367
    %v4369 = vand.u32 %v47, 4294901760
    %4370 = vmatpush.msra.mxu0 %v4369
    %v4371 = vand.u32 %v40, 4294901760
    %4372 = vmatpush.msra.mxu0 %v4371
    %v4373 = vand.u32 %v33, 4294901760
    %4374 = vmatpush.msra.mxu0 %v4373
    %v4375 = vand.u32 %v25, 4294901760
    %v4376 = vsub.f32 %v25, %v4375
    %v4377 = vand.u32 %v4376, 4294901760
    %v4378 = vsub.f32 %v4376, %v4377
    %v4379 = vand.u32 %v4378, 4294901760
    %4380 = vmatmul.f32.gmra.mxu0 %v4379
    %v4381 = vpop.f32.mrf.mxu0
    %v4382 = vadd.f32 0.0, %v4381
    %4383 = vdwg.mxu0
    %v4384 = vand.u32 %v138, 4294901760
    %v4385 = vsub.f32 %v138, %v4384
    %v4386 = vand.u32 %v4385, 4294901760
    %v4387 = vsub.f32 %v4385, %v4386
    %v4388 = vand.u32 %v4387, 4294901760
    %4389 = vmatpush.msra.mxu0 %v4388
    %v4390 = vand.u32 %v131, 4294901760
    %v4391 = vsub.f32 %v131, %v4390
    %v4392 = vand.u32 %v4391, 4294901760
    %v4393 = vsub.f32 %v4391, %v4392
    %v4394 = vand.u32 %v4393, 4294901760
    %4395 = vmatpush.msra.mxu0 %v4394
    %v4396 = vand.u32 %v124, 4294901760
    %v4397 = vsub.f32 %v124, %v4396
    %v4398 = vand.u32 %v4397, 4294901760
    %v4399 = vsub.f32 %v4397, %v4398
    %v4400 = vand.u32 %v4399, 4294901760
    %4401 = vmatpush.msra.mxu0 %v4400
    %v4402 = vand.u32 %v117, 4294901760
    %v4403 = vsub.f32 %v117, %v4402
    %v4404 = vand.u32 %v4403, 4294901760
    %v4405 = vsub.f32 %v4403, %v4404
    %v4406 = vand.u32 %v4405, 4294901760
    %4407 = vmatpush.msra.mxu0 %v4406
    %v4408 = vand.u32 %v110, 4294901760
    %v4409 = vsub.f32 %v110, %v4408
    %v4410 = vand.u32 %v4409, 4294901760
    %v4411 = vsub.f32 %v4409, %v4410
    %v4412 = vand.u32 %v4411, 4294901760
    %4413 = vmatpush.msra.mxu0 %v4412
    %v4414 = vand.u32 %v103, 4294901760
    %v4415 = vsub.f32 %v103, %v4414
    %v4416 = vand.u32 %v4415, 4294901760
    %v4417 = vsub.f32 %v4415, %v4416
    %v4418 = vand.u32 %v4417, 4294901760
    %4419 = vmatpush.msra.mxu0 %v4418
    %v4420 = vand.u32 %v96, 4294901760
    %v4421 = vsub.f32 %v96, %v4420
    %v4422 = vand.u32 %v4421, 4294901760
    %v4423 = vsub.f32 %v4421, %v4422
    %v4424 = vand.u32 %v4423, 4294901760
    %4425 = vmatpush.msra.mxu0 %v4424
    %v4426 = vand.u32 %v89, 4294901760
    %v4427 = vsub.f32 %v89, %v4426
    %v4428 = vand.u32 %v4427, 4294901760
    %v4429 = vsub.f32 %v4427, %v4428
    %v4430 = vand.u32 %v4429, 4294901760
    %4431 = vmatpush.msra.mxu0 %v4430
    %v4432 = vand.u32 %v82, 4294901760
    %v4433 = vsub.f32 %v82, %v4432
    %v4434 = vand.u32 %v4433, 4294901760
    %v4435 = vsub.f32 %v4433, %v4434
    %v4436 = vand.u32 %v4435, 4294901760
    %4437 = vmatpush.msra.mxu0 %v4436
    %v4438 = vand.u32 %v75, 4294901760
    %v4439 = vsub.f32 %v75, %v4438
    %v4440 = vand.u32 %v4439, 4294901760
    %v4441 = vsub.f32 %v4439, %v4440
    %v4442 = vand.u32 %v4441, 4294901760
    %4443 = vmatpush.msra.mxu0 %v4442
    %v4444 = vand.u32 %v68, 4294901760
    %v4445 = vsub.f32 %v68, %v4444
    %v4446 = vand.u32 %v4445, 4294901760
    %v4447 = vsub.f32 %v4445, %v4446
    %v4448 = vand.u32 %v4447, 4294901760
    %4449 = vmatpush.msra.mxu0 %v4448
    %v4450 = vand.u32 %v61, 4294901760
    %v4451 = vsub.f32 %v61, %v4450
    %v4452 = vand.u32 %v4451, 4294901760
    %v4453 = vsub.f32 %v4451, %v4452
    %v4454 = vand.u32 %v4453, 4294901760
    %4455 = vmatpush.msra.mxu0 %v4454
    %v4456 = vand.u32 %v54, 4294901760
    %v4457 = vsub.f32 %v54, %v4456
    %v4458 = vand.u32 %v4457, 4294901760
    %v4459 = vsub.f32 %v4457, %v4458
    %v4460 = vand.u32 %v4459, 4294901760
    %4461 = vmatpush.msra.mxu0 %v4460
    %v4462 = vand.u32 %v47, 4294901760
    %v4463 = vsub.f32 %v47, %v4462
    %v4464 = vand.u32 %v4463, 4294901760
    %v4465 = vsub.f32 %v4463, %v4464
    %v4466 = vand.u32 %v4465, 4294901760
    %4467 = vmatpush.msra.mxu0 %v4466
    %v4468 = vand.u32 %v40, 4294901760
    %v4469 = vsub.f32 %v40, %v4468
    %v4470 = vand.u32 %v4469, 4294901760
    %v4471 = vsub.f32 %v4469, %v4470
    %v4472 = vand.u32 %v4471, 4294901760
    %4473 = vmatpush.msra.mxu0 %v4472
    %v4474 = vand.u32 %v33, 4294901760
    %v4475 = vsub.f32 %v33, %v4474
    %v4476 = vand.u32 %v4475, 4294901760
    %v4477 = vsub.f32 %v4475, %v4476
    %v4478 = vand.u32 %v4477, 4294901760
    %4479 = vmatpush.msra.mxu0 %v4478
    %v4480 = vand.u32 %v25, 4294901760
    %4481 = vmatmul.f32.gmra.mxu0 %v4480
    %v4482 = vpop.f32.mrf.mxu0
    %v4483 = vadd.f32 %v4382, %v4482
    %4484 = vdwg.mxu0
    %v4485 = vand.u32 %v138, 4294901760
    %v4486 = vsub.f32 %v138, %v4485
    %4487 = vmatpush.msra.mxu0 %v4486
    %v4488 = vand.u32 %v131, 4294901760
    %v4489 = vsub.f32 %v131, %v4488
    %4490 = vmatpush.msra.mxu0 %v4489
    %v4491 = vand.u32 %v124, 4294901760
    %v4492 = vsub.f32 %v124, %v4491
    %4493 = vmatpush.msra.mxu0 %v4492
    %v4494 = vand.u32 %v117, 4294901760
    %v4495 = vsub.f32 %v117, %v4494
    %4496 = vmatpush.msra.mxu0 %v4495
    %v4497 = vand.u32 %v110, 4294901760
    %v4498 = vsub.f32 %v110, %v4497
    %4499 = vmatpush.msra.mxu0 %v4498
    %v4500 = vand.u32 %v103, 4294901760
    %v4501 = vsub.f32 %v103, %v4500
    %4502 = vmatpush.msra.mxu0 %v4501
    %v4503 = vand.u32 %v96, 4294901760
    %v4504 = vsub.f32 %v96, %v4503
    %4505 = vmatpush.msra.mxu0 %v4504
    %v4506 = vand.u32 %v89, 4294901760
    %v4507 = vsub.f32 %v89, %v4506
    %4508 = vmatpush.msra.mxu0 %v4507
    %v4509 = vand.u32 %v82, 4294901760
    %v4510 = vsub.f32 %v82, %v4509
    %4511 = vmatpush.msra.mxu0 %v4510
    %v4512 = vand.u32 %v75, 4294901760
    %v4513 = vsub.f32 %v75, %v4512
    %4514 = vmatpush.msra.mxu0 %v4513
    %v4515 = vand.u32 %v68, 4294901760
    %v4516 = vsub.f32 %v68, %v4515
    %4517 = vmatpush.msra.mxu0 %v4516
    %v4518 = vand.u32 %v61, 4294901760
    %v4519 = vsub.f32 %v61, %v4518
    %4520 = vmatpush.msra.mxu0 %v4519
    %v4521 = vand.u32 %v54, 4294901760
    %v4522 = vsub.f32 %v54, %v4521
    %4523 = vmatpush.msra.mxu0 %v4522
    %v4524 = vand.u32 %v47, 4294901760
    %v4525 = vsub.f32 %v47, %v4524
    %4526 = vmatpush.msra.mxu0 %v4525
    %v4527 = vand.u32 %v40, 4294901760
    %v4528 = vsub.f32 %v40, %v4527
    %4529 = vmatpush.msra.mxu0 %v4528
    %v4530 = vand.u32 %v33, 4294901760
    %v4531 = vsub.f32 %v33, %v4530
    %4532 = vmatpush.msra.mxu0 %v4531
    %v4533 = vand.u32 %v25, 4294901760
    %v4534 = vsub.f32 %v25, %v4533
    %4535 = vmatmul.f32.gmra.mxu0 %v4534
    %v4536 = vpop.f32.mrf.mxu0
    %v4537 = vadd.f32 %v4483, %v4536
    %4538 = vdwg.mxu0
    %v4539 = vand.u32 %v138, 4294901760
    %4540 = vmatpush.msra.mxu0 %v4539
    %v4541 = vand.u32 %v131, 4294901760
    %4542 = vmatpush.msra.mxu0 %v4541
    %v4543 = vand.u32 %v124, 4294901760
    %4544 = vmatpush.msra.mxu0 %v4543
    %v4545 = vand.u32 %v117, 4294901760
    %4546 = vmatpush.msra.mxu0 %v4545
    %v4547 = vand.u32 %v110, 4294901760
    %4548 = vmatpush.msra.mxu0 %v4547
    %v4549 = vand.u32 %v103, 4294901760
    %4550 = vmatpush.msra.mxu0 %v4549
    %v4551 = vand.u32 %v96, 4294901760
    %4552 = vmatpush.msra.mxu0 %v4551
    %v4553 = vand.u32 %v89, 4294901760
    %4554 = vmatpush.msra.mxu0 %v4553
    %v4555 = vand.u32 %v82, 4294901760
    %4556 = vmatpush.msra.mxu0 %v4555
    %v4557 = vand.u32 %v75, 4294901760
    %4558 = vmatpush.msra.mxu0 %v4557
    %v4559 = vand.u32 %v68, 4294901760
    %4560 = vmatpush.msra.mxu0 %v4559
    %v4561 = vand.u32 %v61, 4294901760
    %4562 = vmatpush.msra.mxu0 %v4561
    %v4563 = vand.u32 %v54, 4294901760
    %4564 = vmatpush.msra.mxu0 %v4563
    %v4565 = vand.u32 %v47, 4294901760
    %4566 = vmatpush.msra.mxu0 %v4565
    %v4567 = vand.u32 %v40, 4294901760
    %4568 = vmatpush.msra.mxu0 %v4567
    %v4569 = vand.u32 %v33, 4294901760
    %4570 = vmatpush.msra.mxu0 %v4569
    %v4571 = vand.u32 %v25, 4294901760
    %v4572 = vsub.f32 %v25, %v4571
    %v4573 = vand.u32 %v4572, 4294901760
    %4574 = vmatmul.f32.gmra.mxu0 %v4573
    %v4575 = vpop.f32.mrf.mxu0
    %v4576 = vadd.f32 %v4537, %v4575
    %4577 = vdwg.mxu0
    %v4578 = vand.u32 %v138, 4294901760
    %v4579 = vsub.f32 %v138, %v4578
    %v4580 = vand.u32 %v4579, 4294901760
    %4581 = vmatpush.msra.mxu0 %v4580
    %v4582 = vand.u32 %v131, 4294901760
    %v4583 = vsub.f32 %v131, %v4582
    %v4584 = vand.u32 %v4583, 4294901760
    %4585 = vmatpush.msra.mxu0 %v4584
    %v4586 = vand.u32 %v124, 4294901760
    %v4587 = vsub.f32 %v124, %v4586
    %v4588 = vand.u32 %v4587, 4294901760
    %4589 = vmatpush.msra.mxu0 %v4588
    %v4590 = vand.u32 %v117, 4294901760
    %v4591 = vsub.f32 %v117, %v4590
    %v4592 = vand.u32 %v4591, 4294901760
    %4593 = vmatpush.msra.mxu0 %v4592
    %v4594 = vand.u32 %v110, 4294901760
    %v4595 = vsub.f32 %v110, %v4594
    %v4596 = vand.u32 %v4595, 4294901760
    %4597 = vmatpush.msra.mxu0 %v4596
    %v4598 = vand.u32 %v103, 4294901760
    %v4599 = vsub.f32 %v103, %v4598
    %v4600 = vand.u32 %v4599, 4294901760
    %4601 = vmatpush.msra.mxu0 %v4600
    %v4602 = vand.u32 %v96, 4294901760
    %v4603 = vsub.f32 %v96, %v4602
    %v4604 = vand.u32 %v4603, 4294901760
    %4605 = vmatpush.msra.mxu0 %v4604
    %v4606 = vand.u32 %v89, 4294901760
    %v4607 = vsub.f32 %v89, %v4606
    %v4608 = vand.u32 %v4607, 4294901760
    %4609 = vmatpush.msra.mxu0 %v4608
    %v4610 = vand.u32 %v82, 4294901760
    %v4611 = vsub.f32 %v82, %v4610
    %v4612 = vand.u32 %v4611, 4294901760
    %4613 = vmatpush.msra.mxu0 %v4612
    %v4614 = vand.u32 %v75, 4294901760
    %v4615 = vsub.f32 %v75, %v4614
    %v4616 = vand.u32 %v4615, 4294901760
    %4617 = vmatpush.msra.mxu0 %v4616
    %v4618 = vand.u32 %v68, 4294901760
    %v4619 = vsub.f32 %v68, %v4618
    %v4620 = vand.u32 %v4619, 4294901760
    %4621 = vmatpush.msra.mxu0 %v4620
    %v4622 = vand.u32 %v61, 4294901760
    %v4623 = vsub.f32 %v61, %v4622
    %v4624 = vand.u32 %v4623, 4294901760
    %4625 = vmatpush.msra.mxu0 %v4624
    %v4626 = vand.u32 %v54, 4294901760
    %v4627 = vsub.f32 %v54, %v4626
    %v4628 = vand.u32 %v4627, 4294901760
    %4629 = vmatpush.msra.mxu0 %v4628
    %v4630 = vand.u32 %v47, 4294901760
    %v4631 = vsub.f32 %v47, %v4630
    %v4632 = vand.u32 %v4631, 4294901760
    %4633 = vmatpush.msra.mxu0 %v4632
    %v4634 = vand.u32 %v40, 4294901760
    %v4635 = vsub.f32 %v40, %v4634
    %v4636 = vand.u32 %v4635, 4294901760
    %4637 = vmatpush.msra.mxu0 %v4636
    %v4638 = vand.u32 %v33, 4294901760
    %v4639 = vsub.f32 %v33, %v4638
    %v4640 = vand.u32 %v4639, 4294901760
    %4641 = vmatpush.msra.mxu0 %v4640
    %v4642 = vand.u32 %v25, 4294901760
    %4643 = vmatmul.f32.gmra.mxu0 %v4642
    %v4644 = vpop.f32.mrf.mxu0
    %v4645 = vadd.f32 %v4576, %v4644
    %4646 = vdwg.mxu0
    %v4647 = vand.u32 %v138, 4294901760
    %4648 = vmatpush.msra.mxu0 %v4647
    %v4649 = vand.u32 %v131, 4294901760
    %4650 = vmatpush.msra.mxu0 %v4649
    %v4651 = vand.u32 %v124, 4294901760
    %4652 = vmatpush.msra.mxu0 %v4651
    %v4653 = vand.u32 %v117, 4294901760
    %4654 = vmatpush.msra.mxu0 %v4653
    %v4655 = vand.u32 %v110, 4294901760
    %4656 = vmatpush.msra.mxu0 %v4655
    %v4657 = vand.u32 %v103, 4294901760
    %4658 = vmatpush.msra.mxu0 %v4657
    %v4659 = vand.u32 %v96, 4294901760
    %4660 = vmatpush.msra.mxu0 %v4659
    %v4661 = vand.u32 %v89, 4294901760
    %4662 = vmatpush.msra.mxu0 %v4661
    %v4663 = vand.u32 %v82, 4294901760
    %4664 = vmatpush.msra.mxu0 %v4663
    %v4665 = vand.u32 %v75, 4294901760
    %4666 = vmatpush.msra.mxu0 %v4665
    %v4667 = vand.u32 %v68, 4294901760
    %4668 = vmatpush.msra.mxu0 %v4667
    %v4669 = vand.u32 %v61, 4294901760
    %4670 = vmatpush.msra.mxu0 %v4669
    %v4671 = vand.u32 %v54, 4294901760
    %4672 = vmatpush.msra.mxu0 %v4671
    %v4673 = vand.u32 %v47, 4294901760
    %4674 = vmatpush.msra.mxu0 %v4673
    %v4675 = vand.u32 %v40, 4294901760
    %4676 = vmatpush.msra.mxu0 %v4675
    %v4677 = vand.u32 %v33, 4294901760
    %4678 = vmatpush.msra.mxu0 %v4677
    %v4679 = vand.u32 %v25, 4294901760
    %4680 = vmatmul.f32.gmra.mxu0 %v4679
    %v4681 = vpop.f32.mrf.mxu0
    %v4682 = vadd.f32 %v4645, %v4681
    %4683 = vdwg.mxu0
    %v4684 = vand.u32 %v250, 4294901760
    %4685 = vmatpush.msra.mxu0 %v4684
    %v4686 = vand.u32 %v243, 4294901760
    %4687 = vmatpush.msra.mxu0 %v4686
    %v4688 = vand.u32 %v236, 4294901760
    %4689 = vmatpush.msra.mxu0 %v4688
    %v4690 = vand.u32 %v229, 4294901760
    %4691 = vmatpush.msra.mxu0 %v4690
    %v4692 = vand.u32 %v222, 4294901760
    %4693 = vmatpush.msra.mxu0 %v4692
    %v4694 = vand.u32 %v215, 4294901760
    %4695 = vmatpush.msra.mxu0 %v4694
    %v4696 = vand.u32 %v208, 4294901760
    %4697 = vmatpush.msra.mxu0 %v4696
    %v4698 = vand.u32 %v201, 4294901760
    %4699 = vmatpush.msra.mxu0 %v4698
    %v4700 = vand.u32 %v194, 4294901760
    %4701 = vmatpush.msra.mxu0 %v4700
    %v4702 = vand.u32 %v187, 4294901760
    %4703 = vmatpush.msra.mxu0 %v4702
    %v4704 = vand.u32 %v180, 4294901760
    %4705 = vmatpush.msra.mxu0 %v4704
    %v4706 = vand.u32 %v173, 4294901760
    %4707 = vmatpush.msra.mxu0 %v4706
    %v4708 = vand.u32 %v166, 4294901760
    %4709 = vmatpush.msra.mxu0 %v4708
    %v4710 = vand.u32 %v159, 4294901760
    %4711 = vmatpush.msra.mxu0 %v4710
    %v4712 = vand.u32 %v152, 4294901760
    %4713 = vmatpush.msra.mxu0 %v4712
    %v4714 = vand.u32 %v145, 4294901760
    %4715 = vmatpush.msra.mxu0 %v4714
    %v4716 = vand.u32 %v26, 4294901760
    %v4717 = vsub.f32 %v26, %v4716
    %v4718 = vand.u32 %v4717, 4294901760
    %v4719 = vsub.f32 %v4717, %v4718
    %v4720 = vand.u32 %v4719, 4294901760
    %4721 = vmatmul.f32.gmra.mxu0 %v4720
    %v4722 = vpop.f32.mrf.mxu0
    %v4723 = vadd.f32 %v4682, %v4722
    %4724 = vdwg.mxu0
    %v4725 = vand.u32 %v250, 4294901760
    %v4726 = vsub.f32 %v250, %v4725
    %v4727 = vand.u32 %v4726, 4294901760
    %v4728 = vsub.f32 %v4726, %v4727
    %v4729 = vand.u32 %v4728, 4294901760
    %4730 = vmatpush.msra.mxu0 %v4729
    %v4731 = vand.u32 %v243, 4294901760
    %v4732 = vsub.f32 %v243, %v4731
    %v4733 = vand.u32 %v4732, 4294901760
    %v4734 = vsub.f32 %v4732, %v4733
    %v4735 = vand.u32 %v4734, 4294901760
    %4736 = vmatpush.msra.mxu0 %v4735
    %v4737 = vand.u32 %v236, 4294901760
    %v4738 = vsub.f32 %v236, %v4737
    %v4739 = vand.u32 %v4738, 4294901760
    %v4740 = vsub.f32 %v4738, %v4739
    %v4741 = vand.u32 %v4740, 4294901760
    %4742 = vmatpush.msra.mxu0 %v4741
    %v4743 = vand.u32 %v229, 4294901760
    %v4744 = vsub.f32 %v229, %v4743
    %v4745 = vand.u32 %v4744, 4294901760
    %v4746 = vsub.f32 %v4744, %v4745
    %v4747 = vand.u32 %v4746, 4294901760
    %4748 = vmatpush.msra.mxu0 %v4747
    %v4749 = vand.u32 %v222, 4294901760
    %v4750 = vsub.f32 %v222, %v4749
    %v4751 = vand.u32 %v4750, 4294901760
    %v4752 = vsub.f32 %v4750, %v4751
    %v4753 = vand.u32 %v4752, 4294901760
    %4754 = vmatpush.msra.mxu0 %v4753
    %v4755 = vand.u32 %v215, 4294901760
    %v4756 = vsub.f32 %v215, %v4755
    %v4757 = vand.u32 %v4756, 4294901760
    %v4758 = vsub.f32 %v4756, %v4757
    %v4759 = vand.u32 %v4758, 4294901760
    %4760 = vmatpush.msra.mxu0 %v4759
    %v4761 = vand.u32 %v208, 4294901760
    %v4762 = vsub.f32 %v208, %v4761
    %v4763 = vand.u32 %v4762, 4294901760
    %v4764 = vsub.f32 %v4762, %v4763
    %v4765 = vand.u32 %v4764, 4294901760
    %4766 = vmatpush.msra.mxu0 %v4765
    %v4767 = vand.u32 %v201, 4294901760
    %v4768 = vsub.f32 %v201, %v4767
    %v4769 = vand.u32 %v4768, 4294901760
    %v4770 = vsub.f32 %v4768, %v4769
    %v4771 = vand.u32 %v4770, 4294901760
    %4772 = vmatpush.msra.mxu0 %v4771
    %v4773 = vand.u32 %v194, 4294901760
    %v4774 = vsub.f32 %v194, %v4773
    %v4775 = vand.u32 %v4774, 4294901760
    %v4776 = vsub.f32 %v4774, %v4775
    %v4777 = vand.u32 %v4776, 4294901760
    %4778 = vmatpush.msra.mxu0 %v4777
    %v4779 = vand.u32 %v187, 4294901760
    %v4780 = vsub.f32 %v187, %v4779
    %v4781 = vand.u32 %v4780, 4294901760
    %v4782 = vsub.f32 %v4780, %v4781
    %v4783 = vand.u32 %v4782, 4294901760
    %4784 = vmatpush.msra.mxu0 %v4783
    %v4785 = vand.u32 %v180, 4294901760
    %v4786 = vsub.f32 %v180, %v4785
    %v4787 = vand.u32 %v4786, 4294901760
    %v4788 = vsub.f32 %v4786, %v4787
    %v4789 = vand.u32 %v4788, 4294901760
    %4790 = vmatpush.msra.mxu0 %v4789
    %v4791 = vand.u32 %v173, 4294901760
    %v4792 = vsub.f32 %v173, %v4791
    %v4793 = vand.u32 %v4792, 4294901760
    %v4794 = vsub.f32 %v4792, %v4793
    %v4795 = vand.u32 %v4794, 4294901760
    %4796 = vmatpush.msra.mxu0 %v4795
    %v4797 = vand.u32 %v166, 4294901760
    %v4798 = vsub.f32 %v166, %v4797
    %v4799 = vand.u32 %v4798, 4294901760
    %v4800 = vsub.f32 %v4798, %v4799
    %v4801 = vand.u32 %v4800, 4294901760
    %4802 = vmatpush.msra.mxu0 %v4801
    %v4803 = vand.u32 %v159, 4294901760
    %v4804 = vsub.f32 %v159, %v4803
    %v4805 = vand.u32 %v4804, 4294901760
    %v4806 = vsub.f32 %v4804, %v4805
    %v4807 = vand.u32 %v4806, 4294901760
    %4808 = vmatpush.msra.mxu0 %v4807
    %v4809 = vand.u32 %v152, 4294901760
    %v4810 = vsub.f32 %v152, %v4809
    %v4811 = vand.u32 %v4810, 4294901760
    %v4812 = vsub.f32 %v4810, %v4811
    %v4813 = vand.u32 %v4812, 4294901760
    %4814 = vmatpush.msra.mxu0 %v4813
    %v4815 = vand.u32 %v145, 4294901760
    %v4816 = vsub.f32 %v145, %v4815
    %v4817 = vand.u32 %v4816, 4294901760
    %v4818 = vsub.f32 %v4816, %v4817
    %v4819 = vand.u32 %v4818, 4294901760
    %4820 = vmatpush.msra.mxu0 %v4819
    %v4821 = vand.u32 %v26, 4294901760
    %4822 = vmatmul.f32.gmra.mxu0 %v4821
    %v4823 = vpop.f32.mrf.mxu0
    %v4824 = vadd.f32 %v4723, %v4823
    %4825 = vdwg.mxu0
    %v4826 = vand.u32 %v250, 4294901760
    %v4827 = vsub.f32 %v250, %v4826
    %4828 = vmatpush.msra.mxu0 %v4827
    %v4829 = vand.u32 %v243, 4294901760
    %v4830 = vsub.f32 %v243, %v4829
    %4831 = vmatpush.msra.mxu0 %v4830
    %v4832 = vand.u32 %v236, 4294901760
    %v4833 = vsub.f32 %v236, %v4832
    %4834 = vmatpush.msra.mxu0 %v4833
    %v4835 = vand.u32 %v229, 4294901760
    %v4836 = vsub.f32 %v229, %v4835
    %4837 = vmatpush.msra.mxu0 %v4836
    %v4838 = vand.u32 %v222, 4294901760
    %v4839 = vsub.f32 %v222, %v4838
    %4840 = vmatpush.msra.mxu0 %v4839
    %v4841 = vand.u32 %v215, 4294901760
    %v4842 = vsub.f32 %v215, %v4841
    %4843 = vmatpush.msra.mxu0 %v4842
    %v4844 = vand.u32 %v208, 4294901760
    %v4845 = vsub.f32 %v208, %v4844
    %4846 = vmatpush.msra.mxu0 %v4845
    %v4847 = vand.u32 %v201, 4294901760
    %v4848 = vsub.f32 %v201, %v4847
    %4849 = vmatpush.msra.mxu0 %v4848
    %v4850 = vand.u32 %v194, 4294901760
    %v4851 = vsub.f32 %v194, %v4850
    %4852 = vmatpush.msra.mxu0 %v4851
    %v4853 = vand.u32 %v187, 4294901760
    %v4854 = vsub.f32 %v187, %v4853
    %4855 = vmatpush.msra.mxu0 %v4854
    %v4856 = vand.u32 %v180, 4294901760
    %v4857 = vsub.f32 %v180, %v4856
    %4858 = vmatpush.msra.mxu0 %v4857
    %v4859 = vand.u32 %v173, 4294901760
    %v4860 = vsub.f32 %v173, %v4859
    %4861 = vmatpush.msra.mxu0 %v4860
    %v4862 = vand.u32 %v166, 4294901760
    %v4863 = vsub.f32 %v166, %v4862
    %4864 = vmatpush.msra.mxu0 %v4863
    %v4865 = vand.u32 %v159, 4294901760
    %v4866 = vsub.f32 %v159, %v4865
    %4867 = vmatpush.msra.mxu0 %v4866
    %v4868 = vand.u32 %v152, 4294901760
    %v4869 = vsub.f32 %v152, %v4868
    %4870 = vmatpush.msra.mxu0 %v4869
    %v4871 = vand.u32 %v145, 4294901760
    %v4872 = vsub.f32 %v145, %v4871
    %4873 = vmatpush.msra.mxu0 %v4872
    %v4874 = vand.u32 %v26, 4294901760
    %v4875 = vsub.f32 %v26, %v4874
    %4876 = vmatmul.f32.gmra.mxu0 %v4875
    %v4877 = vpop.f32.mrf.mxu0
    %v4878 = vadd.f32 %v4824, %v4877
    %4879 = vdwg.mxu0
    %v4880 = vand.u32 %v250, 4294901760
    %4881 = vmatpush.msra.mxu0 %v4880
    %v4882 = vand.u32 %v243, 4294901760
    %4883 = vmatpush.msra.mxu0 %v4882
    %v4884 = vand.u32 %v236, 4294901760
    %4885 = vmatpush.msra.mxu0 %v4884
    %v4886 = vand.u32 %v229, 4294901760
    %4887 = vmatpush.msra.mxu0 %v4886
    %v4888 = vand.u32 %v222, 4294901760
    %4889 = vmatpush.msra.mxu0 %v4888
    %v4890 = vand.u32 %v215, 4294901760
    %4891 = vmatpush.msra.mxu0 %v4890
    %v4892 = vand.u32 %v208, 4294901760
    %4893 = vmatpush.msra.mxu0 %v4892
    %v4894 = vand.u32 %v201, 4294901760
    %4895 = vmatpush.msra.mxu0 %v4894
    %v4896 = vand.u32 %v194, 4294901760
    %4897 = vmatpush.msra.mxu0 %v4896
    %v4898 = vand.u32 %v187, 4294901760
    %4899 = vmatpush.msra.mxu0 %v4898
    %v4900 = vand.u32 %v180, 4294901760
    %4901 = vmatpush.msra.mxu0 %v4900
    %v4902 = vand.u32 %v173, 4294901760
    %4903 = vmatpush.msra.mxu0 %v4902
    %v4904 = vand.u32 %v166, 4294901760
    %4905 = vmatpush.msra.mxu0 %v4904
    %v4906 = vand.u32 %v159, 4294901760
    %4907 = vmatpush.msra.mxu0 %v4906
    %v4908 = vand.u32 %v152, 4294901760
    %4909 = vmatpush.msra.mxu0 %v4908
    %v4910 = vand.u32 %v145, 4294901760
    %4911 = vmatpush.msra.mxu0 %v4910
    %v4912 = vand.u32 %v26, 4294901760
    %v4913 = vsub.f32 %v26, %v4912
    %v4914 = vand.u32 %v4913, 4294901760
    %4915 = vmatmul.f32.gmra.mxu0 %v4914
    %v4916 = vpop.f32.mrf.mxu0
    %v4917 = vadd.f32 %v4878, %v4916
    %4918 = vdwg.mxu0
    %v4919 = vand.u32 %v250, 4294901760
    %v4920 = vsub.f32 %v250, %v4919
    %v4921 = vand.u32 %v4920, 4294901760
    %4922 = vmatpush.msra.mxu0 %v4921
    %v4923 = vand.u32 %v243, 4294901760
    %v4924 = vsub.f32 %v243, %v4923
    %v4925 = vand.u32 %v4924, 4294901760
    %4926 = vmatpush.msra.mxu0 %v4925
    %v4927 = vand.u32 %v236, 4294901760
    %v4928 = vsub.f32 %v236, %v4927
    %v4929 = vand.u32 %v4928, 4294901760
    %4930 = vmatpush.msra.mxu0 %v4929
    %v4931 = vand.u32 %v229, 4294901760
    %v4932 = vsub.f32 %v229, %v4931
    %v4933 = vand.u32 %v4932, 4294901760
    %4934 = vmatpush.msra.mxu0 %v4933
    %v4935 = vand.u32 %v222, 4294901760
    %v4936 = vsub.f32 %v222, %v4935
    %v4937 = vand.u32 %v4936, 4294901760
    %4938 = vmatpush.msra.mxu0 %v4937
    %v4939 = vand.u32 %v215, 4294901760
    %v4940 = vsub.f32 %v215, %v4939
    %v4941 = vand.u32 %v4940, 4294901760
    %4942 = vmatpush.msra.mxu0 %v4941
    %v4943 = vand.u32 %v208, 4294901760
    %v4944 = vsub.f32 %v208, %v4943
    %v4945 = vand.u32 %v4944, 4294901760
    %4946 = vmatpush.msra.mxu0 %v4945
    %v4947 = vand.u32 %v201, 4294901760
    %v4948 = vsub.f32 %v201, %v4947
    %v4949 = vand.u32 %v4948, 4294901760
    %4950 = vmatpush.msra.mxu0 %v4949
    %v4951 = vand.u32 %v194, 4294901760
    %v4952 = vsub.f32 %v194, %v4951
    %v4953 = vand.u32 %v4952, 4294901760
    %4954 = vmatpush.msra.mxu0 %v4953
    %v4955 = vand.u32 %v187, 4294901760
    %v4956 = vsub.f32 %v187, %v4955
    %v4957 = vand.u32 %v4956, 4294901760
    %4958 = vmatpush.msra.mxu0 %v4957
    %v4959 = vand.u32 %v180, 4294901760
    %v4960 = vsub.f32 %v180, %v4959
    %v4961 = vand.u32 %v4960, 4294901760
    %4962 = vmatpush.msra.mxu0 %v4961
    %v4963 = vand.u32 %v173, 4294901760
    %v4964 = vsub.f32 %v173, %v4963
    %v4965 = vand.u32 %v4964, 4294901760
    %4966 = vmatpush.msra.mxu0 %v4965
    %v4967 = vand.u32 %v166, 4294901760
    %v4968 = vsub.f32 %v166, %v4967
    %v4969 = vand.u32 %v4968, 4294901760
    %4970 = vmatpush.msra.mxu0 %v4969
    %v4971 = vand.u32 %v159, 4294901760
    %v4972 = vsub.f32 %v159, %v4971
    %v4973 = vand.u32 %v4972, 4294901760
    %4974 = vmatpush.msra.mxu0 %v4973
    %v4975 = vand.u32 %v152, 4294901760
    %v4976 = vsub.f32 %v152, %v4975
    %v4977 = vand.u32 %v4976, 4294901760
    %4978 = vmatpush.msra.mxu0 %v4977
    %v4979 = vand.u32 %v145, 4294901760
    %v4980 = vsub.f32 %v145, %v4979
    %v4981 = vand.u32 %v4980, 4294901760
    %4982 = vmatpush.msra.mxu0 %v4981
    %v4983 = vand.u32 %v26, 4294901760
    %4984 = vmatmul.f32.gmra.mxu0 %v4983
    %v4985 = vpop.f32.mrf.mxu0
    %v4986 = vadd.f32 %v4917, %v4985
    %4987 = vdwg.mxu0
    %v4988 = vand.u32 %v250, 4294901760
    %4989 = vmatpush.msra.mxu0 %v4988
    %v4990 = vand.u32 %v243, 4294901760
    %4991 = vmatpush.msra.mxu0 %v4990
    %v4992 = vand.u32 %v236, 4294901760
    %4993 = vmatpush.msra.mxu0 %v4992
    %v4994 = vand.u32 %v229, 4294901760
    %4995 = vmatpush.msra.mxu0 %v4994
    %v4996 = vand.u32 %v222, 4294901760
    %4997 = vmatpush.msra.mxu0 %v4996
    %v4998 = vand.u32 %v215, 4294901760
    %4999 = vmatpush.msra.mxu0 %v4998
    %v5000 = vand.u32 %v208, 4294901760
    %5001 = vmatpush.msra.mxu0 %v5000
    %v5002 = vand.u32 %v201, 4294901760
    %5003 = vmatpush.msra.mxu0 %v5002
    %v5004 = vand.u32 %v194, 4294901760
    %5005 = vmatpush.msra.mxu0 %v5004
    %v5006 = vand.u32 %v187, 4294901760
    %5007 = vmatpush.msra.mxu0 %v5006
    %v5008 = vand.u32 %v180, 4294901760
    %5009 = vmatpush.msra.mxu0 %v5008
    %v5010 = vand.u32 %v173, 4294901760
    %5011 = vmatpush.msra.mxu0 %v5010
    %v5012 = vand.u32 %v166, 4294901760
    %5013 = vmatpush.msra.mxu0 %v5012
    %v5014 = vand.u32 %v159, 4294901760
    %5015 = vmatpush.msra.mxu0 %v5014
    %v5016 = vand.u32 %v152, 4294901760
    %5017 = vmatpush.msra.mxu0 %v5016
    %v5018 = vand.u32 %v145, 4294901760
    %5019 = vmatpush.msra.mxu0 %v5018
    %v5020 = vand.u32 %v26, 4294901760
    %5021 = vmatmul.f32.gmra.mxu0 %v5020
    %v5022 = vpop.f32.mrf.mxu0
    %v5023 = vadd.f32 %v4986, %v5022
    %5024 = vdwg.mxu0
    %5026 = vrot.lane.b32.xlu0 %v931, 64
    %v5027 = vpop.permute.xlu0 %5026
    %v5029 = vmax.f32 %v931, %v5027
    %v5030 = vmax.f32 %v5029, %v1613
    %5032 = vrot.lane.b32.xlu0 %v1613, 64
    %v5033 = vpop.permute.xlu0 %5032
    %v5035 = vmax.f32 %v5030, %v5033
    %5037 = vrot.lane.b32.xlu0 %v2295, 103
    %v5038 = vpop.permute.xlu0 %5037
    %v5040 = vmax.f32 %v2295, %v5038
    %5041 = vrot.lane.b32.xlu0 %v2295, 78
    %v5042 = vpop.permute.xlu0 %5041
    %v5044 = vmax.f32 %v5040, %v5042
    %5045 = vrot.lane.b32.xlu0 %v2295, 53
    %v5046 = vpop.permute.xlu0 %5045
    %v5048 = vmax.f32 %v5044, %v5046
    %5049 = vrot.lane.b32.xlu0 %v2295, 28
    %v5050 = vpop.permute.xlu0 %5049
    %v5052 = vmax.f32 %v5048, %v5050
    %5054 = vrot.lane.b32.xlu0 %v2295, 3
    %v5055 = vpop.permute.xlu0 %5054
    %5056 = vrot.lane.b32.xlu0 %v2977, 3
    %v5057 = vpop.permute.xlu0 %5056
    %vm5058 = vcmask 23552
    %v5059 = vsel %vm5058, %v5055, %v5057
    %v5061 = vmax.f32 %v5052, %v5059
    %5062 = vrot.lane.b32.xlu0 %v2977, 106
    %v5063 = vpop.permute.xlu0 %5062
    %v5065 = vmax.f32 %v5061, %v5063
    %5066 = vrot.lane.b32.xlu0 %v2977, 81
    %v5067 = vpop.permute.xlu0 %5066
    %v5069 = vmax.f32 %v5065, %v5067
    %5070 = vrot.lane.b32.xlu0 %v2977, 56
    %v5071 = vpop.permute.xlu0 %5070
    %v5073 = vmax.f32 %v5069, %v5071
    %5074 = vrot.lane.b32.xlu0 %v2977, 119
    %v5075 = vpop.permute.xlu0 %5074
    %v5077 = vmax.f32 %v2977, %v5075
    %5078 = vrot.lane.b32.xlu0 %v2977, 110
    %v5079 = vpop.permute.xlu0 %5078
    %v5081 = vmax.f32 %v5077, %v5079
    %5083 = vrot.lane.b32.xlu0 %v2977, 101
    %v5084 = vpop.permute.xlu0 %5083
    %5085 = vrot.lane.b32.xlu0 %v3659, 101
    %v5086 = vpop.permute.xlu0 %5085
    %vm5087 = vcmask 826368
    %v5088 = vsel %vm5087, %v5084, %v5086
    %v5090 = vmax.f32 %v5081, %v5088
    %5091 = vrot.lane.b32.xlu0 %v3659, 92
    %v5092 = vpop.permute.xlu0 %5091
    %v5094 = vmax.f32 %v5090, %v5092
    %5095 = vrot.lane.b32.xlu0 %v3659, 83
    %v5096 = vpop.permute.xlu0 %5095
    %v5098 = vmax.f32 %v5094, %v5096
    %5099 = vrot.lane.b32.xlu0 %v3659, 74
    %v5100 = vpop.permute.xlu0 %5099
    %v5102 = vmax.f32 %v5098, %v5100
    %5103 = vrot.lane.b32.xlu0 %v3659, 65
    %v5104 = vpop.permute.xlu0 %5103
    %v5106 = vmax.f32 %v5102, %v5104
    %5107 = vrot.lane.b32.xlu0 %v3659, 56
    %v5108 = vpop.permute.xlu0 %5107
    %v5110 = vmax.f32 %v5106, %v5108
    %5111 = vrot.lane.b32.xlu0 %v3659, 47
    %v5112 = vpop.permute.xlu0 %5111
    %v5114 = vmax.f32 %v5110, %v5112
    %5115 = vrot.lane.b32.xlu0 %v3659, 38
    %v5116 = vpop.permute.xlu0 %5115
    %v5118 = vmax.f32 %v5114, %v5116
    %5119 = vrot.lane.b32.xlu0 %v3659, 29
    %v5120 = vpop.permute.xlu0 %5119
    %v5122 = vmax.f32 %v5118, %v5120
    %5123 = vrot.lane.b32.xlu0 %v3659, 20
    %v5124 = vpop.permute.xlu0 %5123
    %v5126 = vmax.f32 %v5122, %v5124
    %5127 = vrot.lane.b32.xlu0 %v3659, 11
    %v5128 = vpop.permute.xlu0 %5127
    %v5130 = vmax.f32 %v5126, %v5128
    %5131 = vrot.lane.b32.xlu0 %v3659, 2
    %v5132 = vpop.permute.xlu0 %5131
    %v5134 = vmax.f32 %v5130, %v5132
    %5135 = vrot.lane.b32.xlu0 %v3659, 121
    %v5136 = vpop.permute.xlu0 %5135
    %v5138 = vmax.f32 %v5134, %v5136
    %5139 = vrot.lane.b32.xlu0 %v3659, 112
    %v5140 = vpop.permute.xlu0 %5139
    %v5142 = vmax.f32 %v5138, %v5140
    %5144 = vrot.lane.b32.xlu0 %v3659, 103
    %v5145 = vpop.permute.xlu0 %5144
    %5146 = vrot.lane.b32.xlu0 %v4341, 103
    %v5147 = vpop.permute.xlu0 %5146
    %vm5148 = vcmask 842752
    %v5149 = vsel %vm5148, %v5145, %v5147
    %v5151 = vmax.f32 %v5142, %v5149
    %5152 = vrot.lane.b32.xlu0 %v4341, 94
    %v5153 = vpop.permute.xlu0 %5152
    %v5155 = vmax.f32 %v5151, %v5153
    %5156 = vrot.lane.b32.xlu0 %v4341, 85
    %v5157 = vpop.permute.xlu0 %5156
    %v5159 = vmax.f32 %v5155, %v5157
    %5160 = vrot.lane.b32.xlu0 %v4341, 76
    %v5161 = vpop.permute.xlu0 %5160
    %v5163 = vmax.f32 %v5159, %v5161
    %5164 = vrot.lane.b32.xlu0 %v4341, 67
    %v5165 = vpop.permute.xlu0 %5164
    %v5167 = vmax.f32 %v5163, %v5165
    %5168 = vrot.lane.b32.xlu0 %v4341, 58
    %v5169 = vpop.permute.xlu0 %5168
    %v5171 = vmax.f32 %v5167, %v5169
    %5172 = vrot.lane.b32.xlu0 %v4341, 49
    %v5173 = vpop.permute.xlu0 %5172
    %v5175 = vmax.f32 %v5171, %v5173
    %5176 = vrot.lane.b32.xlu0 %v4341, 40
    %v5177 = vpop.permute.xlu0 %5176
    %v5179 = vmax.f32 %v5175, %v5177
    %5180 = vrot.lane.b32.xlu0 %v4341, 124
    %v5181 = vpop.permute.xlu0 %5180
    %v5183 = vmax.f32 %v4341, %v5181
    %5184 = vrot.lane.b32.xlu0 %v4341, 120
    %v5185 = vpop.permute.xlu0 %5184
    %v5187 = vmax.f32 %v5183, %v5185
    %5188 = vrot.lane.b32.xlu0 %v4341, 116
    %v5189 = vpop.permute.xlu0 %5188
    %v5191 = vmax.f32 %v5187, %v5189
    %5192 = vrot.lane.b32.xlu0 %v4341, 112
    %v5193 = vpop.permute.xlu0 %5192
    %v5195 = vmax.f32 %v5191, %v5193
    %5196 = vrot.lane.b32.xlu0 %v4341, 108
    %v5197 = vpop.permute.xlu0 %5196
    %v5199 = vmax.f32 %v5195, %v5197
    %5200 = vrot.lane.b32.xlu0 %v4341, 104
    %v5201 = vpop.permute.xlu0 %5200
    %v5203 = vmax.f32 %v5199, %v5201
    %5204 = vrot.lane.b32.xlu0 %v4341, 100
    %v5205 = vpop.permute.xlu0 %5204
    %v5207 = vmax.f32 %v5203, %v5205
    %5208 = vrot.lane.b32.xlu0 %v4341, 96
    %v5209 = vpop.permute.xlu0 %5208
    %v5211 = vmax.f32 %v5207, %v5209
    %5212 = vrot.lane.b32.xlu0 %v4341, 92
    %v5213 = vpop.permute.xlu0 %5212
    %v5215 = vmax.f32 %v5211, %v5213
    %5216 = vrot.lane.b32.xlu0 %v4341, 88
    %v5217 = vpop.permute.xlu0 %5216
    %v5219 = vmax.f32 %v5215, %v5217
    %5220 = vrot.lane.b32.xlu0 %v4341, 84
    %v5221 = vpop.permute.xlu0 %5220
    %v5223 = vmax.f32 %v5219, %v5221
    %5224 = vrot.lane.b32.xlu0 %v4341, 80
    %v5225 = vpop.permute.xlu0 %5224
    %v5227 = vmax.f32 %v5223, %v5225
    %v5228 = vmax.f32 %v5227, %v5161
    %5229 = vrot.lane.b32.xlu0 %v4341, 72
    %v5230 = vpop.permute.xlu0 %5229
    %v5232 = vmax.f32 %v5228, %v5230
    %5234 = vrot.lane.b32.xlu0 %v4341, 68
    %v5235 = vpop.permute.xlu0 %5234
    %5236 = vrot.lane.b32.xlu0 %v5023, 68
    %v5237 = vpop.permute.xlu0 %5236
    %vm5238 = vcmask 556032
    %v5239 = vsel %vm5238, %v5235, %v5237
    %v5241 = vmax.f32 %v5232, %v5239
    %5242 = vrot.lane.b32.xlu0 %v5023, 64
    %v5243 = vpop.permute.xlu0 %5242
    %v5245 = vmax.f32 %v5241, %v5243
    %5246 = vrot.lane.b32.xlu0 %v5023, 60
    %v5247 = vpop.permute.xlu0 %5246
    %v5249 = vmax.f32 %v5245, %v5247
    %5250 = vrot.lane.b32.xlu0 %v5023, 56
    %v5251 = vpop.permute.xlu0 %5250
    %v5253 = vmax.f32 %v5249, %v5251
    %5254 = vrot.lane.b32.xlu0 %v5023, 52
    %v5255 = vpop.permute.xlu0 %5254
    %v5257 = vmax.f32 %v5253, %v5255
    %5258 = vrot.lane.b32.xlu0 %v5023, 48
    %v5259 = vpop.permute.xlu0 %5258
    %v5261 = vmax.f32 %v5257, %v5259
    %5262 = vrot.lane.b32.xlu0 %v5023, 44
    %v5263 = vpop.permute.xlu0 %5262
    %v5265 = vmax.f32 %v5261, %v5263
    %5266 = vrot.lane.b32.xlu0 %v5023, 40
    %v5267 = vpop.permute.xlu0 %5266
    %v5269 = vmax.f32 %v5265, %v5267
    %5270 = vrot.lane.b32.xlu0 %v5023, 36
    %v5271 = vpop.permute.xlu0 %5270
    %v5273 = vmax.f32 %v5269, %v5271
    %5274 = vrot.lane.b32.xlu0 %v5023, 32
    %v5275 = vpop.permute.xlu0 %5274
    %v5277 = vmax.f32 %v5273, %v5275
    %5278 = vrot.lane.b32.xlu0 %v5023, 28
    %v5279 = vpop.permute.xlu0 %5278
    %v5281 = vmax.f32 %v5277, %v5279
    %5282 = vrot.lane.b32.xlu0 %v5023, 24
    %v5283 = vpop.permute.xlu0 %5282
    %v5285 = vmax.f32 %v5281, %v5283
    %5286 = vrot.lane.b32.xlu0 %v5023, 20
    %v5287 = vpop.permute.xlu0 %5286
    %v5289 = vmax.f32 %v5285, %v5287
    %5290 = vrot.lane.b32.xlu0 %v5023, 16
    %v5291 = vpop.permute.xlu0 %5290
    %v5293 = vmax.f32 %v5289, %v5291
    %5294 = vrot.lane.b32.xlu0 %v5023, 12
    %v5295 = vpop.permute.xlu0 %5294
    %v5297 = vmax.f32 %v5293, %v5295
    %5298 = vrot.lane.b32.xlu0 %v5023, 8
    %v5299 = vpop.permute.xlu0 %5298
    %v5301 = vmax.f32 %v5297, %v5299
    %5302 = vrot.lane.b32.xlu0 %v5023, 4
    %v5303 = vpop.permute.xlu0 %5302
    %v5305 = vmax.f32 %v5301, %v5303
    %v5306 = vmax.f32 %v5305, %v5023
    %5307 = vrot.lane.b32.xlu0 %v5023, 124
    %v5308 = vpop.permute.xlu0 %5307
    %v5310 = vmax.f32 %v5306, %v5308
    %5311 = vrot.lane.b32.xlu0 %v5023, 120
    %v5312 = vpop.permute.xlu0 %5311
    %v5314 = vmax.f32 %v5310, %v5312
    %5315 = vrot.lane.b32.xlu0 %v5023, 116
    %v5316 = vpop.permute.xlu0 %5315
    %v5318 = vmax.f32 %v5314, %v5316
    %5320 = vrot.lane.b32.xlu0 %v5073, 64
    %v5321 = vpop.permute.xlu0 %5320
    %5324 = vrot.lane.b32.xlu0 %v5179, 120
    %v5325 = vpop.permute.xlu0 %5324
    %5328 = vrot.lane.b32.xlu0 %v5318, 32
    %v5329 = vpop.permute.xlu0 %5328
    %vm5331 = vcmask 523264
    %v5332 = vsel %vm5331, %v5035, %v5321
    %vm5333 = vcmask 728064
    %v5334 = vsel %vm5333, %v5332, %v5325
    %vm5335 = vcmask 801792
    %v5336 = vsel %vm5335, %v5334, %v5329
    %v5337 = vld [vmem:[%s4] sm:$0x3]
    %vm5338 = vcmask 64512
    %v5340 = vsel %vm5338, %v5337, 0
    %5342 = vmatpush.msra.mxu0 0.0
    %5343 = vmatpush.msra.mxu0 0.0
    %5344 = vmatpush.msra.mxu0 0.0
    %5345 = vmatpush.msra.mxu0 0.0
    %5346 = vmatpush.msra.mxu0 0.0
    %5347 = vmatpush.msra.mxu0 0.0
    %5348 = vmatpush.msra.mxu0 0.0
    %5349 = vmatpush.msra.mxu0 0.0
    %5350 = vmatpush.msra.mxu0 0.0
    %5351 = vmatpush.msra.mxu0 0.0
    %5352 = vmatpush.msra.mxu0 0.0
    %5353 = vmatpush.msra.mxu0 0.0
    %5354 = vmatpush.msra.mxu0 0.0
    %5355 = vmatpush.msra.mxu0 0.0
    %5356 = vmatpush.msra.mxu0 0.0
    %v5357 = vand.u32 %v5336, 4294901760
    %5358 = vmatpush.msra.mxu0 %v5357
    %v5359 = vand.u32 %v5340, 4294901760
    %v5360 = vsub.f32 %v5340, %v5359
    %v5361 = vand.u32 %v5360, 4294901760
    %v5362 = vsub.f32 %v5360, %v5361
    %v5363 = vand.u32 %v5362, 4294901760
    %5364 = vmatmul.f32.gmra.mxu0 %v5363
    %v5365 = vpop.f32.mrf.mxu0
    %v5366 = vadd.f32 0.0, %v5365
    %5367 = vdwg.mxu0
    %5368 = vmatpush.msra.mxu0 0.0
    %5369 = vmatpush.msra.mxu0 0.0
    %5370 = vmatpush.msra.mxu0 0.0
    %5371 = vmatpush.msra.mxu0 0.0
    %5372 = vmatpush.msra.mxu0 0.0
    %5373 = vmatpush.msra.mxu0 0.0
    %5374 = vmatpush.msra.mxu0 0.0
    %5375 = vmatpush.msra.mxu0 0.0
    %5376 = vmatpush.msra.mxu0 0.0
    %5377 = vmatpush.msra.mxu0 0.0
    %5378 = vmatpush.msra.mxu0 0.0
    %5379 = vmatpush.msra.mxu0 0.0
    %5380 = vmatpush.msra.mxu0 0.0
    %5381 = vmatpush.msra.mxu0 0.0
    %5382 = vmatpush.msra.mxu0 0.0
    %v5383 = vand.u32 %v5336, 4294901760
    %v5384 = vsub.f32 %v5336, %v5383
    %v5385 = vand.u32 %v5384, 4294901760
    %v5386 = vsub.f32 %v5384, %v5385
    %v5387 = vand.u32 %v5386, 4294901760
    %5388 = vmatpush.msra.mxu0 %v5387
    %v5389 = vand.u32 %v5340, 4294901760
    %5390 = vmatmul.f32.gmra.mxu0 %v5389
    %v5391 = vpop.f32.mrf.mxu0
    %v5392 = vadd.f32 %v5366, %v5391
    %5393 = vdwg.mxu0
    %5394 = vmatpush.msra.mxu0 0.0
    %5395 = vmatpush.msra.mxu0 0.0
    %5396 = vmatpush.msra.mxu0 0.0
    %5397 = vmatpush.msra.mxu0 0.0
    %5398 = vmatpush.msra.mxu0 0.0
    %5399 = vmatpush.msra.mxu0 0.0
    %5400 = vmatpush.msra.mxu0 0.0
    %5401 = vmatpush.msra.mxu0 0.0
    %5402 = vmatpush.msra.mxu0 0.0
    %5403 = vmatpush.msra.mxu0 0.0
    %5404 = vmatpush.msra.mxu0 0.0
    %5405 = vmatpush.msra.mxu0 0.0
    %5406 = vmatpush.msra.mxu0 0.0
    %5407 = vmatpush.msra.mxu0 0.0
    %5408 = vmatpush.msra.mxu0 0.0
    %v5409 = vand.u32 %v5336, 4294901760
    %v5410 = vsub.f32 %v5336, %v5409
    %5411 = vmatpush.msra.mxu0 %v5410
    %v5412 = vand.u32 %v5340, 4294901760
    %v5413 = vsub.f32 %v5340, %v5412
    %5414 = vmatmul.f32.gmra.mxu0 %v5413
    %v5415 = vpop.f32.mrf.mxu0
    %v5416 = vadd.f32 %v5392, %v5415
    %5417 = vdwg.mxu0
    %5418 = vmatpush.msra.mxu0 0.0
    %5419 = vmatpush.msra.mxu0 0.0
    %5420 = vmatpush.msra.mxu0 0.0
    %5421 = vmatpush.msra.mxu0 0.0
    %5422 = vmatpush.msra.mxu0 0.0
    %5423 = vmatpush.msra.mxu0 0.0
    %5424 = vmatpush.msra.mxu0 0.0
    %5425 = vmatpush.msra.mxu0 0.0
    %5426 = vmatpush.msra.mxu0 0.0
    %5427 = vmatpush.msra.mxu0 0.0
    %5428 = vmatpush.msra.mxu0 0.0
    %5429 = vmatpush.msra.mxu0 0.0
    %5430 = vmatpush.msra.mxu0 0.0
    %5431 = vmatpush.msra.mxu0 0.0
    %5432 = vmatpush.msra.mxu0 0.0
    %v5433 = vand.u32 %v5336, 4294901760
    %5434 = vmatpush.msra.mxu0 %v5433
    %v5435 = vand.u32 %v5340, 4294901760
    %v5436 = vsub.f32 %v5340, %v5435
    %v5437 = vand.u32 %v5436, 4294901760
    %5438 = vmatmul.f32.gmra.mxu0 %v5437
    %v5439 = vpop.f32.mrf.mxu0
    %v5440 = vadd.f32 %v5416, %v5439
    %5441 = vdwg.mxu0
    %5442 = vmatpush.msra.mxu0 0.0
    %5443 = vmatpush.msra.mxu0 0.0
    %5444 = vmatpush.msra.mxu0 0.0
    %5445 = vmatpush.msra.mxu0 0.0
    %5446 = vmatpush.msra.mxu0 0.0
    %5447 = vmatpush.msra.mxu0 0.0
    %5448 = vmatpush.msra.mxu0 0.0
    %5449 = vmatpush.msra.mxu0 0.0
    %5450 = vmatpush.msra.mxu0 0.0
    %5451 = vmatpush.msra.mxu0 0.0
    %5452 = vmatpush.msra.mxu0 0.0
    %5453 = vmatpush.msra.mxu0 0.0
    %5454 = vmatpush.msra.mxu0 0.0
    %5455 = vmatpush.msra.mxu0 0.0
    %5456 = vmatpush.msra.mxu0 0.0
    %v5457 = vand.u32 %v5336, 4294901760
    %v5458 = vsub.f32 %v5336, %v5457
    %v5459 = vand.u32 %v5458, 4294901760
    %5460 = vmatpush.msra.mxu0 %v5459
    %v5461 = vand.u32 %v5340, 4294901760
    %5462 = vmatmul.f32.gmra.mxu0 %v5461
    %v5463 = vpop.f32.mrf.mxu0
    %v5464 = vadd.f32 %v5440, %v5463
    %5465 = vdwg.mxu0
    %5466 = vmatpush.msra.mxu0 0.0
    %5467 = vmatpush.msra.mxu0 0.0
    %5468 = vmatpush.msra.mxu0 0.0
    %5469 = vmatpush.msra.mxu0 0.0
    %5470 = vmatpush.msra.mxu0 0.0
    %5471 = vmatpush.msra.mxu0 0.0
    %5472 = vmatpush.msra.mxu0 0.0
    %5473 = vmatpush.msra.mxu0 0.0
    %5474 = vmatpush.msra.mxu0 0.0
    %5475 = vmatpush.msra.mxu0 0.0
    %5476 = vmatpush.msra.mxu0 0.0
    %5477 = vmatpush.msra.mxu0 0.0
    %5478 = vmatpush.msra.mxu0 0.0
    %5479 = vmatpush.msra.mxu0 0.0
    %5480 = vmatpush.msra.mxu0 0.0
    %v5481 = vand.u32 %v5336, 4294901760
    %5482 = vmatpush.msra.mxu0 %v5481
    %v5483 = vand.u32 %v5340, 4294901760
    %5484 = vmatmul.f32.gmra.mxu0 %v5483
    %v5485 = vpop.f32.mrf.mxu0
    %v5486 = vadd.f32 %v5464, %v5485
    %5487 = vdwg.mxu0
    %s5488 = sld [smem:[#allocation2]]
    %v5489 = vld [vmem:[%s3] sm:$0xf]
    %v5490 = vld [vmem:[%s2] sm:$0xff]
    %v5491 = vld [vmem:[%s2 + $0x8] sm:$0xff]
    %v5492 = vld [vmem:[%s2 + $0x10] sm:$0xff]
    %v5493 = vld [vmem:[%s2 + $0x18] sm:$0xff]
    %v5494 = vld [vmem:[%s2 + $0x20] sm:$0xff]
    %v5495 = vld [vmem:[%s2 + $0x28] sm:$0xff]
    %v5496 = vld [vmem:[%s2 + $0x30] sm:$0xff]
    %v5497 = vld [vmem:[%s2 + $0x38] sm:$0xff]
    %v5498 = vld [vmem:[%s2 + $0x40] sm:$0xff]
    %v5499 = vld [vmem:[%s2 + $0x48] sm:$0xff]
    %v5500 = vld [vmem:[%s2 + $0x50] sm:$0xff]
    %v5501 = vld [vmem:[%s2 + $0x58] sm:$0xff]
    %v5502 = vld [vmem:[%s2 + $0x60] sm:$0xff]
    %v5503 = vld [vmem:[%s2 + $0x68] sm:$0xff]
    %v5504 = vld [vmem:[%s2 + $0x70] sm:$0xff]
    %v5505 = vld [vmem:[%s2 + $0x78] sm:$0xff]
    %v5506 = vld [vmem:[%s2 + $0x80] sm:$0xff]
    %v5507 = vld [vmem:[%s2 + $0x88] sm:$0xff]
    %v5508 = vld [vmem:[%s2 + $0x90] sm:$0xff]
    %v5509 = vld [vmem:[%s2 + $0x98] sm:$0xff]
    %v5510 = vld [vmem:[%s2 + $0xa0] sm:$0xff]
    %v5511 = vld [vmem:[%s2 + $0xa8] sm:$0xff]
    %v5512 = vld [vmem:[%s2 + $0xb0] sm:$0xff]
    %v5513 = vld [vmem:[%s2 + $0xb8] sm:$0xff]
    %v5514 = vld [vmem:[%s2 + $0xc0] sm:$0x3f]
    %v5515 = vld [vmem:[%s2 + $0xc8] sm:$0x3f]
    %v5516 = vperm.slane %v5486, 0
    %v5517 = vmul.f32 %v5516, %v5489
    %v5518 = vstv %s5488
    %vm5519 = vcmask 834560
    %v5521 = vsel %vm5519, %v5517, 0
    %vm5523 = vcmask 1045504
    %v5525 = vsel %vm5523, %v5514, 0
    %v5528 = vsel %vm5523, %v5515, 0
    %5530 = vmatpush.msra.mxu0 0.0
    %5531 = vmatpush.msra.mxu0 0.0
    %5532 = vmatpush.msra.mxu0 0.0
    %v5533 = vand.u32 %v5525, 4294901760
    %5534 = vmatpush.msra.mxu0 %v5533
    %v5535 = vand.u32 %v5512, 4294901760
    %5536 = vmatpush.msra.mxu0 %v5535
    %v5537 = vand.u32 %v5510, 4294901760
    %5538 = vmatpush.msra.mxu0 %v5537
    %v5539 = vand.u32 %v5508, 4294901760
    %5540 = vmatpush.msra.mxu0 %v5539
    %v5541 = vand.u32 %v5506, 4294901760
    %5542 = vmatpush.msra.mxu0 %v5541
    %v5543 = vand.u32 %v5504, 4294901760
    %5544 = vmatpush.msra.mxu0 %v5543
    %v5545 = vand.u32 %v5502, 4294901760
    %5546 = vmatpush.msra.mxu0 %v5545
    %v5547 = vand.u32 %v5500, 4294901760
    %5548 = vmatpush.msra.mxu0 %v5547
    %v5549 = vand.u32 %v5498, 4294901760
    %5550 = vmatpush.msra.mxu0 %v5549
    %v5551 = vand.u32 %v5496, 4294901760
    %5552 = vmatpush.msra.mxu0 %v5551
    %v5553 = vand.u32 %v5494, 4294901760
    %5554 = vmatpush.msra.mxu0 %v5553
    %v5555 = vand.u32 %v5492, 4294901760
    %5556 = vmatpush.msra.mxu0 %v5555
    %v5557 = vand.u32 %v5490, 4294901760
    %5558 = vmatpush.msra.mxu0 %v5557
    %v5559 = vand.u32 %v5521, 4294901760
    %v5560 = vsub.f32 %v5521, %v5559
    %v5561 = vand.u32 %v5560, 4294901760
    %v5562 = vsub.f32 %v5560, %v5561
    %v5563 = vand.u32 %v5562, 4294901760
    %5564 = vmatmul.f32.gmra.mxu0 %v5563
    %v5565 = vpop.f32.mrf.mxu0
    %v5566 = vadd.f32 %v5518, %v5565
    %5567 = vdwg.mxu0
    %5568 = vmatpush.msra.mxu0 0.0
    %5569 = vmatpush.msra.mxu0 0.0
    %5570 = vmatpush.msra.mxu0 0.0
    %v5571 = vand.u32 %v5525, 4294901760
    %v5572 = vsub.f32 %v5525, %v5571
    %v5573 = vand.u32 %v5572, 4294901760
    %v5574 = vsub.f32 %v5572, %v5573
    %v5575 = vand.u32 %v5574, 4294901760
    %5576 = vmatpush.msra.mxu0 %v5575
    %v5577 = vand.u32 %v5512, 4294901760
    %v5578 = vsub.f32 %v5512, %v5577
    %v5579 = vand.u32 %v5578, 4294901760
    %v5580 = vsub.f32 %v5578, %v5579
    %v5581 = vand.u32 %v5580, 4294901760
    %5582 = vmatpush.msra.mxu0 %v5581
    %v5583 = vand.u32 %v5510, 4294901760
    %v5584 = vsub.f32 %v5510, %v5583
    %v5585 = vand.u32 %v5584, 4294901760
    %v5586 = vsub.f32 %v5584, %v5585
    %v5587 = vand.u32 %v5586, 4294901760
    %5588 = vmatpush.msra.mxu0 %v5587
    %v5589 = vand.u32 %v5508, 4294901760
    %v5590 = vsub.f32 %v5508, %v5589
    %v5591 = vand.u32 %v5590, 4294901760
    %v5592 = vsub.f32 %v5590, %v5591
    %v5593 = vand.u32 %v5592, 4294901760
    %5594 = vmatpush.msra.mxu0 %v5593
    %v5595 = vand.u32 %v5506, 4294901760
    %v5596 = vsub.f32 %v5506, %v5595
    %v5597 = vand.u32 %v5596, 4294901760
    %v5598 = vsub.f32 %v5596, %v5597
    %v5599 = vand.u32 %v5598, 4294901760
    %5600 = vmatpush.msra.mxu0 %v5599
    %v5601 = vand.u32 %v5504, 4294901760
    %v5602 = vsub.f32 %v5504, %v5601
    %v5603 = vand.u32 %v5602, 4294901760
    %v5604 = vsub.f32 %v5602, %v5603
    %v5605 = vand.u32 %v5604, 4294901760
    %5606 = vmatpush.msra.mxu0 %v5605
    %v5607 = vand.u32 %v5502, 4294901760
    %v5608 = vsub.f32 %v5502, %v5607
    %v5609 = vand.u32 %v5608, 4294901760
    %v5610 = vsub.f32 %v5608, %v5609
    %v5611 = vand.u32 %v5610, 4294901760
    %5612 = vmatpush.msra.mxu0 %v5611
    %v5613 = vand.u32 %v5500, 4294901760
    %v5614 = vsub.f32 %v5500, %v5613
    %v5615 = vand.u32 %v5614, 4294901760
    %v5616 = vsub.f32 %v5614, %v5615
    %v5617 = vand.u32 %v5616, 4294901760
    %5618 = vmatpush.msra.mxu0 %v5617
    %v5619 = vand.u32 %v5498, 4294901760
    %v5620 = vsub.f32 %v5498, %v5619
    %v5621 = vand.u32 %v5620, 4294901760
    %v5622 = vsub.f32 %v5620, %v5621
    %v5623 = vand.u32 %v5622, 4294901760
    %5624 = vmatpush.msra.mxu0 %v5623
    %v5625 = vand.u32 %v5496, 4294901760
    %v5626 = vsub.f32 %v5496, %v5625
    %v5627 = vand.u32 %v5626, 4294901760
    %v5628 = vsub.f32 %v5626, %v5627
    %v5629 = vand.u32 %v5628, 4294901760
    %5630 = vmatpush.msra.mxu0 %v5629
    %v5631 = vand.u32 %v5494, 4294901760
    %v5632 = vsub.f32 %v5494, %v5631
    %v5633 = vand.u32 %v5632, 4294901760
    %v5634 = vsub.f32 %v5632, %v5633
    %v5635 = vand.u32 %v5634, 4294901760
    %5636 = vmatpush.msra.mxu0 %v5635
    %v5637 = vand.u32 %v5492, 4294901760
    %v5638 = vsub.f32 %v5492, %v5637
    %v5639 = vand.u32 %v5638, 4294901760
    %v5640 = vsub.f32 %v5638, %v5639
    %v5641 = vand.u32 %v5640, 4294901760
    %5642 = vmatpush.msra.mxu0 %v5641
    %v5643 = vand.u32 %v5490, 4294901760
    %v5644 = vsub.f32 %v5490, %v5643
    %v5645 = vand.u32 %v5644, 4294901760
    %v5646 = vsub.f32 %v5644, %v5645
    %v5647 = vand.u32 %v5646, 4294901760
    %5648 = vmatpush.msra.mxu0 %v5647
    %v5649 = vand.u32 %v5521, 4294901760
    %5650 = vmatmul.f32.gmra.mxu0 %v5649
    %v5651 = vpop.f32.mrf.mxu0
    %v5652 = vadd.f32 %v5566, %v5651
    %5653 = vdwg.mxu0
    %5654 = vmatpush.msra.mxu0 0.0
    %5655 = vmatpush.msra.mxu0 0.0
    %5656 = vmatpush.msra.mxu0 0.0
    %v5657 = vand.u32 %v5525, 4294901760
    %v5658 = vsub.f32 %v5525, %v5657
    %5659 = vmatpush.msra.mxu0 %v5658
    %v5660 = vand.u32 %v5512, 4294901760
    %v5661 = vsub.f32 %v5512, %v5660
    %5662 = vmatpush.msra.mxu0 %v5661
    %v5663 = vand.u32 %v5510, 4294901760
    %v5664 = vsub.f32 %v5510, %v5663
    %5665 = vmatpush.msra.mxu0 %v5664
    %v5666 = vand.u32 %v5508, 4294901760
    %v5667 = vsub.f32 %v5508, %v5666
    %5668 = vmatpush.msra.mxu0 %v5667
    %v5669 = vand.u32 %v5506, 4294901760
    %v5670 = vsub.f32 %v5506, %v5669
    %5671 = vmatpush.msra.mxu0 %v5670
    %v5672 = vand.u32 %v5504, 4294901760
    %v5673 = vsub.f32 %v5504, %v5672
    %5674 = vmatpush.msra.mxu0 %v5673
    %v5675 = vand.u32 %v5502, 4294901760
    %v5676 = vsub.f32 %v5502, %v5675
    %5677 = vmatpush.msra.mxu0 %v5676
    %v5678 = vand.u32 %v5500, 4294901760
    %v5679 = vsub.f32 %v5500, %v5678
    %5680 = vmatpush.msra.mxu0 %v5679
    %v5681 = vand.u32 %v5498, 4294901760
    %v5682 = vsub.f32 %v5498, %v5681
    %5683 = vmatpush.msra.mxu0 %v5682
    %v5684 = vand.u32 %v5496, 4294901760
    %v5685 = vsub.f32 %v5496, %v5684
    %5686 = vmatpush.msra.mxu0 %v5685
    %v5687 = vand.u32 %v5494, 4294901760
    %v5688 = vsub.f32 %v5494, %v5687
    %5689 = vmatpush.msra.mxu0 %v5688
    %v5690 = vand.u32 %v5492, 4294901760
    %v5691 = vsub.f32 %v5492, %v5690
    %5692 = vmatpush.msra.mxu0 %v5691
    %v5693 = vand.u32 %v5490, 4294901760
    %v5694 = vsub.f32 %v5490, %v5693
    %5695 = vmatpush.msra.mxu0 %v5694
    %v5696 = vand.u32 %v5521, 4294901760
    %v5697 = vsub.f32 %v5521, %v5696
    %5698 = vmatmul.f32.gmra.mxu0 %v5697
    %v5699 = vpop.f32.mrf.mxu0
    %v5700 = vadd.f32 %v5652, %v5699
    %5701 = vdwg.mxu0
    %5702 = vmatpush.msra.mxu0 0.0
    %5703 = vmatpush.msra.mxu0 0.0
    %5704 = vmatpush.msra.mxu0 0.0
    %v5705 = vand.u32 %v5525, 4294901760
    %5706 = vmatpush.msra.mxu0 %v5705
    %v5707 = vand.u32 %v5512, 4294901760
    %5708 = vmatpush.msra.mxu0 %v5707
    %v5709 = vand.u32 %v5510, 4294901760
    %5710 = vmatpush.msra.mxu0 %v5709
    %v5711 = vand.u32 %v5508, 4294901760
    %5712 = vmatpush.msra.mxu0 %v5711
    %v5713 = vand.u32 %v5506, 4294901760
    %5714 = vmatpush.msra.mxu0 %v5713
    %v5715 = vand.u32 %v5504, 4294901760
    %5716 = vmatpush.msra.mxu0 %v5715
    %v5717 = vand.u32 %v5502, 4294901760
    %5718 = vmatpush.msra.mxu0 %v5717
    %v5719 = vand.u32 %v5500, 4294901760
    %5720 = vmatpush.msra.mxu0 %v5719
    %v5721 = vand.u32 %v5498, 4294901760
    %5722 = vmatpush.msra.mxu0 %v5721
    %v5723 = vand.u32 %v5496, 4294901760
    %5724 = vmatpush.msra.mxu0 %v5723
    %v5725 = vand.u32 %v5494, 4294901760
    %5726 = vmatpush.msra.mxu0 %v5725
    %v5727 = vand.u32 %v5492, 4294901760
    %5728 = vmatpush.msra.mxu0 %v5727
    %v5729 = vand.u32 %v5490, 4294901760
    %5730 = vmatpush.msra.mxu0 %v5729
    %v5731 = vand.u32 %v5521, 4294901760
    %v5732 = vsub.f32 %v5521, %v5731
    %v5733 = vand.u32 %v5732, 4294901760
    %5734 = vmatmul.f32.gmra.mxu0 %v5733
    %v5735 = vpop.f32.mrf.mxu0
    %v5736 = vadd.f32 %v5700, %v5735
    %5737 = vdwg.mxu0
    %5738 = vmatpush.msra.mxu0 0.0
    %5739 = vmatpush.msra.mxu0 0.0
    %5740 = vmatpush.msra.mxu0 0.0
    %v5741 = vand.u32 %v5525, 4294901760
    %v5742 = vsub.f32 %v5525, %v5741
    %v5743 = vand.u32 %v5742, 4294901760
    %5744 = vmatpush.msra.mxu0 %v5743
    %v5745 = vand.u32 %v5512, 4294901760
    %v5746 = vsub.f32 %v5512, %v5745
    %v5747 = vand.u32 %v5746, 4294901760
    %5748 = vmatpush.msra.mxu0 %v5747
    %v5749 = vand.u32 %v5510, 4294901760
    %v5750 = vsub.f32 %v5510, %v5749
    %v5751 = vand.u32 %v5750, 4294901760
    %5752 = vmatpush.msra.mxu0 %v5751
    %v5753 = vand.u32 %v5508, 4294901760
    %v5754 = vsub.f32 %v5508, %v5753
    %v5755 = vand.u32 %v5754, 4294901760
    %5756 = vmatpush.msra.mxu0 %v5755
    %v5757 = vand.u32 %v5506, 4294901760
    %v5758 = vsub.f32 %v5506, %v5757
    %v5759 = vand.u32 %v5758, 4294901760
    %5760 = vmatpush.msra.mxu0 %v5759
    %v5761 = vand.u32 %v5504, 4294901760
    %v5762 = vsub.f32 %v5504, %v5761
    %v5763 = vand.u32 %v5762, 4294901760
    %5764 = vmatpush.msra.mxu0 %v5763
    %v5765 = vand.u32 %v5502, 4294901760
    %v5766 = vsub.f32 %v5502, %v5765
    %v5767 = vand.u32 %v5766, 4294901760
    %5768 = vmatpush.msra.mxu0 %v5767
    %v5769 = vand.u32 %v5500, 4294901760
    %v5770 = vsub.f32 %v5500, %v5769
    %v5771 = vand.u32 %v5770, 4294901760
    %5772 = vmatpush.msra.mxu0 %v5771
    %v5773 = vand.u32 %v5498, 4294901760
    %v5774 = vsub.f32 %v5498, %v5773
    %v5775 = vand.u32 %v5774, 4294901760
    %5776 = vmatpush.msra.mxu0 %v5775
    %v5777 = vand.u32 %v5496, 4294901760
    %v5778 = vsub.f32 %v5496, %v5777
    %v5779 = vand.u32 %v5778, 4294901760
    %5780 = vmatpush.msra.mxu0 %v5779
    %v5781 = vand.u32 %v5494, 4294901760
    %v5782 = vsub.f32 %v5494, %v5781
    %v5783 = vand.u32 %v5782, 4294901760
    %5784 = vmatpush.msra.mxu0 %v5783
    %v5785 = vand.u32 %v5492, 4294901760
    %v5786 = vsub.f32 %v5492, %v5785
    %v5787 = vand.u32 %v5786, 4294901760
    %5788 = vmatpush.msra.mxu0 %v5787
    %v5789 = vand.u32 %v5490, 4294901760
    %v5790 = vsub.f32 %v5490, %v5789
    %v5791 = vand.u32 %v5790, 4294901760
    %5792 = vmatpush.msra.mxu0 %v5791
    %v5793 = vand.u32 %v5521, 4294901760
    %5794 = vmatmul.f32.gmra.mxu0 %v5793
    %v5795 = vpop.f32.mrf.mxu0
    %v5796 = vadd.f32 %v5736, %v5795
    %5797 = vdwg.mxu0
    %5798 = vmatpush.msra.mxu0 0.0
    %5799 = vmatpush.msra.mxu0 0.0
    %5800 = vmatpush.msra.mxu0 0.0
    %v5801 = vand.u32 %v5525, 4294901760
    %5802 = vmatpush.msra.mxu0 %v5801
    %v5803 = vand.u32 %v5512, 4294901760
    %5804 = vmatpush.msra.mxu0 %v5803
    %v5805 = vand.u32 %v5510, 4294901760
    %5806 = vmatpush.msra.mxu0 %v5805
    %v5807 = vand.u32 %v5508, 4294901760
    %5808 = vmatpush.msra.mxu0 %v5807
    %v5809 = vand.u32 %v5506, 4294901760
    %5810 = vmatpush.msra.mxu0 %v5809
    %v5811 = vand.u32 %v5504, 4294901760
    %5812 = vmatpush.msra.mxu0 %v5811
    %v5813 = vand.u32 %v5502, 4294901760
    %5814 = vmatpush.msra.mxu0 %v5813
    %v5815 = vand.u32 %v5500, 4294901760
    %5816 = vmatpush.msra.mxu0 %v5815
    %v5817 = vand.u32 %v5498, 4294901760
    %5818 = vmatpush.msra.mxu0 %v5817
    %v5819 = vand.u32 %v5496, 4294901760
    %5820 = vmatpush.msra.mxu0 %v5819
    %v5821 = vand.u32 %v5494, 4294901760
    %5822 = vmatpush.msra.mxu0 %v5821
    %v5823 = vand.u32 %v5492, 4294901760
    %5824 = vmatpush.msra.mxu0 %v5823
    %v5825 = vand.u32 %v5490, 4294901760
    %5826 = vmatpush.msra.mxu0 %v5825
    %v5827 = vand.u32 %v5521, 4294901760
    %5828 = vmatmul.f32.gmra.mxu0 %v5827
    %v5829 = vpop.f32.mrf.mxu0
    %v5830 = vadd.f32 %v5796, %v5829
    %5831 = vdwg.mxu0
    %5832 = vmatpush.msra.mxu0 0.0
    %5833 = vmatpush.msra.mxu0 0.0
    %5834 = vmatpush.msra.mxu0 0.0
    %v5835 = vand.u32 %v5528, 4294901760
    %5836 = vmatpush.msra.mxu0 %v5835
    %v5837 = vand.u32 %v5513, 4294901760
    %5838 = vmatpush.msra.mxu0 %v5837
    %v5839 = vand.u32 %v5511, 4294901760
    %5840 = vmatpush.msra.mxu0 %v5839
    %v5841 = vand.u32 %v5509, 4294901760
    %5842 = vmatpush.msra.mxu0 %v5841
    %v5843 = vand.u32 %v5507, 4294901760
    %5844 = vmatpush.msra.mxu0 %v5843
    %v5845 = vand.u32 %v5505, 4294901760
    %5846 = vmatpush.msra.mxu0 %v5845
    %v5847 = vand.u32 %v5503, 4294901760
    %5848 = vmatpush.msra.mxu0 %v5847
    %v5849 = vand.u32 %v5501, 4294901760
    %5850 = vmatpush.msra.mxu0 %v5849
    %v5851 = vand.u32 %v5499, 4294901760
    %5852 = vmatpush.msra.mxu0 %v5851
    %v5853 = vand.u32 %v5497, 4294901760
    %5854 = vmatpush.msra.mxu0 %v5853
    %v5855 = vand.u32 %v5495, 4294901760
    %5856 = vmatpush.msra.mxu0 %v5855
    %v5857 = vand.u32 %v5493, 4294901760
    %5858 = vmatpush.msra.mxu0 %v5857
    %v5859 = vand.u32 %v5491, 4294901760
    %5860 = vmatpush.msra.mxu0 %v5859
    %v5861 = vand.u32 %v5521, 4294901760
    %v5862 = vsub.f32 %v5521, %v5861
    %v5863 = vand.u32 %v5862, 4294901760
    %v5864 = vsub.f32 %v5862, %v5863
    %v5865 = vand.u32 %v5864, 4294901760
    %5866 = vmatmul.f32.gmra.mxu0 %v5865
    %v5867 = vpop.f32.mrf.mxu0
    %v5868 = vadd.f32 %v5518, %v5867
    %5869 = vdwg.mxu0
    %5870 = vmatpush.msra.mxu0 0.0
    %5871 = vmatpush.msra.mxu0 0.0
    %5872 = vmatpush.msra.mxu0 0.0
    %v5873 = vand.u32 %v5528, 4294901760
    %v5874 = vsub.f32 %v5528, %v5873
    %v5875 = vand.u32 %v5874, 4294901760
    %v5876 = vsub.f32 %v5874, %v5875
    %v5877 = vand.u32 %v5876, 4294901760
    %5878 = vmatpush.msra.mxu0 %v5877
    %v5879 = vand.u32 %v5513, 4294901760
    %v5880 = vsub.f32 %v5513, %v5879
    %v5881 = vand.u32 %v5880, 4294901760
    %v5882 = vsub.f32 %v5880, %v5881
    %v5883 = vand.u32 %v5882, 4294901760
    %5884 = vmatpush.msra.mxu0 %v5883
    %v5885 = vand.u32 %v5511, 4294901760
    %v5886 = vsub.f32 %v5511, %v5885
    %v5887 = vand.u32 %v5886, 4294901760
    %v5888 = vsub.f32 %v5886, %v5887
    %v5889 = vand.u32 %v5888, 4294901760
    %5890 = vmatpush.msra.mxu0 %v5889
    %v5891 = vand.u32 %v5509, 4294901760
    %v5892 = vsub.f32 %v5509, %v5891
    %v5893 = vand.u32 %v5892, 4294901760
    %v5894 = vsub.f32 %v5892, %v5893
    %v5895 = vand.u32 %v5894, 4294901760
    %5896 = vmatpush.msra.mxu0 %v5895
    %v5897 = vand.u32 %v5507, 4294901760
    %v5898 = vsub.f32 %v5507, %v5897
    %v5899 = vand.u32 %v5898, 4294901760
    %v5900 = vsub.f32 %v5898, %v5899
    %v5901 = vand.u32 %v5900, 4294901760
    %5902 = vmatpush.msra.mxu0 %v5901
    %v5903 = vand.u32 %v5505, 4294901760
    %v5904 = vsub.f32 %v5505, %v5903
    %v5905 = vand.u32 %v5904, 4294901760
    %v5906 = vsub.f32 %v5904, %v5905
    %v5907 = vand.u32 %v5906, 4294901760
    %5908 = vmatpush.msra.mxu0 %v5907
    %v5909 = vand.u32 %v5503, 4294901760
    %v5910 = vsub.f32 %v5503, %v5909
    %v5911 = vand.u32 %v5910, 4294901760
    %v5912 = vsub.f32 %v5910, %v5911
    %v5913 = vand.u32 %v5912, 4294901760
    %5914 = vmatpush.msra.mxu0 %v5913
    %v5915 = vand.u32 %v5501, 4294901760
    %v5916 = vsub.f32 %v5501, %v5915
    %v5917 = vand.u32 %v5916, 4294901760
    %v5918 = vsub.f32 %v5916, %v5917
    %v5919 = vand.u32 %v5918, 4294901760
    %5920 = vmatpush.msra.mxu0 %v5919
    %v5921 = vand.u32 %v5499, 4294901760
    %v5922 = vsub.f32 %v5499, %v5921
    %v5923 = vand.u32 %v5922, 4294901760
    %v5924 = vsub.f32 %v5922, %v5923
    %v5925 = vand.u32 %v5924, 4294901760
    %5926 = vmatpush.msra.mxu0 %v5925
    %v5927 = vand.u32 %v5497, 4294901760
    %v5928 = vsub.f32 %v5497, %v5927
    %v5929 = vand.u32 %v5928, 4294901760
    %v5930 = vsub.f32 %v5928, %v5929
    %v5931 = vand.u32 %v5930, 4294901760
    %5932 = vmatpush.msra.mxu0 %v5931
    %v5933 = vand.u32 %v5495, 4294901760
    %v5934 = vsub.f32 %v5495, %v5933
    %v5935 = vand.u32 %v5934, 4294901760
    %v5936 = vsub.f32 %v5934, %v5935
    %v5937 = vand.u32 %v5936, 4294901760
    %5938 = vmatpush.msra.mxu0 %v5937
    %v5939 = vand.u32 %v5493, 4294901760
    %v5940 = vsub.f32 %v5493, %v5939
    %v5941 = vand.u32 %v5940, 4294901760
    %v5942 = vsub.f32 %v5940, %v5941
    %v5943 = vand.u32 %v5942, 4294901760
    %5944 = vmatpush.msra.mxu0 %v5943
    %v5945 = vand.u32 %v5491, 4294901760
    %v5946 = vsub.f32 %v5491, %v5945
    %v5947 = vand.u32 %v5946, 4294901760
    %v5948 = vsub.f32 %v5946, %v5947
    %v5949 = vand.u32 %v5948, 4294901760
    %5950 = vmatpush.msra.mxu0 %v5949
    %v5951 = vand.u32 %v5521, 4294901760
    %5952 = vmatmul.f32.gmra.mxu0 %v5951
    %v5953 = vpop.f32.mrf.mxu0
    %v5954 = vadd.f32 %v5868, %v5953
    %5955 = vdwg.mxu0
    %5956 = vmatpush.msra.mxu0 0.0
    %5957 = vmatpush.msra.mxu0 0.0
    %5958 = vmatpush.msra.mxu0 0.0
    %v5959 = vand.u32 %v5528, 4294901760
    %v5960 = vsub.f32 %v5528, %v5959
    %5961 = vmatpush.msra.mxu0 %v5960
    %v5962 = vand.u32 %v5513, 4294901760
    %v5963 = vsub.f32 %v5513, %v5962
    %5964 = vmatpush.msra.mxu0 %v5963
    %v5965 = vand.u32 %v5511, 4294901760
    %v5966 = vsub.f32 %v5511, %v5965
    %5967 = vmatpush.msra.mxu0 %v5966
    %v5968 = vand.u32 %v5509, 4294901760
    %v5969 = vsub.f32 %v5509, %v5968
    %5970 = vmatpush.msra.mxu0 %v5969
    %v5971 = vand.u32 %v5507, 4294901760
    %v5972 = vsub.f32 %v5507, %v5971
    %5973 = vmatpush.msra.mxu0 %v5972
    %v5974 = vand.u32 %v5505, 4294901760
    %v5975 = vsub.f32 %v5505, %v5974
    %5976 = vmatpush.msra.mxu0 %v5975
    %v5977 = vand.u32 %v5503, 4294901760
    %v5978 = vsub.f32 %v5503, %v5977
    %5979 = vmatpush.msra.mxu0 %v5978
    %v5980 = vand.u32 %v5501, 4294901760
    %v5981 = vsub.f32 %v5501, %v5980
    %5982 = vmatpush.msra.mxu0 %v5981
    %v5983 = vand.u32 %v5499, 4294901760
    %v5984 = vsub.f32 %v5499, %v5983
    %5985 = vmatpush.msra.mxu0 %v5984
    %v5986 = vand.u32 %v5497, 4294901760
    %v5987 = vsub.f32 %v5497, %v5986
    %5988 = vmatpush.msra.mxu0 %v5987
    %v5989 = vand.u32 %v5495, 4294901760
    %v5990 = vsub.f32 %v5495, %v5989
    %5991 = vmatpush.msra.mxu0 %v5990
    %v5992 = vand.u32 %v5493, 4294901760
    %v5993 = vsub.f32 %v5493, %v5992
    %5994 = vmatpush.msra.mxu0 %v5993
    %v5995 = vand.u32 %v5491, 4294901760
    %v5996 = vsub.f32 %v5491, %v5995
    %5997 = vmatpush.msra.mxu0 %v5996
    %v5998 = vand.u32 %v5521, 4294901760
    %v5999 = vsub.f32 %v5521, %v5998
    %6000 = vmatmul.f32.gmra.mxu0 %v5999
    %v6001 = vpop.f32.mrf.mxu0
    %v6002 = vadd.f32 %v5954, %v6001
    %6003 = vdwg.mxu0
    %6004 = vmatpush.msra.mxu0 0.0
    %6005 = vmatpush.msra.mxu0 0.0
    %6006 = vmatpush.msra.mxu0 0.0
    %v6007 = vand.u32 %v5528, 4294901760
    %6008 = vmatpush.msra.mxu0 %v6007
    %v6009 = vand.u32 %v5513, 4294901760
    %6010 = vmatpush.msra.mxu0 %v6009
    %v6011 = vand.u32 %v5511, 4294901760
    %6012 = vmatpush.msra.mxu0 %v6011
    %v6013 = vand.u32 %v5509, 4294901760
    %6014 = vmatpush.msra.mxu0 %v6013
    %v6015 = vand.u32 %v5507, 4294901760
    %6016 = vmatpush.msra.mxu0 %v6015
    %v6017 = vand.u32 %v5505, 4294901760
    %6018 = vmatpush.msra.mxu0 %v6017
    %v6019 = vand.u32 %v5503, 4294901760
    %6020 = vmatpush.msra.mxu0 %v6019
    %v6021 = vand.u32 %v5501, 4294901760
    %6022 = vmatpush.msra.mxu0 %v6021
    %v6023 = vand.u32 %v5499, 4294901760
    %6024 = vmatpush.msra.mxu0 %v6023
    %v6025 = vand.u32 %v5497, 4294901760
    %6026 = vmatpush.msra.mxu0 %v6025
    %v6027 = vand.u32 %v5495, 4294901760
    %6028 = vmatpush.msra.mxu0 %v6027
    %v6029 = vand.u32 %v5493, 4294901760
    %6030 = vmatpush.msra.mxu0 %v6029
    %v6031 = vand.u32 %v5491, 4294901760
    %6032 = vmatpush.msra.mxu0 %v6031
    %v6033 = vand.u32 %v5521, 4294901760
    %v6034 = vsub.f32 %v5521, %v6033
    %v6035 = vand.u32 %v6034, 4294901760
    %6036 = vmatmul.f32.gmra.mxu0 %v6035
    %v6037 = vpop.f32.mrf.mxu0
    %v6038 = vadd.f32 %v6002, %v6037
    %6039 = vdwg.mxu0
    %6040 = vmatpush.msra.mxu0 0.0
    %6041 = vmatpush.msra.mxu0 0.0
    %6042 = vmatpush.msra.mxu0 0.0
    %v6043 = vand.u32 %v5528, 4294901760
    %v6044 = vsub.f32 %v5528, %v6043
    %v6045 = vand.u32 %v6044, 4294901760
    %6046 = vmatpush.msra.mxu0 %v6045
    %v6047 = vand.u32 %v5513, 4294901760
    %v6048 = vsub.f32 %v5513, %v6047
    %v6049 = vand.u32 %v6048, 4294901760
    %6050 = vmatpush.msra.mxu0 %v6049
    %v6051 = vand.u32 %v5511, 4294901760
    %v6052 = vsub.f32 %v5511, %v6051
    %v6053 = vand.u32 %v6052, 4294901760
    %6054 = vmatpush.msra.mxu0 %v6053
    %v6055 = vand.u32 %v5509, 4294901760
    %v6056 = vsub.f32 %v5509, %v6055
    %v6057 = vand.u32 %v6056, 4294901760
    %6058 = vmatpush.msra.mxu0 %v6057
    %v6059 = vand.u32 %v5507, 4294901760
    %v6060 = vsub.f32 %v5507, %v6059
    %v6061 = vand.u32 %v6060, 4294901760
    %6062 = vmatpush.msra.mxu0 %v6061
    %v6063 = vand.u32 %v5505, 4294901760
    %v6064 = vsub.f32 %v5505, %v6063
    %v6065 = vand.u32 %v6064, 4294901760
    %6066 = vmatpush.msra.mxu0 %v6065
    %v6067 = vand.u32 %v5503, 4294901760
    %v6068 = vsub.f32 %v5503, %v6067
    %v6069 = vand.u32 %v6068, 4294901760
    %6070 = vmatpush.msra.mxu0 %v6069
    %v6071 = vand.u32 %v5501, 4294901760
    %v6072 = vsub.f32 %v5501, %v6071
    %v6073 = vand.u32 %v6072, 4294901760
    %6074 = vmatpush.msra.mxu0 %v6073
    %v6075 = vand.u32 %v5499, 4294901760
    %v6076 = vsub.f32 %v5499, %v6075
    %v6077 = vand.u32 %v6076, 4294901760
    %6078 = vmatpush.msra.mxu0 %v6077
    %v6079 = vand.u32 %v5497, 4294901760
    %v6080 = vsub.f32 %v5497, %v6079
    %v6081 = vand.u32 %v6080, 4294901760
    %6082 = vmatpush.msra.mxu0 %v6081
    %v6083 = vand.u32 %v5495, 4294901760
    %v6084 = vsub.f32 %v5495, %v6083
    %v6085 = vand.u32 %v6084, 4294901760
    %6086 = vmatpush.msra.mxu0 %v6085
    %v6087 = vand.u32 %v5493, 4294901760
    %v6088 = vsub.f32 %v5493, %v6087
    %v6089 = vand.u32 %v6088, 4294901760
    %6090 = vmatpush.msra.mxu0 %v6089
    %v6091 = vand.u32 %v5491, 4294901760
    %v6092 = vsub.f32 %v5491, %v6091
    %v6093 = vand.u32 %v6092, 4294901760
    %6094 = vmatpush.msra.mxu0 %v6093
    %v6095 = vand.u32 %v5521, 4294901760
    %6096 = vmatmul.f32.gmra.mxu0 %v6095
    %v6097 = vpop.f32.mrf.mxu0
    %v6098 = vadd.f32 %v6038, %v6097
    %6099 = vdwg.mxu0
    %6100 = vmatpush.msra.mxu0 0.0
    %6101 = vmatpush.msra.mxu0 0.0
    %6102 = vmatpush.msra.mxu0 0.0
    %v6103 = vand.u32 %v5528, 4294901760
    %6104 = vmatpush.msra.mxu0 %v6103
    %v6105 = vand.u32 %v5513, 4294901760
    %6106 = vmatpush.msra.mxu0 %v6105
    %v6107 = vand.u32 %v5511, 4294901760
    %6108 = vmatpush.msra.mxu0 %v6107
    %v6109 = vand.u32 %v5509, 4294901760
    %6110 = vmatpush.msra.mxu0 %v6109
    %v6111 = vand.u32 %v5507, 4294901760
    %6112 = vmatpush.msra.mxu0 %v6111
    %v6113 = vand.u32 %v5505, 4294901760
    %6114 = vmatpush.msra.mxu0 %v6113
    %v6115 = vand.u32 %v5503, 4294901760
    %6116 = vmatpush.msra.mxu0 %v6115
    %v6117 = vand.u32 %v5501, 4294901760
    %6118 = vmatpush.msra.mxu0 %v6117
    %v6119 = vand.u32 %v5499, 4294901760
    %6120 = vmatpush.msra.mxu0 %v6119
    %v6121 = vand.u32 %v5497, 4294901760
    %6122 = vmatpush.msra.mxu0 %v6121
    %v6123 = vand.u32 %v5495, 4294901760
    %6124 = vmatpush.msra.mxu0 %v6123
    %v6125 = vand.u32 %v5493, 4294901760
    %6126 = vmatpush.msra.mxu0 %v6125
    %v6127 = vand.u32 %v5491, 4294901760
    %6128 = vmatpush.msra.mxu0 %v6127
    %v6129 = vand.u32 %v5521, 4294901760
    %6130 = vmatmul.f32.gmra.mxu0 %v6129
    %v6131 = vpop.f32.mrf.mxu0
    %v6132 = vadd.f32 %v6098, %v6131
    %6133 = vdwg.mxu0
    %v6136 = vrot.slane %v25, 4
    %v6137 = vrot.slane %v26, 4
    %vm6140 = vcmask 1043456
    %v6141 = vsel %vm6140, %v5830, %v6136
    %v6142 = vsel %vm6140, %v6132, %v6137
    %6143 = vst [vmem:[#allocation3] sm:$0xff] %v6141
    %6144 = vst [vmem:[#allocation3 + $0x8] sm:$0xff] %v6142
    %v6145 = vperm.slane %v5486, 1
    %v6146 = vmul.f32 %v6145, %v5489
    %v6148 = vsel %vm5519, %v6146, 0
    %6150 = vmatpush.msra.mxu0 0.0
    %6151 = vmatpush.msra.mxu0 0.0
    %6152 = vmatpush.msra.mxu0 0.0
    %v6153 = vand.u32 %v5525, 4294901760
    %6154 = vmatpush.msra.mxu0 %v6153
    %v6155 = vand.u32 %v5512, 4294901760
    %6156 = vmatpush.msra.mxu0 %v6155
    %v6157 = vand.u32 %v5510, 4294901760
    %6158 = vmatpush.msra.mxu0 %v6157
    %v6159 = vand.u32 %v5508, 4294901760
    %6160 = vmatpush.msra.mxu0 %v6159
    %v6161 = vand.u32 %v5506, 4294901760
    %6162 = vmatpush.msra.mxu0 %v6161
    %v6163 = vand.u32 %v5504, 4294901760
    %6164 = vmatpush.msra.mxu0 %v6163
    %v6165 = vand.u32 %v5502, 4294901760
    %6166 = vmatpush.msra.mxu0 %v6165
    %v6167 = vand.u32 %v5500, 4294901760
    %6168 = vmatpush.msra.mxu0 %v6167
    %v6169 = vand.u32 %v5498, 4294901760
    %6170 = vmatpush.msra.mxu0 %v6169
    %v6171 = vand.u32 %v5496, 4294901760
    %6172 = vmatpush.msra.mxu0 %v6171
    %v6173 = vand.u32 %v5494, 4294901760
    %6174 = vmatpush.msra.mxu0 %v6173
    %v6175 = vand.u32 %v5492, 4294901760
    %6176 = vmatpush.msra.mxu0 %v6175
    %v6177 = vand.u32 %v5490, 4294901760
    %6178 = vmatpush.msra.mxu0 %v6177
    %v6179 = vand.u32 %v6148, 4294901760
    %v6180 = vsub.f32 %v6148, %v6179
    %v6181 = vand.u32 %v6180, 4294901760
    %v6182 = vsub.f32 %v6180, %v6181
    %v6183 = vand.u32 %v6182, 4294901760
    %6184 = vmatmul.f32.gmra.mxu0 %v6183
    %v6185 = vpop.f32.mrf.mxu0
    %v6186 = vadd.f32 %v5518, %v6185
    %6187 = vdwg.mxu0
    %6188 = vmatpush.msra.mxu0 0.0
    %6189 = vmatpush.msra.mxu0 0.0
    %6190 = vmatpush.msra.mxu0 0.0
    %v6191 = vand.u32 %v5525, 4294901760
    %v6192 = vsub.f32 %v5525, %v6191
    %v6193 = vand.u32 %v6192, 4294901760
    %v6194 = vsub.f32 %v6192, %v6193
    %v6195 = vand.u32 %v6194, 4294901760
    %6196 = vmatpush.msra.mxu0 %v6195
    %v6197 = vand.u32 %v5512, 4294901760
    %v6198 = vsub.f32 %v5512, %v6197
    %v6199 = vand.u32 %v6198, 4294901760
    %v6200 = vsub.f32 %v6198, %v6199
    %v6201 = vand.u32 %v6200, 4294901760
    %6202 = vmatpush.msra.mxu0 %v6201
    %v6203 = vand.u32 %v5510, 4294901760
    %v6204 = vsub.f32 %v5510, %v6203
    %v6205 = vand.u32 %v6204, 4294901760
    %v6206 = vsub.f32 %v6204, %v6205
    %v6207 = vand.u32 %v6206, 4294901760
    %6208 = vmatpush.msra.mxu0 %v6207
    %v6209 = vand.u32 %v5508, 4294901760
    %v6210 = vsub.f32 %v5508, %v6209
    %v6211 = vand.u32 %v6210, 4294901760
    %v6212 = vsub.f32 %v6210, %v6211
    %v6213 = vand.u32 %v6212, 4294901760
    %6214 = vmatpush.msra.mxu0 %v6213
    %v6215 = vand.u32 %v5506, 4294901760
    %v6216 = vsub.f32 %v5506, %v6215
    %v6217 = vand.u32 %v6216, 4294901760
    %v6218 = vsub.f32 %v6216, %v6217
    %v6219 = vand.u32 %v6218, 4294901760
    %6220 = vmatpush.msra.mxu0 %v6219
    %v6221 = vand.u32 %v5504, 4294901760
    %v6222 = vsub.f32 %v5504, %v6221
    %v6223 = vand.u32 %v6222, 4294901760
    %v6224 = vsub.f32 %v6222, %v6223
    %v6225 = vand.u32 %v6224, 4294901760
    %6226 = vmatpush.msra.mxu0 %v6225
    %v6227 = vand.u32 %v5502, 4294901760
    %v6228 = vsub.f32 %v5502, %v6227
    %v6229 = vand.u32 %v6228, 4294901760
    %v6230 = vsub.f32 %v6228, %v6229
    %v6231 = vand.u32 %v6230, 4294901760
    %6232 = vmatpush.msra.mxu0 %v6231
    %v6233 = vand.u32 %v5500, 4294901760
    %v6234 = vsub.f32 %v5500, %v6233
    %v6235 = vand.u32 %v6234, 4294901760
    %v6236 = vsub.f32 %v6234, %v6235
    %v6237 = vand.u32 %v6236, 4294901760
    %6238 = vmatpush.msra.mxu0 %v6237
    %v6239 = vand.u32 %v5498, 4294901760
    %v6240 = vsub.f32 %v5498, %v6239
    %v6241 = vand.u32 %v6240, 4294901760
    %v6242 = vsub.f32 %v6240, %v6241
    %v6243 = vand.u32 %v6242, 4294901760
    %6244 = vmatpush.msra.mxu0 %v6243
    %v6245 = vand.u32 %v5496, 4294901760
    %v6246 = vsub.f32 %v5496, %v6245
    %v6247 = vand.u32 %v6246, 4294901760
    %v6248 = vsub.f32 %v6246, %v6247
    %v6249 = vand.u32 %v6248, 4294901760
    %6250 = vmatpush.msra.mxu0 %v6249
    %v6251 = vand.u32 %v5494, 4294901760
    %v6252 = vsub.f32 %v5494, %v6251
    %v6253 = vand.u32 %v6252, 4294901760
    %v6254 = vsub.f32 %v6252, %v6253
    %v6255 = vand.u32 %v6254, 4294901760
    %6256 = vmatpush.msra.mxu0 %v6255
    %v6257 = vand.u32 %v5492, 4294901760
    %v6258 = vsub.f32 %v5492, %v6257
    %v6259 = vand.u32 %v6258, 4294901760
    %v6260 = vsub.f32 %v6258, %v6259
    %v6261 = vand.u32 %v6260, 4294901760
    %6262 = vmatpush.msra.mxu0 %v6261
    %v6263 = vand.u32 %v5490, 4294901760
    %v6264 = vsub.f32 %v5490, %v6263
    %v6265 = vand.u32 %v6264, 4294901760
    %v6266 = vsub.f32 %v6264, %v6265
    %v6267 = vand.u32 %v6266, 4294901760
    %6268 = vmatpush.msra.mxu0 %v6267
    %v6269 = vand.u32 %v6148, 4294901760
    %6270 = vmatmul.f32.gmra.mxu0 %v6269
    %v6271 = vpop.f32.mrf.mxu0
    %v6272 = vadd.f32 %v6186, %v6271
    %6273 = vdwg.mxu0
    %6274 = vmatpush.msra.mxu0 0.0
    %6275 = vmatpush.msra.mxu0 0.0
    %6276 = vmatpush.msra.mxu0 0.0
    %v6277 = vand.u32 %v5525, 4294901760
    %v6278 = vsub.f32 %v5525, %v6277
    %6279 = vmatpush.msra.mxu0 %v6278
    %v6280 = vand.u32 %v5512, 4294901760
    %v6281 = vsub.f32 %v5512, %v6280
    %6282 = vmatpush.msra.mxu0 %v6281
    %v6283 = vand.u32 %v5510, 4294901760
    %v6284 = vsub.f32 %v5510, %v6283
    %6285 = vmatpush.msra.mxu0 %v6284
    %v6286 = vand.u32 %v5508, 4294901760
    %v6287 = vsub.f32 %v5508, %v6286
    %6288 = vmatpush.msra.mxu0 %v6287
    %v6289 = vand.u32 %v5506, 4294901760
    %v6290 = vsub.f32 %v5506, %v6289
    %6291 = vmatpush.msra.mxu0 %v6290
    %v6292 = vand.u32 %v5504, 4294901760
    %v6293 = vsub.f32 %v5504, %v6292
    %6294 = vmatpush.msra.mxu0 %v6293
    %v6295 = vand.u32 %v5502, 4294901760
    %v6296 = vsub.f32 %v5502, %v6295
    %6297 = vmatpush.msra.mxu0 %v6296
    %v6298 = vand.u32 %v5500, 4294901760
    %v6299 = vsub.f32 %v5500, %v6298
    %6300 = vmatpush.msra.mxu0 %v6299
    %v6301 = vand.u32 %v5498, 4294901760
    %v6302 = vsub.f32 %v5498, %v6301
    %6303 = vmatpush.msra.mxu0 %v6302
    %v6304 = vand.u32 %v5496, 4294901760
    %v6305 = vsub.f32 %v5496, %v6304
    %6306 = vmatpush.msra.mxu0 %v6305
    %v6307 = vand.u32 %v5494, 4294901760
    %v6308 = vsub.f32 %v5494, %v6307
    %6309 = vmatpush.msra.mxu0 %v6308
    %v6310 = vand.u32 %v5492, 4294901760
    %v6311 = vsub.f32 %v5492, %v6310
    %6312 = vmatpush.msra.mxu0 %v6311
    %v6313 = vand.u32 %v5490, 4294901760
    %v6314 = vsub.f32 %v5490, %v6313
    %6315 = vmatpush.msra.mxu0 %v6314
    %v6316 = vand.u32 %v6148, 4294901760
    %v6317 = vsub.f32 %v6148, %v6316
    %6318 = vmatmul.f32.gmra.mxu0 %v6317
    %v6319 = vpop.f32.mrf.mxu0
    %v6320 = vadd.f32 %v6272, %v6319
    %6321 = vdwg.mxu0
    %6322 = vmatpush.msra.mxu0 0.0
    %6323 = vmatpush.msra.mxu0 0.0
    %6324 = vmatpush.msra.mxu0 0.0
    %v6325 = vand.u32 %v5525, 4294901760
    %6326 = vmatpush.msra.mxu0 %v6325
    %v6327 = vand.u32 %v5512, 4294901760
    %6328 = vmatpush.msra.mxu0 %v6327
    %v6329 = vand.u32 %v5510, 4294901760
    %6330 = vmatpush.msra.mxu0 %v6329
    %v6331 = vand.u32 %v5508, 4294901760
    %6332 = vmatpush.msra.mxu0 %v6331
    %v6333 = vand.u32 %v5506, 4294901760
    %6334 = vmatpush.msra.mxu0 %v6333
    %v6335 = vand.u32 %v5504, 4294901760
    %6336 = vmatpush.msra.mxu0 %v6335
    %v6337 = vand.u32 %v5502, 4294901760
    %6338 = vmatpush.msra.mxu0 %v6337
    %v6339 = vand.u32 %v5500, 4294901760
    %6340 = vmatpush.msra.mxu0 %v6339
    %v6341 = vand.u32 %v5498, 4294901760
    %6342 = vmatpush.msra.mxu0 %v6341
    %v6343 = vand.u32 %v5496, 4294901760
    %6344 = vmatpush.msra.mxu0 %v6343
    %v6345 = vand.u32 %v5494, 4294901760
    %6346 = vmatpush.msra.mxu0 %v6345
    %v6347 = vand.u32 %v5492, 4294901760
    %6348 = vmatpush.msra.mxu0 %v6347
    %v6349 = vand.u32 %v5490, 4294901760
    %6350 = vmatpush.msra.mxu0 %v6349
    %v6351 = vand.u32 %v6148, 4294901760
    %v6352 = vsub.f32 %v6148, %v6351
    %v6353 = vand.u32 %v6352, 4294901760
    %6354 = vmatmul.f32.gmra.mxu0 %v6353
    %v6355 = vpop.f32.mrf.mxu0
    %v6356 = vadd.f32 %v6320, %v6355
    %6357 = vdwg.mxu0
    %6358 = vmatpush.msra.mxu0 0.0
    %6359 = vmatpush.msra.mxu0 0.0
    %6360 = vmatpush.msra.mxu0 0.0
    %v6361 = vand.u32 %v5525, 4294901760
    %v6362 = vsub.f32 %v5525, %v6361
    %v6363 = vand.u32 %v6362, 4294901760
    %6364 = vmatpush.msra.mxu0 %v6363
    %v6365 = vand.u32 %v5512, 4294901760
    %v6366 = vsub.f32 %v5512, %v6365
    %v6367 = vand.u32 %v6366, 4294901760
    %6368 = vmatpush.msra.mxu0 %v6367
    %v6369 = vand.u32 %v5510, 4294901760
    %v6370 = vsub.f32 %v5510, %v6369
    %v6371 = vand.u32 %v6370, 4294901760
    %6372 = vmatpush.msra.mxu0 %v6371
    %v6373 = vand.u32 %v5508, 4294901760
    %v6374 = vsub.f32 %v5508, %v6373
    %v6375 = vand.u32 %v6374, 4294901760
    %6376 = vmatpush.msra.mxu0 %v6375
    %v6377 = vand.u32 %v5506, 4294901760
    %v6378 = vsub.f32 %v5506, %v6377
    %v6379 = vand.u32 %v6378, 4294901760
    %6380 = vmatpush.msra.mxu0 %v6379
    %v6381 = vand.u32 %v5504, 4294901760
    %v6382 = vsub.f32 %v5504, %v6381
    %v6383 = vand.u32 %v6382, 4294901760
    %6384 = vmatpush.msra.mxu0 %v6383
    %v6385 = vand.u32 %v5502, 4294901760
    %v6386 = vsub.f32 %v5502, %v6385
    %v6387 = vand.u32 %v6386, 4294901760
    %6388 = vmatpush.msra.mxu0 %v6387
    %v6389 = vand.u32 %v5500, 4294901760
    %v6390 = vsub.f32 %v5500, %v6389
    %v6391 = vand.u32 %v6390, 4294901760
    %6392 = vmatpush.msra.mxu0 %v6391
    %v6393 = vand.u32 %v5498, 4294901760
    %v6394 = vsub.f32 %v5498, %v6393
    %v6395 = vand.u32 %v6394, 4294901760
    %6396 = vmatpush.msra.mxu0 %v6395
    %v6397 = vand.u32 %v5496, 4294901760
    %v6398 = vsub.f32 %v5496, %v6397
    %v6399 = vand.u32 %v6398, 4294901760
    %6400 = vmatpush.msra.mxu0 %v6399
    %v6401 = vand.u32 %v5494, 4294901760
    %v6402 = vsub.f32 %v5494, %v6401
    %v6403 = vand.u32 %v6402, 4294901760
    %6404 = vmatpush.msra.mxu0 %v6403
    %v6405 = vand.u32 %v5492, 4294901760
    %v6406 = vsub.f32 %v5492, %v6405
    %v6407 = vand.u32 %v6406, 4294901760
    %6408 = vmatpush.msra.mxu0 %v6407
    %v6409 = vand.u32 %v5490, 4294901760
    %v6410 = vsub.f32 %v5490, %v6409
    %v6411 = vand.u32 %v6410, 4294901760
    %6412 = vmatpush.msra.mxu0 %v6411
    %v6413 = vand.u32 %v6148, 4294901760
    %6414 = vmatmul.f32.gmra.mxu0 %v6413
    %v6415 = vpop.f32.mrf.mxu0
    %v6416 = vadd.f32 %v6356, %v6415
    %6417 = vdwg.mxu0
    %6418 = vmatpush.msra.mxu0 0.0
    %6419 = vmatpush.msra.mxu0 0.0
    %6420 = vmatpush.msra.mxu0 0.0
    %v6421 = vand.u32 %v5525, 4294901760
    %6422 = vmatpush.msra.mxu0 %v6421
    %v6423 = vand.u32 %v5512, 4294901760
    %6424 = vmatpush.msra.mxu0 %v6423
    %v6425 = vand.u32 %v5510, 4294901760
    %6426 = vmatpush.msra.mxu0 %v6425
    %v6427 = vand.u32 %v5508, 4294901760
    %6428 = vmatpush.msra.mxu0 %v6427
    %v6429 = vand.u32 %v5506, 4294901760
    %6430 = vmatpush.msra.mxu0 %v6429
    %v6431 = vand.u32 %v5504, 4294901760
    %6432 = vmatpush.msra.mxu0 %v6431
    %v6433 = vand.u32 %v5502, 4294901760
    %6434 = vmatpush.msra.mxu0 %v6433
    %v6435 = vand.u32 %v5500, 4294901760
    %6436 = vmatpush.msra.mxu0 %v6435
    %v6437 = vand.u32 %v5498, 4294901760
    %6438 = vmatpush.msra.mxu0 %v6437
    %v6439 = vand.u32 %v5496, 4294901760
    %6440 = vmatpush.msra.mxu0 %v6439
    %v6441 = vand.u32 %v5494, 4294901760
    %6442 = vmatpush.msra.mxu0 %v6441
    %v6443 = vand.u32 %v5492, 4294901760
    %6444 = vmatpush.msra.mxu0 %v6443
    %v6445 = vand.u32 %v5490, 4294901760
    %6446 = vmatpush.msra.mxu0 %v6445
    %v6447 = vand.u32 %v6148, 4294901760
    %6448 = vmatmul.f32.gmra.mxu0 %v6447
    %v6449 = vpop.f32.mrf.mxu0
    %v6450 = vadd.f32 %v6416, %v6449
    %6451 = vdwg.mxu0
    %6452 = vmatpush.msra.mxu0 0.0
    %6453 = vmatpush.msra.mxu0 0.0
    %6454 = vmatpush.msra.mxu0 0.0
    %v6455 = vand.u32 %v5528, 4294901760
    %6456 = vmatpush.msra.mxu0 %v6455
    %v6457 = vand.u32 %v5513, 4294901760
    %6458 = vmatpush.msra.mxu0 %v6457
    %v6459 = vand.u32 %v5511, 4294901760
    %6460 = vmatpush.msra.mxu0 %v6459
    %v6461 = vand.u32 %v5509, 4294901760
    %6462 = vmatpush.msra.mxu0 %v6461
    %v6463 = vand.u32 %v5507, 4294901760
    %6464 = vmatpush.msra.mxu0 %v6463
    %v6465 = vand.u32 %v5505, 4294901760
    %6466 = vmatpush.msra.mxu0 %v6465
    %v6467 = vand.u32 %v5503, 4294901760
    %6468 = vmatpush.msra.mxu0 %v6467
    %v6469 = vand.u32 %v5501, 4294901760
    %6470 = vmatpush.msra.mxu0 %v6469
    %v6471 = vand.u32 %v5499, 4294901760
    %6472 = vmatpush.msra.mxu0 %v6471
    %v6473 = vand.u32 %v5497, 4294901760
    %6474 = vmatpush.msra.mxu0 %v6473
    %v6475 = vand.u32 %v5495, 4294901760
    %6476 = vmatpush.msra.mxu0 %v6475
    %v6477 = vand.u32 %v5493, 4294901760
    %6478 = vmatpush.msra.mxu0 %v6477
    %v6479 = vand.u32 %v5491, 4294901760
    %6480 = vmatpush.msra.mxu0 %v6479
    %v6481 = vand.u32 %v6148, 4294901760
    %v6482 = vsub.f32 %v6148, %v6481
    %v6483 = vand.u32 %v6482, 4294901760
    %v6484 = vsub.f32 %v6482, %v6483
    %v6485 = vand.u32 %v6484, 4294901760
    %6486 = vmatmul.f32.gmra.mxu0 %v6485
    %v6487 = vpop.f32.mrf.mxu0
    %v6488 = vadd.f32 %v5518, %v6487
    %6489 = vdwg.mxu0
    %6490 = vmatpush.msra.mxu0 0.0
    %6491 = vmatpush.msra.mxu0 0.0
    %6492 = vmatpush.msra.mxu0 0.0
    %v6493 = vand.u32 %v5528, 4294901760
    %v6494 = vsub.f32 %v5528, %v6493
    %v6495 = vand.u32 %v6494, 4294901760
    %v6496 = vsub.f32 %v6494, %v6495
    %v6497 = vand.u32 %v6496, 4294901760
    %6498 = vmatpush.msra.mxu0 %v6497
    %v6499 = vand.u32 %v5513, 4294901760
    %v6500 = vsub.f32 %v5513, %v6499
    %v6501 = vand.u32 %v6500, 4294901760
    %v6502 = vsub.f32 %v6500, %v6501
    %v6503 = vand.u32 %v6502, 4294901760
    %6504 = vmatpush.msra.mxu0 %v6503
    %v6505 = vand.u32 %v5511, 4294901760
    %v6506 = vsub.f32 %v5511, %v6505
    %v6507 = vand.u32 %v6506, 4294901760
    %v6508 = vsub.f32 %v6506, %v6507
    %v6509 = vand.u32 %v6508, 4294901760
    %6510 = vmatpush.msra.mxu0 %v6509
    %v6511 = vand.u32 %v5509, 4294901760
    %v6512 = vsub.f32 %v5509, %v6511
    %v6513 = vand.u32 %v6512, 4294901760
    %v6514 = vsub.f32 %v6512, %v6513
    %v6515 = vand.u32 %v6514, 4294901760
    %6516 = vmatpush.msra.mxu0 %v6515
    %v6517 = vand.u32 %v5507, 4294901760
    %v6518 = vsub.f32 %v5507, %v6517
    %v6519 = vand.u32 %v6518, 4294901760
    %v6520 = vsub.f32 %v6518, %v6519
    %v6521 = vand.u32 %v6520, 4294901760
    %6522 = vmatpush.msra.mxu0 %v6521
    %v6523 = vand.u32 %v5505, 4294901760
    %v6524 = vsub.f32 %v5505, %v6523
    %v6525 = vand.u32 %v6524, 4294901760
    %v6526 = vsub.f32 %v6524, %v6525
    %v6527 = vand.u32 %v6526, 4294901760
    %6528 = vmatpush.msra.mxu0 %v6527
    %v6529 = vand.u32 %v5503, 4294901760
    %v6530 = vsub.f32 %v5503, %v6529
    %v6531 = vand.u32 %v6530, 4294901760
    %v6532 = vsub.f32 %v6530, %v6531
    %v6533 = vand.u32 %v6532, 4294901760
    %6534 = vmatpush.msra.mxu0 %v6533
    %v6535 = vand.u32 %v5501, 4294901760
    %v6536 = vsub.f32 %v5501, %v6535
    %v6537 = vand.u32 %v6536, 4294901760
    %v6538 = vsub.f32 %v6536, %v6537
    %v6539 = vand.u32 %v6538, 4294901760
    %6540 = vmatpush.msra.mxu0 %v6539
    %v6541 = vand.u32 %v5499, 4294901760
    %v6542 = vsub.f32 %v5499, %v6541
    %v6543 = vand.u32 %v6542, 4294901760
    %v6544 = vsub.f32 %v6542, %v6543
    %v6545 = vand.u32 %v6544, 4294901760
    %6546 = vmatpush.msra.mxu0 %v6545
    %v6547 = vand.u32 %v5497, 4294901760
    %v6548 = vsub.f32 %v5497, %v6547
    %v6549 = vand.u32 %v6548, 4294901760
    %v6550 = vsub.f32 %v6548, %v6549
    %v6551 = vand.u32 %v6550, 4294901760
    %6552 = vmatpush.msra.mxu0 %v6551
    %v6553 = vand.u32 %v5495, 4294901760
    %v6554 = vsub.f32 %v5495, %v6553
    %v6555 = vand.u32 %v6554, 4294901760
    %v6556 = vsub.f32 %v6554, %v6555
    %v6557 = vand.u32 %v6556, 4294901760
    %6558 = vmatpush.msra.mxu0 %v6557
    %v6559 = vand.u32 %v5493, 4294901760
    %v6560 = vsub.f32 %v5493, %v6559
    %v6561 = vand.u32 %v6560, 4294901760
    %v6562 = vsub.f32 %v6560, %v6561
    %v6563 = vand.u32 %v6562, 4294901760
    %6564 = vmatpush.msra.mxu0 %v6563
    %v6565 = vand.u32 %v5491, 4294901760
    %v6566 = vsub.f32 %v5491, %v6565
    %v6567 = vand.u32 %v6566, 4294901760
    %v6568 = vsub.f32 %v6566, %v6567
    %v6569 = vand.u32 %v6568, 4294901760
    %6570 = vmatpush.msra.mxu0 %v6569
    %v6571 = vand.u32 %v6148, 4294901760
    %6572 = vmatmul.f32.gmra.mxu0 %v6571
    %v6573 = vpop.f32.mrf.mxu0
    %v6574 = vadd.f32 %v6488, %v6573
    %6575 = vdwg.mxu0
    %6576 = vmatpush.msra.mxu0 0.0
    %6577 = vmatpush.msra.mxu0 0.0
    %6578 = vmatpush.msra.mxu0 0.0
    %v6579 = vand.u32 %v5528, 4294901760
    %v6580 = vsub.f32 %v5528, %v6579
    %6581 = vmatpush.msra.mxu0 %v6580
    %v6582 = vand.u32 %v5513, 4294901760
    %v6583 = vsub.f32 %v5513, %v6582
    %6584 = vmatpush.msra.mxu0 %v6583
    %v6585 = vand.u32 %v5511, 4294901760
    %v6586 = vsub.f32 %v5511, %v6585
    %6587 = vmatpush.msra.mxu0 %v6586
    %v6588 = vand.u32 %v5509, 4294901760
    %v6589 = vsub.f32 %v5509, %v6588
    %6590 = vmatpush.msra.mxu0 %v6589
    %v6591 = vand.u32 %v5507, 4294901760
    %v6592 = vsub.f32 %v5507, %v6591
    %6593 = vmatpush.msra.mxu0 %v6592
    %v6594 = vand.u32 %v5505, 4294901760
    %v6595 = vsub.f32 %v5505, %v6594
    %6596 = vmatpush.msra.mxu0 %v6595
    %v6597 = vand.u32 %v5503, 4294901760
    %v6598 = vsub.f32 %v5503, %v6597
    %6599 = vmatpush.msra.mxu0 %v6598
    %v6600 = vand.u32 %v5501, 4294901760
    %v6601 = vsub.f32 %v5501, %v6600
    %6602 = vmatpush.msra.mxu0 %v6601
    %v6603 = vand.u32 %v5499, 4294901760
    %v6604 = vsub.f32 %v5499, %v6603
    %6605 = vmatpush.msra.mxu0 %v6604
    %v6606 = vand.u32 %v5497, 4294901760
    %v6607 = vsub.f32 %v5497, %v6606
    %6608 = vmatpush.msra.mxu0 %v6607
    %v6609 = vand.u32 %v5495, 4294901760
    %v6610 = vsub.f32 %v5495, %v6609
    %6611 = vmatpush.msra.mxu0 %v6610
    %v6612 = vand.u32 %v5493, 4294901760
    %v6613 = vsub.f32 %v5493, %v6612
    %6614 = vmatpush.msra.mxu0 %v6613
    %v6615 = vand.u32 %v5491, 4294901760
    %v6616 = vsub.f32 %v5491, %v6615
    %6617 = vmatpush.msra.mxu0 %v6616
    %v6618 = vand.u32 %v6148, 4294901760
    %v6619 = vsub.f32 %v6148, %v6618
    %6620 = vmatmul.f32.gmra.mxu0 %v6619
    %v6621 = vpop.f32.mrf.mxu0
    %v6622 = vadd.f32 %v6574, %v6621
    %6623 = vdwg.mxu0
    %6624 = vmatpush.msra.mxu0 0.0
    %6625 = vmatpush.msra.mxu0 0.0
    %6626 = vmatpush.msra.mxu0 0.0
    %v6627 = vand.u32 %v5528, 4294901760
    %6628 = vmatpush.msra.mxu0 %v6627
    %v6629 = vand.u32 %v5513, 4294901760
    %6630 = vmatpush.msra.mxu0 %v6629
    %v6631 = vand.u32 %v5511, 4294901760
    %6632 = vmatpush.msra.mxu0 %v6631
    %v6633 = vand.u32 %v5509, 4294901760
    %6634 = vmatpush.msra.mxu0 %v6633
    %v6635 = vand.u32 %v5507, 4294901760
    %6636 = vmatpush.msra.mxu0 %v6635
    %v6637 = vand.u32 %v5505, 4294901760
    %6638 = vmatpush.msra.mxu0 %v6637
    %v6639 = vand.u32 %v5503, 4294901760
    %6640 = vmatpush.msra.mxu0 %v6639
    %v6641 = vand.u32 %v5501, 4294901760
    %6642 = vmatpush.msra.mxu0 %v6641
    %v6643 = vand.u32 %v5499, 4294901760
    %6644 = vmatpush.msra.mxu0 %v6643
    %v6645 = vand.u32 %v5497, 4294901760
    %6646 = vmatpush.msra.mxu0 %v6645
    %v6647 = vand.u32 %v5495, 4294901760
    %6648 = vmatpush.msra.mxu0 %v6647
    %v6649 = vand.u32 %v5493, 4294901760
    %6650 = vmatpush.msra.mxu0 %v6649
    %v6651 = vand.u32 %v5491, 4294901760
    %6652 = vmatpush.msra.mxu0 %v6651
    %v6653 = vand.u32 %v6148, 4294901760
    %v6654 = vsub.f32 %v6148, %v6653
    %v6655 = vand.u32 %v6654, 4294901760
    %6656 = vmatmul.f32.gmra.mxu0 %v6655
    %v6657 = vpop.f32.mrf.mxu0
    %v6658 = vadd.f32 %v6622, %v6657
    %6659 = vdwg.mxu0
    %6660 = vmatpush.msra.mxu0 0.0
    %6661 = vmatpush.msra.mxu0 0.0
    %6662 = vmatpush.msra.mxu0 0.0
    %v6663 = vand.u32 %v5528, 4294901760
    %v6664 = vsub.f32 %v5528, %v6663
    %v6665 = vand.u32 %v6664, 4294901760
    %6666 = vmatpush.msra.mxu0 %v6665
    %v6667 = vand.u32 %v5513, 4294901760
    %v6668 = vsub.f32 %v5513, %v6667
    %v6669 = vand.u32 %v6668, 4294901760
    %6670 = vmatpush.msra.mxu0 %v6669
    %v6671 = vand.u32 %v5511, 4294901760
    %v6672 = vsub.f32 %v5511, %v6671
    %v6673 = vand.u32 %v6672, 4294901760
    %6674 = vmatpush.msra.mxu0 %v6673
    %v6675 = vand.u32 %v5509, 4294901760
    %v6676 = vsub.f32 %v5509, %v6675
    %v6677 = vand.u32 %v6676, 4294901760
    %6678 = vmatpush.msra.mxu0 %v6677
    %v6679 = vand.u32 %v5507, 4294901760
    %v6680 = vsub.f32 %v5507, %v6679
    %v6681 = vand.u32 %v6680, 4294901760
    %6682 = vmatpush.msra.mxu0 %v6681
    %v6683 = vand.u32 %v5505, 4294901760
    %v6684 = vsub.f32 %v5505, %v6683
    %v6685 = vand.u32 %v6684, 4294901760
    %6686 = vmatpush.msra.mxu0 %v6685
    %v6687 = vand.u32 %v5503, 4294901760
    %v6688 = vsub.f32 %v5503, %v6687
    %v6689 = vand.u32 %v6688, 4294901760
    %6690 = vmatpush.msra.mxu0 %v6689
    %v6691 = vand.u32 %v5501, 4294901760
    %v6692 = vsub.f32 %v5501, %v6691
    %v6693 = vand.u32 %v6692, 4294901760
    %6694 = vmatpush.msra.mxu0 %v6693
    %v6695 = vand.u32 %v5499, 4294901760
    %v6696 = vsub.f32 %v5499, %v6695
    %v6697 = vand.u32 %v6696, 4294901760
    %6698 = vmatpush.msra.mxu0 %v6697
    %v6699 = vand.u32 %v5497, 4294901760
    %v6700 = vsub.f32 %v5497, %v6699
    %v6701 = vand.u32 %v6700, 4294901760
    %6702 = vmatpush.msra.mxu0 %v6701
    %v6703 = vand.u32 %v5495, 4294901760
    %v6704 = vsub.f32 %v5495, %v6703
    %v6705 = vand.u32 %v6704, 4294901760
    %6706 = vmatpush.msra.mxu0 %v6705
    %v6707 = vand.u32 %v5493, 4294901760
    %v6708 = vsub.f32 %v5493, %v6707
    %v6709 = vand.u32 %v6708, 4294901760
    %6710 = vmatpush.msra.mxu0 %v6709
    %v6711 = vand.u32 %v5491, 4294901760
    %v6712 = vsub.f32 %v5491, %v6711
    %v6713 = vand.u32 %v6712, 4294901760
    %6714 = vmatpush.msra.mxu0 %v6713
    %v6715 = vand.u32 %v6148, 4294901760
    %6716 = vmatmul.f32.gmra.mxu0 %v6715
    %v6717 = vpop.f32.mrf.mxu0
    %v6718 = vadd.f32 %v6658, %v6717
    %6719 = vdwg.mxu0
    %6720 = vmatpush.msra.mxu0 0.0
    %6721 = vmatpush.msra.mxu0 0.0
    %6722 = vmatpush.msra.mxu0 0.0
    %v6723 = vand.u32 %v5528, 4294901760
    %6724 = vmatpush.msra.mxu0 %v6723
    %v6725 = vand.u32 %v5513, 4294901760
    %6726 = vmatpush.msra.mxu0 %v6725
    %v6727 = vand.u32 %v5511, 4294901760
    %6728 = vmatpush.msra.mxu0 %v6727
    %v6729 = vand.u32 %v5509, 4294901760
    %6730 = vmatpush.msra.mxu0 %v6729
    %v6731 = vand.u32 %v5507, 4294901760
    %6732 = vmatpush.msra.mxu0 %v6731
    %v6733 = vand.u32 %v5505, 4294901760
    %6734 = vmatpush.msra.mxu0 %v6733
    %v6735 = vand.u32 %v5503, 4294901760
    %6736 = vmatpush.msra.mxu0 %v6735
    %v6737 = vand.u32 %v5501, 4294901760
    %6738 = vmatpush.msra.mxu0 %v6737
    %v6739 = vand.u32 %v5499, 4294901760
    %6740 = vmatpush.msra.mxu0 %v6739
    %v6741 = vand.u32 %v5497, 4294901760
    %6742 = vmatpush.msra.mxu0 %v6741
    %v6743 = vand.u32 %v5495, 4294901760
    %6744 = vmatpush.msra.mxu0 %v6743
    %v6745 = vand.u32 %v5493, 4294901760
    %6746 = vmatpush.msra.mxu0 %v6745
    %v6747 = vand.u32 %v5491, 4294901760
    %6748 = vmatpush.msra.mxu0 %v6747
    %v6749 = vand.u32 %v6148, 4294901760
    %6750 = vmatmul.f32.gmra.mxu0 %v6749
    %v6751 = vpop.f32.mrf.mxu0
    %v6752 = vadd.f32 %v6718, %v6751
    %6753 = vdwg.mxu0
    %v6754 = vsel %vm6140, %v6450, %v25
    %v6755 = vsel %vm6140, %v6752, %v26
    %s6756 = scalar_lea.vmem [#allocation3], 16
    %6757 = vst [vmem:[%s6756] sm:$0xff] %v6754
    %6758 = vst [vmem:[%s6756 + $0x8] sm:$0xff] %v6755
    // Predicated region
    $region26: #{tpu_custom_call.1} parent=1 // pred_check
      _
    $region27: #{tpu_custom_call.1} parent=1 // pred_check_branch
      %6760 = sbr.rel (0) target = $region29
    $region28: #{tpu_custom_call.1} parent=1 // pred_region
      %6762 = vsyncadd [#allocation4], 0
      %s6763 = sshll.u32 [#allocation3], 4
      %s6764 = int_to_ptr.vmem [resolvable:$true] %s6763
      %s6765 = sshll.u32 %s6, 4
      %s6766 = int_to_ptr.hbm [resolvable:$true] %s6765
      %6771 = dma.vmem_to_hbm [thread:$0]  %s6764, 512, %s6766, [#allocation4], 256, 256, 16
    $region29: #{tpu_custom_call.1} parent=1 // pred_fallthru
      _
    // Predicated region
    $region30: #{tpu_custom_call.1} parent=1 // pred_check
      _
    $region31: #{tpu_custom_call.1} parent=1 // pred_check_branch
      %6773 = sbr.rel (0) target = $region33
    $region32: #{tpu_custom_call.1} parent=1 // pred_region
      %6775 = dma.done [#allocation4], 512
    $region33: #{tpu_custom_call.1} parent=1 // pred_fallthru
      _
    %6776 = vsyncpa [#allocation4], 1

</llo_original>
